<compile_context>
chip_gen: v6e
topology: v6e:2x2x1
jax: 0.10.0
libtpu: 0.0.40
codegen_flags: <defaults>
</compile_context>

<pallas_src>
import jax
import jax.numpy as jnp
from jax.experimental import pallas as pl
from jax.experimental.pallas import tpu as pltpu


# ----------------------------------------------------------------------------- helpers
def _round_up(n, m):
    return ((n + m - 1) // m) * m


def _pad_axis(a, axis, target):
    pad = int(target) - a.shape[axis]
    if pad == 0:
        return a
    widths = [(0, 0)] * a.ndim
    widths[axis] = (0, pad)
    return jnp.pad(a, widths)


def _batch_tiles(batch):
    """Return (padded_batch, batch_tile).

    Batches >= 16 are split into at least two grid steps so the 'parallel'
    batch axis can be sharded across v7x's two TensorCores (one extra grid
    step ~0.35 us is negligible on v5e/v6e).  Large batches use 512-row tiles.
    """
    b8 = _round_up(batch, 8)
    if b8 <= 8:
        return 8, 8
    if b8 <= 1024:
        tb = _round_up((b8 + 1) // 2, 8)
        return 2 * tb, tb
    tb = 512
    return _round_up(b8, tb), tb


def _weight_spec(a):
    # Full-array block pinned to (0, 0): stays VMEM-resident across batch tiles.
    return pl.BlockSpec(a.shape, lambda i: (0, 0))


def _vmem_limit(weight_bytes, block_io_bytes):
    # double-buffered weights + pipelined activation tiles + intermediate slack
    est = 2 * weight_bytes + 3 * block_io_bytes + (16 << 20)
    return int(min(max(est, 24 << 20), 48 << 20))


# ----------------------------------------------------------------------------- kernel
def _vae_kernel(x_ref, c_ref, eps_ref,
                w1x_ref, w1c_ref, b1_ref,
                w2_ref, b2_ref, w3_ref, b3_ref,
                w4_ref, b4_ref,
                w5z_ref, w5c_ref, b5_ref,
                w6_ref, b6_ref, w7_ref, b7_ref,
                w8_ref, b8_ref,
                out_ref, mu_ref, logvar_ref):
    bf16 = jnp.bfloat16
    f32 = jnp.float32
    c = c_ref[...]                                  # (tb, label) f32 (bf16-rounded)
    label = c.shape[1]

    # ---------------- encoder ----------------
    # fc1: clean-K MXU dot on x; label columns folded in as a rank-`label` VPU update.
    h = jnp.dot(x_ref[...], w1x_ref[...], preferred_element_type=f32) + b1_ref[...]
    w1c = w1c_ref[...]
    for j in range(label):
        h = h + c[:, j:j + 1] * w1c[j:j + 1, :]
    h = jnp.maximum(h, 0.0).astype(bf16)

    h = jnp.dot(h, w2_ref[...], preferred_element_type=f32) + b2_ref[...]
    h = jnp.maximum(h, 0.0).astype(bf16)
    h = jnp.dot(h, w3_ref[...], preferred_element_type=f32) + b3_ref[...]
    h = jnp.maximum(h, 0.0).astype(bf16)

    # fused latent heads: [fc41 | fc42] in one 256-wide MXU pass.
    head = jnp.dot(h, w4_ref[...], preferred_element_type=f32) + b4_ref[...]
    lp = mu_ref.shape[1]
    mu = head[:, :lp]
    logvar = head[:, lp:]
    z = mu + jnp.exp(0.5 * logvar) * eps_ref[...]   # padded lanes stay 0 (eps=0 there)
    mu_ref[...] = mu
    logvar_ref[...] = logvar

    # ---------------- decoder (z never leaves VMEM) ----------------
    d = jnp.dot(z.astype(bf16), w5z_ref[...], preferred_element_type=f32) + b5_ref[...]
    w5c = w5c_ref[...]
    for j in range(label):
        d = d + c[:, j:j + 1] * w5c[j:j + 1, :]
    d = jnp.maximum(d, 0.0).astype(bf16)

    d = jnp.dot(d, w6_ref[...], preferred_element_type=f32) + b6_ref[...]
    d = jnp.maximum(d, 0.0).astype(bf16)
    d = jnp.dot(d, w7_ref[...], preferred_element_type=f32) + b7_ref[...]
    d = jnp.maximum(d, 0.0).astype(bf16)
    d = jnp.dot(d, w8_ref[...], preferred_element_type=f32) + b8_ref[...]
    out_ref[...] = jax.nn.sigmoid(d).astype(out_ref.dtype)


# ----------------------------------------------------------------------------- pallas wrapper
_WEIGHT_NAMES = ("w1x", "w1c", "b1", "w2", "b2", "w3", "b3", "w4", "b4",
                 "w5z", "w5c", "b5", "w6", "b6", "w7", "b7", "w8", "b8")


def _vae_call(x, c, eps, kp, tb, lat_pad, nout_pad):
    b_pad, kx = x.shape
    label = c.shape[1]
    grid = (b_pad // tb,)

    weights = tuple(kp[n] for n in _WEIGHT_NAMES)

    in_specs = ([pl.BlockSpec((tb, kx), lambda i: (i, 0)),
                 pl.BlockSpec((tb, label), lambda i: (i, 0)),
                 pl.BlockSpec((tb, lat_pad), lambda i: (i, 0))]
                + [_weight_spec(w) for w in weights])
    out_specs = (pl.BlockSpec((tb, nout_pad), lambda i: (i, 0)),
                 pl.BlockSpec((tb, lat_pad), lambda i: (i, 0)),
                 pl.BlockSpec((tb, lat_pad), lambda i: (i, 0)))
    out_shape = (jax.ShapeDtypeStruct((b_pad, nout_pad), jnp.float32),
                 jax.ShapeDtypeStruct((b_pad, lat_pad), jnp.float32),
                 jax.ShapeDtypeStruct((b_pad, lat_pad), jnp.float32))

    weight_bytes = sum(int(w.size) * w.dtype.itemsize for w in weights)
    block_io = (tb * kx * 2 + tb * label * 4 + tb * lat_pad * 4
                + tb * nout_pad * 4 + 2 * tb * lat_pad * 4)
    flops = 2 * b_pad * (kx * 1024 + 1024 * 512 + 512 * 256 + 256 * 2 * lat_pad
                         + lat_pad * 256 + 256 * 512 + 512 * 1024 + 1024 * nout_pad)
    trans = b_pad * (lat_pad + 2 * nout_pad)        # exp for z + sigmoid (exp+recip)
    io_bytes = (int(x.size) * 2 + int(c.size) * 4 + int(eps.size) * 4
                + b_pad * (nout_pad + 2 * lat_pad) * 4)
    cost = pl.CostEstimate(flops=flops, transcendentals=trans,
                           bytes_accessed=weight_bytes + io_bytes)

    return pl.pallas_call(
        _vae_kernel,
        grid=grid,
        in_specs=in_specs,
        out_specs=out_specs,
        out_shape=out_shape,
        compiler_params=pltpu.CompilerParams(
            dimension_semantics=("parallel",),
            vmem_limit_bytes=_vmem_limit(weight_bytes, block_io)),
        cost_estimate=cost,
    )(x, c, eps, *weights)


def vae_forward(x, c, eps, params, kparams):
    """x: (B, input_dim*num_channels) f32, c: (B, label_size) f32,
    eps: (B, latent_dim) f32 standard-normal noise.
    Returns (reconstruction, mu, logvar), all f32."""
    batch = x.shape[0]
    latent_dim = params["w41"].shape[1]
    out_feat = params["w8"].shape[1]

    lat_pad = kparams["w4"].shape[1] // 2
    kx_pad = kparams["w1x"].shape[0]
    nout_pad = kparams["w8"].shape[1]

    b_pad, tb = _batch_tiles(batch)

    x_p = _pad_axis(_pad_axis(x.astype(jnp.bfloat16), 1, kx_pad), 0, b_pad)
    # c feeds the rank-2 VPU updates in f32; round to bf16 first so it matches
    # the reference's bf16 matmul inputs exactly.
    c_p = _pad_axis(c.astype(jnp.bfloat16).astype(jnp.float32), 0, b_pad)
    eps_p = _pad_axis(_pad_axis(eps.astype(jnp.float32), 1, lat_pad), 0, b_pad)

    out_p, mu_p, logvar_p = _vae_call(x_p, c_p, eps_p, kparams, tb, lat_pad, nout_pad)
    return (out_p[:batch, :out_feat],
            mu_p[:batch, :latent_dim],
            logvar_p[:batch, :latent_dim])


# ----------------------------------------------------------------------------- params
def init_params(key, input_dim, num_channels, latent_dim, label_size):
    """PyTorch-Linear-style init. Weights stored transposed (in, out) in bf16;
    biases (1, out) in f32."""
    in_flat = input_dim * num_channels
    layer_dims = {
        "w1": (in_flat + label_size, 1024), "w2": (1024, 512), "w3": (512, 256),
        "w41": (256, latent_dim), "w42": (256, latent_dim),
        "w5": (latent_dim + label_size, 256), "w6": (256, 512), "w7": (512, 1024),
        "w8": (1024, in_flat),
    }
    keys = jax.random.split(key, 2 * len(layer_dims))
    params = {}
    for idx, (name, (din, dout)) in enumerate(layer_dims.items()):
        bound = float(1.0 / (din ** 0.5))
        w = jax.random.uniform(keys[2 * idx], (din, dout), jnp.float32, -bound, bound)
        b = jax.random.uniform(keys[2 * idx + 1], (1, dout), jnp.float32, -bound, bound)
        params[name] = w.astype(jnp.bfloat16)
        params["b" + name[1:]] = b
    return params


def prepare_params(params, in_flat):
    """Reshape / pad the PyTorch-style params into kernel-ready arrays:
    fc1/fc5 split into a clean-K MXU block + label rows (f32, VPU update);
    fc41+fc42 fused column-wise; all lane dims padded to multiples of 128."""
    lat = params["w41"].shape[1]
    lat_pad = _round_up(lat, 128)
    kx_pad = _round_up(in_flat, 128)
    nout_pad = _round_up(params["w8"].shape[1], 128)
    f32 = jnp.float32

    kp = {}
    # fc1: x rows go to the MXU (bf16), label rows to the VPU (f32, exact bf16 values).
    kp["w1x"] = _pad_axis(params["w1"][:in_flat], 0, kx_pad)
    kp["w1c"] = params["w1"][in_flat:].astype(f32)
    kp["b1"] = params["b1"]
    kp["w2"], kp["b2"] = params["w2"], params["b2"]
    kp["w3"], kp["b3"] = params["w3"], params["b3"]
    # fused latent heads: [w41 | w42], each zero-padded to 128 lanes.
    kp["w4"] = jnp.concatenate([_pad_axis(params["w41"], 1, lat_pad),
                                _pad_axis(params["w42"], 1, lat_pad)], axis=1)
    kp["b4"] = jnp.concatenate([_pad_axis(params["b41"], 1, lat_pad),
                                _pad_axis(params["b42"], 1, lat_pad)], axis=1)
    # fc5: latent rows padded to 128 for the MXU, label rows to the VPU.
    kp["w5z"] = _pad_axis(params["w5"][:lat], 0, lat_pad)
    kp["w5c"] = params["w5"][lat:].astype(f32)
    kp["b5"] = params["b5"]
    kp["w6"], kp["b6"] = params["w6"], params["b6"]
    kp["w7"], kp["b7"] = params["w7"], params["b7"]
    kp["w8"] = _pad_axis(params["w8"], 1, nout_pad)
    kp["b8"] = _pad_axis(params["b8"], 1, nout_pad)
    return kp


# ----------------------------------------------------------------------------- reference
def reference_forward(x, c, eps, params):
    """Plain-JAX forward with the same bf16 cast points as the kernel."""
    bf16, f32 = jnp.bfloat16, jnp.float32

    def lin(h, w, b):
        return jnp.dot(h.astype(bf16), params[w], preferred_element_type=f32) + params[b]

    xc = jnp.concatenate([x, c], axis=1)
    h = jax.nn.relu(lin(xc, "w1", "b1"))
    h = jax.nn.relu(lin(h, "w2", "b2"))
    h = jax.nn.relu(lin(h, "w3", "b3"))
    mu = lin(h, "w41", "b41")
    logvar = lin(h, "w42", "b42")
    z = mu + jnp.exp(0.5 * logvar) * eps
    zc = jnp.concatenate([z, c], axis=1)
    d = jax.nn.relu(lin(zc, "w5", "b5"))
    d = jax.nn.relu(lin(d, "w6", "b6"))
    d = jax.nn.relu(lin(d, "w7", "b7"))
    out = jax.nn.sigmoid(lin(d, "w8", "b8"))
    return out, mu, logvar


# ----------------------------------------------------------------------------- demo
if __name__ == "__main__":
    # Module-default shapes (VAE(input_dim=256, num_channels=2, latent_dim=32, label_size=2)).
    input_dim = 256
    num_channels = 2
    latent_dim = 32
    label_size = 2
    batch = 2
    in_flat = input_dim * num_channels

    key = jax.random.PRNGKey(0)
    kx, kc, keps, kp = jax.random.split(key, 4)
    x = jax.random.normal(kx, (batch, in_flat), jnp.float32)
    c = jax.random.normal(kc, (batch, label_size), jnp.float32)
    # TODO(synk): the torch reparametrize casts the noise to float64; TPU has no
    # fast f64 path, so the Gaussian noise is kept (and passed in) as float32.
    eps = jax.random.normal(keps, (batch, latent_dim), jnp.float32)

    params = init_params(kp, input_dim, num_channels, latent_dim, label_size)
    kparams = prepare_params(params, in_flat)

    out, mu, logvar = jax.block_until_ready(vae_forward(x, c, eps, params, kparams))

    ref_out, ref_mu, ref_logvar = reference_forward(x, c, eps, params)

    assert out.shape == (batch, in_flat)
    assert mu.shape == (batch, latent_dim) and logvar.shape == (batch, latent_dim)
    assert jnp.allclose(mu, ref_mu, atol=1e-3, rtol=1e-3), "mu mismatch vs reference"
    assert jnp.allclose(logvar, ref_logvar, atol=1e-3, rtol=1e-3), "logvar mismatch vs reference"
    assert jnp.allclose(out, ref_out, atol=1e-3, rtol=1e-3), "output mismatch vs reference"

    print("KERNEL_OK")
</pallas_src>

<mosaic_0001>
module attributes {stable_mosaic.version = 11 : i64} {
  func.func @_vae_kernel(%arg0: i32, %arg1: memref<8x512xbf16, #tpu.memory_space<vmem>>, %arg2: memref<8x2xf32, #tpu.memory_space<vmem>>, %arg3: memref<8x128xf32, #tpu.memory_space<vmem>>, %arg4: memref<512x1024xbf16, #tpu.memory_space<vmem>>, %arg5: memref<2x1024xf32, #tpu.memory_space<vmem>>, %arg6: memref<1x1024xf32, #tpu.memory_space<vmem>>, %arg7: memref<1024x512xbf16, #tpu.memory_space<vmem>>, %arg8: memref<1x512xf32, #tpu.memory_space<vmem>>, %arg9: memref<512x256xbf16, #tpu.memory_space<vmem>>, %arg10: memref<1x256xf32, #tpu.memory_space<vmem>>, %arg11: memref<256x256xbf16, #tpu.memory_space<vmem>>, %arg12: memref<1x256xf32, #tpu.memory_space<vmem>>, %arg13: memref<128x256xbf16, #tpu.memory_space<vmem>>, %arg14: memref<2x256xf32, #tpu.memory_space<vmem>>, %arg15: memref<1x256xf32, #tpu.memory_space<vmem>>, %arg16: memref<256x512xbf16, #tpu.memory_space<vmem>>, %arg17: memref<1x512xf32, #tpu.memory_space<vmem>>, %arg18: memref<512x1024xbf16, #tpu.memory_space<vmem>>, %arg19: memref<1x1024xf32, #tpu.memory_space<vmem>>, %arg20: memref<1024x512xbf16, #tpu.memory_space<vmem>>, %arg21: memref<1x512xf32, #tpu.memory_space<vmem>>, %arg22: memref<8x512xf32, #tpu.memory_space<vmem>>, %arg23: memref<8x128xf32, #tpu.memory_space<vmem>>, %arg24: memref<8x128xf32, #tpu.memory_space<vmem>>) attributes {dimension_semantics = [#tpu.dimension_semantics<parallel>], iteration_bounds = array<i64: 1>, scalar_prefetch = 0 : i64, scratch_operands = 0 : i64, tpu.core_type = #tpu.core_type<tc>, window_params = [{transform_indices = @transform_0, window_bounds = array<i64: 8, 512>}, {transform_indices = @transform_1, window_bounds = array<i64: 8, 2>}, {transform_indices = @transform_2, window_bounds = array<i64: 8, 128>}, {pipeline_mode = #tpu.pipeline_mode<synchronous>, transform_indices = @transform_3, window_bounds = array<i64: 512, 1024>}, {pipeline_mode = #tpu.pipeline_mode<synchronous>, transform_indices = @transform_4, window_bounds = array<i64: 2, 1024>}, {pipeline_mode = #tpu.pipeline_mode<synchronous>, transform_indices = @transform_5, window_bounds = array<i64: 1, 1024>}, {pipeline_mode = #tpu.pipeline_mode<synchronous>, transform_indices = @transform_6, window_bounds = array<i64: 1024, 512>}, {pipeline_mode = #tpu.pipeline_mode<synchronous>, transform_indices = @transform_7, window_bounds = array<i64: 1, 512>}, {pipeline_mode = #tpu.pipeline_mode<synchronous>, transform_indices = @transform_8, window_bounds = array<i64: 512, 256>}, {pipeline_mode = #tpu.pipeline_mode<synchronous>, transform_indices = @transform_9, window_bounds = array<i64: 1, 256>}, {pipeline_mode = #tpu.pipeline_mode<synchronous>, transform_indices = @transform_10, window_bounds = array<i64: 256, 256>}, {pipeline_mode = #tpu.pipeline_mode<synchronous>, transform_indices = @transform_11, window_bounds = array<i64: 1, 256>}, {pipeline_mode = #tpu.pipeline_mode<synchronous>, transform_indices = @transform_12, window_bounds = array<i64: 128, 256>}, {pipeline_mode = #tpu.pipeline_mode<synchronous>, transform_indices = @transform_13, window_bounds = array<i64: 2, 256>}, {pipeline_mode = #tpu.pipeline_mode<synchronous>, transform_indices = @transform_14, window_bounds = array<i64: 1, 256>}, {pipeline_mode = #tpu.pipeline_mode<synchronous>, transform_indices = @transform_15, window_bounds = array<i64: 256, 512>}, {pipeline_mode = #tpu.pipeline_mode<synchronous>, transform_indices = @transform_16, window_bounds = array<i64: 1, 512>}, {pipeline_mode = #tpu.pipeline_mode<synchronous>, transform_indices = @transform_17, window_bounds = array<i64: 512, 1024>}, {pipeline_mode = #tpu.pipeline_mode<synchronous>, transform_indices = @transform_18, window_bounds = array<i64: 1, 1024>}, {pipeline_mode = #tpu.pipeline_mode<synchronous>, transform_indices = @transform_19, window_bounds = array<i64: 1024, 512>}, {pipeline_mode = #tpu.pipeline_mode<synchronous>, transform_indices = @transform_20, window_bounds = array<i64: 1, 512>}, {transform_indices = @transform_21, window_bounds = array<i64: 8, 512>}, {transform_indices = @transform_22, window_bounds = array<i64: 8, 128>}, {transform_indices = @transform_23, window_bounds = array<i64: 8, 128>}]} {
    %c0 = arith.constant 0 : index
    %c0_0 = arith.constant 0 : index
    %0 = vector.load %arg2[%c0, %c0_0] : memref<8x2xf32, #tpu.memory_space<vmem>>, vector<8x2xf32>
    %c0_1 = arith.constant 0 : index
    %c0_2 = arith.constant 0 : index
    %1 = vector.load %arg1[%c0_1, %c0_2] : memref<8x512xbf16, #tpu.memory_space<vmem>>, vector<8x512xbf16>
    %c0_3 = arith.constant 0 : index
    %c0_4 = arith.constant 0 : index
    %2 = vector.load %arg4[%c0_3, %c0_4] : memref<512x1024xbf16, #tpu.memory_space<vmem>>, vector<512x1024xbf16>
    %cst = arith.constant dense<0.000000e+00> : vector<8x1024xf32>
    %3 = tpu.matmul %1, %2, %cst {dimension_numbers = #tpu.dot_dimension_numbers<[1], [0], [0], [1], [0, 0, 1, 1], [], []>} : vector<8x512xbf16>, vector<512x1024xbf16>, vector<8x1024xf32> -> vector<8x1024xf32>
    %c0_5 = arith.constant 0 : index
    %c0_6 = arith.constant 0 : index
    %4 = vector.load %arg6[%c0_5, %c0_6] : memref<1x1024xf32, #tpu.memory_space<vmem>>, vector<1x1024xf32>
    %5 = vector.broadcast %4 : vector<1x1024xf32> to vector<8x1024xf32>
    %6 = arith.addf %3, %5 : vector<8x1024xf32>
    %c0_7 = arith.constant 0 : index
    %c0_8 = arith.constant 0 : index
    %7 = vector.load %arg5[%c0_7, %c0_8] : memref<2x1024xf32, #tpu.memory_space<vmem>>, vector<2x1024xf32>
    %8 = vector.extract_strided_slice %0 {offsets = [0, 0], sizes = [8, 1], strides = [1, 1]} : vector<8x2xf32> to vector<8x1xf32>
    %9 = vector.extract_strided_slice %7 {offsets = [0, 0], sizes = [1, 1024], strides = [1, 1]} : vector<2x1024xf32> to vector<1x1024xf32>
    %10 = vector.broadcast %8 : vector<8x1xf32> to vector<8x1024xf32>
    %11 = vector.broadcast %9 : vector<1x1024xf32> to vector<8x1024xf32>
    %12 = arith.mulf %10, %11 : vector<8x1024xf32>
    %13 = arith.addf %6, %12 : vector<8x1024xf32>
    %14 = vector.extract_strided_slice %0 {offsets = [0, 1], sizes = [8, 1], strides = [1, 1]} : vector<8x2xf32> to vector<8x1xf32>
    %15 = vector.extract_strided_slice %7 {offsets = [1, 0], sizes = [1, 1024], strides = [1, 1]} : vector<2x1024xf32> to vector<1x1024xf32>
    %16 = vector.broadcast %14 : vector<8x1xf32> to vector<8x1024xf32>
    %17 = vector.broadcast %15 : vector<1x1024xf32> to vector<8x1024xf32>
    %18 = arith.mulf %16, %17 : vector<8x1024xf32>
    %19 = arith.addf %13, %18 : vector<8x1024xf32>
    %cst_9 = arith.constant 0.000000e+00 : f32
    %20 = vector.broadcast %cst_9 : f32 to vector<8x1024xf32>
    %21 = arith.maximumf %19, %20 : vector<8x1024xf32>
    %22 = arith.truncf %21 : vector<8x1024xf32> to vector<8x1024xbf16>
    %c0_10 = arith.constant 0 : index
    %c0_11 = arith.constant 0 : index
    %23 = vector.load %arg7[%c0_10, %c0_11] : memref<1024x512xbf16, #tpu.memory_space<vmem>>, vector<1024x512xbf16>
    %cst_12 = arith.constant dense<0.000000e+00> : vector<8x512xf32>
    %24 = tpu.matmul %22, %23, %cst_12 {dimension_numbers = #tpu.dot_dimension_numbers<[1], [0], [0], [1], [0, 0, 1, 1], [], []>} : vector<8x1024xbf16>, vector<1024x512xbf16>, vector<8x512xf32> -> vector<8x512xf32>
    %c0_13 = arith.constant 0 : index
    %c0_14 = arith.constant 0 : index
    %25 = vector.load %arg8[%c0_13, %c0_14] : memref<1x512xf32, #tpu.memory_space<vmem>>, vector<1x512xf32>
    %26 = vector.broadcast %25 : vector<1x512xf32> to vector<8x512xf32>
    %27 = arith.addf %24, %26 : vector<8x512xf32>
    %cst_15 = arith.constant 0.000000e+00 : f32
    %28 = vector.broadcast %cst_15 : f32 to vector<8x512xf32>
    %29 = arith.maximumf %27, %28 : vector<8x512xf32>
    %30 = arith.truncf %29 : vector<8x512xf32> to vector<8x512xbf16>
    %c0_16 = arith.constant 0 : index
    %c0_17 = arith.constant 0 : index
    %31 = vector.load %arg9[%c0_16, %c0_17] : memref<512x256xbf16, #tpu.memory_space<vmem>>, vector<512x256xbf16>
    %cst_18 = arith.constant dense<0.000000e+00> : vector<8x256xf32>
    %32 = tpu.matmul %30, %31, %cst_18 {dimension_numbers = #tpu.dot_dimension_numbers<[1], [0], [0], [1], [0, 0, 1, 1], [], []>} : vector<8x512xbf16>, vector<512x256xbf16>, vector<8x256xf32> -> vector<8x256xf32>
    %c0_19 = arith.constant 0 : index
    %c0_20 = arith.constant 0 : index
    %33 = vector.load %arg10[%c0_19, %c0_20] : memref<1x256xf32, #tpu.memory_space<vmem>>, vector<1x256xf32>
    %34 = vector.broadcast %33 : vector<1x256xf32> to vector<8x256xf32>
    %35 = arith.addf %32, %34 : vector<8x256xf32>
    %cst_21 = arith.constant 0.000000e+00 : f32
    %36 = vector.broadcast %cst_21 : f32 to vector<8x256xf32>
    %37 = arith.maximumf %35, %36 : vector<8x256xf32>
    %38 = arith.truncf %37 : vector<8x256xf32> to vector<8x256xbf16>
    %c0_22 = arith.constant 0 : index
    %c0_23 = arith.constant 0 : index
    %39 = vector.load %arg11[%c0_22, %c0_23] : memref<256x256xbf16, #tpu.memory_space<vmem>>, vector<256x256xbf16>
    %cst_24 = arith.constant dense<0.000000e+00> : vector<8x256xf32>
    %40 = tpu.matmul %38, %39, %cst_24 {dimension_numbers = #tpu.dot_dimension_numbers<[1], [0], [0], [1], [0, 0, 1, 1], [], []>} : vector<8x256xbf16>, vector<256x256xbf16>, vector<8x256xf32> -> vector<8x256xf32>
    %c0_25 = arith.constant 0 : index
    %c0_26 = arith.constant 0 : index
    %41 = vector.load %arg12[%c0_25, %c0_26] : memref<1x256xf32, #tpu.memory_space<vmem>>, vector<1x256xf32>
    %42 = vector.broadcast %41 : vector<1x256xf32> to vector<8x256xf32>
    %43 = arith.addf %40, %42 : vector<8x256xf32>
    %44 = vector.extract_strided_slice %43 {offsets = [0, 0], sizes = [8, 128], strides = [1, 1]} : vector<8x256xf32> to vector<8x128xf32>
    %45 = vector.extract_strided_slice %43 {offsets = [0, 128], sizes = [8, 128], strides = [1, 1]} : vector<8x256xf32> to vector<8x128xf32>
    %cst_27 = arith.constant 5.000000e-01 : f32
    %46 = vector.broadcast %cst_27 : f32 to vector<8x128xf32>
    %47 = arith.mulf %46, %45 : vector<8x128xf32>
    %48 = math.exp %47 : vector<8x128xf32>
    %c0_28 = arith.constant 0 : index
    %c0_29 = arith.constant 0 : index
    %49 = vector.load %arg3[%c0_28, %c0_29] : memref<8x128xf32, #tpu.memory_space<vmem>>, vector<8x128xf32>
    %50 = arith.mulf %48, %49 : vector<8x128xf32>
    %51 = arith.addf %44, %50 : vector<8x128xf32>
    %c0_30 = arith.constant 0 : index
    %c0_31 = arith.constant 0 : index
    %52 = vector.load %arg23[%c0_30, %c0_31] : memref<8x128xf32, #tpu.memory_space<vmem>>, vector<8x128xf32>
    tpu.vector_store %arg23[%c0_30, %c0_31], %44 {strides = array<i32>} : memref<8x128xf32, #tpu.memory_space<vmem>>, vector<8x128xf32>,
    %c0_32 = arith.constant 0 : index
    %c0_33 = arith.constant 0 : index
    %53 = vector.load %arg24[%c0_32, %c0_33] : memref<8x128xf32, #tpu.memory_space<vmem>>, vector<8x128xf32>
    tpu.vector_store %arg24[%c0_32, %c0_33], %45 {strides = array<i32>} : memref<8x128xf32, #tpu.memory_space<vmem>>, vector<8x128xf32>,
    %54 = arith.truncf %51 : vector<8x128xf32> to vector<8x128xbf16>
    %c0_34 = arith.constant 0 : index
    %c0_35 = arith.constant 0 : index
    %55 = vector.load %arg13[%c0_34, %c0_35] : memref<128x256xbf16, #tpu.memory_space<vmem>>, vector<128x256xbf16>
    %cst_36 = arith.constant dense<0.000000e+00> : vector<8x256xf32>
    %56 = tpu.matmul %54, %55, %cst_36 {dimension_numbers = #tpu.dot_dimension_numbers<[1], [0], [0], [1], [0, 0, 1, 1], [], []>} : vector<8x128xbf16>, vector<128x256xbf16>, vector<8x256xf32> -> vector<8x256xf32>
    %c0_37 = arith.constant 0 : index
    %c0_38 = arith.constant 0 : index
    %57 = vector.load %arg15[%c0_37, %c0_38] : memref<1x256xf32, #tpu.memory_space<vmem>>, vector<1x256xf32>
    %58 = vector.broadcast %57 : vector<1x256xf32> to vector<8x256xf32>
    %59 = arith.addf %56, %58 : vector<8x256xf32>
    %c0_39 = arith.constant 0 : index
    %c0_40 = arith.constant 0 : index
    %60 = vector.load %arg14[%c0_39, %c0_40] : memref<2x256xf32, #tpu.memory_space<vmem>>, vector<2x256xf32>
    %61 = vector.extract_strided_slice %0 {offsets = [0, 0], sizes = [8, 1], strides = [1, 1]} : vector<8x2xf32> to vector<8x1xf32>
    %62 = vector.extract_strided_slice %60 {offsets = [0, 0], sizes = [1, 256], strides = [1, 1]} : vector<2x256xf32> to vector<1x256xf32>
    %63 = vector.broadcast %61 : vector<8x1xf32> to vector<8x256xf32>
    %64 = vector.broadcast %62 : vector<1x256xf32> to vector<8x256xf32>
    %65 = arith.mulf %63, %64 : vector<8x256xf32>
    %66 = arith.addf %59, %65 : vector<8x256xf32>
    %67 = vector.extract_strided_slice %0 {offsets = [0, 1], sizes = [8, 1], strides = [1, 1]} : vector<8x2xf32> to vector<8x1xf32>
    %68 = vector.extract_strided_slice %60 {offsets = [1, 0], sizes = [1, 256], strides = [1, 1]} : vector<2x256xf32> to vector<1x256xf32>
    %69 = vector.broadcast %67 : vector<8x1xf32> to vector<8x256xf32>
    %70 = vector.broadcast %68 : vector<1x256xf32> to vector<8x256xf32>
    %71 = arith.mulf %69, %70 : vector<8x256xf32>
    %72 = arith.addf %66, %71 : vector<8x256xf32>
    %cst_41 = arith.constant 0.000000e+00 : f32
    %73 = vector.broadcast %cst_41 : f32 to vector<8x256xf32>
    %74 = arith.maximumf %72, %73 : vector<8x256xf32>
    %75 = arith.truncf %74 : vector<8x256xf32> to vector<8x256xbf16>
    %c0_42 = arith.constant 0 : index
    %c0_43 = arith.constant 0 : index
    %76 = vector.load %arg16[%c0_42, %c0_43] : memref<256x512xbf16, #tpu.memory_space<vmem>>, vector<256x512xbf16>
    %cst_44 = arith.constant dense<0.000000e+00> : vector<8x512xf32>
    %77 = tpu.matmul %75, %76, %cst_44 {dimension_numbers = #tpu.dot_dimension_numbers<[1], [0], [0], [1], [0, 0, 1, 1], [], []>} : vector<8x256xbf16>, vector<256x512xbf16>, vector<8x512xf32> -> vector<8x512xf32>
    %c0_45 = arith.constant 0 : index
    %c0_46 = arith.constant 0 : index
    %78 = vector.load %arg17[%c0_45, %c0_46] : memref<1x512xf32, #tpu.memory_space<vmem>>, vector<1x512xf32>
    %79 = vector.broadcast %78 : vector<1x512xf32> to vector<8x512xf32>
    %80 = arith.addf %77, %79 : vector<8x512xf32>
    %cst_47 = arith.constant 0.000000e+00 : f32
    %81 = vector.broadcast %cst_47 : f32 to vector<8x512xf32>
    %82 = arith.maximumf %80, %81 : vector<8x512xf32>
    %83 = arith.truncf %82 : vector<8x512xf32> to vector<8x512xbf16>
    %c0_48 = arith.constant 0 : index
    %c0_49 = arith.constant 0 : index
    %84 = vector.load %arg18[%c0_48, %c0_49] : memref<512x1024xbf16, #tpu.memory_space<vmem>>, vector<512x1024xbf16>
    %cst_50 = arith.constant dense<0.000000e+00> : vector<8x1024xf32>
    %85 = tpu.matmul %83, %84, %cst_50 {dimension_numbers = #tpu.dot_dimension_numbers<[1], [0], [0], [1], [0, 0, 1, 1], [], []>} : vector<8x512xbf16>, vector<512x1024xbf16>, vector<8x1024xf32> -> vector<8x1024xf32>
    %c0_51 = arith.constant 0 : index
    %c0_52 = arith.constant 0 : index
    %86 = vector.load %arg19[%c0_51, %c0_52] : memref<1x1024xf32, #tpu.memory_space<vmem>>, vector<1x1024xf32>
    %87 = vector.broadcast %86 : vector<1x1024xf32> to vector<8x1024xf32>
    %88 = arith.addf %85, %87 : vector<8x1024xf32>
    %cst_53 = arith.constant 0.000000e+00 : f32
    %89 = vector.broadcast %cst_53 : f32 to vector<8x1024xf32>
    %90 = arith.maximumf %88, %89 : vector<8x1024xf32>
    %91 = arith.truncf %90 : vector<8x1024xf32> to vector<8x1024xbf16>
    %c0_54 = arith.constant 0 : index
    %c0_55 = arith.constant 0 : index
    %92 = vector.load %arg20[%c0_54, %c0_55] : memref<1024x512xbf16, #tpu.memory_space<vmem>>, vector<1024x512xbf16>
    %cst_56 = arith.constant dense<0.000000e+00> : vector<8x512xf32>
    %93 = tpu.matmul %91, %92, %cst_56 {dimension_numbers = #tpu.dot_dimension_numbers<[1], [0], [0], [1], [0, 0, 1, 1], [], []>} : vector<8x1024xbf16>, vector<1024x512xbf16>, vector<8x512xf32> -> vector<8x512xf32>
    %c0_57 = arith.constant 0 : index
    %c0_58 = arith.constant 0 : index
    %94 = vector.load %arg21[%c0_57, %c0_58] : memref<1x512xf32, #tpu.memory_space<vmem>>, vector<1x512xf32>
    %95 = vector.broadcast %94 : vector<1x512xf32> to vector<8x512xf32>
    %96 = arith.addf %93, %95 : vector<8x512xf32>
    %97 = arith.negf %96 : vector<8x512xf32>
    %98 = math.exp %97 : vector<8x512xf32>
    %cst_59 = arith.constant 1.000000e+00 : f32
    %99 = vector.broadcast %cst_59 : f32 to vector<8x512xf32>
    %100 = arith.addf %99, %98 : vector<8x512xf32>
    %101 = arith.divf %99, %100 : vector<8x512xf32>
    %c0_60 = arith.constant 0 : index
    %c0_61 = arith.constant 0 : index
    %102 = vector.load %arg22[%c0_60, %c0_61] : memref<8x512xf32, #tpu.memory_space<vmem>>, vector<8x512xf32>
    tpu.vector_store %arg22[%c0_60, %c0_61], %101 {strides = array<i32>} : memref<8x512xf32, #tpu.memory_space<vmem>>, vector<8x512xf32>,
    return
  }
  func.func @transform_0(%arg0: i32) -> (i32, i32) {
    %c0_i32 = arith.constant 0 : i32
    %c0_i32_0 = arith.constant 0 : i32
    return %arg0, %c0_i32 : i32, i32
  }
  func.func @transform_1(%arg0: i32) -> (i32, i32) {
    %c0_i32 = arith.constant 0 : i32
    %c0_i32_0 = arith.constant 0 : i32
    return %arg0, %c0_i32 : i32, i32
  }
  func.func @transform_2(%arg0: i32) -> (i32, i32) {
    %c0_i32 = arith.constant 0 : i32
    %c0_i32_0 = arith.constant 0 : i32
    return %arg0, %c0_i32 : i32, i32
  }
  func.func @transform_3(%arg0: i32) -> (i32, i32) {
    %c0_i32 = arith.constant 0 : i32
    %c0_i32_0 = arith.constant 0 : i32
    %c0_i32_1 = arith.constant 0 : i32
    return %c0_i32, %c0_i32_0 : i32, i32
  }
  func.func @transform_4(%arg0: i32) -> (i32, i32) {
    %c0_i32 = arith.constant 0 : i32
    %c0_i32_0 = arith.constant 0 : i32
    %c0_i32_1 = arith.constant 0 : i32
    return %c0_i32, %c0_i32_0 : i32, i32
  }
  func.func @transform_5(%arg0: i32) -> (i32, i32) {
    %c0_i32 = arith.constant 0 : i32
    %c0_i32_0 = arith.constant 0 : i32
    %c0_i32_1 = arith.constant 0 : i32
    return %c0_i32, %c0_i32_0 : i32, i32
  }
  func.func @transform_6(%arg0: i32) -> (i32, i32) {
    %c0_i32 = arith.constant 0 : i32
    %c0_i32_0 = arith.constant 0 : i32
    %c0_i32_1 = arith.constant 0 : i32
    return %c0_i32, %c0_i32_0 : i32, i32
  }
  func.func @transform_7(%arg0: i32) -> (i32, i32) {
    %c0_i32 = arith.constant 0 : i32
    %c0_i32_0 = arith.constant 0 : i32
    %c0_i32_1 = arith.constant 0 : i32
    return %c0_i32, %c0_i32_0 : i32, i32
  }
  func.func @transform_8(%arg0: i32) -> (i32, i32) {
    %c0_i32 = arith.constant 0 : i32
    %c0_i32_0 = arith.constant 0 : i32
    %c0_i32_1 = arith.constant 0 : i32
    return %c0_i32, %c0_i32_0 : i32, i32
  }
  func.func @transform_9(%arg0: i32) -> (i32, i32) {
    %c0_i32 = arith.constant 0 : i32
    %c0_i32_0 = arith.constant 0 : i32
    %c0_i32_1 = arith.constant 0 : i32
    return %c0_i32, %c0_i32_0 : i32, i32
  }
  func.func @transform_10(%arg0: i32) -> (i32, i32) {
    %c0_i32 = arith.constant 0 : i32
    %c0_i32_0 = arith.constant 0 : i32
    %c0_i32_1 = arith.constant 0 : i32
    return %c0_i32, %c0_i32_0 : i32, i32
  }
  func.func @transform_11(%arg0: i32) -> (i32, i32) {
    %c0_i32 = arith.constant 0 : i32
    %c0_i32_0 = arith.constant 0 : i32
    %c0_i32_1 = arith.constant 0 : i32
    return %c0_i32, %c0_i32_0 : i32, i32
  }
  func.func @transform_12(%arg0: i32) -> (i32, i32) {
    %c0_i32 = arith.constant 0 : i32
    %c0_i32_0 = arith.constant 0 : i32
    %c0_i32_1 = arith.constant 0 : i32
    return %c0_i32, %c0_i32_0 : i32, i32
  }
  func.func @transform_13(%arg0: i32) -> (i32, i32) {
    %c0_i32 = arith.constant 0 : i32
    %c0_i32_0 = arith.constant 0 : i32
    %c0_i32_1 = arith.constant 0 : i32
    return %c0_i32, %c0_i32_0 : i32, i32
  }
  func.func @transform_14(%arg0: i32) -> (i32, i32) {
    %c0_i32 = arith.constant 0 : i32
    %c0_i32_0 = arith.constant 0 : i32
    %c0_i32_1 = arith.constant 0 : i32
    return %c0_i32, %c0_i32_0 : i32, i32
  }
  func.func @transform_15(%arg0: i32) -> (i32, i32) {
    %c0_i32 = arith.constant 0 : i32
    %c0_i32_0 = arith.constant 0 : i32
    %c0_i32_1 = arith.constant 0 : i32
    return %c0_i32, %c0_i32_0 : i32, i32
  }
  func.func @transform_16(%arg0: i32) -> (i32, i32) {
    %c0_i32 = arith.constant 0 : i32
    %c0_i32_0 = arith.constant 0 : i32
    %c0_i32_1 = arith.constant 0 : i32
    return %c0_i32, %c0_i32_0 : i32, i32
  }
  func.func @transform_17(%arg0: i32) -> (i32, i32) {
    %c0_i32 = arith.constant 0 : i32
    %c0_i32_0 = arith.constant 0 : i32
    %c0_i32_1 = arith.constant 0 : i32
    return %c0_i32, %c0_i32_0 : i32, i32
  }
  func.func @transform_18(%arg0: i32) -> (i32, i32) {
    %c0_i32 = arith.constant 0 : i32
    %c0_i32_0 = arith.constant 0 : i32
    %c0_i32_1 = arith.constant 0 : i32
    return %c0_i32, %c0_i32_0 : i32, i32
  }
  func.func @transform_19(%arg0: i32) -> (i32, i32) {
    %c0_i32 = arith.constant 0 : i32
    %c0_i32_0 = arith.constant 0 : i32
    %c0_i32_1 = arith.constant 0 : i32
    return %c0_i32, %c0_i32_0 : i32, i32
  }
  func.func @transform_20(%arg0: i32) -> (i32, i32) {
    %c0_i32 = arith.constant 0 : i32
    %c0_i32_0 = arith.constant 0 : i32
    %c0_i32_1 = arith.constant 0 : i32
    return %c0_i32, %c0_i32_0 : i32, i32
  }
  func.func @transform_21(%arg0: i32) -> (i32, i32) {
    %c0_i32 = arith.constant 0 : i32
    %c0_i32_0 = arith.constant 0 : i32
    return %arg0, %c0_i32 : i32, i32
  }
  func.func @transform_22(%arg0: i32) -> (i32, i32) {
    %c0_i32 = arith.constant 0 : i32
    %c0_i32_0 = arith.constant 0 : i32
    return %arg0, %c0_i32 : i32, i32
  }
  func.func @transform_23(%arg0: i32) -> (i32, i32) {
    %c0_i32 = arith.constant 0 : i32
    %c0_i32_0 = arith.constant 0 : i32
    return %arg0, %c0_i32 : i32, i32
  }
}

</mosaic_0001>

<llo_original>
// kernel: tpu_custom_call.1
$region0: #{tpu_custom_call.1}
  #allocation0 [shape = 'u32[]', space=smem, size = 0x4, offset = 0x4, fixed_abs, tag = 'smem constant byte address 0x4 - core index']
  #allocation1 [shape = 'u32[144,128]{1,0:T(1,128)}', space=vmem, size = 0x12000, scoped, tag = 'internal scratch']
  %s0 = inlined_call_operand.hbm [shape: bf16[8,512], index: 0, kind: input, shape index: {}]
  %s1 = inlined_call_operand.vmem [shape: f32[8,2], index: 1, kind: input, shape index: {}]
  %s2 = inlined_call_operand.hbm [shape: f32[8,128], index: 2, kind: input, shape index: {}]
  %s3 = inlined_call_operand.hbm [shape: bf16[512,1024], index: 3, kind: input, shape index: {}]
  %s4 = inlined_call_operand.vmem [shape: f32[2,1024], index: 4, kind: input, shape index: {}]
  %s5 = inlined_call_operand.hbm [shape: f32[1,1024], index: 5, kind: input, shape index: {}]
  %s6 = inlined_call_operand.hbm [shape: bf16[1024,512], index: 6, kind: input, shape index: {}]
  %s7 = inlined_call_operand.hbm [shape: f32[1,512], index: 7, kind: input, shape index: {}]
  %s8 = inlined_call_operand.hbm [shape: bf16[512,256], index: 8, kind: input, shape index: {}]
  %s9 = inlined_call_operand.hbm [shape: f32[1,256], index: 9, kind: input, shape index: {}]
  %s10 = inlined_call_operand.hbm [shape: bf16[256,256], index: 10, kind: input, shape index: {}]
  %s11 = inlined_call_operand.hbm [shape: f32[1,256], index: 11, kind: input, shape index: {}]
  %s12 = inlined_call_operand.hbm [shape: bf16[128,256], index: 12, kind: input, shape index: {}]
  %s13 = inlined_call_operand.vmem [shape: f32[2,256], index: 13, kind: input, shape index: {}]
  %s14 = inlined_call_operand.hbm [shape: f32[1,256], index: 14, kind: input, shape index: {}]
  %s15 = inlined_call_operand.hbm [shape: bf16[256,512], index: 15, kind: input, shape index: {}]
  %s16 = inlined_call_operand.vmem [shape: f32[1,512], index: 16, kind: input, shape index: {}]
  %s17 = inlined_call_operand.hbm [shape: bf16[512,1024], index: 17, kind: input, shape index: {}]
  %s18 = inlined_call_operand.vmem [shape: f32[1,1024], index: 18, kind: input, shape index: {}]
  %s19 = inlined_call_operand.hbm [shape: bf16[1024,512], index: 19, kind: input, shape index: {}]
  %s20 = inlined_call_operand.vmem [shape: f32[1,512], index: 20, kind: input, shape index: {}]
  %s21 = inlined_call_operand.hbm [shape: f32[8,512], index: 21, kind: output, shape index: {0}]
  %s22 = inlined_call_operand.hbm [shape: f32[8,128], index: 22, kind: output, shape index: {1}]
  %s23 = inlined_call_operand.hbm [shape: f32[8,128], index: 23, kind: output, shape index: {2}]
  %24 = xla_tuple %s21, %s22, %s23
  %s25 = sld [smem:[#allocation0]]
  $region170: #{tpu_custom_call.1} parent=0
    _
  %s27 = ssub.s32 1, %s25
  %s28 = scalar_select 0, %s27, %s25
  $region1: #{tpu_custom_call.1} parent=0
    #allocation2 [shape = 'u8[8192]{0}', space=vmem, size = 0x2000, scoped, tag = 'input window, operand 0, single buffered']
    #allocation3 [shape = 's32[1]{0}', space=sflag, size = 0x4, scoped, tag = 'scoped memory for tpu_custom_call.1']
    #allocation4 [shape = 's32[1]{0}', space=sflag, size = 0x4, scoped, tag = 'scoped memory for tpu_custom_call.1']
    #allocation5 [shape = 'u8[4096]{0}', space=vmem, size = 0x1000, scoped, tag = 'input window, operand 2, single buffered']
    #allocation6 [shape = 's32[1]{0}', space=sflag, size = 0x4, scoped, tag = 'scoped memory for tpu_custom_call.1']
    #allocation7 [shape = 'u8[1048576]{0}', space=vmem, size = 0x100000, scoped, tag = 'input window, operand 3, single buffered']
    #allocation8 [shape = 'u8[4096]{0}', space=vmem, size = 0x1000, scoped, tag = 'input window, operand 5, single buffered']
    #allocation9 [shape = 's32[1]{0}', space=sflag, size = 0x4, scoped, tag = 'scoped memory for tpu_custom_call.1']
    #allocation10 [shape = 'u8[1048576]{0}', space=vmem, size = 0x100000, scoped, tag = 'input window, operand 6, single buffered']
    #allocation11 [shape = 'u8[2048]{0}', space=vmem, size = 0x800, scoped, tag = 'input window, operand 7, single buffered']
    #allocation12 [shape = 's32[1]{0}', space=sflag, size = 0x4, scoped, tag = 'scoped memory for tpu_custom_call.1']
    #allocation13 [shape = 'u8[262144]{0}', space=vmem, size = 0x40000, scoped, tag = 'input window, operand 8, single buffered']
    #allocation14 [shape = 'u8[1024]{0}', space=vmem, size = 0x400, scoped, tag = 'input window, operand 9, single buffered']
    #allocation15 [shape = 's32[1]{0}', space=sflag, size = 0x4, scoped, tag = 'scoped memory for tpu_custom_call.1']
    #allocation16 [shape = 'u8[131072]{0}', space=vmem, size = 0x20000, scoped, tag = 'input window, operand 10, single buffered']
    #allocation17 [shape = 'u8[1024]{0}', space=vmem, size = 0x400, scoped, tag = 'input window, operand 11, single buffered']
    #allocation18 [shape = 's32[1]{0}', space=sflag, size = 0x4, scoped, tag = 'scoped memory for tpu_custom_call.1']
    #allocation19 [shape = 'u8[65536]{0}', space=vmem, size = 0x10000, scoped, tag = 'input window, operand 12, single buffered']
    #allocation20 [shape = 'u8[1024]{0}', space=vmem, size = 0x400, scoped, tag = 'input window, operand 14, single buffered']
    #allocation21 [shape = 's32[1]{0}', space=sflag, size = 0x4, scoped, tag = 'scoped memory for tpu_custom_call.1']
    #allocation22 [shape = 'u8[262144]{0}', space=vmem, size = 0x40000, scoped, tag = 'input window, operand 15, single buffered']
    #allocation23 [shape = 'u8[1048576]{0}', space=vmem, size = 0x100000, scoped, tag = 'input window, operand 17, single buffered']
    #allocation24 [shape = 's32[1]{0}', space=sflag, size = 0x4, scoped, tag = 'scoped memory for tpu_custom_call.1']
    #allocation25 [shape = 'u8[1048576]{0}', space=vmem, size = 0x100000, scoped, tag = 'input window, operand 19, single buffered']
    #allocation26 [shape = 'u8[16384]{0}', space=vmem, size = 0x4000, scoped, tag = 'output window, operand 0, single buffered']
    #allocation27 [shape = 'u8[4096]{0}', space=vmem, size = 0x1000, scoped, tag = 'output window, operand 1, single buffered']
    #allocation28 [shape = 's32[1]{0}', space=sflag, size = 0x4, scoped, tag = 'scoped memory for tpu_custom_call.1']
    #allocation29 [shape = 'u8[4096]{0}', space=vmem, size = 0x1000, scoped, tag = 'output window, operand 2, single buffered']
    %29 = vsyncpa [#allocation3], 0
    %30 = vsyncpa [#allocation6], 0
    %31 = vsyncpa [#allocation9], 0
    %32 = vsyncpa [#allocation12], 0
    %33 = vsyncpa [#allocation15], 0
    %34 = vsyncpa [#allocation18], 0
    %35 = vsyncpa [#allocation21], 0
    %36 = vsyncpa [#allocation24], 0
    %37 = vsyncpa [#allocation4], 0
    %38 = vsyncpa [#allocation28], 0
    // Predicated region
    $region2: #{tpu_custom_call.1} parent=1 // pred_check
      _
    $region3: #{tpu_custom_call.1} parent=1 // pred_check_branch
      %40 = sbr.rel (0) target = $region5
    $region4: #{tpu_custom_call.1} parent=1 // pred_region
      %s42 = ssub.s32 256, 256
      %43 = vsyncadd [#allocation3], %s42
      %s45 = sshll.u32 [#allocation2], 4
      %s46 = int_to_ptr.vmem [resolvable:$true] %s45
      %48 = dma.hbm_to_vmem [thread:$0]  %s0, 256, %s46, [#allocation3]
    $region5: #{tpu_custom_call.1} parent=1 // pred_fallthru
      _
    // Predicated region
    $region6: #{tpu_custom_call.1} parent=1 // pred_check
      _
    $region7: #{tpu_custom_call.1} parent=1 // pred_check_branch
      %50 = sbr.rel (0) target = $region9
    $region8: #{tpu_custom_call.1} parent=1 // pred_region
      _
    $region9: #{tpu_custom_call.1} parent=1 // pred_fallthru
      _
    // Predicated region
    $region10: #{tpu_custom_call.1} parent=1 // pred_check
      _
    $region11: #{tpu_custom_call.1} parent=1 // pred_check_branch
      %52 = sbr.rel (0) target = $region13
    $region12: #{tpu_custom_call.1} parent=1 // pred_region
      %s54 = ssub.s32 128, 128
      %55 = vsyncadd [#allocation6], %s54
      %s57 = sshll.u32 [#allocation5], 4
      %s58 = int_to_ptr.vmem [resolvable:$true] %s57
      %60 = dma.hbm_to_vmem [thread:$0]  %s2, 128, %s58, [#allocation6]
    $region13: #{tpu_custom_call.1} parent=1 // pred_fallthru
      _
    // Predicated region
    $region14: #{tpu_custom_call.1} parent=1 // pred_check
      _
    $region15: #{tpu_custom_call.1} parent=1 // pred_check_branch
      %62 = sbr.rel (0) target = $region17
    $region16: #{tpu_custom_call.1} parent=1 // pred_region
      %s64 = ssub.s32 32768, 32768
      %65 = vsyncadd [#allocation6], %s64
      %s66 = sshll.u32 [#allocation7], 4
      %s67 = int_to_ptr.vmem [resolvable:$true] %s66
      %72 = dma.hbm_to_vmem [thread:$0]  %s3, 32768, %s67, [#allocation6], 512, 512, 32
    $region17: #{tpu_custom_call.1} parent=1 // pred_fallthru
      _
    // Predicated region
    $region18: #{tpu_custom_call.1} parent=1 // pred_check
      _
    $region19: #{tpu_custom_call.1} parent=1 // pred_check_branch
      %74 = sbr.rel (0) target = $region21
    $region20: #{tpu_custom_call.1} parent=1 // pred_region
      _
    $region21: #{tpu_custom_call.1} parent=1 // pred_fallthru
      _
    // Predicated region
    $region22: #{tpu_custom_call.1} parent=1 // pred_check
      _
    $region23: #{tpu_custom_call.1} parent=1 // pred_check_branch
      %76 = sbr.rel (0) target = $region25
    $region24: #{tpu_custom_call.1} parent=1 // pred_region
      %s78 = ssub.s32 128, 128
      %79 = vsyncadd [#allocation9], %s78
      %s81 = sshll.u32 [#allocation8], 4
      %s82 = int_to_ptr.vmem [resolvable:$true] %s81
      %84 = dma.hbm_to_vmem [thread:$0]  %s5, 128, %s82, [#allocation9]
    $region25: #{tpu_custom_call.1} parent=1 // pred_fallthru
      _
    // Predicated region
    $region26: #{tpu_custom_call.1} parent=1 // pred_check
      _
    $region27: #{tpu_custom_call.1} parent=1 // pred_check_branch
      %86 = sbr.rel (0) target = $region29
    $region28: #{tpu_custom_call.1} parent=1 // pred_region
      %s88 = ssub.s32 32768, 32768
      %89 = vsyncadd [#allocation9], %s88
      %s90 = sshll.u32 [#allocation10], 4
      %s91 = int_to_ptr.vmem [resolvable:$true] %s90
      %96 = dma.hbm_to_vmem [thread:$0]  %s6, 32768, %s91, [#allocation9], 256, 256, 16
    $region29: #{tpu_custom_call.1} parent=1 // pred_fallthru
      _
    // Predicated region
    $region30: #{tpu_custom_call.1} parent=1 // pred_check
      _
    $region31: #{tpu_custom_call.1} parent=1 // pred_check_branch
      %98 = sbr.rel (0) target = $region33
    $region32: #{tpu_custom_call.1} parent=1 // pred_region
      %s100 = ssub.s32 64, 64
      %101 = vsyncadd [#allocation12], %s100
      %s103 = sshll.u32 [#allocation11], 4
      %s104 = int_to_ptr.vmem [resolvable:$true] %s103
      %106 = dma.hbm_to_vmem [thread:$0]  %s7, 64, %s104, [#allocation12]
    $region33: #{tpu_custom_call.1} parent=1 // pred_fallthru
      _
    // Predicated region
    $region34: #{tpu_custom_call.1} parent=1 // pred_check
      _
    $region35: #{tpu_custom_call.1} parent=1 // pred_check_branch
      %108 = sbr.rel (0) target = $region37
    $region36: #{tpu_custom_call.1} parent=1 // pred_region
      %s110 = ssub.s32 8192, 8192
      %111 = vsyncadd [#allocation12], %s110
      %s112 = sshll.u32 [#allocation13], 4
      %s113 = int_to_ptr.vmem [resolvable:$true] %s112
      %118 = dma.hbm_to_vmem [thread:$0]  %s8, 8192, %s113, [#allocation12], 128, 128, 8
    $region37: #{tpu_custom_call.1} parent=1 // pred_fallthru
      _
    // Predicated region
    $region38: #{tpu_custom_call.1} parent=1 // pred_check
      _
    $region39: #{tpu_custom_call.1} parent=1 // pred_check_branch
      %120 = sbr.rel (0) target = $region41
    $region40: #{tpu_custom_call.1} parent=1 // pred_region
      %s122 = ssub.s32 32, 32
      %123 = vsyncadd [#allocation15], %s122
      %s125 = sshll.u32 [#allocation14], 4
      %s126 = int_to_ptr.vmem [resolvable:$true] %s125
      %128 = dma.hbm_to_vmem [thread:$0]  %s9, 32, %s126, [#allocation15]
    $region41: #{tpu_custom_call.1} parent=1 // pred_fallthru
      _
    // Predicated region
    $region42: #{tpu_custom_call.1} parent=1 // pred_check
      _
    $region43: #{tpu_custom_call.1} parent=1 // pred_check_branch
      %130 = sbr.rel (0) target = $region45
    $region44: #{tpu_custom_call.1} parent=1 // pred_region
      %s132 = ssub.s32 4096, 4096
      %133 = vsyncadd [#allocation15], %s132
      %s134 = sshll.u32 [#allocation16], 4
      %s135 = int_to_ptr.vmem [resolvable:$true] %s134
      %140 = dma.hbm_to_vmem [thread:$0]  %s10, 4096, %s135, [#allocation15], 128, 128, 8
    $region45: #{tpu_custom_call.1} parent=1 // pred_fallthru
      _
    // Predicated region
    $region46: #{tpu_custom_call.1} parent=1 // pred_check
      _
    $region47: #{tpu_custom_call.1} parent=1 // pred_check_branch
      %142 = sbr.rel (0) target = $region49
    $region48: #{tpu_custom_call.1} parent=1 // pred_region
      %s144 = ssub.s32 32, 32
      %145 = vsyncadd [#allocation18], %s144
      %s147 = sshll.u32 [#allocation17], 4
      %s148 = int_to_ptr.vmem [resolvable:$true] %s147
      %150 = dma.hbm_to_vmem [thread:$0]  %s11, 32, %s148, [#allocation18]
    $region49: #{tpu_custom_call.1} parent=1 // pred_fallthru
      _
    // Predicated region
    $region50: #{tpu_custom_call.1} parent=1 // pred_check
      _
    $region51: #{tpu_custom_call.1} parent=1 // pred_check_branch
      %152 = sbr.rel (0) target = $region53
    $region52: #{tpu_custom_call.1} parent=1 // pred_region
      %s154 = ssub.s32 2048, 2048
      %155 = vsyncadd [#allocation18], %s154
      %s156 = sshll.u32 [#allocation19], 4
      %s157 = int_to_ptr.vmem [resolvable:$true] %s156
      %162 = dma.hbm_to_vmem [thread:$0]  %s12, 2048, %s157, [#allocation18], 128, 128, 8
    $region53: #{tpu_custom_call.1} parent=1 // pred_fallthru
      _
    // Predicated region
    $region54: #{tpu_custom_call.1} parent=1 // pred_check
      _
    $region55: #{tpu_custom_call.1} parent=1 // pred_check_branch
      %164 = sbr.rel (0) target = $region57
    $region56: #{tpu_custom_call.1} parent=1 // pred_region
      _
    $region57: #{tpu_custom_call.1} parent=1 // pred_fallthru
      _
    // Predicated region
    $region58: #{tpu_custom_call.1} parent=1 // pred_check
      _
    $region59: #{tpu_custom_call.1} parent=1 // pred_check_branch
      %166 = sbr.rel (0) target = $region61
    $region60: #{tpu_custom_call.1} parent=1 // pred_region
      %s168 = ssub.s32 32, 32
      %169 = vsyncadd [#allocation21], %s168
      %s171 = sshll.u32 [#allocation20], 4
      %s172 = int_to_ptr.vmem [resolvable:$true] %s171
      %174 = dma.hbm_to_vmem [thread:$0]  %s14, 32, %s172, [#allocation21]
    $region61: #{tpu_custom_call.1} parent=1 // pred_fallthru
      _
    // Predicated region
    $region62: #{tpu_custom_call.1} parent=1 // pred_check
      _
    $region63: #{tpu_custom_call.1} parent=1 // pred_check_branch
      %176 = sbr.rel (0) target = $region65
    $region64: #{tpu_custom_call.1} parent=1 // pred_region
      %s178 = ssub.s32 8192, 8192
      %179 = vsyncadd [#allocation21], %s178
      %s180 = sshll.u32 [#allocation22], 4
      %s181 = int_to_ptr.vmem [resolvable:$true] %s180
      %186 = dma.hbm_to_vmem [thread:$0]  %s15, 8192, %s181, [#allocation21], 256, 256, 16
    $region65: #{tpu_custom_call.1} parent=1 // pred_fallthru
      _
    // Predicated region
    $region66: #{tpu_custom_call.1} parent=1 // pred_check
      _
    $region67: #{tpu_custom_call.1} parent=1 // pred_check_branch
      %188 = sbr.rel (0) target = $region69
    $region68: #{tpu_custom_call.1} parent=1 // pred_region
      _
    $region69: #{tpu_custom_call.1} parent=1 // pred_fallthru
      _
    // Predicated region
    $region70: #{tpu_custom_call.1} parent=1 // pred_check
      _
    $region71: #{tpu_custom_call.1} parent=1 // pred_check_branch
      %190 = sbr.rel (0) target = $region73
    $region72: #{tpu_custom_call.1} parent=1 // pred_region
      %s192 = ssub.s32 32768, 32768
      %193 = vsyncadd [#allocation24], %s192
      %s194 = sshll.u32 [#allocation23], 4
      %s195 = int_to_ptr.vmem [resolvable:$true] %s194
      %200 = dma.hbm_to_vmem [thread:$0]  %s17, 32768, %s195, [#allocation24], 512, 512, 32
    $region73: #{tpu_custom_call.1} parent=1 // pred_fallthru
      _
    // Predicated region
    $region74: #{tpu_custom_call.1} parent=1 // pred_check
      _
    $region75: #{tpu_custom_call.1} parent=1 // pred_check_branch
      %202 = sbr.rel (0) target = $region77
    $region76: #{tpu_custom_call.1} parent=1 // pred_region
      _
    $region77: #{tpu_custom_call.1} parent=1 // pred_fallthru
      _
    // Predicated region
    $region78: #{tpu_custom_call.1} parent=1 // pred_check
      _
    $region79: #{tpu_custom_call.1} parent=1 // pred_check_branch
      %204 = sbr.rel (0) target = $region81
    $region80: #{tpu_custom_call.1} parent=1 // pred_region
      %s206 = ssub.s32 32768, 32768
      %207 = vsyncadd [#allocation24], %s206
      %s208 = sshll.u32 [#allocation25], 4
      %s209 = int_to_ptr.vmem [resolvable:$true] %s208
      %214 = dma.hbm_to_vmem [thread:$0]  %s19, 32768, %s209, [#allocation24], 256, 256, 16
    $region81: #{tpu_custom_call.1} parent=1 // pred_fallthru
      _
    // Predicated region
    $region82: #{tpu_custom_call.1} parent=1 // pred_check
      _
    $region83: #{tpu_custom_call.1} parent=1 // pred_check_branch
      %216 = sbr.rel (0) target = $region85
    $region84: #{tpu_custom_call.1} parent=1 // pred_region
      _
    $region85: #{tpu_custom_call.1} parent=1 // pred_fallthru
      _
    // Predicated region
    $region86: #{tpu_custom_call.1} parent=1 // pred_check
      _
    $region87: #{tpu_custom_call.1} parent=1 // pred_check_branch
      %218 = sbr.rel (0) target = $region89
    $region88: #{tpu_custom_call.1} parent=1 // pred_region
      %219 = dma.done [#allocation3], 256
    $region89: #{tpu_custom_call.1} parent=1 // pred_fallthru
      _
    // Predicated region
    $region90: #{tpu_custom_call.1} parent=1 // pred_check
      _
    $region91: #{tpu_custom_call.1} parent=1 // pred_check_branch
      %221 = sbr.rel (0) target = $region93
    $region92: #{tpu_custom_call.1} parent=1 // pred_region
      %222 = dma.done [#allocation6], 128
    $region93: #{tpu_custom_call.1} parent=1 // pred_fallthru
      _
    // Predicated region
    $region94: #{tpu_custom_call.1} parent=1 // pred_check
      _
    $region95: #{tpu_custom_call.1} parent=1 // pred_check_branch
      %224 = sbr.rel (0) target = $region97
    $region96: #{tpu_custom_call.1} parent=1 // pred_region
      %225 = dma.done [#allocation6], 32768
    $region97: #{tpu_custom_call.1} parent=1 // pred_fallthru
      _
    // Predicated region
    $region98: #{tpu_custom_call.1} parent=1 // pred_check
      _
    $region99: #{tpu_custom_call.1} parent=1 // pred_check_branch
      %227 = sbr.rel (0) target = $region101
    $region100: #{tpu_custom_call.1} parent=1 // pred_region
      %228 = dma.done [#allocation9], 128
    $region101: #{tpu_custom_call.1} parent=1 // pred_fallthru
      _
    // Predicated region
    $region102: #{tpu_custom_call.1} parent=1 // pred_check
      _
    $region103: #{tpu_custom_call.1} parent=1 // pred_check_branch
      %230 = sbr.rel (0) target = $region105
    $region104: #{tpu_custom_call.1} parent=1 // pred_region
      %231 = dma.done [#allocation9], 32768
    $region105: #{tpu_custom_call.1} parent=1 // pred_fallthru
      _
    // Predicated region
    $region106: #{tpu_custom_call.1} parent=1 // pred_check
      _
    $region107: #{tpu_custom_call.1} parent=1 // pred_check_branch
      %233 = sbr.rel (0) target = $region109
    $region108: #{tpu_custom_call.1} parent=1 // pred_region
      %234 = dma.done [#allocation12], 64
    $region109: #{tpu_custom_call.1} parent=1 // pred_fallthru
      _
    // Predicated region
    $region110: #{tpu_custom_call.1} parent=1 // pred_check
      _
    $region111: #{tpu_custom_call.1} parent=1 // pred_check_branch
      %236 = sbr.rel (0) target = $region113
    $region112: #{tpu_custom_call.1} parent=1 // pred_region
      %237 = dma.done [#allocation12], 8192
    $region113: #{tpu_custom_call.1} parent=1 // pred_fallthru
      _
    // Predicated region
    $region114: #{tpu_custom_call.1} parent=1 // pred_check
      _
    $region115: #{tpu_custom_call.1} parent=1 // pred_check_branch
      %239 = sbr.rel (0) target = $region117
    $region116: #{tpu_custom_call.1} parent=1 // pred_region
      %240 = dma.done [#allocation15], 32
    $region117: #{tpu_custom_call.1} parent=1 // pred_fallthru
      _
    // Predicated region
    $region118: #{tpu_custom_call.1} parent=1 // pred_check
      _
    $region119: #{tpu_custom_call.1} parent=1 // pred_check_branch
      %242 = sbr.rel (0) target = $region121
    $region120: #{tpu_custom_call.1} parent=1 // pred_region
      %243 = dma.done [#allocation15], 4096
    $region121: #{tpu_custom_call.1} parent=1 // pred_fallthru
      _
    // Predicated region
    $region122: #{tpu_custom_call.1} parent=1 // pred_check
      _
    $region123: #{tpu_custom_call.1} parent=1 // pred_check_branch
      %245 = sbr.rel (0) target = $region125
    $region124: #{tpu_custom_call.1} parent=1 // pred_region
      %246 = dma.done [#allocation18], 32
    $region125: #{tpu_custom_call.1} parent=1 // pred_fallthru
      _
    // Predicated region
    $region126: #{tpu_custom_call.1} parent=1 // pred_check
      _
    $region127: #{tpu_custom_call.1} parent=1 // pred_check_branch
      %248 = sbr.rel (0) target = $region129
    $region128: #{tpu_custom_call.1} parent=1 // pred_region
      %249 = dma.done [#allocation18], 2048
    $region129: #{tpu_custom_call.1} parent=1 // pred_fallthru
      _
    // Predicated region
    $region130: #{tpu_custom_call.1} parent=1 // pred_check
      _
    $region131: #{tpu_custom_call.1} parent=1 // pred_check_branch
      %251 = sbr.rel (0) target = $region133
    $region132: #{tpu_custom_call.1} parent=1 // pred_region
      %252 = dma.done [#allocation21], 32
    $region133: #{tpu_custom_call.1} parent=1 // pred_fallthru
      _
    // Predicated region
    $region134: #{tpu_custom_call.1} parent=1 // pred_check
      _
    $region135: #{tpu_custom_call.1} parent=1 // pred_check_branch
      %254 = sbr.rel (0) target = $region137
    $region136: #{tpu_custom_call.1} parent=1 // pred_region
      %255 = dma.done [#allocation21], 8192
    $region137: #{tpu_custom_call.1} parent=1 // pred_fallthru
      _
    // Predicated region
    $region138: #{tpu_custom_call.1} parent=1 // pred_check
      _
    $region139: #{tpu_custom_call.1} parent=1 // pred_check_branch
      %257 = sbr.rel (0) target = $region141
    $region140: #{tpu_custom_call.1} parent=1 // pred_region
      %258 = dma.done [#allocation24], 32768
    $region141: #{tpu_custom_call.1} parent=1 // pred_fallthru
      _
    // Predicated region
    $region142: #{tpu_custom_call.1} parent=1 // pred_check
      _
    $region143: #{tpu_custom_call.1} parent=1 // pred_check_branch
      %260 = sbr.rel (0) target = $region145
    $region144: #{tpu_custom_call.1} parent=1 // pred_region
      %261 = dma.done [#allocation24], 32768
    $region145: #{tpu_custom_call.1} parent=1 // pred_fallthru
      _
    %v263 = vld [vmem:[%s1] sm:$0xff]
    %v264 = vld [vmem:[#allocation2] sm:$0xff]
    %v265 = vld [vmem:[#allocation2 + $0x8] sm:$0xff]
    %v266 = vld [vmem:[#allocation7] sm:$0xff]
    %v267 = vld [vmem:[#allocation7 + $0x8] sm:$0xff]
    %v268 = vld [vmem:[#allocation7 + $0x10] sm:$0xff]
    %v269 = vld [vmem:[#allocation7 + $0x18] sm:$0xff]
    %v270 = vld [vmem:[#allocation7 + $0x20] sm:$0xff]
    %v271 = vld [vmem:[#allocation7 + $0x28] sm:$0xff]
    %v272 = vld [vmem:[#allocation7 + $0x30] sm:$0xff]
    %v273 = vld [vmem:[#allocation7 + $0x38] sm:$0xff]
    %v274 = vld [vmem:[#allocation7 + $0x40] sm:$0xff]
    %v275 = vld [vmem:[#allocation7 + $0x48] sm:$0xff]
    %v276 = vld [vmem:[#allocation7 + $0x50] sm:$0xff]
    %v277 = vld [vmem:[#allocation7 + $0x58] sm:$0xff]
    %v278 = vld [vmem:[#allocation7 + $0x60] sm:$0xff]
    %v279 = vld [vmem:[#allocation7 + $0x68] sm:$0xff]
    %v280 = vld [vmem:[#allocation7 + $0x70] sm:$0xff]
    %v281 = vld [vmem:[#allocation7 + $0x78] sm:$0xff]
    %v282 = vld [vmem:[#allocation7 + $0x80] sm:$0xff]
    %v283 = vld [vmem:[#allocation7 + $0x88] sm:$0xff]
    %v284 = vld [vmem:[#allocation7 + $0x90] sm:$0xff]
    %v285 = vld [vmem:[#allocation7 + $0x98] sm:$0xff]
    %v286 = vld [vmem:[#allocation7 + $0xa0] sm:$0xff]
    %v287 = vld [vmem:[#allocation7 + $0xa8] sm:$0xff]
    %v288 = vld [vmem:[#allocation7 + $0xb0] sm:$0xff]
    %v289 = vld [vmem:[#allocation7 + $0xb8] sm:$0xff]
    %v290 = vld [vmem:[#allocation7 + $0xc0] sm:$0xff]
    %v291 = vld [vmem:[#allocation7 + $0xc8] sm:$0xff]
    %v292 = vld [vmem:[#allocation7 + $0xd0] sm:$0xff]
    %v293 = vld [vmem:[#allocation7 + $0xd8] sm:$0xff]
    %v294 = vld [vmem:[#allocation7 + $0xe0] sm:$0xff]
    %v295 = vld [vmem:[#allocation7 + $0xe8] sm:$0xff]
    %v296 = vld [vmem:[#allocation7 + $0xf0] sm:$0xff]
    %v297 = vld [vmem:[#allocation7 + $0xf8] sm:$0xff]
    %v298 = vld [vmem:[#allocation7 + $0x100] sm:$0xff]
    %v299 = vld [vmem:[#allocation7 + $0x108] sm:$0xff]
    %v300 = vld [vmem:[#allocation7 + $0x110] sm:$0xff]
    %v301 = vld [vmem:[#allocation7 + $0x118] sm:$0xff]
    %v302 = vld [vmem:[#allocation7 + $0x120] sm:$0xff]
    %v303 = vld [vmem:[#allocation7 + $0x128] sm:$0xff]
    %v304 = vld [vmem:[#allocation7 + $0x130] sm:$0xff]
    %v305 = vld [vmem:[#allocation7 + $0x138] sm:$0xff]
    %v306 = vld [vmem:[#allocation7 + $0x140] sm:$0xff]
    %v307 = vld [vmem:[#allocation7 + $0x148] sm:$0xff]
    %v308 = vld [vmem:[#allocation7 + $0x150] sm:$0xff]
    %v309 = vld [vmem:[#allocation7 + $0x158] sm:$0xff]
    %v310 = vld [vmem:[#allocation7 + $0x160] sm:$0xff]
    %v311 = vld [vmem:[#allocation7 + $0x168] sm:$0xff]
    %v312 = vld [vmem:[#allocation7 + $0x170] sm:$0xff]
    %v313 = vld [vmem:[#allocation7 + $0x178] sm:$0xff]
    %v314 = vld [vmem:[#allocation7 + $0x180] sm:$0xff]
    %v315 = vld [vmem:[#allocation7 + $0x188] sm:$0xff]
    %v316 = vld [vmem:[#allocation7 + $0x190] sm:$0xff]
    %v317 = vld [vmem:[#allocation7 + $0x198] sm:$0xff]
    %v318 = vld [vmem:[#allocation7 + $0x1a0] sm:$0xff]
    %v319 = vld [vmem:[#allocation7 + $0x1a8] sm:$0xff]
    %v320 = vld [vmem:[#allocation7 + $0x1b0] sm:$0xff]
    %v321 = vld [vmem:[#allocation7 + $0x1b8] sm:$0xff]
    %v322 = vld [vmem:[#allocation7 + $0x1c0] sm:$0xff]
    %v323 = vld [vmem:[#allocation7 + $0x1c8] sm:$0xff]
    %v324 = vld [vmem:[#allocation7 + $0x1d0] sm:$0xff]
    %v325 = vld [vmem:[#allocation7 + $0x1d8] sm:$0xff]
    %v326 = vld [vmem:[#allocation7 + $0x1e0] sm:$0xff]
    %v327 = vld [vmem:[#allocation7 + $0x1e8] sm:$0xff]
    %v328 = vld [vmem:[#allocation7 + $0x1f0] sm:$0xff]
    %v329 = vld [vmem:[#allocation7 + $0x1f8] sm:$0xff]
    %v330 = vld [vmem:[#allocation7 + $0x200] sm:$0xff]
    %v331 = vld [vmem:[#allocation7 + $0x208] sm:$0xff]
    %v332 = vld [vmem:[#allocation7 + $0x210] sm:$0xff]
    %v333 = vld [vmem:[#allocation7 + $0x218] sm:$0xff]
    %v334 = vld [vmem:[#allocation7 + $0x220] sm:$0xff]
    %v335 = vld [vmem:[#allocation7 + $0x228] sm:$0xff]
    %v336 = vld [vmem:[#allocation7 + $0x230] sm:$0xff]
    %v337 = vld [vmem:[#allocation7 + $0x238] sm:$0xff]
    %v338 = vld [vmem:[#allocation7 + $0x240] sm:$0xff]
    %v339 = vld [vmem:[#allocation7 + $0x248] sm:$0xff]
    %v340 = vld [vmem:[#allocation7 + $0x250] sm:$0xff]
    %v341 = vld [vmem:[#allocation7 + $0x258] sm:$0xff]
    %v342 = vld [vmem:[#allocation7 + $0x260] sm:$0xff]
    %v343 = vld [vmem:[#allocation7 + $0x268] sm:$0xff]
    %v344 = vld [vmem:[#allocation7 + $0x270] sm:$0xff]
    %v345 = vld [vmem:[#allocation7 + $0x278] sm:$0xff]
    %v346 = vld [vmem:[#allocation7 + $0x280] sm:$0xff]
    %v347 = vld [vmem:[#allocation7 + $0x288] sm:$0xff]
    %v348 = vld [vmem:[#allocation7 + $0x290] sm:$0xff]
    %v349 = vld [vmem:[#allocation7 + $0x298] sm:$0xff]
    %v350 = vld [vmem:[#allocation7 + $0x2a0] sm:$0xff]
    %v351 = vld [vmem:[#allocation7 + $0x2a8] sm:$0xff]
    %v352 = vld [vmem:[#allocation7 + $0x2b0] sm:$0xff]
    %v353 = vld [vmem:[#allocation7 + $0x2b8] sm:$0xff]
    %v354 = vld [vmem:[#allocation7 + $0x2c0] sm:$0xff]
    %v355 = vld [vmem:[#allocation7 + $0x2c8] sm:$0xff]
    %v356 = vld [vmem:[#allocation7 + $0x2d0] sm:$0xff]
    %v357 = vld [vmem:[#allocation7 + $0x2d8] sm:$0xff]
    %v358 = vld [vmem:[#allocation7 + $0x2e0] sm:$0xff]
    %v359 = vld [vmem:[#allocation7 + $0x2e8] sm:$0xff]
    %v360 = vld [vmem:[#allocation7 + $0x2f0] sm:$0xff]
    %v361 = vld [vmem:[#allocation7 + $0x2f8] sm:$0xff]
    %v362 = vld [vmem:[#allocation7 + $0x300] sm:$0xff]
    %v363 = vld [vmem:[#allocation7 + $0x308] sm:$0xff]
    %v364 = vld [vmem:[#allocation7 + $0x310] sm:$0xff]
    %v365 = vld [vmem:[#allocation7 + $0x318] sm:$0xff]
    %v366 = vld [vmem:[#allocation7 + $0x320] sm:$0xff]
    %v367 = vld [vmem:[#allocation7 + $0x328] sm:$0xff]
    %v368 = vld [vmem:[#allocation7 + $0x330] sm:$0xff]
    %v369 = vld [vmem:[#allocation7 + $0x338] sm:$0xff]
    %v370 = vld [vmem:[#allocation7 + $0x340] sm:$0xff]
    %v371 = vld [vmem:[#allocation7 + $0x348] sm:$0xff]
    %v372 = vld [vmem:[#allocation7 + $0x350] sm:$0xff]
    %v373 = vld [vmem:[#allocation7 + $0x358] sm:$0xff]
    %v374 = vld [vmem:[#allocation7 + $0x360] sm:$0xff]
    %v375 = vld [vmem:[#allocation7 + $0x368] sm:$0xff]
    %v376 = vld [vmem:[#allocation7 + $0x370] sm:$0xff]
    %v377 = vld [vmem:[#allocation7 + $0x378] sm:$0xff]
    %v378 = vld [vmem:[#allocation7 + $0x380] sm:$0xff]
    %v379 = vld [vmem:[#allocation7 + $0x388] sm:$0xff]
    %v380 = vld [vmem:[#allocation7 + $0x390] sm:$0xff]
    %v381 = vld [vmem:[#allocation7 + $0x398] sm:$0xff]
    %v382 = vld [vmem:[#allocation7 + $0x3a0] sm:$0xff]
    %v383 = vld [vmem:[#allocation7 + $0x3a8] sm:$0xff]
    %v384 = vld [vmem:[#allocation7 + $0x3b0] sm:$0xff]
    %v385 = vld [vmem:[#allocation7 + $0x3b8] sm:$0xff]
    %v386 = vld [vmem:[#allocation7 + $0x3c0] sm:$0xff]
    %v387 = vld [vmem:[#allocation7 + $0x3c8] sm:$0xff]
    %v388 = vld [vmem:[#allocation7 + $0x3d0] sm:$0xff]
    %v389 = vld [vmem:[#allocation7 + $0x3d8] sm:$0xff]
    %v390 = vld [vmem:[#allocation7 + $0x3e0] sm:$0xff]
    %v391 = vld [vmem:[#allocation7 + $0x3e8] sm:$0xff]
    %v392 = vld [vmem:[#allocation7 + $0x3f0] sm:$0xff]
    %v393 = vld [vmem:[#allocation7 + $0x3f8] sm:$0xff]
    %v394 = vld [vmem:[#allocation7 + $0x400] sm:$0xff]
    %v395 = vld [vmem:[#allocation7 + $0x408] sm:$0xff]
    %v396 = vld [vmem:[#allocation7 + $0x410] sm:$0xff]
    %v397 = vld [vmem:[#allocation7 + $0x418] sm:$0xff]
    %v398 = vld [vmem:[#allocation7 + $0x420] sm:$0xff]
    %v399 = vld [vmem:[#allocation7 + $0x428] sm:$0xff]
    %v400 = vld [vmem:[#allocation7 + $0x430] sm:$0xff]
    %v401 = vld [vmem:[#allocation7 + $0x438] sm:$0xff]
    %v402 = vld [vmem:[#allocation7 + $0x440] sm:$0xff]
    %v403 = vld [vmem:[#allocation7 + $0x448] sm:$0xff]
    %v404 = vld [vmem:[#allocation7 + $0x450] sm:$0xff]
    %v405 = vld [vmem:[#allocation7 + $0x458] sm:$0xff]
    %v406 = vld [vmem:[#allocation7 + $0x460] sm:$0xff]
    %v407 = vld [vmem:[#allocation7 + $0x468] sm:$0xff]
    %v408 = vld [vmem:[#allocation7 + $0x470] sm:$0xff]
    %v409 = vld [vmem:[#allocation7 + $0x478] sm:$0xff]
    %v410 = vld [vmem:[#allocation7 + $0x480] sm:$0xff]
    %v411 = vld [vmem:[#allocation7 + $0x488] sm:$0xff]
    %v412 = vld [vmem:[#allocation7 + $0x490] sm:$0xff]
    %v413 = vld [vmem:[#allocation7 + $0x498] sm:$0xff]
    %v414 = vld [vmem:[#allocation7 + $0x4a0] sm:$0xff]
    %v415 = vld [vmem:[#allocation7 + $0x4a8] sm:$0xff]
    %v416 = vld [vmem:[#allocation7 + $0x4b0] sm:$0xff]
    %v417 = vld [vmem:[#allocation7 + $0x4b8] sm:$0xff]
    %v418 = vld [vmem:[#allocation7 + $0x4c0] sm:$0xff]
    %v419 = vld [vmem:[#allocation7 + $0x4c8] sm:$0xff]
    %v420 = vld [vmem:[#allocation7 + $0x4d0] sm:$0xff]
    %v421 = vld [vmem:[#allocation7 + $0x4d8] sm:$0xff]
    %v422 = vld [vmem:[#allocation7 + $0x4e0] sm:$0xff]
    %v423 = vld [vmem:[#allocation7 + $0x4e8] sm:$0xff]
    %v424 = vld [vmem:[#allocation7 + $0x4f0] sm:$0xff]
    %v425 = vld [vmem:[#allocation7 + $0x4f8] sm:$0xff]
    %v426 = vld [vmem:[#allocation7 + $0x500] sm:$0xff]
    %v427 = vld [vmem:[#allocation7 + $0x508] sm:$0xff]
    %v428 = vld [vmem:[#allocation7 + $0x510] sm:$0xff]
    %v429 = vld [vmem:[#allocation7 + $0x518] sm:$0xff]
    %v430 = vld [vmem:[#allocation7 + $0x520] sm:$0xff]
    %v431 = vld [vmem:[#allocation7 + $0x528] sm:$0xff]
    %v432 = vld [vmem:[#allocation7 + $0x530] sm:$0xff]
    %v433 = vld [vmem:[#allocation7 + $0x538] sm:$0xff]
    %v434 = vld [vmem:[#allocation7 + $0x540] sm:$0xff]
    %v435 = vld [vmem:[#allocation7 + $0x548] sm:$0xff]
    %v436 = vld [vmem:[#allocation7 + $0x550] sm:$0xff]
    %v437 = vld [vmem:[#allocation7 + $0x558] sm:$0xff]
    %v438 = vld [vmem:[#allocation7 + $0x560] sm:$0xff]
    %v439 = vld [vmem:[#allocation7 + $0x568] sm:$0xff]
    %v440 = vld [vmem:[#allocation7 + $0x570] sm:$0xff]
    %v441 = vld [vmem:[#allocation7 + $0x578] sm:$0xff]
    %v442 = vld [vmem:[#allocation7 + $0x580] sm:$0xff]
    %v443 = vld [vmem:[#allocation7 + $0x588] sm:$0xff]
    %v444 = vld [vmem:[#allocation7 + $0x590] sm:$0xff]
    %v445 = vld [vmem:[#allocation7 + $0x598] sm:$0xff]
    %v446 = vld [vmem:[#allocation7 + $0x5a0] sm:$0xff]
    %v447 = vld [vmem:[#allocation7 + $0x5a8] sm:$0xff]
    %v448 = vld [vmem:[#allocation7 + $0x5b0] sm:$0xff]
    %v449 = vld [vmem:[#allocation7 + $0x5b8] sm:$0xff]
    %v450 = vld [vmem:[#allocation7 + $0x5c0] sm:$0xff]
    %v451 = vld [vmem:[#allocation7 + $0x5c8] sm:$0xff]
    %v452 = vld [vmem:[#allocation7 + $0x5d0] sm:$0xff]
    %v453 = vld [vmem:[#allocation7 + $0x5d8] sm:$0xff]
    %v454 = vld [vmem:[#allocation7 + $0x5e0] sm:$0xff]
    %v455 = vld [vmem:[#allocation7 + $0x5e8] sm:$0xff]
    %v456 = vld [vmem:[#allocation7 + $0x5f0] sm:$0xff]
    %v457 = vld [vmem:[#allocation7 + $0x5f8] sm:$0xff]
    %v458 = vld [vmem:[#allocation7 + $0x600] sm:$0xff]
    %v459 = vld [vmem:[#allocation7 + $0x608] sm:$0xff]
    %v460 = vld [vmem:[#allocation7 + $0x610] sm:$0xff]
    %v461 = vld [vmem:[#allocation7 + $0x618] sm:$0xff]
    %v462 = vld [vmem:[#allocation7 + $0x620] sm:$0xff]
    %v463 = vld [vmem:[#allocation7 + $0x628] sm:$0xff]
    %v464 = vld [vmem:[#allocation7 + $0x630] sm:$0xff]
    %v465 = vld [vmem:[#allocation7 + $0x638] sm:$0xff]
    %v466 = vld [vmem:[#allocation7 + $0x640] sm:$0xff]
    %v467 = vld [vmem:[#allocation7 + $0x648] sm:$0xff]
    %v468 = vld [vmem:[#allocation7 + $0x650] sm:$0xff]
    %v469 = vld [vmem:[#allocation7 + $0x658] sm:$0xff]
    %v470 = vld [vmem:[#allocation7 + $0x660] sm:$0xff]
    %v471 = vld [vmem:[#allocation7 + $0x668] sm:$0xff]
    %v472 = vld [vmem:[#allocation7 + $0x670] sm:$0xff]
    %v473 = vld [vmem:[#allocation7 + $0x678] sm:$0xff]
    %v474 = vld [vmem:[#allocation7 + $0x680] sm:$0xff]
    %v475 = vld [vmem:[#allocation7 + $0x688] sm:$0xff]
    %v476 = vld [vmem:[#allocation7 + $0x690] sm:$0xff]
    %v477 = vld [vmem:[#allocation7 + $0x698] sm:$0xff]
    %v478 = vld [vmem:[#allocation7 + $0x6a0] sm:$0xff]
    %v479 = vld [vmem:[#allocation7 + $0x6a8] sm:$0xff]
    %v480 = vld [vmem:[#allocation7 + $0x6b0] sm:$0xff]
    %v481 = vld [vmem:[#allocation7 + $0x6b8] sm:$0xff]
    %v482 = vld [vmem:[#allocation7 + $0x6c0] sm:$0xff]
    %v483 = vld [vmem:[#allocation7 + $0x6c8] sm:$0xff]
    %v484 = vld [vmem:[#allocation7 + $0x6d0] sm:$0xff]
    %v485 = vld [vmem:[#allocation7 + $0x6d8] sm:$0xff]
    %v486 = vld [vmem:[#allocation7 + $0x6e0] sm:$0xff]
    %v487 = vld [vmem:[#allocation7 + $0x6e8] sm:$0xff]
    %v488 = vld [vmem:[#allocation7 + $0x6f0] sm:$0xff]
    %v489 = vld [vmem:[#allocation7 + $0x6f8] sm:$0xff]
    %v490 = vld [vmem:[#allocation7 + $0x700] sm:$0xff]
    %v491 = vld [vmem:[#allocation7 + $0x708] sm:$0xff]
    %v492 = vld [vmem:[#allocation7 + $0x710] sm:$0xff]
    %v493 = vld [vmem:[#allocation7 + $0x718] sm:$0xff]
    %v494 = vld [vmem:[#allocation7 + $0x720] sm:$0xff]
    %v495 = vld [vmem:[#allocation7 + $0x728] sm:$0xff]
    %v496 = vld [vmem:[#allocation7 + $0x730] sm:$0xff]
    %v497 = vld [vmem:[#allocation7 + $0x738] sm:$0xff]
    %v498 = vld [vmem:[#allocation7 + $0x740] sm:$0xff]
    %v499 = vld [vmem:[#allocation7 + $0x748] sm:$0xff]
    %v500 = vld [vmem:[#allocation7 + $0x750] sm:$0xff]
    %v501 = vld [vmem:[#allocation7 + $0x758] sm:$0xff]
    %v502 = vld [vmem:[#allocation7 + $0x760] sm:$0xff]
    %v503 = vld [vmem:[#allocation7 + $0x768] sm:$0xff]
    %v504 = vld [vmem:[#allocation7 + $0x770] sm:$0xff]
    %v505 = vld [vmem:[#allocation7 + $0x778] sm:$0xff]
    %v506 = vld [vmem:[#allocation7 + $0x780] sm:$0xff]
    %v507 = vld [vmem:[#allocation7 + $0x788] sm:$0xff]
    %v508 = vld [vmem:[#allocation7 + $0x790] sm:$0xff]
    %v509 = vld [vmem:[#allocation7 + $0x798] sm:$0xff]
    %v510 = vld [vmem:[#allocation7 + $0x7a0] sm:$0xff]
    %v511 = vld [vmem:[#allocation7 + $0x7a8] sm:$0xff]
    %v512 = vld [vmem:[#allocation7 + $0x7b0] sm:$0xff]
    %v513 = vld [vmem:[#allocation7 + $0x7b8] sm:$0xff]
    %v514 = vld [vmem:[#allocation7 + $0x7c0] sm:$0xff]
    %v515 = vld [vmem:[#allocation7 + $0x7c8] sm:$0xff]
    %v516 = vld [vmem:[#allocation7 + $0x7d0] sm:$0xff]
    %v517 = vld [vmem:[#allocation7 + $0x7d8] sm:$0xff]
    %v518 = vld [vmem:[#allocation7 + $0x7e0] sm:$0xff]
    %v519 = vld [vmem:[#allocation7 + $0x7e8] sm:$0xff]
    %v520 = vld [vmem:[#allocation7 + $0x7f0] sm:$0xff]
    %v521 = vld [vmem:[#allocation7 + $0x7f8] sm:$0xff]
    %v522 = vld [vmem:[#allocation8] sm:$0xff]
    %v524 = vlaneseq
    %v525 = vshrl.u32 %v524, 7
    %v526 = vsub.s32 0, %v525
    %v527 = vrot.slane %v522, %v526
    %v528 = vlaneseq
    %v529 = vshrl.u32 %v528, 7
    %v530 = vsub.s32 1, %v529
    %v531 = vrot.slane %v522, %v530
    %v532 = vlaneseq
    %v533 = vshrl.u32 %v532, 7
    %v534 = vsub.s32 2, %v533
    %v535 = vrot.slane %v522, %v534
    %v536 = vlaneseq
    %v537 = vshrl.u32 %v536, 7
    %v538 = vsub.s32 3, %v537
    %v539 = vrot.slane %v522, %v538
    %v540 = vlaneseq
    %v541 = vshrl.u32 %v540, 7
    %v542 = vsub.s32 4, %v541
    %v543 = vrot.slane %v522, %v542
    %v544 = vlaneseq
    %v545 = vshrl.u32 %v544, 7
    %v546 = vsub.s32 5, %v545
    %v547 = vrot.slane %v522, %v546
    %v548 = vlaneseq
    %v549 = vshrl.u32 %v548, 7
    %v550 = vsub.s32 6, %v549
    %v551 = vrot.slane %v522, %v550
    %v552 = vlaneseq
    %v553 = vshrl.u32 %v552, 7
    %v554 = vsub.s32 7, %v553
    %v555 = vrot.slane %v522, %v554
    %v566 = vunpack.c.l.b16 %v264
    %v567 = vunpack.c.h.b16 %v264
    %v568 = vunpack.c.l.b16 %v265
    %v569 = vunpack.c.h.b16 %v265
    %v570 = vpack.c.b16 %v566, %v566
    %v571 = vpack.c.b16 %v567, %v567
    %v572 = vpack.c.b16 %v568, %v568
    %v573 = vpack.c.b16 %v569, %v569
    %v834 = vunpack.c.l.b16 %v266
    %v835 = vunpack.c.h.b16 %v266
    %v836 = vunpack.c.l.b16 %v267
    %v837 = vunpack.c.h.b16 %v267
    %v838 = vunpack.c.l.b16 %v268
    %v839 = vunpack.c.h.b16 %v268
    %v840 = vunpack.c.l.b16 %v269
    %v841 = vunpack.c.h.b16 %v269
    %v842 = vunpack.c.l.b16 %v270
    %v843 = vunpack.c.h.b16 %v270
    %v844 = vunpack.c.l.b16 %v271
    %v845 = vunpack.c.h.b16 %v271
    %v846 = vunpack.c.l.b16 %v272
    %v847 = vunpack.c.h.b16 %v272
    %v848 = vunpack.c.l.b16 %v273
    %v849 = vunpack.c.h.b16 %v273
    %v850 = vunpack.c.l.b16 %v274
    %v851 = vunpack.c.h.b16 %v274
    %v852 = vunpack.c.l.b16 %v275
    %v853 = vunpack.c.h.b16 %v275
    %v854 = vunpack.c.l.b16 %v276
    %v855 = vunpack.c.h.b16 %v276
    %v856 = vunpack.c.l.b16 %v277
    %v857 = vunpack.c.h.b16 %v277
    %v858 = vunpack.c.l.b16 %v278
    %v859 = vunpack.c.h.b16 %v278
    %v860 = vunpack.c.l.b16 %v279
    %v861 = vunpack.c.h.b16 %v279
    %v862 = vunpack.c.l.b16 %v280
    %v863 = vunpack.c.h.b16 %v280
    %v864 = vunpack.c.l.b16 %v281
    %v865 = vunpack.c.h.b16 %v281
    %v866 = vunpack.c.l.b16 %v282
    %v867 = vunpack.c.h.b16 %v282
    %v868 = vunpack.c.l.b16 %v283
    %v869 = vunpack.c.h.b16 %v283
    %v870 = vunpack.c.l.b16 %v284
    %v871 = vunpack.c.h.b16 %v284
    %v872 = vunpack.c.l.b16 %v285
    %v873 = vunpack.c.h.b16 %v285
    %v874 = vunpack.c.l.b16 %v286
    %v875 = vunpack.c.h.b16 %v286
    %v876 = vunpack.c.l.b16 %v287
    %v877 = vunpack.c.h.b16 %v287
    %v878 = vunpack.c.l.b16 %v288
    %v879 = vunpack.c.h.b16 %v288
    %v880 = vunpack.c.l.b16 %v289
    %v881 = vunpack.c.h.b16 %v289
    %v882 = vunpack.c.l.b16 %v290
    %v883 = vunpack.c.h.b16 %v290
    %v884 = vunpack.c.l.b16 %v291
    %v885 = vunpack.c.h.b16 %v291
    %v886 = vunpack.c.l.b16 %v292
    %v887 = vunpack.c.h.b16 %v292
    %v888 = vunpack.c.l.b16 %v293
    %v889 = vunpack.c.h.b16 %v293
    %v890 = vunpack.c.l.b16 %v294
    %v891 = vunpack.c.h.b16 %v294
    %v892 = vunpack.c.l.b16 %v295
    %v893 = vunpack.c.h.b16 %v295
    %v894 = vunpack.c.l.b16 %v296
    %v895 = vunpack.c.h.b16 %v296
    %v896 = vunpack.c.l.b16 %v297
    %v897 = vunpack.c.h.b16 %v297
    %v898 = vunpack.c.l.b16 %v298
    %v899 = vunpack.c.h.b16 %v298
    %v900 = vunpack.c.l.b16 %v299
    %v901 = vunpack.c.h.b16 %v299
    %v902 = vunpack.c.l.b16 %v300
    %v903 = vunpack.c.h.b16 %v300
    %v904 = vunpack.c.l.b16 %v301
    %v905 = vunpack.c.h.b16 %v301
    %v906 = vunpack.c.l.b16 %v302
    %v907 = vunpack.c.h.b16 %v302
    %v908 = vunpack.c.l.b16 %v303
    %v909 = vunpack.c.h.b16 %v303
    %v910 = vunpack.c.l.b16 %v304
    %v911 = vunpack.c.h.b16 %v304
    %v912 = vunpack.c.l.b16 %v305
    %v913 = vunpack.c.h.b16 %v305
    %v914 = vunpack.c.l.b16 %v306
    %v915 = vunpack.c.h.b16 %v306
    %v916 = vunpack.c.l.b16 %v307
    %v917 = vunpack.c.h.b16 %v307
    %v918 = vunpack.c.l.b16 %v308
    %v919 = vunpack.c.h.b16 %v308
    %v920 = vunpack.c.l.b16 %v309
    %v921 = vunpack.c.h.b16 %v309
    %v922 = vunpack.c.l.b16 %v310
    %v923 = vunpack.c.h.b16 %v310
    %v924 = vunpack.c.l.b16 %v311
    %v925 = vunpack.c.h.b16 %v311
    %v926 = vunpack.c.l.b16 %v312
    %v927 = vunpack.c.h.b16 %v312
    %v928 = vunpack.c.l.b16 %v313
    %v929 = vunpack.c.h.b16 %v313
    %v930 = vunpack.c.l.b16 %v314
    %v931 = vunpack.c.h.b16 %v314
    %v932 = vunpack.c.l.b16 %v315
    %v933 = vunpack.c.h.b16 %v315
    %v934 = vunpack.c.l.b16 %v316
    %v935 = vunpack.c.h.b16 %v316
    %v936 = vunpack.c.l.b16 %v317
    %v937 = vunpack.c.h.b16 %v317
    %v938 = vunpack.c.l.b16 %v318
    %v939 = vunpack.c.h.b16 %v318
    %v940 = vunpack.c.l.b16 %v319
    %v941 = vunpack.c.h.b16 %v319
    %v942 = vunpack.c.l.b16 %v320
    %v943 = vunpack.c.h.b16 %v320
    %v944 = vunpack.c.l.b16 %v321
    %v945 = vunpack.c.h.b16 %v321
    %v946 = vunpack.c.l.b16 %v322
    %v947 = vunpack.c.h.b16 %v322
    %v948 = vunpack.c.l.b16 %v323
    %v949 = vunpack.c.h.b16 %v323
    %v950 = vunpack.c.l.b16 %v324
    %v951 = vunpack.c.h.b16 %v324
    %v952 = vunpack.c.l.b16 %v325
    %v953 = vunpack.c.h.b16 %v325
    %v954 = vunpack.c.l.b16 %v326
    %v955 = vunpack.c.h.b16 %v326
    %v956 = vunpack.c.l.b16 %v327
    %v957 = vunpack.c.h.b16 %v327
    %v958 = vunpack.c.l.b16 %v328
    %v959 = vunpack.c.h.b16 %v328
    %v960 = vunpack.c.l.b16 %v329
    %v961 = vunpack.c.h.b16 %v329
    %v962 = vunpack.c.l.b16 %v330
    %v963 = vunpack.c.h.b16 %v330
    %v964 = vunpack.c.l.b16 %v331
    %v965 = vunpack.c.h.b16 %v331
    %v966 = vunpack.c.l.b16 %v332
    %v967 = vunpack.c.h.b16 %v332
    %v968 = vunpack.c.l.b16 %v333
    %v969 = vunpack.c.h.b16 %v333
    %v970 = vunpack.c.l.b16 %v334
    %v971 = vunpack.c.h.b16 %v334
    %v972 = vunpack.c.l.b16 %v335
    %v973 = vunpack.c.h.b16 %v335
    %v974 = vunpack.c.l.b16 %v336
    %v975 = vunpack.c.h.b16 %v336
    %v976 = vunpack.c.l.b16 %v337
    %v977 = vunpack.c.h.b16 %v337
    %v978 = vunpack.c.l.b16 %v338
    %v979 = vunpack.c.h.b16 %v338
    %v980 = vunpack.c.l.b16 %v339
    %v981 = vunpack.c.h.b16 %v339
    %v982 = vunpack.c.l.b16 %v340
    %v983 = vunpack.c.h.b16 %v340
    %v984 = vunpack.c.l.b16 %v341
    %v985 = vunpack.c.h.b16 %v341
    %v986 = vunpack.c.l.b16 %v342
    %v987 = vunpack.c.h.b16 %v342
    %v988 = vunpack.c.l.b16 %v343
    %v989 = vunpack.c.h.b16 %v343
    %v990 = vunpack.c.l.b16 %v344
    %v991 = vunpack.c.h.b16 %v344
    %v992 = vunpack.c.l.b16 %v345
    %v993 = vunpack.c.h.b16 %v345
    %v994 = vunpack.c.l.b16 %v346
    %v995 = vunpack.c.h.b16 %v346
    %v996 = vunpack.c.l.b16 %v347
    %v997 = vunpack.c.h.b16 %v347
    %v998 = vunpack.c.l.b16 %v348
    %v999 = vunpack.c.h.b16 %v348
    %v1000 = vunpack.c.l.b16 %v349
    %v1001 = vunpack.c.h.b16 %v349
    %v1002 = vunpack.c.l.b16 %v350
    %v1003 = vunpack.c.h.b16 %v350
    %v1004 = vunpack.c.l.b16 %v351
    %v1005 = vunpack.c.h.b16 %v351
    %v1006 = vunpack.c.l.b16 %v352
    %v1007 = vunpack.c.h.b16 %v352
    %v1008 = vunpack.c.l.b16 %v353
    %v1009 = vunpack.c.h.b16 %v353
    %v1010 = vunpack.c.l.b16 %v354
    %v1011 = vunpack.c.h.b16 %v354
    %v1012 = vunpack.c.l.b16 %v355
    %v1013 = vunpack.c.h.b16 %v355
    %v1014 = vunpack.c.l.b16 %v356
    %v1015 = vunpack.c.h.b16 %v356
    %v1016 = vunpack.c.l.b16 %v357
    %v1017 = vunpack.c.h.b16 %v357
    %v1018 = vunpack.c.l.b16 %v358
    %v1019 = vunpack.c.h.b16 %v358
    %v1020 = vunpack.c.l.b16 %v359
    %v1021 = vunpack.c.h.b16 %v359
    %v1022 = vunpack.c.l.b16 %v360
    %v1023 = vunpack.c.h.b16 %v360
    %v1024 = vunpack.c.l.b16 %v361
    %v1025 = vunpack.c.h.b16 %v361
    %v1026 = vunpack.c.l.b16 %v362
    %v1027 = vunpack.c.h.b16 %v362
    %v1028 = vunpack.c.l.b16 %v363
    %v1029 = vunpack.c.h.b16 %v363
    %v1030 = vunpack.c.l.b16 %v364
    %v1031 = vunpack.c.h.b16 %v364
    %v1032 = vunpack.c.l.b16 %v365
    %v1033 = vunpack.c.h.b16 %v365
    %v1034 = vunpack.c.l.b16 %v366
    %v1035 = vunpack.c.h.b16 %v366
    %v1036 = vunpack.c.l.b16 %v367
    %v1037 = vunpack.c.h.b16 %v367
    %v1038 = vunpack.c.l.b16 %v368
    %v1039 = vunpack.c.h.b16 %v368
    %v1040 = vunpack.c.l.b16 %v369
    %v1041 = vunpack.c.h.b16 %v369
    %v1042 = vunpack.c.l.b16 %v370
    %v1043 = vunpack.c.h.b16 %v370
    %v1044 = vunpack.c.l.b16 %v371
    %v1045 = vunpack.c.h.b16 %v371
    %v1046 = vunpack.c.l.b16 %v372
    %v1047 = vunpack.c.h.b16 %v372
    %v1048 = vunpack.c.l.b16 %v373
    %v1049 = vunpack.c.h.b16 %v373
    %v1050 = vunpack.c.l.b16 %v374
    %v1051 = vunpack.c.h.b16 %v374
    %v1052 = vunpack.c.l.b16 %v375
    %v1053 = vunpack.c.h.b16 %v375
    %v1054 = vunpack.c.l.b16 %v376
    %v1055 = vunpack.c.h.b16 %v376
    %v1056 = vunpack.c.l.b16 %v377
    %v1057 = vunpack.c.h.b16 %v377
    %v1058 = vunpack.c.l.b16 %v378
    %v1059 = vunpack.c.h.b16 %v378
    %v1060 = vunpack.c.l.b16 %v379
    %v1061 = vunpack.c.h.b16 %v379
    %v1062 = vunpack.c.l.b16 %v380
    %v1063 = vunpack.c.h.b16 %v380
    %v1064 = vunpack.c.l.b16 %v381
    %v1065 = vunpack.c.h.b16 %v381
    %v1066 = vunpack.c.l.b16 %v382
    %v1067 = vunpack.c.h.b16 %v382
    %v1068 = vunpack.c.l.b16 %v383
    %v1069 = vunpack.c.h.b16 %v383
    %v1070 = vunpack.c.l.b16 %v384
    %v1071 = vunpack.c.h.b16 %v384
    %v1072 = vunpack.c.l.b16 %v385
    %v1073 = vunpack.c.h.b16 %v385
    %v1074 = vunpack.c.l.b16 %v386
    %v1075 = vunpack.c.h.b16 %v386
    %v1076 = vunpack.c.l.b16 %v387
    %v1077 = vunpack.c.h.b16 %v387
    %v1078 = vunpack.c.l.b16 %v388
    %v1079 = vunpack.c.h.b16 %v388
    %v1080 = vunpack.c.l.b16 %v389
    %v1081 = vunpack.c.h.b16 %v389
    %v1082 = vunpack.c.l.b16 %v390
    %v1083 = vunpack.c.h.b16 %v390
    %v1084 = vunpack.c.l.b16 %v391
    %v1085 = vunpack.c.h.b16 %v391
    %v1086 = vunpack.c.l.b16 %v392
    %v1087 = vunpack.c.h.b16 %v392
    %v1088 = vunpack.c.l.b16 %v393
    %v1089 = vunpack.c.h.b16 %v393
    %v1090 = vunpack.c.l.b16 %v394
    %v1091 = vunpack.c.h.b16 %v394
    %v1092 = vunpack.c.l.b16 %v395
    %v1093 = vunpack.c.h.b16 %v395
    %v1094 = vunpack.c.l.b16 %v396
    %v1095 = vunpack.c.h.b16 %v396
    %v1096 = vunpack.c.l.b16 %v397
    %v1097 = vunpack.c.h.b16 %v397
    %v1098 = vunpack.c.l.b16 %v398
    %v1099 = vunpack.c.h.b16 %v398
    %v1100 = vunpack.c.l.b16 %v399
    %v1101 = vunpack.c.h.b16 %v399
    %v1102 = vunpack.c.l.b16 %v400
    %v1103 = vunpack.c.h.b16 %v400
    %v1104 = vunpack.c.l.b16 %v401
    %v1105 = vunpack.c.h.b16 %v401
    %v1106 = vunpack.c.l.b16 %v402
    %v1107 = vunpack.c.h.b16 %v402
    %v1108 = vunpack.c.l.b16 %v403
    %v1109 = vunpack.c.h.b16 %v403
    %v1110 = vunpack.c.l.b16 %v404
    %v1111 = vunpack.c.h.b16 %v404
    %v1112 = vunpack.c.l.b16 %v405
    %v1113 = vunpack.c.h.b16 %v405
    %v1114 = vunpack.c.l.b16 %v406
    %v1115 = vunpack.c.h.b16 %v406
    %v1116 = vunpack.c.l.b16 %v407
    %v1117 = vunpack.c.h.b16 %v407
    %v1118 = vunpack.c.l.b16 %v408
    %v1119 = vunpack.c.h.b16 %v408
    %v1120 = vunpack.c.l.b16 %v409
    %v1121 = vunpack.c.h.b16 %v409
    %v1122 = vunpack.c.l.b16 %v410
    %v1123 = vunpack.c.h.b16 %v410
    %v1124 = vunpack.c.l.b16 %v411
    %v1125 = vunpack.c.h.b16 %v411
    %v1126 = vunpack.c.l.b16 %v412
    %v1127 = vunpack.c.h.b16 %v412
    %v1128 = vunpack.c.l.b16 %v413
    %v1129 = vunpack.c.h.b16 %v413
    %v1130 = vunpack.c.l.b16 %v414
    %v1131 = vunpack.c.h.b16 %v414
    %v1132 = vunpack.c.l.b16 %v415
    %v1133 = vunpack.c.h.b16 %v415
    %v1134 = vunpack.c.l.b16 %v416
    %v1135 = vunpack.c.h.b16 %v416
    %v1136 = vunpack.c.l.b16 %v417
    %v1137 = vunpack.c.h.b16 %v417
    %v1138 = vunpack.c.l.b16 %v418
    %v1139 = vunpack.c.h.b16 %v418
    %v1140 = vunpack.c.l.b16 %v419
    %v1141 = vunpack.c.h.b16 %v419
    %v1142 = vunpack.c.l.b16 %v420
    %v1143 = vunpack.c.h.b16 %v420
    %v1144 = vunpack.c.l.b16 %v421
    %v1145 = vunpack.c.h.b16 %v421
    %v1146 = vunpack.c.l.b16 %v422
    %v1147 = vunpack.c.h.b16 %v422
    %v1148 = vunpack.c.l.b16 %v423
    %v1149 = vunpack.c.h.b16 %v423
    %v1150 = vunpack.c.l.b16 %v424
    %v1151 = vunpack.c.h.b16 %v424
    %v1152 = vunpack.c.l.b16 %v425
    %v1153 = vunpack.c.h.b16 %v425
    %v1154 = vunpack.c.l.b16 %v426
    %v1155 = vunpack.c.h.b16 %v426
    %v1156 = vunpack.c.l.b16 %v427
    %v1157 = vunpack.c.h.b16 %v427
    %v1158 = vunpack.c.l.b16 %v428
    %v1159 = vunpack.c.h.b16 %v428
    %v1160 = vunpack.c.l.b16 %v429
    %v1161 = vunpack.c.h.b16 %v429
    %v1162 = vunpack.c.l.b16 %v430
    %v1163 = vunpack.c.h.b16 %v430
    %v1164 = vunpack.c.l.b16 %v431
    %v1165 = vunpack.c.h.b16 %v431
    %v1166 = vunpack.c.l.b16 %v432
    %v1167 = vunpack.c.h.b16 %v432
    %v1168 = vunpack.c.l.b16 %v433
    %v1169 = vunpack.c.h.b16 %v433
    %v1170 = vunpack.c.l.b16 %v434
    %v1171 = vunpack.c.h.b16 %v434
    %v1172 = vunpack.c.l.b16 %v435
    %v1173 = vunpack.c.h.b16 %v435
    %v1174 = vunpack.c.l.b16 %v436
    %v1175 = vunpack.c.h.b16 %v436
    %v1176 = vunpack.c.l.b16 %v437
    %v1177 = vunpack.c.h.b16 %v437
    %v1178 = vunpack.c.l.b16 %v438
    %v1179 = vunpack.c.h.b16 %v438
    %v1180 = vunpack.c.l.b16 %v439
    %v1181 = vunpack.c.h.b16 %v439
    %v1182 = vunpack.c.l.b16 %v440
    %v1183 = vunpack.c.h.b16 %v440
    %v1184 = vunpack.c.l.b16 %v441
    %v1185 = vunpack.c.h.b16 %v441
    %v1186 = vunpack.c.l.b16 %v442
    %v1187 = vunpack.c.h.b16 %v442
    %v1188 = vunpack.c.l.b16 %v443
    %v1189 = vunpack.c.h.b16 %v443
    %v1190 = vunpack.c.l.b16 %v444
    %v1191 = vunpack.c.h.b16 %v444
    %v1192 = vunpack.c.l.b16 %v445
    %v1193 = vunpack.c.h.b16 %v445
    %v1194 = vunpack.c.l.b16 %v446
    %v1195 = vunpack.c.h.b16 %v446
    %v1196 = vunpack.c.l.b16 %v447
    %v1197 = vunpack.c.h.b16 %v447
    %v1198 = vunpack.c.l.b16 %v448
    %v1199 = vunpack.c.h.b16 %v448
    %v1200 = vunpack.c.l.b16 %v449
    %v1201 = vunpack.c.h.b16 %v449
    %v1202 = vunpack.c.l.b16 %v450
    %v1203 = vunpack.c.h.b16 %v450
    %v1204 = vunpack.c.l.b16 %v451
    %v1205 = vunpack.c.h.b16 %v451
    %v1206 = vunpack.c.l.b16 %v452
    %v1207 = vunpack.c.h.b16 %v452
    %v1208 = vunpack.c.l.b16 %v453
    %v1209 = vunpack.c.h.b16 %v453
    %v1210 = vunpack.c.l.b16 %v454
    %v1211 = vunpack.c.h.b16 %v454
    %v1212 = vunpack.c.l.b16 %v455
    %v1213 = vunpack.c.h.b16 %v455
    %v1214 = vunpack.c.l.b16 %v456
    %v1215 = vunpack.c.h.b16 %v456
    %v1216 = vunpack.c.l.b16 %v457
    %v1217 = vunpack.c.h.b16 %v457
    %v1218 = vunpack.c.l.b16 %v458
    %v1219 = vunpack.c.h.b16 %v458
    %v1220 = vunpack.c.l.b16 %v459
    %v1221 = vunpack.c.h.b16 %v459
    %v1222 = vunpack.c.l.b16 %v460
    %v1223 = vunpack.c.h.b16 %v460
    %v1224 = vunpack.c.l.b16 %v461
    %v1225 = vunpack.c.h.b16 %v461
    %v1226 = vunpack.c.l.b16 %v462
    %v1227 = vunpack.c.h.b16 %v462
    %v1228 = vunpack.c.l.b16 %v463
    %v1229 = vunpack.c.h.b16 %v463
    %v1230 = vunpack.c.l.b16 %v464
    %v1231 = vunpack.c.h.b16 %v464
    %v1232 = vunpack.c.l.b16 %v465
    %v1233 = vunpack.c.h.b16 %v465
    %v1234 = vunpack.c.l.b16 %v466
    %v1235 = vunpack.c.h.b16 %v466
    %v1236 = vunpack.c.l.b16 %v467
    %v1237 = vunpack.c.h.b16 %v467
    %v1238 = vunpack.c.l.b16 %v468
    %v1239 = vunpack.c.h.b16 %v468
    %v1240 = vunpack.c.l.b16 %v469
    %v1241 = vunpack.c.h.b16 %v469
    %v1242 = vunpack.c.l.b16 %v470
    %v1243 = vunpack.c.h.b16 %v470
    %v1244 = vunpack.c.l.b16 %v471
    %v1245 = vunpack.c.h.b16 %v471
    %v1246 = vunpack.c.l.b16 %v472
    %v1247 = vunpack.c.h.b16 %v472
    %v1248 = vunpack.c.l.b16 %v473
    %v1249 = vunpack.c.h.b16 %v473
    %v1250 = vunpack.c.l.b16 %v474
    %v1251 = vunpack.c.h.b16 %v474
    %v1252 = vunpack.c.l.b16 %v475
    %v1253 = vunpack.c.h.b16 %v475
    %v1254 = vunpack.c.l.b16 %v476
    %v1255 = vunpack.c.h.b16 %v476
    %v1256 = vunpack.c.l.b16 %v477
    %v1257 = vunpack.c.h.b16 %v477
    %v1258 = vunpack.c.l.b16 %v478
    %v1259 = vunpack.c.h.b16 %v478
    %v1260 = vunpack.c.l.b16 %v479
    %v1261 = vunpack.c.h.b16 %v479
    %v1262 = vunpack.c.l.b16 %v480
    %v1263 = vunpack.c.h.b16 %v480
    %v1264 = vunpack.c.l.b16 %v481
    %v1265 = vunpack.c.h.b16 %v481
    %v1266 = vunpack.c.l.b16 %v482
    %v1267 = vunpack.c.h.b16 %v482
    %v1268 = vunpack.c.l.b16 %v483
    %v1269 = vunpack.c.h.b16 %v483
    %v1270 = vunpack.c.l.b16 %v484
    %v1271 = vunpack.c.h.b16 %v484
    %v1272 = vunpack.c.l.b16 %v485
    %v1273 = vunpack.c.h.b16 %v485
    %v1274 = vunpack.c.l.b16 %v486
    %v1275 = vunpack.c.h.b16 %v486
    %v1276 = vunpack.c.l.b16 %v487
    %v1277 = vunpack.c.h.b16 %v487
    %v1278 = vunpack.c.l.b16 %v488
    %v1279 = vunpack.c.h.b16 %v488
    %v1280 = vunpack.c.l.b16 %v489
    %v1281 = vunpack.c.h.b16 %v489
    %v1282 = vunpack.c.l.b16 %v490
    %v1283 = vunpack.c.h.b16 %v490
    %v1284 = vunpack.c.l.b16 %v491
    %v1285 = vunpack.c.h.b16 %v491
    %v1286 = vunpack.c.l.b16 %v492
    %v1287 = vunpack.c.h.b16 %v492
    %v1288 = vunpack.c.l.b16 %v493
    %v1289 = vunpack.c.h.b16 %v493
    %v1290 = vunpack.c.l.b16 %v494
    %v1291 = vunpack.c.h.b16 %v494
    %v1292 = vunpack.c.l.b16 %v495
    %v1293 = vunpack.c.h.b16 %v495
    %v1294 = vunpack.c.l.b16 %v496
    %v1295 = vunpack.c.h.b16 %v496
    %v1296 = vunpack.c.l.b16 %v497
    %v1297 = vunpack.c.h.b16 %v497
    %v1298 = vunpack.c.l.b16 %v498
    %v1299 = vunpack.c.h.b16 %v498
    %v1300 = vunpack.c.l.b16 %v499
    %v1301 = vunpack.c.h.b16 %v499
    %v1302 = vunpack.c.l.b16 %v500
    %v1303 = vunpack.c.h.b16 %v500
    %v1304 = vunpack.c.l.b16 %v501
    %v1305 = vunpack.c.h.b16 %v501
    %v1306 = vunpack.c.l.b16 %v502
    %v1307 = vunpack.c.h.b16 %v502
    %v1308 = vunpack.c.l.b16 %v503
    %v1309 = vunpack.c.h.b16 %v503
    %v1310 = vunpack.c.l.b16 %v504
    %v1311 = vunpack.c.h.b16 %v504
    %v1312 = vunpack.c.l.b16 %v505
    %v1313 = vunpack.c.h.b16 %v505
    %v1314 = vunpack.c.l.b16 %v506
    %v1315 = vunpack.c.h.b16 %v506
    %v1316 = vunpack.c.l.b16 %v507
    %v1317 = vunpack.c.h.b16 %v507
    %v1318 = vunpack.c.l.b16 %v508
    %v1319 = vunpack.c.h.b16 %v508
    %v1320 = vunpack.c.l.b16 %v509
    %v1321 = vunpack.c.h.b16 %v509
    %v1322 = vunpack.c.l.b16 %v510
    %v1323 = vunpack.c.h.b16 %v510
    %v1324 = vunpack.c.l.b16 %v511
    %v1325 = vunpack.c.h.b16 %v511
    %v1326 = vunpack.c.l.b16 %v512
    %v1327 = vunpack.c.h.b16 %v512
    %v1328 = vunpack.c.l.b16 %v513
    %v1329 = vunpack.c.h.b16 %v513
    %v1330 = vunpack.c.l.b16 %v514
    %v1331 = vunpack.c.h.b16 %v514
    %v1332 = vunpack.c.l.b16 %v515
    %v1333 = vunpack.c.h.b16 %v515
    %v1334 = vunpack.c.l.b16 %v516
    %v1335 = vunpack.c.h.b16 %v516
    %v1336 = vunpack.c.l.b16 %v517
    %v1337 = vunpack.c.h.b16 %v517
    %v1338 = vunpack.c.l.b16 %v518
    %v1339 = vunpack.c.h.b16 %v518
    %v1340 = vunpack.c.l.b16 %v519
    %v1341 = vunpack.c.h.b16 %v519
    %v1342 = vunpack.c.l.b16 %v520
    %v1343 = vunpack.c.h.b16 %v520
    %v1344 = vunpack.c.l.b16 %v521
    %v1345 = vunpack.c.h.b16 %v521
    %v1346 = vpack.c.b16 %v842, %v834
    %v1347 = vpack.c.b16 %v843, %v835
    %v1348 = vpack.c.b16 %v844, %v836
    %v1349 = vpack.c.b16 %v845, %v837
    %v1350 = vpack.c.b16 %v846, %v838
    %v1351 = vpack.c.b16 %v847, %v839
    %v1352 = vpack.c.b16 %v848, %v840
    %v1353 = vpack.c.b16 %v849, %v841
    %v1354 = vpack.c.b16 %v858, %v850
    %v1355 = vpack.c.b16 %v859, %v851
    %v1356 = vpack.c.b16 %v860, %v852
    %v1357 = vpack.c.b16 %v861, %v853
    %v1358 = vpack.c.b16 %v862, %v854
    %v1359 = vpack.c.b16 %v863, %v855
    %v1360 = vpack.c.b16 %v864, %v856
    %v1361 = vpack.c.b16 %v865, %v857
    %v1362 = vpack.c.b16 %v874, %v866
    %v1363 = vpack.c.b16 %v875, %v867
    %v1364 = vpack.c.b16 %v876, %v868
    %v1365 = vpack.c.b16 %v877, %v869
    %v1366 = vpack.c.b16 %v878, %v870
    %v1367 = vpack.c.b16 %v879, %v871
    %v1368 = vpack.c.b16 %v880, %v872
    %v1369 = vpack.c.b16 %v881, %v873
    %v1370 = vpack.c.b16 %v890, %v882
    %v1371 = vpack.c.b16 %v891, %v883
    %v1372 = vpack.c.b16 %v892, %v884
    %v1373 = vpack.c.b16 %v893, %v885
    %v1374 = vpack.c.b16 %v894, %v886
    %v1375 = vpack.c.b16 %v895, %v887
    %v1376 = vpack.c.b16 %v896, %v888
    %v1377 = vpack.c.b16 %v897, %v889
    %v1378 = vpack.c.b16 %v906, %v898
    %v1379 = vpack.c.b16 %v907, %v899
    %v1380 = vpack.c.b16 %v908, %v900
    %v1381 = vpack.c.b16 %v909, %v901
    %v1382 = vpack.c.b16 %v910, %v902
    %v1383 = vpack.c.b16 %v911, %v903
    %v1384 = vpack.c.b16 %v912, %v904
    %v1385 = vpack.c.b16 %v913, %v905
    %v1386 = vpack.c.b16 %v922, %v914
    %v1387 = vpack.c.b16 %v923, %v915
    %v1388 = vpack.c.b16 %v924, %v916
    %v1389 = vpack.c.b16 %v925, %v917
    %v1390 = vpack.c.b16 %v926, %v918
    %v1391 = vpack.c.b16 %v927, %v919
    %v1392 = vpack.c.b16 %v928, %v920
    %v1393 = vpack.c.b16 %v929, %v921
    %v1394 = vpack.c.b16 %v938, %v930
    %v1395 = vpack.c.b16 %v939, %v931
    %v1396 = vpack.c.b16 %v940, %v932
    %v1397 = vpack.c.b16 %v941, %v933
    %v1398 = vpack.c.b16 %v942, %v934
    %v1399 = vpack.c.b16 %v943, %v935
    %v1400 = vpack.c.b16 %v944, %v936
    %v1401 = vpack.c.b16 %v945, %v937
    %v1402 = vpack.c.b16 %v954, %v946
    %v1403 = vpack.c.b16 %v955, %v947
    %v1404 = vpack.c.b16 %v956, %v948
    %v1405 = vpack.c.b16 %v957, %v949
    %v1406 = vpack.c.b16 %v958, %v950
    %v1407 = vpack.c.b16 %v959, %v951
    %v1408 = vpack.c.b16 %v960, %v952
    %v1409 = vpack.c.b16 %v961, %v953
    %v1410 = vpack.c.b16 %v970, %v962
    %v1411 = vpack.c.b16 %v971, %v963
    %v1412 = vpack.c.b16 %v972, %v964
    %v1413 = vpack.c.b16 %v973, %v965
    %v1414 = vpack.c.b16 %v974, %v966
    %v1415 = vpack.c.b16 %v975, %v967
    %v1416 = vpack.c.b16 %v976, %v968
    %v1417 = vpack.c.b16 %v977, %v969
    %v1418 = vpack.c.b16 %v986, %v978
    %v1419 = vpack.c.b16 %v987, %v979
    %v1420 = vpack.c.b16 %v988, %v980
    %v1421 = vpack.c.b16 %v989, %v981
    %v1422 = vpack.c.b16 %v990, %v982
    %v1423 = vpack.c.b16 %v991, %v983
    %v1424 = vpack.c.b16 %v992, %v984
    %v1425 = vpack.c.b16 %v993, %v985
    %v1426 = vpack.c.b16 %v1002, %v994
    %v1427 = vpack.c.b16 %v1003, %v995
    %v1428 = vpack.c.b16 %v1004, %v996
    %v1429 = vpack.c.b16 %v1005, %v997
    %v1430 = vpack.c.b16 %v1006, %v998
    %v1431 = vpack.c.b16 %v1007, %v999
    %v1432 = vpack.c.b16 %v1008, %v1000
    %v1433 = vpack.c.b16 %v1009, %v1001
    %v1434 = vpack.c.b16 %v1018, %v1010
    %v1435 = vpack.c.b16 %v1019, %v1011
    %v1436 = vpack.c.b16 %v1020, %v1012
    %v1437 = vpack.c.b16 %v1021, %v1013
    %v1438 = vpack.c.b16 %v1022, %v1014
    %v1439 = vpack.c.b16 %v1023, %v1015
    %v1440 = vpack.c.b16 %v1024, %v1016
    %v1441 = vpack.c.b16 %v1025, %v1017
    %v1442 = vpack.c.b16 %v1034, %v1026
    %v1443 = vpack.c.b16 %v1035, %v1027
    %v1444 = vpack.c.b16 %v1036, %v1028
    %v1445 = vpack.c.b16 %v1037, %v1029
    %v1446 = vpack.c.b16 %v1038, %v1030
    %v1447 = vpack.c.b16 %v1039, %v1031
    %v1448 = vpack.c.b16 %v1040, %v1032
    %v1449 = vpack.c.b16 %v1041, %v1033
    %v1450 = vpack.c.b16 %v1050, %v1042
    %v1451 = vpack.c.b16 %v1051, %v1043
    %v1452 = vpack.c.b16 %v1052, %v1044
    %v1453 = vpack.c.b16 %v1053, %v1045
    %v1454 = vpack.c.b16 %v1054, %v1046
    %v1455 = vpack.c.b16 %v1055, %v1047
    %v1456 = vpack.c.b16 %v1056, %v1048
    %v1457 = vpack.c.b16 %v1057, %v1049
    %v1458 = vpack.c.b16 %v1066, %v1058
    %v1459 = vpack.c.b16 %v1067, %v1059
    %v1460 = vpack.c.b16 %v1068, %v1060
    %v1461 = vpack.c.b16 %v1069, %v1061
    %v1462 = vpack.c.b16 %v1070, %v1062
    %v1463 = vpack.c.b16 %v1071, %v1063
    %v1464 = vpack.c.b16 %v1072, %v1064
    %v1465 = vpack.c.b16 %v1073, %v1065
    %v1466 = vpack.c.b16 %v1082, %v1074
    %v1467 = vpack.c.b16 %v1083, %v1075
    %v1468 = vpack.c.b16 %v1084, %v1076
    %v1469 = vpack.c.b16 %v1085, %v1077
    %v1470 = vpack.c.b16 %v1086, %v1078
    %v1471 = vpack.c.b16 %v1087, %v1079
    %v1472 = vpack.c.b16 %v1088, %v1080
    %v1473 = vpack.c.b16 %v1089, %v1081
    %v1474 = vpack.c.b16 %v1098, %v1090
    %v1475 = vpack.c.b16 %v1099, %v1091
    %v1476 = vpack.c.b16 %v1100, %v1092
    %v1477 = vpack.c.b16 %v1101, %v1093
    %v1478 = vpack.c.b16 %v1102, %v1094
    %v1479 = vpack.c.b16 %v1103, %v1095
    %v1480 = vpack.c.b16 %v1104, %v1096
    %v1481 = vpack.c.b16 %v1105, %v1097
    %v1482 = vpack.c.b16 %v1114, %v1106
    %v1483 = vpack.c.b16 %v1115, %v1107
    %v1484 = vpack.c.b16 %v1116, %v1108
    %v1485 = vpack.c.b16 %v1117, %v1109
    %v1486 = vpack.c.b16 %v1118, %v1110
    %v1487 = vpack.c.b16 %v1119, %v1111
    %v1488 = vpack.c.b16 %v1120, %v1112
    %v1489 = vpack.c.b16 %v1121, %v1113
    %v1490 = vpack.c.b16 %v1130, %v1122
    %v1491 = vpack.c.b16 %v1131, %v1123
    %v1492 = vpack.c.b16 %v1132, %v1124
    %v1493 = vpack.c.b16 %v1133, %v1125
    %v1494 = vpack.c.b16 %v1134, %v1126
    %v1495 = vpack.c.b16 %v1135, %v1127
    %v1496 = vpack.c.b16 %v1136, %v1128
    %v1497 = vpack.c.b16 %v1137, %v1129
    %v1498 = vpack.c.b16 %v1146, %v1138
    %v1499 = vpack.c.b16 %v1147, %v1139
    %v1500 = vpack.c.b16 %v1148, %v1140
    %v1501 = vpack.c.b16 %v1149, %v1141
    %v1502 = vpack.c.b16 %v1150, %v1142
    %v1503 = vpack.c.b16 %v1151, %v1143
    %v1504 = vpack.c.b16 %v1152, %v1144
    %v1505 = vpack.c.b16 %v1153, %v1145
    %v1506 = vpack.c.b16 %v1162, %v1154
    %v1507 = vpack.c.b16 %v1163, %v1155
    %v1508 = vpack.c.b16 %v1164, %v1156
    %v1509 = vpack.c.b16 %v1165, %v1157
    %v1510 = vpack.c.b16 %v1166, %v1158
    %v1511 = vpack.c.b16 %v1167, %v1159
    %v1512 = vpack.c.b16 %v1168, %v1160
    %v1513 = vpack.c.b16 %v1169, %v1161
    %v1514 = vpack.c.b16 %v1178, %v1170
    %v1515 = vpack.c.b16 %v1179, %v1171
    %v1516 = vpack.c.b16 %v1180, %v1172
    %v1517 = vpack.c.b16 %v1181, %v1173
    %v1518 = vpack.c.b16 %v1182, %v1174
    %v1519 = vpack.c.b16 %v1183, %v1175
    %v1520 = vpack.c.b16 %v1184, %v1176
    %v1521 = vpack.c.b16 %v1185, %v1177
    %v1522 = vpack.c.b16 %v1194, %v1186
    %v1523 = vpack.c.b16 %v1195, %v1187
    %v1524 = vpack.c.b16 %v1196, %v1188
    %v1525 = vpack.c.b16 %v1197, %v1189
    %v1526 = vpack.c.b16 %v1198, %v1190
    %v1527 = vpack.c.b16 %v1199, %v1191
    %v1528 = vpack.c.b16 %v1200, %v1192
    %v1529 = vpack.c.b16 %v1201, %v1193
    %v1530 = vpack.c.b16 %v1210, %v1202
    %v1531 = vpack.c.b16 %v1211, %v1203
    %v1532 = vpack.c.b16 %v1212, %v1204
    %v1533 = vpack.c.b16 %v1213, %v1205
    %v1534 = vpack.c.b16 %v1214, %v1206
    %v1535 = vpack.c.b16 %v1215, %v1207
    %v1536 = vpack.c.b16 %v1216, %v1208
    %v1537 = vpack.c.b16 %v1217, %v1209
    %v1538 = vpack.c.b16 %v1226, %v1218
    %v1539 = vpack.c.b16 %v1227, %v1219
    %v1540 = vpack.c.b16 %v1228, %v1220
    %v1541 = vpack.c.b16 %v1229, %v1221
    %v1542 = vpack.c.b16 %v1230, %v1222
    %v1543 = vpack.c.b16 %v1231, %v1223
    %v1544 = vpack.c.b16 %v1232, %v1224
    %v1545 = vpack.c.b16 %v1233, %v1225
    %v1546 = vpack.c.b16 %v1242, %v1234
    %v1547 = vpack.c.b16 %v1243, %v1235
    %v1548 = vpack.c.b16 %v1244, %v1236
    %v1549 = vpack.c.b16 %v1245, %v1237
    %v1550 = vpack.c.b16 %v1246, %v1238
    %v1551 = vpack.c.b16 %v1247, %v1239
    %v1552 = vpack.c.b16 %v1248, %v1240
    %v1553 = vpack.c.b16 %v1249, %v1241
    %v1554 = vpack.c.b16 %v1258, %v1250
    %v1555 = vpack.c.b16 %v1259, %v1251
    %v1556 = vpack.c.b16 %v1260, %v1252
    %v1557 = vpack.c.b16 %v1261, %v1253
    %v1558 = vpack.c.b16 %v1262, %v1254
    %v1559 = vpack.c.b16 %v1263, %v1255
    %v1560 = vpack.c.b16 %v1264, %v1256
    %v1561 = vpack.c.b16 %v1265, %v1257
    %v1562 = vpack.c.b16 %v1274, %v1266
    %v1563 = vpack.c.b16 %v1275, %v1267
    %v1564 = vpack.c.b16 %v1276, %v1268
    %v1565 = vpack.c.b16 %v1277, %v1269
    %v1566 = vpack.c.b16 %v1278, %v1270
    %v1567 = vpack.c.b16 %v1279, %v1271
    %v1568 = vpack.c.b16 %v1280, %v1272
    %v1569 = vpack.c.b16 %v1281, %v1273
    %v1570 = vpack.c.b16 %v1290, %v1282
    %v1571 = vpack.c.b16 %v1291, %v1283
    %v1572 = vpack.c.b16 %v1292, %v1284
    %v1573 = vpack.c.b16 %v1293, %v1285
    %v1574 = vpack.c.b16 %v1294, %v1286
    %v1575 = vpack.c.b16 %v1295, %v1287
    %v1576 = vpack.c.b16 %v1296, %v1288
    %v1577 = vpack.c.b16 %v1297, %v1289
    %v1578 = vpack.c.b16 %v1306, %v1298
    %v1579 = vpack.c.b16 %v1307, %v1299
    %v1580 = vpack.c.b16 %v1308, %v1300
    %v1581 = vpack.c.b16 %v1309, %v1301
    %v1582 = vpack.c.b16 %v1310, %v1302
    %v1583 = vpack.c.b16 %v1311, %v1303
    %v1584 = vpack.c.b16 %v1312, %v1304
    %v1585 = vpack.c.b16 %v1313, %v1305
    %v1586 = vpack.c.b16 %v1322, %v1314
    %v1587 = vpack.c.b16 %v1323, %v1315
    %v1588 = vpack.c.b16 %v1324, %v1316
    %v1589 = vpack.c.b16 %v1325, %v1317
    %v1590 = vpack.c.b16 %v1326, %v1318
    %v1591 = vpack.c.b16 %v1327, %v1319
    %v1592 = vpack.c.b16 %v1328, %v1320
    %v1593 = vpack.c.b16 %v1329, %v1321
    %v1594 = vpack.c.b16 %v1338, %v1330
    %v1595 = vpack.c.b16 %v1339, %v1331
    %v1596 = vpack.c.b16 %v1340, %v1332
    %v1597 = vpack.c.b16 %v1341, %v1333
    %v1598 = vpack.c.b16 %v1342, %v1334
    %v1599 = vpack.c.b16 %v1343, %v1335
    %v1600 = vpack.c.b16 %v1344, %v1336
    %v1601 = vpack.c.b16 %v1345, %v1337
    %1858 = vmatprep.subr.bf16.mxu0 %v1403
    %1859 = vmatpush1.bf16.msra.mxu0 %v1402
    %1860 = vmatprep.subr.bf16.mxu0 %v1395
    %1861 = vmatpush1.bf16.msra.mxu0 %v1394
    %1862 = vmatprep.subr.bf16.mxu0 %v1387
    %1863 = vmatpush1.bf16.msra.mxu0 %v1386
    %1864 = vmatprep.subr.bf16.mxu0 %v1379
    %1865 = vmatpush1.bf16.msra.mxu0 %v1378
    %1866 = vmatprep.subr.bf16.mxu0 %v1371
    %1867 = vmatpush1.bf16.msra.mxu0 %v1370
    %1868 = vmatprep.subr.bf16.mxu0 %v1363
    %1869 = vmatpush1.bf16.msra.mxu0 %v1362
    %1870 = vmatprep.subr.bf16.mxu0 %v1355
    %1871 = vmatpush1.bf16.msra.mxu0 %v1354
    %1872 = vmatprep.subr.bf16.mxu0 %v1347
    %1873 = vmatpush1.bf16.msra.mxu0 %v1346
    %1874 = vmatprep.subr.bf16.mxu0 %v1467
    %1875 = vmatpush2.bf16.msra.mxu0 %v1466
    %1876 = vmatprep.subr.bf16.mxu0 %v1459
    %1877 = vmatpush2.bf16.msra.mxu0 %v1458
    %1878 = vmatprep.subr.bf16.mxu0 %v1451
    %1879 = vmatpush2.bf16.msra.mxu0 %v1450
    %1880 = vmatprep.subr.bf16.mxu0 %v1443
    %1881 = vmatpush2.bf16.msra.mxu0 %v1442
    %1882 = vmatprep.subr.bf16.mxu0 %v1435
    %1883 = vmatpush2.bf16.msra.mxu0 %v1434
    %1884 = vmatprep.subr.bf16.mxu0 %v1427
    %1885 = vmatpush2.bf16.msra.mxu0 %v1426
    %1886 = vmatprep.subr.bf16.mxu0 %v1419
    %1887 = vmatpush2.bf16.msra.mxu0 %v1418
    %1888 = vmatprep.subr.bf16.mxu0 %v1411
    %1889 = vmatpush2.bf16.msra.mxu0 %v1410
    %1890 = vmatprep.mubr.bf16.mxu0 %v571
    %1891 = vmatmul.mubr.bf16.gmra.mxu0 %v570
    %v1892 = vpop.f32.mrf.mxu0
    %v1893 = vadd.f32 %v527, %v1892
    %v1894 = vpop.f32.mrf.mxu0
    %v1895 = vadd.f32 %v531, %v1894
    %v1896 = vpop.f32.mrf.mxu0
    %v1897 = vpop.f32.mrf.mxu0
    %1898 = vdwg.mxu0
    %1899 = vmatprep.subr.bf16.mxu0 %v1531
    %1900 = vmatpush1.bf16.msra.mxu0 %v1530
    %1901 = vmatprep.subr.bf16.mxu0 %v1523
    %1902 = vmatpush1.bf16.msra.mxu0 %v1522
    %1903 = vmatprep.subr.bf16.mxu0 %v1515
    %1904 = vmatpush1.bf16.msra.mxu0 %v1514
    %1905 = vmatprep.subr.bf16.mxu0 %v1507
    %1906 = vmatpush1.bf16.msra.mxu0 %v1506
    %1907 = vmatprep.subr.bf16.mxu0 %v1499
    %1908 = vmatpush1.bf16.msra.mxu0 %v1498
    %1909 = vmatprep.subr.bf16.mxu0 %v1491
    %1910 = vmatpush1.bf16.msra.mxu0 %v1490
    %1911 = vmatprep.subr.bf16.mxu0 %v1483
    %1912 = vmatpush1.bf16.msra.mxu0 %v1482
    %1913 = vmatprep.subr.bf16.mxu0 %v1475
    %1914 = vmatpush1.bf16.msra.mxu0 %v1474
    %1915 = vmatprep.subr.bf16.mxu0 %v1595
    %1916 = vmatpush2.bf16.msra.mxu0 %v1594
    %1917 = vmatprep.subr.bf16.mxu0 %v1587
    %1918 = vmatpush2.bf16.msra.mxu0 %v1586
    %1919 = vmatprep.subr.bf16.mxu0 %v1579
    %1920 = vmatpush2.bf16.msra.mxu0 %v1578
    %1921 = vmatprep.subr.bf16.mxu0 %v1571
    %1922 = vmatpush2.bf16.msra.mxu0 %v1570
    %1923 = vmatprep.subr.bf16.mxu0 %v1563
    %1924 = vmatpush2.bf16.msra.mxu0 %v1562
    %1925 = vmatprep.subr.bf16.mxu0 %v1555
    %1926 = vmatpush2.bf16.msra.mxu0 %v1554
    %1927 = vmatprep.subr.bf16.mxu0 %v1547
    %1928 = vmatpush2.bf16.msra.mxu0 %v1546
    %1929 = vmatprep.subr.bf16.mxu0 %v1539
    %1930 = vmatpush2.bf16.msra.mxu0 %v1538
    %1931 = vmatprep.mubr.bf16.mxu0 %v573
    %1932 = vmatmul.mubr.bf16.gmra.mxu0 %v572
    %v1933 = vpop.f32.mrf.mxu0
    %v1934 = vadd.f32 %v1893, %v1933
    %v1935 = vpop.f32.mrf.mxu0
    %v1936 = vadd.f32 %v1895, %v1935
    %v1937 = vpop.f32.mrf.mxu0
    %v1938 = vpop.f32.mrf.mxu0
    %1939 = vdwg.mxu0
    %1940 = vmatprep.subr.bf16.mxu0 %v1405
    %1941 = vmatpush1.bf16.msra.mxu0 %v1404
    %1942 = vmatprep.subr.bf16.mxu0 %v1397
    %1943 = vmatpush1.bf16.msra.mxu0 %v1396
    %1944 = vmatprep.subr.bf16.mxu0 %v1389
    %1945 = vmatpush1.bf16.msra.mxu0 %v1388
    %1946 = vmatprep.subr.bf16.mxu0 %v1381
    %1947 = vmatpush1.bf16.msra.mxu0 %v1380
    %1948 = vmatprep.subr.bf16.mxu0 %v1373
    %1949 = vmatpush1.bf16.msra.mxu0 %v1372
    %1950 = vmatprep.subr.bf16.mxu0 %v1365
    %1951 = vmatpush1.bf16.msra.mxu0 %v1364
    %1952 = vmatprep.subr.bf16.mxu0 %v1357
    %1953 = vmatpush1.bf16.msra.mxu0 %v1356
    %1954 = vmatprep.subr.bf16.mxu0 %v1349
    %1955 = vmatpush1.bf16.msra.mxu0 %v1348
    %1956 = vmatprep.subr.bf16.mxu0 %v1469
    %1957 = vmatpush2.bf16.msra.mxu0 %v1468
    %1958 = vmatprep.subr.bf16.mxu0 %v1461
    %1959 = vmatpush2.bf16.msra.mxu0 %v1460
    %1960 = vmatprep.subr.bf16.mxu0 %v1453
    %1961 = vmatpush2.bf16.msra.mxu0 %v1452
    %1962 = vmatprep.subr.bf16.mxu0 %v1445
    %1963 = vmatpush2.bf16.msra.mxu0 %v1444
    %1964 = vmatprep.subr.bf16.mxu0 %v1437
    %1965 = vmatpush2.bf16.msra.mxu0 %v1436
    %1966 = vmatprep.subr.bf16.mxu0 %v1429
    %1967 = vmatpush2.bf16.msra.mxu0 %v1428
    %1968 = vmatprep.subr.bf16.mxu0 %v1421
    %1969 = vmatpush2.bf16.msra.mxu0 %v1420
    %1970 = vmatprep.subr.bf16.mxu0 %v1413
    %1971 = vmatpush2.bf16.msra.mxu0 %v1412
    %1972 = vmatprep.mubr.bf16.mxu0 %v571
    %1973 = vmatmul.mubr.bf16.gmra.mxu0 %v570
    %v1974 = vpop.f32.mrf.mxu0
    %v1975 = vadd.f32 %v535, %v1974
    %v1976 = vpop.f32.mrf.mxu0
    %v1977 = vadd.f32 %v539, %v1976
    %v1978 = vpop.f32.mrf.mxu0
    %v1979 = vpop.f32.mrf.mxu0
    %1980 = vdwg.mxu0
    %1981 = vmatprep.subr.bf16.mxu0 %v1533
    %1982 = vmatpush1.bf16.msra.mxu0 %v1532
    %1983 = vmatprep.subr.bf16.mxu0 %v1525
    %1984 = vmatpush1.bf16.msra.mxu0 %v1524
    %1985 = vmatprep.subr.bf16.mxu0 %v1517
    %1986 = vmatpush1.bf16.msra.mxu0 %v1516
    %1987 = vmatprep.subr.bf16.mxu0 %v1509
    %1988 = vmatpush1.bf16.msra.mxu0 %v1508
    %1989 = vmatprep.subr.bf16.mxu0 %v1501
    %1990 = vmatpush1.bf16.msra.mxu0 %v1500
    %1991 = vmatprep.subr.bf16.mxu0 %v1493
    %1992 = vmatpush1.bf16.msra.mxu0 %v1492
    %1993 = vmatprep.subr.bf16.mxu0 %v1485
    %1994 = vmatpush1.bf16.msra.mxu0 %v1484
    %1995 = vmatprep.subr.bf16.mxu0 %v1477
    %1996 = vmatpush1.bf16.msra.mxu0 %v1476
    %1997 = vmatprep.subr.bf16.mxu0 %v1597
    %1998 = vmatpush2.bf16.msra.mxu0 %v1596
    %1999 = vmatprep.subr.bf16.mxu0 %v1589
    %2000 = vmatpush2.bf16.msra.mxu0 %v1588
    %2001 = vmatprep.subr.bf16.mxu0 %v1581
    %2002 = vmatpush2.bf16.msra.mxu0 %v1580
    %2003 = vmatprep.subr.bf16.mxu0 %v1573
    %2004 = vmatpush2.bf16.msra.mxu0 %v1572
    %2005 = vmatprep.subr.bf16.mxu0 %v1565
    %2006 = vmatpush2.bf16.msra.mxu0 %v1564
    %2007 = vmatprep.subr.bf16.mxu0 %v1557
    %2008 = vmatpush2.bf16.msra.mxu0 %v1556
    %2009 = vmatprep.subr.bf16.mxu0 %v1549
    %2010 = vmatpush2.bf16.msra.mxu0 %v1548
    %2011 = vmatprep.subr.bf16.mxu0 %v1541
    %2012 = vmatpush2.bf16.msra.mxu0 %v1540
    %2013 = vmatprep.mubr.bf16.mxu0 %v573
    %2014 = vmatmul.mubr.bf16.gmra.mxu0 %v572
    %v2015 = vpop.f32.mrf.mxu0
    %v2016 = vadd.f32 %v1975, %v2015
    %v2017 = vpop.f32.mrf.mxu0
    %v2018 = vadd.f32 %v1977, %v2017
    %v2019 = vpop.f32.mrf.mxu0
    %v2020 = vpop.f32.mrf.mxu0
    %2021 = vdwg.mxu0
    %2022 = vmatprep.subr.bf16.mxu0 %v1407
    %2023 = vmatpush1.bf16.msra.mxu0 %v1406
    %2024 = vmatprep.subr.bf16.mxu0 %v1399
    %2025 = vmatpush1.bf16.msra.mxu0 %v1398
    %2026 = vmatprep.subr.bf16.mxu0 %v1391
    %2027 = vmatpush1.bf16.msra.mxu0 %v1390
    %2028 = vmatprep.subr.bf16.mxu0 %v1383
    %2029 = vmatpush1.bf16.msra.mxu0 %v1382
    %2030 = vmatprep.subr.bf16.mxu0 %v1375
    %2031 = vmatpush1.bf16.msra.mxu0 %v1374
    %2032 = vmatprep.subr.bf16.mxu0 %v1367
    %2033 = vmatpush1.bf16.msra.mxu0 %v1366
    %2034 = vmatprep.subr.bf16.mxu0 %v1359
    %2035 = vmatpush1.bf16.msra.mxu0 %v1358
    %2036 = vmatprep.subr.bf16.mxu0 %v1351
    %2037 = vmatpush1.bf16.msra.mxu0 %v1350
    %2038 = vmatprep.subr.bf16.mxu0 %v1471
    %2039 = vmatpush2.bf16.msra.mxu0 %v1470
    %2040 = vmatprep.subr.bf16.mxu0 %v1463
    %2041 = vmatpush2.bf16.msra.mxu0 %v1462
    %2042 = vmatprep.subr.bf16.mxu0 %v1455
    %2043 = vmatpush2.bf16.msra.mxu0 %v1454
    %2044 = vmatprep.subr.bf16.mxu0 %v1447
    %2045 = vmatpush2.bf16.msra.mxu0 %v1446
    %2046 = vmatprep.subr.bf16.mxu0 %v1439
    %2047 = vmatpush2.bf16.msra.mxu0 %v1438
    %2048 = vmatprep.subr.bf16.mxu0 %v1431
    %2049 = vmatpush2.bf16.msra.mxu0 %v1430
    %2050 = vmatprep.subr.bf16.mxu0 %v1423
    %2051 = vmatpush2.bf16.msra.mxu0 %v1422
    %2052 = vmatprep.subr.bf16.mxu0 %v1415
    %2053 = vmatpush2.bf16.msra.mxu0 %v1414
    %2054 = vmatprep.mubr.bf16.mxu0 %v571
    %2055 = vmatmul.mubr.bf16.gmra.mxu0 %v570
    %v2056 = vpop.f32.mrf.mxu0
    %v2057 = vadd.f32 %v543, %v2056
    %v2058 = vpop.f32.mrf.mxu0
    %v2059 = vadd.f32 %v547, %v2058
    %v2060 = vpop.f32.mrf.mxu0
    %v2061 = vpop.f32.mrf.mxu0
    %2062 = vdwg.mxu0
    %2063 = vmatprep.subr.bf16.mxu0 %v1535
    %2064 = vmatpush1.bf16.msra.mxu0 %v1534
    %2065 = vmatprep.subr.bf16.mxu0 %v1527
    %2066 = vmatpush1.bf16.msra.mxu0 %v1526
    %2067 = vmatprep.subr.bf16.mxu0 %v1519
    %2068 = vmatpush1.bf16.msra.mxu0 %v1518
    %2069 = vmatprep.subr.bf16.mxu0 %v1511
    %2070 = vmatpush1.bf16.msra.mxu0 %v1510
    %2071 = vmatprep.subr.bf16.mxu0 %v1503
    %2072 = vmatpush1.bf16.msra.mxu0 %v1502
    %2073 = vmatprep.subr.bf16.mxu0 %v1495
    %2074 = vmatpush1.bf16.msra.mxu0 %v1494
    %2075 = vmatprep.subr.bf16.mxu0 %v1487
    %2076 = vmatpush1.bf16.msra.mxu0 %v1486
    %2077 = vmatprep.subr.bf16.mxu0 %v1479
    %2078 = vmatpush1.bf16.msra.mxu0 %v1478
    %2079 = vmatprep.subr.bf16.mxu0 %v1599
    %2080 = vmatpush2.bf16.msra.mxu0 %v1598
    %2081 = vmatprep.subr.bf16.mxu0 %v1591
    %2082 = vmatpush2.bf16.msra.mxu0 %v1590
    %2083 = vmatprep.subr.bf16.mxu0 %v1583
    %2084 = vmatpush2.bf16.msra.mxu0 %v1582
    %2085 = vmatprep.subr.bf16.mxu0 %v1575
    %2086 = vmatpush2.bf16.msra.mxu0 %v1574
    %2087 = vmatprep.subr.bf16.mxu0 %v1567
    %2088 = vmatpush2.bf16.msra.mxu0 %v1566
    %2089 = vmatprep.subr.bf16.mxu0 %v1559
    %2090 = vmatpush2.bf16.msra.mxu0 %v1558
    %2091 = vmatprep.subr.bf16.mxu0 %v1551
    %2092 = vmatpush2.bf16.msra.mxu0 %v1550
    %2093 = vmatprep.subr.bf16.mxu0 %v1543
    %2094 = vmatpush2.bf16.msra.mxu0 %v1542
    %2095 = vmatprep.mubr.bf16.mxu0 %v573
    %2096 = vmatmul.mubr.bf16.gmra.mxu0 %v572
    %v2097 = vpop.f32.mrf.mxu0
    %v2098 = vadd.f32 %v2057, %v2097
    %v2099 = vpop.f32.mrf.mxu0
    %v2100 = vadd.f32 %v2059, %v2099
    %v2101 = vpop.f32.mrf.mxu0
    %v2102 = vpop.f32.mrf.mxu0
    %2103 = vdwg.mxu0
    %2104 = vmatprep.subr.bf16.mxu0 %v1409
    %2105 = vmatpush1.bf16.msra.mxu0 %v1408
    %2106 = vmatprep.subr.bf16.mxu0 %v1401
    %2107 = vmatpush1.bf16.msra.mxu0 %v1400
    %2108 = vmatprep.subr.bf16.mxu0 %v1393
    %2109 = vmatpush1.bf16.msra.mxu0 %v1392
    %2110 = vmatprep.subr.bf16.mxu0 %v1385
    %2111 = vmatpush1.bf16.msra.mxu0 %v1384
    %2112 = vmatprep.subr.bf16.mxu0 %v1377
    %2113 = vmatpush1.bf16.msra.mxu0 %v1376
    %2114 = vmatprep.subr.bf16.mxu0 %v1369
    %2115 = vmatpush1.bf16.msra.mxu0 %v1368
    %2116 = vmatprep.subr.bf16.mxu0 %v1361
    %2117 = vmatpush1.bf16.msra.mxu0 %v1360
    %2118 = vmatprep.subr.bf16.mxu0 %v1353
    %2119 = vmatpush1.bf16.msra.mxu0 %v1352
    %2120 = vmatprep.subr.bf16.mxu0 %v1473
    %2121 = vmatpush2.bf16.msra.mxu0 %v1472
    %2122 = vmatprep.subr.bf16.mxu0 %v1465
    %2123 = vmatpush2.bf16.msra.mxu0 %v1464
    %2124 = vmatprep.subr.bf16.mxu0 %v1457
    %2125 = vmatpush2.bf16.msra.mxu0 %v1456
    %2126 = vmatprep.subr.bf16.mxu0 %v1449
    %2127 = vmatpush2.bf16.msra.mxu0 %v1448
    %2128 = vmatprep.subr.bf16.mxu0 %v1441
    %2129 = vmatpush2.bf16.msra.mxu0 %v1440
    %2130 = vmatprep.subr.bf16.mxu0 %v1433
    %2131 = vmatpush2.bf16.msra.mxu0 %v1432
    %2132 = vmatprep.subr.bf16.mxu0 %v1425
    %2133 = vmatpush2.bf16.msra.mxu0 %v1424
    %2134 = vmatprep.subr.bf16.mxu0 %v1417
    %2135 = vmatpush2.bf16.msra.mxu0 %v1416
    %2136 = vmatprep.mubr.bf16.mxu0 %v571
    %2137 = vmatmul.mubr.bf16.gmra.mxu0 %v570
    %v2138 = vpop.f32.mrf.mxu0
    %v2139 = vadd.f32 %v551, %v2138
    %v2140 = vpop.f32.mrf.mxu0
    %v2141 = vadd.f32 %v555, %v2140
    %v2142 = vpop.f32.mrf.mxu0
    %v2143 = vpop.f32.mrf.mxu0
    %2144 = vdwg.mxu0
    %2145 = vmatprep.subr.bf16.mxu0 %v1537
    %2146 = vmatpush1.bf16.msra.mxu0 %v1536
    %2147 = vmatprep.subr.bf16.mxu0 %v1529
    %2148 = vmatpush1.bf16.msra.mxu0 %v1528
    %2149 = vmatprep.subr.bf16.mxu0 %v1521
    %2150 = vmatpush1.bf16.msra.mxu0 %v1520
    %2151 = vmatprep.subr.bf16.mxu0 %v1513
    %2152 = vmatpush1.bf16.msra.mxu0 %v1512
    %2153 = vmatprep.subr.bf16.mxu0 %v1505
    %2154 = vmatpush1.bf16.msra.mxu0 %v1504
    %2155 = vmatprep.subr.bf16.mxu0 %v1497
    %2156 = vmatpush1.bf16.msra.mxu0 %v1496
    %2157 = vmatprep.subr.bf16.mxu0 %v1489
    %2158 = vmatpush1.bf16.msra.mxu0 %v1488
    %2159 = vmatprep.subr.bf16.mxu0 %v1481
    %2160 = vmatpush1.bf16.msra.mxu0 %v1480
    %2161 = vmatprep.subr.bf16.mxu0 %v1601
    %2162 = vmatpush2.bf16.msra.mxu0 %v1600
    %2163 = vmatprep.subr.bf16.mxu0 %v1593
    %2164 = vmatpush2.bf16.msra.mxu0 %v1592
    %2165 = vmatprep.subr.bf16.mxu0 %v1585
    %2166 = vmatpush2.bf16.msra.mxu0 %v1584
    %2167 = vmatprep.subr.bf16.mxu0 %v1577
    %2168 = vmatpush2.bf16.msra.mxu0 %v1576
    %2169 = vmatprep.subr.bf16.mxu0 %v1569
    %2170 = vmatpush2.bf16.msra.mxu0 %v1568
    %2171 = vmatprep.subr.bf16.mxu0 %v1561
    %2172 = vmatpush2.bf16.msra.mxu0 %v1560
    %2173 = vmatprep.subr.bf16.mxu0 %v1553
    %2174 = vmatpush2.bf16.msra.mxu0 %v1552
    %2175 = vmatprep.subr.bf16.mxu0 %v1545
    %2176 = vmatpush2.bf16.msra.mxu0 %v1544
    %2177 = vmatprep.mubr.bf16.mxu0 %v573
    %2178 = vmatmul.mubr.bf16.gmra.mxu0 %v572
    %v2179 = vpop.f32.mrf.mxu0
    %v2180 = vadd.f32 %v2139, %v2179
    %v2181 = vpop.f32.mrf.mxu0
    %v2182 = vadd.f32 %v2141, %v2181
    %v2183 = vpop.f32.mrf.mxu0
    %v2184 = vpop.f32.mrf.mxu0
    %2185 = vdwg.mxu0
    %v2186 = vld [vmem:[%s4] sm:$0xff]
    %v2187 = vld [vmem:[%s4 + $0x8] sm:$0xff]
    %2189 = vset.pattern.permute.xlu0 0
    %2190 = vperm.xlu0 %2189, %v263
    %v2191 = vpop.permute.xlu0 %2190
    %v2195 = vlaneseq
    %v2196 = vshrl.u32 %v2195, 7
    %v2197 = vsub.s32 0, %v2196
    %v2198 = vrot.slane %v2186, %v2197
    %v2199 = vlaneseq
    %v2200 = vshrl.u32 %v2199, 7
    %v2201 = vsub.s32 2, %v2200
    %v2202 = vrot.slane %v2186, %v2201
    %v2203 = vlaneseq
    %v2204 = vshrl.u32 %v2203, 7
    %v2205 = vsub.s32 4, %v2204
    %v2206 = vrot.slane %v2186, %v2205
    %v2207 = vlaneseq
    %v2208 = vshrl.u32 %v2207, 7
    %v2209 = vsub.s32 6, %v2208
    %v2210 = vrot.slane %v2186, %v2209
    %v2211 = vlaneseq
    %v2212 = vshrl.u32 %v2211, 7
    %v2213 = vsub.s32 0, %v2212
    %v2214 = vrot.slane %v2187, %v2213
    %v2215 = vlaneseq
    %v2216 = vshrl.u32 %v2215, 7
    %v2217 = vsub.s32 2, %v2216
    %v2218 = vrot.slane %v2187, %v2217
    %v2219 = vlaneseq
    %v2220 = vshrl.u32 %v2219, 7
    %v2221 = vsub.s32 4, %v2220
    %v2222 = vrot.slane %v2187, %v2221
    %v2223 = vlaneseq
    %v2224 = vshrl.u32 %v2223, 7
    %v2225 = vsub.s32 6, %v2224
    %v2226 = vrot.slane %v2187, %v2225
    %v2235 = vlaneseq
    %v2236 = vshrl.u32 %v2235, 7
    %v2237 = vsub.s32 0, %v2236
    %v2238 = vrot.slane %v2198, %v2237
    %v2239 = vlaneseq
    %v2240 = vshrl.u32 %v2239, 7
    %v2241 = vsub.s32 0, %v2240
    %v2242 = vrot.slane %v2202, %v2241
    %v2243 = vlaneseq
    %v2244 = vshrl.u32 %v2243, 7
    %v2245 = vsub.s32 0, %v2244
    %v2246 = vrot.slane %v2206, %v2245
    %v2247 = vlaneseq
    %v2248 = vshrl.u32 %v2247, 7
    %v2249 = vsub.s32 0, %v2248
    %v2250 = vrot.slane %v2210, %v2249
    %v2251 = vlaneseq
    %v2252 = vshrl.u32 %v2251, 7
    %v2253 = vsub.s32 0, %v2252
    %v2254 = vrot.slane %v2214, %v2253
    %v2255 = vlaneseq
    %v2256 = vshrl.u32 %v2255, 7
    %v2257 = vsub.s32 0, %v2256
    %v2258 = vrot.slane %v2218, %v2257
    %v2259 = vlaneseq
    %v2260 = vshrl.u32 %v2259, 7
    %v2261 = vsub.s32 0, %v2260
    %v2262 = vrot.slane %v2222, %v2261
    %v2263 = vlaneseq
    %v2264 = vshrl.u32 %v2263, 7
    %v2265 = vsub.s32 0, %v2264
    %v2266 = vrot.slane %v2226, %v2265
    %v2267 = vmul.f32 %v2191, %v2238
    %v2268 = vmul.f32 %v2191, %v2242
    %v2269 = vmul.f32 %v2191, %v2246
    %v2270 = vmul.f32 %v2191, %v2250
    %v2271 = vmul.f32 %v2191, %v2254
    %v2272 = vmul.f32 %v2191, %v2258
    %v2273 = vmul.f32 %v2191, %v2262
    %v2274 = vmul.f32 %v2191, %v2266
    %v2275 = vadd.f32 %v1934, %v2267
    %v2276 = vadd.f32 %v1936, %v2268
    %v2277 = vadd.f32 %v2016, %v2269
    %v2278 = vadd.f32 %v2018, %v2270
    %v2279 = vadd.f32 %v2098, %v2271
    %v2280 = vadd.f32 %v2100, %v2272
    %v2281 = vadd.f32 %v2180, %v2273
    %v2282 = vadd.f32 %v2182, %v2274
    %2283 = vset.pattern.permute.xlu0 1
    %2284 = vperm.xlu0 %2283, %v263
    %v2285 = vpop.permute.xlu0 %2284
    %v2287 = vlaneseq
    %v2288 = vshrl.u32 %v2287, 7
    %v2289 = vsub.s32 1, %v2288
    %v2290 = vrot.slane %v2186, %v2289
    %v2291 = vlaneseq
    %v2292 = vshrl.u32 %v2291, 7
    %v2293 = vsub.s32 3, %v2292
    %v2294 = vrot.slane %v2186, %v2293
    %v2295 = vlaneseq
    %v2296 = vshrl.u32 %v2295, 7
    %v2297 = vsub.s32 5, %v2296
    %v2298 = vrot.slane %v2186, %v2297
    %v2299 = vlaneseq
    %v2300 = vshrl.u32 %v2299, 7
    %v2301 = vsub.s32 7, %v2300
    %v2302 = vrot.slane %v2186, %v2301
    %v2303 = vlaneseq
    %v2304 = vshrl.u32 %v2303, 7
    %v2305 = vsub.s32 1, %v2304
    %v2306 = vrot.slane %v2187, %v2305
    %v2307 = vlaneseq
    %v2308 = vshrl.u32 %v2307, 7
    %v2309 = vsub.s32 3, %v2308
    %v2310 = vrot.slane %v2187, %v2309
    %v2311 = vlaneseq
    %v2312 = vshrl.u32 %v2311, 7
    %v2313 = vsub.s32 5, %v2312
    %v2314 = vrot.slane %v2187, %v2313
    %v2315 = vlaneseq
    %v2316 = vshrl.u32 %v2315, 7
    %v2317 = vsub.s32 7, %v2316
    %v2318 = vrot.slane %v2187, %v2317
    %v2327 = vlaneseq
    %v2328 = vshrl.u32 %v2327, 7
    %v2329 = vsub.s32 1, %v2328
    %v2330 = vrot.slane %v2290, %v2329
    %v2331 = vlaneseq
    %v2332 = vshrl.u32 %v2331, 7
    %v2333 = vsub.s32 1, %v2332
    %v2334 = vrot.slane %v2294, %v2333
    %v2335 = vlaneseq
    %v2336 = vshrl.u32 %v2335, 7
    %v2337 = vsub.s32 1, %v2336
    %v2338 = vrot.slane %v2298, %v2337
    %v2339 = vlaneseq
    %v2340 = vshrl.u32 %v2339, 7
    %v2341 = vsub.s32 1, %v2340
    %v2342 = vrot.slane %v2302, %v2341
    %v2343 = vlaneseq
    %v2344 = vshrl.u32 %v2343, 7
    %v2345 = vsub.s32 1, %v2344
    %v2346 = vrot.slane %v2306, %v2345
    %v2347 = vlaneseq
    %v2348 = vshrl.u32 %v2347, 7
    %v2349 = vsub.s32 1, %v2348
    %v2350 = vrot.slane %v2310, %v2349
    %v2351 = vlaneseq
    %v2352 = vshrl.u32 %v2351, 7
    %v2353 = vsub.s32 1, %v2352
    %v2354 = vrot.slane %v2314, %v2353
    %v2355 = vlaneseq
    %v2356 = vshrl.u32 %v2355, 7
    %v2357 = vsub.s32 1, %v2356
    %v2358 = vrot.slane %v2318, %v2357
    %v2359 = vmul.f32 %v2285, %v2330
    %v2360 = vmul.f32 %v2285, %v2334
    %v2361 = vmul.f32 %v2285, %v2338
    %v2362 = vmul.f32 %v2285, %v2342
    %v2363 = vmul.f32 %v2285, %v2346
    %v2364 = vmul.f32 %v2285, %v2350
    %v2365 = vmul.f32 %v2285, %v2354
    %v2366 = vmul.f32 %v2285, %v2358
    %v2367 = vadd.f32 %v2275, %v2359
    %v2368 = vadd.f32 %v2276, %v2360
    %v2369 = vadd.f32 %v2277, %v2361
    %v2370 = vadd.f32 %v2278, %v2362
    %v2371 = vadd.f32 %v2279, %v2363
    %v2372 = vadd.f32 %v2280, %v2364
    %v2373 = vadd.f32 %v2281, %v2365
    %v2374 = vadd.f32 %v2282, %v2366
    %v2375 = vmax.f32 %v2367, 0.0
    %v2376 = vmax.f32 %v2368, 0.0
    %v2377 = vmax.f32 %v2369, 0.0
    %v2378 = vmax.f32 %v2370, 0.0
    %v2379 = vmax.f32 %v2371, 0.0
    %v2380 = vmax.f32 %v2372, 0.0
    %v2381 = vmax.f32 %v2373, 0.0
    %v2382 = vmax.f32 %v2374, 0.0
    %v2383 = vpack.c.bf16 %v2375, %v2375
    %v2384 = vpack.c.bf16 %v2376, %v2376
    %v2385 = vpack.c.bf16 %v2377, %v2377
    %v2386 = vpack.c.bf16 %v2378, %v2378
    %v2387 = vpack.c.bf16 %v2379, %v2379
    %v2388 = vpack.c.bf16 %v2380, %v2380
    %v2389 = vpack.c.bf16 %v2381, %v2381
    %v2390 = vpack.c.bf16 %v2382, %v2382
    %v2391 = vld [vmem:[#allocation10] sm:$0xff]
    %v2392 = vld [vmem:[#allocation10 + $0x8] sm:$0xff]
    %v2393 = vld [vmem:[#allocation10 + $0x10] sm:$0xff]
    %v2394 = vld [vmem:[#allocation10 + $0x18] sm:$0xff]
    %v2395 = vld [vmem:[#allocation10 + $0x20] sm:$0xff]
    %v2396 = vld [vmem:[#allocation10 + $0x28] sm:$0xff]
    %v2397 = vld [vmem:[#allocation10 + $0x30] sm:$0xff]
    %v2398 = vld [vmem:[#allocation10 + $0x38] sm:$0xff]
    %v2399 = vld [vmem:[#allocation10 + $0x40] sm:$0xff]
    %v2400 = vld [vmem:[#allocation10 + $0x48] sm:$0xff]
    %v2401 = vld [vmem:[#allocation10 + $0x50] sm:$0xff]
    %v2402 = vld [vmem:[#allocation10 + $0x58] sm:$0xff]
    %v2403 = vld [vmem:[#allocation10 + $0x60] sm:$0xff]
    %v2404 = vld [vmem:[#allocation10 + $0x68] sm:$0xff]
    %v2405 = vld [vmem:[#allocation10 + $0x70] sm:$0xff]
    %v2406 = vld [vmem:[#allocation10 + $0x78] sm:$0xff]
    %v2407 = vld [vmem:[#allocation10 + $0x80] sm:$0xff]
    %v2408 = vld [vmem:[#allocation10 + $0x88] sm:$0xff]
    %v2409 = vld [vmem:[#allocation10 + $0x90] sm:$0xff]
    %v2410 = vld [vmem:[#allocation10 + $0x98] sm:$0xff]
    %v2411 = vld [vmem:[#allocation10 + $0xa0] sm:$0xff]
    %v2412 = vld [vmem:[#allocation10 + $0xa8] sm:$0xff]
    %v2413 = vld [vmem:[#allocation10 + $0xb0] sm:$0xff]
    %v2414 = vld [vmem:[#allocation10 + $0xb8] sm:$0xff]
    %v2415 = vld [vmem:[#allocation10 + $0xc0] sm:$0xff]
    %v2416 = vld [vmem:[#allocation10 + $0xc8] sm:$0xff]
    %v2417 = vld [vmem:[#allocation10 + $0xd0] sm:$0xff]
    %v2418 = vld [vmem:[#allocation10 + $0xd8] sm:$0xff]
    %v2419 = vld [vmem:[#allocation10 + $0xe0] sm:$0xff]
    %v2420 = vld [vmem:[#allocation10 + $0xe8] sm:$0xff]
    %v2421 = vld [vmem:[#allocation10 + $0xf0] sm:$0xff]
    %v2422 = vld [vmem:[#allocation10 + $0xf8] sm:$0xff]
    %v2423 = vld [vmem:[#allocation10 + $0x100] sm:$0xff]
    %v2424 = vld [vmem:[#allocation10 + $0x108] sm:$0xff]
    %v2425 = vld [vmem:[#allocation10 + $0x110] sm:$0xff]
    %v2426 = vld [vmem:[#allocation10 + $0x118] sm:$0xff]
    %v2427 = vld [vmem:[#allocation10 + $0x120] sm:$0xff]
    %v2428 = vld [vmem:[#allocation10 + $0x128] sm:$0xff]
    %v2429 = vld [vmem:[#allocation10 + $0x130] sm:$0xff]
    %v2430 = vld [vmem:[#allocation10 + $0x138] sm:$0xff]
    %v2431 = vld [vmem:[#allocation10 + $0x140] sm:$0xff]
    %v2432 = vld [vmem:[#allocation10 + $0x148] sm:$0xff]
    %v2433 = vld [vmem:[#allocation10 + $0x150] sm:$0xff]
    %v2434 = vld [vmem:[#allocation10 + $0x158] sm:$0xff]
    %v2435 = vld [vmem:[#allocation10 + $0x160] sm:$0xff]
    %v2436 = vld [vmem:[#allocation10 + $0x168] sm:$0xff]
    %v2437 = vld [vmem:[#allocation10 + $0x170] sm:$0xff]
    %v2438 = vld [vmem:[#allocation10 + $0x178] sm:$0xff]
    %v2439 = vld [vmem:[#allocation10 + $0x180] sm:$0xff]
    %v2440 = vld [vmem:[#allocation10 + $0x188] sm:$0xff]
    %v2441 = vld [vmem:[#allocation10 + $0x190] sm:$0xff]
    %v2442 = vld [vmem:[#allocation10 + $0x198] sm:$0xff]
    %v2443 = vld [vmem:[#allocation10 + $0x1a0] sm:$0xff]
    %v2444 = vld [vmem:[#allocation10 + $0x1a8] sm:$0xff]
    %v2445 = vld [vmem:[#allocation10 + $0x1b0] sm:$0xff]
    %v2446 = vld [vmem:[#allocation10 + $0x1b8] sm:$0xff]
    %v2447 = vld [vmem:[#allocation10 + $0x1c0] sm:$0xff]
    %v2448 = vld [vmem:[#allocation10 + $0x1c8] sm:$0xff]
    %v2449 = vld [vmem:[#allocation10 + $0x1d0] sm:$0xff]
    %v2450 = vld [vmem:[#allocation10 + $0x1d8] sm:$0xff]
    %v2451 = vld [vmem:[#allocation10 + $0x1e0] sm:$0xff]
    %v2452 = vld [vmem:[#allocation10 + $0x1e8] sm:$0xff]
    %v2453 = vld [vmem:[#allocation10 + $0x1f0] sm:$0xff]
    %v2454 = vld [vmem:[#allocation10 + $0x1f8] sm:$0xff]
    %v2455 = vld [vmem:[#allocation10 + $0x200] sm:$0xff]
    %v2456 = vld [vmem:[#allocation10 + $0x208] sm:$0xff]
    %v2457 = vld [vmem:[#allocation10 + $0x210] sm:$0xff]
    %v2458 = vld [vmem:[#allocation10 + $0x218] sm:$0xff]
    %v2459 = vld [vmem:[#allocation10 + $0x220] sm:$0xff]
    %v2460 = vld [vmem:[#allocation10 + $0x228] sm:$0xff]
    %v2461 = vld [vmem:[#allocation10 + $0x230] sm:$0xff]
    %v2462 = vld [vmem:[#allocation10 + $0x238] sm:$0xff]
    %v2463 = vld [vmem:[#allocation10 + $0x240] sm:$0xff]
    %v2464 = vld [vmem:[#allocation10 + $0x248] sm:$0xff]
    %v2465 = vld [vmem:[#allocation10 + $0x250] sm:$0xff]
    %v2466 = vld [vmem:[#allocation10 + $0x258] sm:$0xff]
    %v2467 = vld [vmem:[#allocation10 + $0x260] sm:$0xff]
    %v2468 = vld [vmem:[#allocation10 + $0x268] sm:$0xff]
    %v2469 = vld [vmem:[#allocation10 + $0x270] sm:$0xff]
    %v2470 = vld [vmem:[#allocation10 + $0x278] sm:$0xff]
    %v2471 = vld [vmem:[#allocation10 + $0x280] sm:$0xff]
    %v2472 = vld [vmem:[#allocation10 + $0x288] sm:$0xff]
    %v2473 = vld [vmem:[#allocation10 + $0x290] sm:$0xff]
    %v2474 = vld [vmem:[#allocation10 + $0x298] sm:$0xff]
    %v2475 = vld [vmem:[#allocation10 + $0x2a0] sm:$0xff]
    %v2476 = vld [vmem:[#allocation10 + $0x2a8] sm:$0xff]
    %v2477 = vld [vmem:[#allocation10 + $0x2b0] sm:$0xff]
    %v2478 = vld [vmem:[#allocation10 + $0x2b8] sm:$0xff]
    %v2479 = vld [vmem:[#allocation10 + $0x2c0] sm:$0xff]
    %v2480 = vld [vmem:[#allocation10 + $0x2c8] sm:$0xff]
    %v2481 = vld [vmem:[#allocation10 + $0x2d0] sm:$0xff]
    %v2482 = vld [vmem:[#allocation10 + $0x2d8] sm:$0xff]
    %v2483 = vld [vmem:[#allocation10 + $0x2e0] sm:$0xff]
    %v2484 = vld [vmem:[#allocation10 + $0x2e8] sm:$0xff]
    %v2485 = vld [vmem:[#allocation10 + $0x2f0] sm:$0xff]
    %v2486 = vld [vmem:[#allocation10 + $0x2f8] sm:$0xff]
    %v2487 = vld [vmem:[#allocation10 + $0x300] sm:$0xff]
    %v2488 = vld [vmem:[#allocation10 + $0x308] sm:$0xff]
    %v2489 = vld [vmem:[#allocation10 + $0x310] sm:$0xff]
    %v2490 = vld [vmem:[#allocation10 + $0x318] sm:$0xff]
    %v2491 = vld [vmem:[#allocation10 + $0x320] sm:$0xff]
    %v2492 = vld [vmem:[#allocation10 + $0x328] sm:$0xff]
    %v2493 = vld [vmem:[#allocation10 + $0x330] sm:$0xff]
    %v2494 = vld [vmem:[#allocation10 + $0x338] sm:$0xff]
    %v2495 = vld [vmem:[#allocation10 + $0x340] sm:$0xff]
    %v2496 = vld [vmem:[#allocation10 + $0x348] sm:$0xff]
    %v2497 = vld [vmem:[#allocation10 + $0x350] sm:$0xff]
    %v2498 = vld [vmem:[#allocation10 + $0x358] sm:$0xff]
    %v2499 = vld [vmem:[#allocation10 + $0x360] sm:$0xff]
    %v2500 = vld [vmem:[#allocation10 + $0x368] sm:$0xff]
    %v2501 = vld [vmem:[#allocation10 + $0x370] sm:$0xff]
    %v2502 = vld [vmem:[#allocation10 + $0x378] sm:$0xff]
    %v2503 = vld [vmem:[#allocation10 + $0x380] sm:$0xff]
    %v2504 = vld [vmem:[#allocation10 + $0x388] sm:$0xff]
    %v2505 = vld [vmem:[#allocation10 + $0x390] sm:$0xff]
    %v2506 = vld [vmem:[#allocation10 + $0x398] sm:$0xff]
    %v2507 = vld [vmem:[#allocation10 + $0x3a0] sm:$0xff]
    %v2508 = vld [vmem:[#allocation10 + $0x3a8] sm:$0xff]
    %v2509 = vld [vmem:[#allocation10 + $0x3b0] sm:$0xff]
    %v2510 = vld [vmem:[#allocation10 + $0x3b8] sm:$0xff]
    %v2511 = vld [vmem:[#allocation10 + $0x3c0] sm:$0xff]
    %v2512 = vld [vmem:[#allocation10 + $0x3c8] sm:$0xff]
    %v2513 = vld [vmem:[#allocation10 + $0x3d0] sm:$0xff]
    %v2514 = vld [vmem:[#allocation10 + $0x3d8] sm:$0xff]
    %v2515 = vld [vmem:[#allocation10 + $0x3e0] sm:$0xff]
    %v2516 = vld [vmem:[#allocation10 + $0x3e8] sm:$0xff]
    %v2517 = vld [vmem:[#allocation10 + $0x3f0] sm:$0xff]
    %v2518 = vld [vmem:[#allocation10 + $0x3f8] sm:$0xff]
    %v2519 = vld [vmem:[#allocation10 + $0x400] sm:$0xff]
    %v2520 = vld [vmem:[#allocation10 + $0x408] sm:$0xff]
    %v2521 = vld [vmem:[#allocation10 + $0x410] sm:$0xff]
    %v2522 = vld [vmem:[#allocation10 + $0x418] sm:$0xff]
    %v2523 = vld [vmem:[#allocation10 + $0x420] sm:$0xff]
    %v2524 = vld [vmem:[#allocation10 + $0x428] sm:$0xff]
    %v2525 = vld [vmem:[#allocation10 + $0x430] sm:$0xff]
    %v2526 = vld [vmem:[#allocation10 + $0x438] sm:$0xff]
    %v2527 = vld [vmem:[#allocation10 + $0x440] sm:$0xff]
    %v2528 = vld [vmem:[#allocation10 + $0x448] sm:$0xff]
    %v2529 = vld [vmem:[#allocation10 + $0x450] sm:$0xff]
    %v2530 = vld [vmem:[#allocation10 + $0x458] sm:$0xff]
    %v2531 = vld [vmem:[#allocation10 + $0x460] sm:$0xff]
    %v2532 = vld [vmem:[#allocation10 + $0x468] sm:$0xff]
    %v2533 = vld [vmem:[#allocation10 + $0x470] sm:$0xff]
    %v2534 = vld [vmem:[#allocation10 + $0x478] sm:$0xff]
    %v2535 = vld [vmem:[#allocation10 + $0x480] sm:$0xff]
    %v2536 = vld [vmem:[#allocation10 + $0x488] sm:$0xff]
    %v2537 = vld [vmem:[#allocation10 + $0x490] sm:$0xff]
    %v2538 = vld [vmem:[#allocation10 + $0x498] sm:$0xff]
    %v2539 = vld [vmem:[#allocation10 + $0x4a0] sm:$0xff]
    %v2540 = vld [vmem:[#allocation10 + $0x4a8] sm:$0xff]
    %v2541 = vld [vmem:[#allocation10 + $0x4b0] sm:$0xff]
    %v2542 = vld [vmem:[#allocation10 + $0x4b8] sm:$0xff]
    %v2543 = vld [vmem:[#allocation10 + $0x4c0] sm:$0xff]
    %v2544 = vld [vmem:[#allocation10 + $0x4c8] sm:$0xff]
    %v2545 = vld [vmem:[#allocation10 + $0x4d0] sm:$0xff]
    %v2546 = vld [vmem:[#allocation10 + $0x4d8] sm:$0xff]
    %v2547 = vld [vmem:[#allocation10 + $0x4e0] sm:$0xff]
    %v2548 = vld [vmem:[#allocation10 + $0x4e8] sm:$0xff]
    %v2549 = vld [vmem:[#allocation10 + $0x4f0] sm:$0xff]
    %v2550 = vld [vmem:[#allocation10 + $0x4f8] sm:$0xff]
    %v2551 = vld [vmem:[#allocation10 + $0x500] sm:$0xff]
    %v2552 = vld [vmem:[#allocation10 + $0x508] sm:$0xff]
    %v2553 = vld [vmem:[#allocation10 + $0x510] sm:$0xff]
    %v2554 = vld [vmem:[#allocation10 + $0x518] sm:$0xff]
    %v2555 = vld [vmem:[#allocation10 + $0x520] sm:$0xff]
    %v2556 = vld [vmem:[#allocation10 + $0x528] sm:$0xff]
    %v2557 = vld [vmem:[#allocation10 + $0x530] sm:$0xff]
    %v2558 = vld [vmem:[#allocation10 + $0x538] sm:$0xff]
    %v2559 = vld [vmem:[#allocation10 + $0x540] sm:$0xff]
    %v2560 = vld [vmem:[#allocation10 + $0x548] sm:$0xff]
    %v2561 = vld [vmem:[#allocation10 + $0x550] sm:$0xff]
    %v2562 = vld [vmem:[#allocation10 + $0x558] sm:$0xff]
    %v2563 = vld [vmem:[#allocation10 + $0x560] sm:$0xff]
    %v2564 = vld [vmem:[#allocation10 + $0x568] sm:$0xff]
    %v2565 = vld [vmem:[#allocation10 + $0x570] sm:$0xff]
    %v2566 = vld [vmem:[#allocation10 + $0x578] sm:$0xff]
    %v2567 = vld [vmem:[#allocation10 + $0x580] sm:$0xff]
    %v2568 = vld [vmem:[#allocation10 + $0x588] sm:$0xff]
    %v2569 = vld [vmem:[#allocation10 + $0x590] sm:$0xff]
    %v2570 = vld [vmem:[#allocation10 + $0x598] sm:$0xff]
    %v2571 = vld [vmem:[#allocation10 + $0x5a0] sm:$0xff]
    %v2572 = vld [vmem:[#allocation10 + $0x5a8] sm:$0xff]
    %v2573 = vld [vmem:[#allocation10 + $0x5b0] sm:$0xff]
    %v2574 = vld [vmem:[#allocation10 + $0x5b8] sm:$0xff]
    %v2575 = vld [vmem:[#allocation10 + $0x5c0] sm:$0xff]
    %v2576 = vld [vmem:[#allocation10 + $0x5c8] sm:$0xff]
    %v2577 = vld [vmem:[#allocation10 + $0x5d0] sm:$0xff]
    %v2578 = vld [vmem:[#allocation10 + $0x5d8] sm:$0xff]
    %v2579 = vld [vmem:[#allocation10 + $0x5e0] sm:$0xff]
    %v2580 = vld [vmem:[#allocation10 + $0x5e8] sm:$0xff]
    %v2581 = vld [vmem:[#allocation10 + $0x5f0] sm:$0xff]
    %v2582 = vld [vmem:[#allocation10 + $0x5f8] sm:$0xff]
    %v2583 = vld [vmem:[#allocation10 + $0x600] sm:$0xff]
    %v2584 = vld [vmem:[#allocation10 + $0x608] sm:$0xff]
    %v2585 = vld [vmem:[#allocation10 + $0x610] sm:$0xff]
    %v2586 = vld [vmem:[#allocation10 + $0x618] sm:$0xff]
    %v2587 = vld [vmem:[#allocation10 + $0x620] sm:$0xff]
    %v2588 = vld [vmem:[#allocation10 + $0x628] sm:$0xff]
    %v2589 = vld [vmem:[#allocation10 + $0x630] sm:$0xff]
    %v2590 = vld [vmem:[#allocation10 + $0x638] sm:$0xff]
    %v2591 = vld [vmem:[#allocation10 + $0x640] sm:$0xff]
    %v2592 = vld [vmem:[#allocation10 + $0x648] sm:$0xff]
    %v2593 = vld [vmem:[#allocation10 + $0x650] sm:$0xff]
    %v2594 = vld [vmem:[#allocation10 + $0x658] sm:$0xff]
    %v2595 = vld [vmem:[#allocation10 + $0x660] sm:$0xff]
    %v2596 = vld [vmem:[#allocation10 + $0x668] sm:$0xff]
    %v2597 = vld [vmem:[#allocation10 + $0x670] sm:$0xff]
    %v2598 = vld [vmem:[#allocation10 + $0x678] sm:$0xff]
    %v2599 = vld [vmem:[#allocation10 + $0x680] sm:$0xff]
    %v2600 = vld [vmem:[#allocation10 + $0x688] sm:$0xff]
    %v2601 = vld [vmem:[#allocation10 + $0x690] sm:$0xff]
    %v2602 = vld [vmem:[#allocation10 + $0x698] sm:$0xff]
    %v2603 = vld [vmem:[#allocation10 + $0x6a0] sm:$0xff]
    %v2604 = vld [vmem:[#allocation10 + $0x6a8] sm:$0xff]
    %v2605 = vld [vmem:[#allocation10 + $0x6b0] sm:$0xff]
    %v2606 = vld [vmem:[#allocation10 + $0x6b8] sm:$0xff]
    %v2607 = vld [vmem:[#allocation10 + $0x6c0] sm:$0xff]
    %v2608 = vld [vmem:[#allocation10 + $0x6c8] sm:$0xff]
    %v2609 = vld [vmem:[#allocation10 + $0x6d0] sm:$0xff]
    %v2610 = vld [vmem:[#allocation10 + $0x6d8] sm:$0xff]
    %v2611 = vld [vmem:[#allocation10 + $0x6e0] sm:$0xff]
    %v2612 = vld [vmem:[#allocation10 + $0x6e8] sm:$0xff]
    %v2613 = vld [vmem:[#allocation10 + $0x6f0] sm:$0xff]
    %v2614 = vld [vmem:[#allocation10 + $0x6f8] sm:$0xff]
    %v2615 = vld [vmem:[#allocation10 + $0x700] sm:$0xff]
    %v2616 = vld [vmem:[#allocation10 + $0x708] sm:$0xff]
    %v2617 = vld [vmem:[#allocation10 + $0x710] sm:$0xff]
    %v2618 = vld [vmem:[#allocation10 + $0x718] sm:$0xff]
    %v2619 = vld [vmem:[#allocation10 + $0x720] sm:$0xff]
    %v2620 = vld [vmem:[#allocation10 + $0x728] sm:$0xff]
    %v2621 = vld [vmem:[#allocation10 + $0x730] sm:$0xff]
    %v2622 = vld [vmem:[#allocation10 + $0x738] sm:$0xff]
    %v2623 = vld [vmem:[#allocation10 + $0x740] sm:$0xff]
    %v2624 = vld [vmem:[#allocation10 + $0x748] sm:$0xff]
    %v2625 = vld [vmem:[#allocation10 + $0x750] sm:$0xff]
    %v2626 = vld [vmem:[#allocation10 + $0x758] sm:$0xff]
    %v2627 = vld [vmem:[#allocation10 + $0x760] sm:$0xff]
    %v2628 = vld [vmem:[#allocation10 + $0x768] sm:$0xff]
    %v2629 = vld [vmem:[#allocation10 + $0x770] sm:$0xff]
    %v2630 = vld [vmem:[#allocation10 + $0x778] sm:$0xff]
    %v2631 = vld [vmem:[#allocation10 + $0x780] sm:$0xff]
    %v2632 = vld [vmem:[#allocation10 + $0x788] sm:$0xff]
    %v2633 = vld [vmem:[#allocation10 + $0x790] sm:$0xff]
    %v2634 = vld [vmem:[#allocation10 + $0x798] sm:$0xff]
    %v2635 = vld [vmem:[#allocation10 + $0x7a0] sm:$0xff]
    %v2636 = vld [vmem:[#allocation10 + $0x7a8] sm:$0xff]
    %v2637 = vld [vmem:[#allocation10 + $0x7b0] sm:$0xff]
    %v2638 = vld [vmem:[#allocation10 + $0x7b8] sm:$0xff]
    %v2639 = vld [vmem:[#allocation10 + $0x7c0] sm:$0xff]
    %v2640 = vld [vmem:[#allocation10 + $0x7c8] sm:$0xff]
    %v2641 = vld [vmem:[#allocation10 + $0x7d0] sm:$0xff]
    %v2642 = vld [vmem:[#allocation10 + $0x7d8] sm:$0xff]
    %v2643 = vld [vmem:[#allocation10 + $0x7e0] sm:$0xff]
    %v2644 = vld [vmem:[#allocation10 + $0x7e8] sm:$0xff]
    %v2645 = vld [vmem:[#allocation10 + $0x7f0] sm:$0xff]
    %v2646 = vld [vmem:[#allocation10 + $0x7f8] sm:$0xff]
    %v2647 = vld [vmem:[#allocation11] sm:$0xf]
    %v2649 = vlaneseq
    %v2650 = vshrl.u32 %v2649, 7
    %v2651 = vsub.s32 0, %v2650
    %v2652 = vrot.slane %v2647, %v2651
    %v2653 = vlaneseq
    %v2654 = vshrl.u32 %v2653, 7
    %v2655 = vsub.s32 1, %v2654
    %v2656 = vrot.slane %v2647, %v2655
    %v2657 = vlaneseq
    %v2658 = vshrl.u32 %v2657, 7
    %v2659 = vsub.s32 2, %v2658
    %v2660 = vrot.slane %v2647, %v2659
    %v2661 = vlaneseq
    %v2662 = vshrl.u32 %v2661, 7
    %v2663 = vsub.s32 3, %v2662
    %v2664 = vrot.slane %v2647, %v2663
    %v2925 = vunpack.c.l.b16 %v2391
    %v2926 = vunpack.c.h.b16 %v2391
    %v2927 = vunpack.c.l.b16 %v2392
    %v2928 = vunpack.c.h.b16 %v2392
    %v2929 = vunpack.c.l.b16 %v2393
    %v2930 = vunpack.c.h.b16 %v2393
    %v2931 = vunpack.c.l.b16 %v2394
    %v2932 = vunpack.c.h.b16 %v2394
    %v2933 = vunpack.c.l.b16 %v2395
    %v2934 = vunpack.c.h.b16 %v2395
    %v2935 = vunpack.c.l.b16 %v2396
    %v2936 = vunpack.c.h.b16 %v2396
    %v2937 = vunpack.c.l.b16 %v2397
    %v2938 = vunpack.c.h.b16 %v2397
    %v2939 = vunpack.c.l.b16 %v2398
    %v2940 = vunpack.c.h.b16 %v2398
    %v2941 = vunpack.c.l.b16 %v2399
    %v2942 = vunpack.c.h.b16 %v2399
    %v2943 = vunpack.c.l.b16 %v2400
    %v2944 = vunpack.c.h.b16 %v2400
    %v2945 = vunpack.c.l.b16 %v2401
    %v2946 = vunpack.c.h.b16 %v2401
    %v2947 = vunpack.c.l.b16 %v2402
    %v2948 = vunpack.c.h.b16 %v2402
    %v2949 = vunpack.c.l.b16 %v2403
    %v2950 = vunpack.c.h.b16 %v2403
    %v2951 = vunpack.c.l.b16 %v2404
    %v2952 = vunpack.c.h.b16 %v2404
    %v2953 = vunpack.c.l.b16 %v2405
    %v2954 = vunpack.c.h.b16 %v2405
    %v2955 = vunpack.c.l.b16 %v2406
    %v2956 = vunpack.c.h.b16 %v2406
    %v2957 = vunpack.c.l.b16 %v2407
    %v2958 = vunpack.c.h.b16 %v2407
    %v2959 = vunpack.c.l.b16 %v2408
    %v2960 = vunpack.c.h.b16 %v2408
    %v2961 = vunpack.c.l.b16 %v2409
    %v2962 = vunpack.c.h.b16 %v2409
    %v2963 = vunpack.c.l.b16 %v2410
    %v2964 = vunpack.c.h.b16 %v2410
    %v2965 = vunpack.c.l.b16 %v2411
    %v2966 = vunpack.c.h.b16 %v2411
    %v2967 = vunpack.c.l.b16 %v2412
    %v2968 = vunpack.c.h.b16 %v2412
    %v2969 = vunpack.c.l.b16 %v2413
    %v2970 = vunpack.c.h.b16 %v2413
    %v2971 = vunpack.c.l.b16 %v2414
    %v2972 = vunpack.c.h.b16 %v2414
    %v2973 = vunpack.c.l.b16 %v2415
    %v2974 = vunpack.c.h.b16 %v2415
    %v2975 = vunpack.c.l.b16 %v2416
    %v2976 = vunpack.c.h.b16 %v2416
    %v2977 = vunpack.c.l.b16 %v2417
    %v2978 = vunpack.c.h.b16 %v2417
    %v2979 = vunpack.c.l.b16 %v2418
    %v2980 = vunpack.c.h.b16 %v2418
    %v2981 = vunpack.c.l.b16 %v2419
    %v2982 = vunpack.c.h.b16 %v2419
    %v2983 = vunpack.c.l.b16 %v2420
    %v2984 = vunpack.c.h.b16 %v2420
    %v2985 = vunpack.c.l.b16 %v2421
    %v2986 = vunpack.c.h.b16 %v2421
    %v2987 = vunpack.c.l.b16 %v2422
    %v2988 = vunpack.c.h.b16 %v2422
    %v2989 = vunpack.c.l.b16 %v2423
    %v2990 = vunpack.c.h.b16 %v2423
    %v2991 = vunpack.c.l.b16 %v2424
    %v2992 = vunpack.c.h.b16 %v2424
    %v2993 = vunpack.c.l.b16 %v2425
    %v2994 = vunpack.c.h.b16 %v2425
    %v2995 = vunpack.c.l.b16 %v2426
    %v2996 = vunpack.c.h.b16 %v2426
    %v2997 = vunpack.c.l.b16 %v2427
    %v2998 = vunpack.c.h.b16 %v2427
    %v2999 = vunpack.c.l.b16 %v2428
    %v3000 = vunpack.c.h.b16 %v2428
    %v3001 = vunpack.c.l.b16 %v2429
    %v3002 = vunpack.c.h.b16 %v2429
    %v3003 = vunpack.c.l.b16 %v2430
    %v3004 = vunpack.c.h.b16 %v2430
    %v3005 = vunpack.c.l.b16 %v2431
    %v3006 = vunpack.c.h.b16 %v2431
    %v3007 = vunpack.c.l.b16 %v2432
    %v3008 = vunpack.c.h.b16 %v2432
    %v3009 = vunpack.c.l.b16 %v2433
    %v3010 = vunpack.c.h.b16 %v2433
    %v3011 = vunpack.c.l.b16 %v2434
    %v3012 = vunpack.c.h.b16 %v2434
    %v3013 = vunpack.c.l.b16 %v2435
    %v3014 = vunpack.c.h.b16 %v2435
    %v3015 = vunpack.c.l.b16 %v2436
    %v3016 = vunpack.c.h.b16 %v2436
    %v3017 = vunpack.c.l.b16 %v2437
    %v3018 = vunpack.c.h.b16 %v2437
    %v3019 = vunpack.c.l.b16 %v2438
    %v3020 = vunpack.c.h.b16 %v2438
    %v3021 = vunpack.c.l.b16 %v2439
    %v3022 = vunpack.c.h.b16 %v2439
    %v3023 = vunpack.c.l.b16 %v2440
    %v3024 = vunpack.c.h.b16 %v2440
    %v3025 = vunpack.c.l.b16 %v2441
    %v3026 = vunpack.c.h.b16 %v2441
    %v3027 = vunpack.c.l.b16 %v2442
    %v3028 = vunpack.c.h.b16 %v2442
    %v3029 = vunpack.c.l.b16 %v2443
    %v3030 = vunpack.c.h.b16 %v2443
    %v3031 = vunpack.c.l.b16 %v2444
    %v3032 = vunpack.c.h.b16 %v2444
    %v3033 = vunpack.c.l.b16 %v2445
    %v3034 = vunpack.c.h.b16 %v2445
    %v3035 = vunpack.c.l.b16 %v2446
    %v3036 = vunpack.c.h.b16 %v2446
    %v3037 = vunpack.c.l.b16 %v2447
    %v3038 = vunpack.c.h.b16 %v2447
    %v3039 = vunpack.c.l.b16 %v2448
    %v3040 = vunpack.c.h.b16 %v2448
    %v3041 = vunpack.c.l.b16 %v2449
    %v3042 = vunpack.c.h.b16 %v2449
    %v3043 = vunpack.c.l.b16 %v2450
    %v3044 = vunpack.c.h.b16 %v2450
    %v3045 = vunpack.c.l.b16 %v2451
    %v3046 = vunpack.c.h.b16 %v2451
    %v3047 = vunpack.c.l.b16 %v2452
    %v3048 = vunpack.c.h.b16 %v2452
    %v3049 = vunpack.c.l.b16 %v2453
    %v3050 = vunpack.c.h.b16 %v2453
    %v3051 = vunpack.c.l.b16 %v2454
    %v3052 = vunpack.c.h.b16 %v2454
    %v3053 = vunpack.c.l.b16 %v2455
    %v3054 = vunpack.c.h.b16 %v2455
    %v3055 = vunpack.c.l.b16 %v2456
    %v3056 = vunpack.c.h.b16 %v2456
    %v3057 = vunpack.c.l.b16 %v2457
    %v3058 = vunpack.c.h.b16 %v2457
    %v3059 = vunpack.c.l.b16 %v2458
    %v3060 = vunpack.c.h.b16 %v2458
    %v3061 = vunpack.c.l.b16 %v2459
    %v3062 = vunpack.c.h.b16 %v2459
    %v3063 = vunpack.c.l.b16 %v2460
    %v3064 = vunpack.c.h.b16 %v2460
    %v3065 = vunpack.c.l.b16 %v2461
    %v3066 = vunpack.c.h.b16 %v2461
    %v3067 = vunpack.c.l.b16 %v2462
    %v3068 = vunpack.c.h.b16 %v2462
    %v3069 = vunpack.c.l.b16 %v2463
    %v3070 = vunpack.c.h.b16 %v2463
    %v3071 = vunpack.c.l.b16 %v2464
    %v3072 = vunpack.c.h.b16 %v2464
    %v3073 = vunpack.c.l.b16 %v2465
    %v3074 = vunpack.c.h.b16 %v2465
    %v3075 = vunpack.c.l.b16 %v2466
    %v3076 = vunpack.c.h.b16 %v2466
    %v3077 = vunpack.c.l.b16 %v2467
    %v3078 = vunpack.c.h.b16 %v2467
    %v3079 = vunpack.c.l.b16 %v2468
    %v3080 = vunpack.c.h.b16 %v2468
    %v3081 = vunpack.c.l.b16 %v2469
    %v3082 = vunpack.c.h.b16 %v2469
    %v3083 = vunpack.c.l.b16 %v2470
    %v3084 = vunpack.c.h.b16 %v2470
    %v3085 = vunpack.c.l.b16 %v2471
    %v3086 = vunpack.c.h.b16 %v2471
    %v3087 = vunpack.c.l.b16 %v2472
    %v3088 = vunpack.c.h.b16 %v2472
    %v3089 = vunpack.c.l.b16 %v2473
    %v3090 = vunpack.c.h.b16 %v2473
    %v3091 = vunpack.c.l.b16 %v2474
    %v3092 = vunpack.c.h.b16 %v2474
    %v3093 = vunpack.c.l.b16 %v2475
    %v3094 = vunpack.c.h.b16 %v2475
    %v3095 = vunpack.c.l.b16 %v2476
    %v3096 = vunpack.c.h.b16 %v2476
    %v3097 = vunpack.c.l.b16 %v2477
    %v3098 = vunpack.c.h.b16 %v2477
    %v3099 = vunpack.c.l.b16 %v2478
    %v3100 = vunpack.c.h.b16 %v2478
    %v3101 = vunpack.c.l.b16 %v2479
    %v3102 = vunpack.c.h.b16 %v2479
    %v3103 = vunpack.c.l.b16 %v2480
    %v3104 = vunpack.c.h.b16 %v2480
    %v3105 = vunpack.c.l.b16 %v2481
    %v3106 = vunpack.c.h.b16 %v2481
    %v3107 = vunpack.c.l.b16 %v2482
    %v3108 = vunpack.c.h.b16 %v2482
    %v3109 = vunpack.c.l.b16 %v2483
    %v3110 = vunpack.c.h.b16 %v2483
    %v3111 = vunpack.c.l.b16 %v2484
    %v3112 = vunpack.c.h.b16 %v2484
    %v3113 = vunpack.c.l.b16 %v2485
    %v3114 = vunpack.c.h.b16 %v2485
    %v3115 = vunpack.c.l.b16 %v2486
    %v3116 = vunpack.c.h.b16 %v2486
    %v3117 = vunpack.c.l.b16 %v2487
    %v3118 = vunpack.c.h.b16 %v2487
    %v3119 = vunpack.c.l.b16 %v2488
    %v3120 = vunpack.c.h.b16 %v2488
    %v3121 = vunpack.c.l.b16 %v2489
    %v3122 = vunpack.c.h.b16 %v2489
    %v3123 = vunpack.c.l.b16 %v2490
    %v3124 = vunpack.c.h.b16 %v2490
    %v3125 = vunpack.c.l.b16 %v2491
    %v3126 = vunpack.c.h.b16 %v2491
    %v3127 = vunpack.c.l.b16 %v2492
    %v3128 = vunpack.c.h.b16 %v2492
    %v3129 = vunpack.c.l.b16 %v2493
    %v3130 = vunpack.c.h.b16 %v2493
    %v3131 = vunpack.c.l.b16 %v2494
    %v3132 = vunpack.c.h.b16 %v2494
    %v3133 = vunpack.c.l.b16 %v2495
    %v3134 = vunpack.c.h.b16 %v2495
    %v3135 = vunpack.c.l.b16 %v2496
    %v3136 = vunpack.c.h.b16 %v2496
    %v3137 = vunpack.c.l.b16 %v2497
    %v3138 = vunpack.c.h.b16 %v2497
    %v3139 = vunpack.c.l.b16 %v2498
    %v3140 = vunpack.c.h.b16 %v2498
    %v3141 = vunpack.c.l.b16 %v2499
    %v3142 = vunpack.c.h.b16 %v2499
    %v3143 = vunpack.c.l.b16 %v2500
    %v3144 = vunpack.c.h.b16 %v2500
    %v3145 = vunpack.c.l.b16 %v2501
    %v3146 = vunpack.c.h.b16 %v2501
    %v3147 = vunpack.c.l.b16 %v2502
    %v3148 = vunpack.c.h.b16 %v2502
    %v3149 = vunpack.c.l.b16 %v2503
    %v3150 = vunpack.c.h.b16 %v2503
    %v3151 = vunpack.c.l.b16 %v2504
    %v3152 = vunpack.c.h.b16 %v2504
    %v3153 = vunpack.c.l.b16 %v2505
    %v3154 = vunpack.c.h.b16 %v2505
    %v3155 = vunpack.c.l.b16 %v2506
    %v3156 = vunpack.c.h.b16 %v2506
    %v3157 = vunpack.c.l.b16 %v2507
    %v3158 = vunpack.c.h.b16 %v2507
    %v3159 = vunpack.c.l.b16 %v2508
    %v3160 = vunpack.c.h.b16 %v2508
    %v3161 = vunpack.c.l.b16 %v2509
    %v3162 = vunpack.c.h.b16 %v2509
    %v3163 = vunpack.c.l.b16 %v2510
    %v3164 = vunpack.c.h.b16 %v2510
    %v3165 = vunpack.c.l.b16 %v2511
    %v3166 = vunpack.c.h.b16 %v2511
    %v3167 = vunpack.c.l.b16 %v2512
    %v3168 = vunpack.c.h.b16 %v2512
    %v3169 = vunpack.c.l.b16 %v2513
    %v3170 = vunpack.c.h.b16 %v2513
    %v3171 = vunpack.c.l.b16 %v2514
    %v3172 = vunpack.c.h.b16 %v2514
    %v3173 = vunpack.c.l.b16 %v2515
    %v3174 = vunpack.c.h.b16 %v2515
    %v3175 = vunpack.c.l.b16 %v2516
    %v3176 = vunpack.c.h.b16 %v2516
    %v3177 = vunpack.c.l.b16 %v2517
    %v3178 = vunpack.c.h.b16 %v2517
    %v3179 = vunpack.c.l.b16 %v2518
    %v3180 = vunpack.c.h.b16 %v2518
    %v3181 = vunpack.c.l.b16 %v2519
    %v3182 = vunpack.c.h.b16 %v2519
    %v3183 = vunpack.c.l.b16 %v2520
    %v3184 = vunpack.c.h.b16 %v2520
    %v3185 = vunpack.c.l.b16 %v2521
    %v3186 = vunpack.c.h.b16 %v2521
    %v3187 = vunpack.c.l.b16 %v2522
    %v3188 = vunpack.c.h.b16 %v2522
    %v3189 = vunpack.c.l.b16 %v2523
    %v3190 = vunpack.c.h.b16 %v2523
    %v3191 = vunpack.c.l.b16 %v2524
    %v3192 = vunpack.c.h.b16 %v2524
    %v3193 = vunpack.c.l.b16 %v2525
    %v3194 = vunpack.c.h.b16 %v2525
    %v3195 = vunpack.c.l.b16 %v2526
    %v3196 = vunpack.c.h.b16 %v2526
    %v3197 = vunpack.c.l.b16 %v2527
    %v3198 = vunpack.c.h.b16 %v2527
    %v3199 = vunpack.c.l.b16 %v2528
    %v3200 = vunpack.c.h.b16 %v2528
    %v3201 = vunpack.c.l.b16 %v2529
    %v3202 = vunpack.c.h.b16 %v2529
    %v3203 = vunpack.c.l.b16 %v2530
    %v3204 = vunpack.c.h.b16 %v2530
    %v3205 = vunpack.c.l.b16 %v2531
    %v3206 = vunpack.c.h.b16 %v2531
    %v3207 = vunpack.c.l.b16 %v2532
    %v3208 = vunpack.c.h.b16 %v2532
    %v3209 = vunpack.c.l.b16 %v2533
    %v3210 = vunpack.c.h.b16 %v2533
    %v3211 = vunpack.c.l.b16 %v2534
    %v3212 = vunpack.c.h.b16 %v2534
    %v3213 = vunpack.c.l.b16 %v2535
    %v3214 = vunpack.c.h.b16 %v2535
    %v3215 = vunpack.c.l.b16 %v2536
    %v3216 = vunpack.c.h.b16 %v2536
    %v3217 = vunpack.c.l.b16 %v2537
    %v3218 = vunpack.c.h.b16 %v2537
    %v3219 = vunpack.c.l.b16 %v2538
    %v3220 = vunpack.c.h.b16 %v2538
    %v3221 = vunpack.c.l.b16 %v2539
    %v3222 = vunpack.c.h.b16 %v2539
    %v3223 = vunpack.c.l.b16 %v2540
    %v3224 = vunpack.c.h.b16 %v2540
    %v3225 = vunpack.c.l.b16 %v2541
    %v3226 = vunpack.c.h.b16 %v2541
    %v3227 = vunpack.c.l.b16 %v2542
    %v3228 = vunpack.c.h.b16 %v2542
    %v3229 = vunpack.c.l.b16 %v2543
    %v3230 = vunpack.c.h.b16 %v2543
    %v3231 = vunpack.c.l.b16 %v2544
    %v3232 = vunpack.c.h.b16 %v2544
    %v3233 = vunpack.c.l.b16 %v2545
    %v3234 = vunpack.c.h.b16 %v2545
    %v3235 = vunpack.c.l.b16 %v2546
    %v3236 = vunpack.c.h.b16 %v2546
    %v3237 = vunpack.c.l.b16 %v2547
    %v3238 = vunpack.c.h.b16 %v2547
    %v3239 = vunpack.c.l.b16 %v2548
    %v3240 = vunpack.c.h.b16 %v2548
    %v3241 = vunpack.c.l.b16 %v2549
    %v3242 = vunpack.c.h.b16 %v2549
    %v3243 = vunpack.c.l.b16 %v2550
    %v3244 = vunpack.c.h.b16 %v2550
    %v3245 = vunpack.c.l.b16 %v2551
    %v3246 = vunpack.c.h.b16 %v2551
    %v3247 = vunpack.c.l.b16 %v2552
    %v3248 = vunpack.c.h.b16 %v2552
    %v3249 = vunpack.c.l.b16 %v2553
    %v3250 = vunpack.c.h.b16 %v2553
    %v3251 = vunpack.c.l.b16 %v2554
    %v3252 = vunpack.c.h.b16 %v2554
    %v3253 = vunpack.c.l.b16 %v2555
    %v3254 = vunpack.c.h.b16 %v2555
    %v3255 = vunpack.c.l.b16 %v2556
    %v3256 = vunpack.c.h.b16 %v2556
    %v3257 = vunpack.c.l.b16 %v2557
    %v3258 = vunpack.c.h.b16 %v2557
    %v3259 = vunpack.c.l.b16 %v2558
    %v3260 = vunpack.c.h.b16 %v2558
    %v3261 = vunpack.c.l.b16 %v2559
    %v3262 = vunpack.c.h.b16 %v2559
    %v3263 = vunpack.c.l.b16 %v2560
    %v3264 = vunpack.c.h.b16 %v2560
    %v3265 = vunpack.c.l.b16 %v2561
    %v3266 = vunpack.c.h.b16 %v2561
    %v3267 = vunpack.c.l.b16 %v2562
    %v3268 = vunpack.c.h.b16 %v2562
    %v3269 = vunpack.c.l.b16 %v2563
    %v3270 = vunpack.c.h.b16 %v2563
    %v3271 = vunpack.c.l.b16 %v2564
    %v3272 = vunpack.c.h.b16 %v2564
    %v3273 = vunpack.c.l.b16 %v2565
    %v3274 = vunpack.c.h.b16 %v2565
    %v3275 = vunpack.c.l.b16 %v2566
    %v3276 = vunpack.c.h.b16 %v2566
    %v3277 = vunpack.c.l.b16 %v2567
    %v3278 = vunpack.c.h.b16 %v2567
    %v3279 = vunpack.c.l.b16 %v2568
    %v3280 = vunpack.c.h.b16 %v2568
    %v3281 = vunpack.c.l.b16 %v2569
    %v3282 = vunpack.c.h.b16 %v2569
    %v3283 = vunpack.c.l.b16 %v2570
    %v3284 = vunpack.c.h.b16 %v2570
    %v3285 = vunpack.c.l.b16 %v2571
    %v3286 = vunpack.c.h.b16 %v2571
    %v3287 = vunpack.c.l.b16 %v2572
    %v3288 = vunpack.c.h.b16 %v2572
    %v3289 = vunpack.c.l.b16 %v2573
    %v3290 = vunpack.c.h.b16 %v2573
    %v3291 = vunpack.c.l.b16 %v2574
    %v3292 = vunpack.c.h.b16 %v2574
    %v3293 = vunpack.c.l.b16 %v2575
    %v3294 = vunpack.c.h.b16 %v2575
    %v3295 = vunpack.c.l.b16 %v2576
    %v3296 = vunpack.c.h.b16 %v2576
    %v3297 = vunpack.c.l.b16 %v2577
    %v3298 = vunpack.c.h.b16 %v2577
    %v3299 = vunpack.c.l.b16 %v2578
    %v3300 = vunpack.c.h.b16 %v2578
    %v3301 = vunpack.c.l.b16 %v2579
    %v3302 = vunpack.c.h.b16 %v2579
    %v3303 = vunpack.c.l.b16 %v2580
    %v3304 = vunpack.c.h.b16 %v2580
    %v3305 = vunpack.c.l.b16 %v2581
    %v3306 = vunpack.c.h.b16 %v2581
    %v3307 = vunpack.c.l.b16 %v2582
    %v3308 = vunpack.c.h.b16 %v2582
    %v3309 = vunpack.c.l.b16 %v2583
    %v3310 = vunpack.c.h.b16 %v2583
    %v3311 = vunpack.c.l.b16 %v2584
    %v3312 = vunpack.c.h.b16 %v2584
    %v3313 = vunpack.c.l.b16 %v2585
    %v3314 = vunpack.c.h.b16 %v2585
    %v3315 = vunpack.c.l.b16 %v2586
    %v3316 = vunpack.c.h.b16 %v2586
    %v3317 = vunpack.c.l.b16 %v2587
    %v3318 = vunpack.c.h.b16 %v2587
    %v3319 = vunpack.c.l.b16 %v2588
    %v3320 = vunpack.c.h.b16 %v2588
    %v3321 = vunpack.c.l.b16 %v2589
    %v3322 = vunpack.c.h.b16 %v2589
    %v3323 = vunpack.c.l.b16 %v2590
    %v3324 = vunpack.c.h.b16 %v2590
    %v3325 = vunpack.c.l.b16 %v2591
    %v3326 = vunpack.c.h.b16 %v2591
    %v3327 = vunpack.c.l.b16 %v2592
    %v3328 = vunpack.c.h.b16 %v2592
    %v3329 = vunpack.c.l.b16 %v2593
    %v3330 = vunpack.c.h.b16 %v2593
    %v3331 = vunpack.c.l.b16 %v2594
    %v3332 = vunpack.c.h.b16 %v2594
    %v3333 = vunpack.c.l.b16 %v2595
    %v3334 = vunpack.c.h.b16 %v2595
    %v3335 = vunpack.c.l.b16 %v2596
    %v3336 = vunpack.c.h.b16 %v2596
    %v3337 = vunpack.c.l.b16 %v2597
    %v3338 = vunpack.c.h.b16 %v2597
    %v3339 = vunpack.c.l.b16 %v2598
    %v3340 = vunpack.c.h.b16 %v2598
    %v3341 = vunpack.c.l.b16 %v2599
    %v3342 = vunpack.c.h.b16 %v2599
    %v3343 = vunpack.c.l.b16 %v2600
    %v3344 = vunpack.c.h.b16 %v2600
    %v3345 = vunpack.c.l.b16 %v2601
    %v3346 = vunpack.c.h.b16 %v2601
    %v3347 = vunpack.c.l.b16 %v2602
    %v3348 = vunpack.c.h.b16 %v2602
    %v3349 = vunpack.c.l.b16 %v2603
    %v3350 = vunpack.c.h.b16 %v2603
    %v3351 = vunpack.c.l.b16 %v2604
    %v3352 = vunpack.c.h.b16 %v2604
    %v3353 = vunpack.c.l.b16 %v2605
    %v3354 = vunpack.c.h.b16 %v2605
    %v3355 = vunpack.c.l.b16 %v2606
    %v3356 = vunpack.c.h.b16 %v2606
    %v3357 = vunpack.c.l.b16 %v2607
    %v3358 = vunpack.c.h.b16 %v2607
    %v3359 = vunpack.c.l.b16 %v2608
    %v3360 = vunpack.c.h.b16 %v2608
    %v3361 = vunpack.c.l.b16 %v2609
    %v3362 = vunpack.c.h.b16 %v2609
    %v3363 = vunpack.c.l.b16 %v2610
    %v3364 = vunpack.c.h.b16 %v2610
    %v3365 = vunpack.c.l.b16 %v2611
    %v3366 = vunpack.c.h.b16 %v2611
    %v3367 = vunpack.c.l.b16 %v2612
    %v3368 = vunpack.c.h.b16 %v2612
    %v3369 = vunpack.c.l.b16 %v2613
    %v3370 = vunpack.c.h.b16 %v2613
    %v3371 = vunpack.c.l.b16 %v2614
    %v3372 = vunpack.c.h.b16 %v2614
    %v3373 = vunpack.c.l.b16 %v2615
    %v3374 = vunpack.c.h.b16 %v2615
    %v3375 = vunpack.c.l.b16 %v2616
    %v3376 = vunpack.c.h.b16 %v2616
    %v3377 = vunpack.c.l.b16 %v2617
    %v3378 = vunpack.c.h.b16 %v2617
    %v3379 = vunpack.c.l.b16 %v2618
    %v3380 = vunpack.c.h.b16 %v2618
    %v3381 = vunpack.c.l.b16 %v2619
    %v3382 = vunpack.c.h.b16 %v2619
    %v3383 = vunpack.c.l.b16 %v2620
    %v3384 = vunpack.c.h.b16 %v2620
    %v3385 = vunpack.c.l.b16 %v2621
    %v3386 = vunpack.c.h.b16 %v2621
    %v3387 = vunpack.c.l.b16 %v2622
    %v3388 = vunpack.c.h.b16 %v2622
    %v3389 = vunpack.c.l.b16 %v2623
    %v3390 = vunpack.c.h.b16 %v2623
    %v3391 = vunpack.c.l.b16 %v2624
    %v3392 = vunpack.c.h.b16 %v2624
    %v3393 = vunpack.c.l.b16 %v2625
    %v3394 = vunpack.c.h.b16 %v2625
    %v3395 = vunpack.c.l.b16 %v2626
    %v3396 = vunpack.c.h.b16 %v2626
    %v3397 = vunpack.c.l.b16 %v2627
    %v3398 = vunpack.c.h.b16 %v2627
    %v3399 = vunpack.c.l.b16 %v2628
    %v3400 = vunpack.c.h.b16 %v2628
    %v3401 = vunpack.c.l.b16 %v2629
    %v3402 = vunpack.c.h.b16 %v2629
    %v3403 = vunpack.c.l.b16 %v2630
    %v3404 = vunpack.c.h.b16 %v2630
    %v3405 = vunpack.c.l.b16 %v2631
    %v3406 = vunpack.c.h.b16 %v2631
    %v3407 = vunpack.c.l.b16 %v2632
    %v3408 = vunpack.c.h.b16 %v2632
    %v3409 = vunpack.c.l.b16 %v2633
    %v3410 = vunpack.c.h.b16 %v2633
    %v3411 = vunpack.c.l.b16 %v2634
    %v3412 = vunpack.c.h.b16 %v2634
    %v3413 = vunpack.c.l.b16 %v2635
    %v3414 = vunpack.c.h.b16 %v2635
    %v3415 = vunpack.c.l.b16 %v2636
    %v3416 = vunpack.c.h.b16 %v2636
    %v3417 = vunpack.c.l.b16 %v2637
    %v3418 = vunpack.c.h.b16 %v2637
    %v3419 = vunpack.c.l.b16 %v2638
    %v3420 = vunpack.c.h.b16 %v2638
    %v3421 = vunpack.c.l.b16 %v2639
    %v3422 = vunpack.c.h.b16 %v2639
    %v3423 = vunpack.c.l.b16 %v2640
    %v3424 = vunpack.c.h.b16 %v2640
    %v3425 = vunpack.c.l.b16 %v2641
    %v3426 = vunpack.c.h.b16 %v2641
    %v3427 = vunpack.c.l.b16 %v2642
    %v3428 = vunpack.c.h.b16 %v2642
    %v3429 = vunpack.c.l.b16 %v2643
    %v3430 = vunpack.c.h.b16 %v2643
    %v3431 = vunpack.c.l.b16 %v2644
    %v3432 = vunpack.c.h.b16 %v2644
    %v3433 = vunpack.c.l.b16 %v2645
    %v3434 = vunpack.c.h.b16 %v2645
    %v3435 = vunpack.c.l.b16 %v2646
    %v3436 = vunpack.c.h.b16 %v2646
    %v3437 = vpack.c.b16 %v2929, %v2925
    %v3438 = vpack.c.b16 %v2930, %v2926
    %v3439 = vpack.c.b16 %v2931, %v2927
    %v3440 = vpack.c.b16 %v2932, %v2928
    %v3441 = vpack.c.b16 %v2937, %v2933
    %v3442 = vpack.c.b16 %v2938, %v2934
    %v3443 = vpack.c.b16 %v2939, %v2935
    %v3444 = vpack.c.b16 %v2940, %v2936
    %v3445 = vpack.c.b16 %v2945, %v2941
    %v3446 = vpack.c.b16 %v2946, %v2942
    %v3447 = vpack.c.b16 %v2947, %v2943
    %v3448 = vpack.c.b16 %v2948, %v2944
    %v3449 = vpack.c.b16 %v2953, %v2949
    %v3450 = vpack.c.b16 %v2954, %v2950
    %v3451 = vpack.c.b16 %v2955, %v2951
    %v3452 = vpack.c.b16 %v2956, %v2952
    %v3453 = vpack.c.b16 %v2961, %v2957
    %v3454 = vpack.c.b16 %v2962, %v2958
    %v3455 = vpack.c.b16 %v2963, %v2959
    %v3456 = vpack.c.b16 %v2964, %v2960
    %v3457 = vpack.c.b16 %v2969, %v2965
    %v3458 = vpack.c.b16 %v2970, %v2966
    %v3459 = vpack.c.b16 %v2971, %v2967
    %v3460 = vpack.c.b16 %v2972, %v2968
    %v3461 = vpack.c.b16 %v2977, %v2973
    %v3462 = vpack.c.b16 %v2978, %v2974
    %v3463 = vpack.c.b16 %v2979, %v2975
    %v3464 = vpack.c.b16 %v2980, %v2976
    %v3465 = vpack.c.b16 %v2985, %v2981
    %v3466 = vpack.c.b16 %v2986, %v2982
    %v3467 = vpack.c.b16 %v2987, %v2983
    %v3468 = vpack.c.b16 %v2988, %v2984
    %v3469 = vpack.c.b16 %v2993, %v2989
    %v3470 = vpack.c.b16 %v2994, %v2990
    %v3471 = vpack.c.b16 %v2995, %v2991
    %v3472 = vpack.c.b16 %v2996, %v2992
    %v3473 = vpack.c.b16 %v3001, %v2997
    %v3474 = vpack.c.b16 %v3002, %v2998
    %v3475 = vpack.c.b16 %v3003, %v2999
    %v3476 = vpack.c.b16 %v3004, %v3000
    %v3477 = vpack.c.b16 %v3009, %v3005
    %v3478 = vpack.c.b16 %v3010, %v3006
    %v3479 = vpack.c.b16 %v3011, %v3007
    %v3480 = vpack.c.b16 %v3012, %v3008
    %v3481 = vpack.c.b16 %v3017, %v3013
    %v3482 = vpack.c.b16 %v3018, %v3014
    %v3483 = vpack.c.b16 %v3019, %v3015
    %v3484 = vpack.c.b16 %v3020, %v3016
    %v3485 = vpack.c.b16 %v3025, %v3021
    %v3486 = vpack.c.b16 %v3026, %v3022
    %v3487 = vpack.c.b16 %v3027, %v3023
    %v3488 = vpack.c.b16 %v3028, %v3024
    %v3489 = vpack.c.b16 %v3033, %v3029
    %v3490 = vpack.c.b16 %v3034, %v3030
    %v3491 = vpack.c.b16 %v3035, %v3031
    %v3492 = vpack.c.b16 %v3036, %v3032
    %v3493 = vpack.c.b16 %v3041, %v3037
    %v3494 = vpack.c.b16 %v3042, %v3038
    %v3495 = vpack.c.b16 %v3043, %v3039
    %v3496 = vpack.c.b16 %v3044, %v3040
    %v3497 = vpack.c.b16 %v3049, %v3045
    %v3498 = vpack.c.b16 %v3050, %v3046
    %v3499 = vpack.c.b16 %v3051, %v3047
    %v3500 = vpack.c.b16 %v3052, %v3048
    %v3501 = vpack.c.b16 %v3057, %v3053
    %v3502 = vpack.c.b16 %v3058, %v3054
    %v3503 = vpack.c.b16 %v3059, %v3055
    %v3504 = vpack.c.b16 %v3060, %v3056
    %v3505 = vpack.c.b16 %v3065, %v3061
    %v3506 = vpack.c.b16 %v3066, %v3062
    %v3507 = vpack.c.b16 %v3067, %v3063
    %v3508 = vpack.c.b16 %v3068, %v3064
    %v3509 = vpack.c.b16 %v3073, %v3069
    %v3510 = vpack.c.b16 %v3074, %v3070
    %v3511 = vpack.c.b16 %v3075, %v3071
    %v3512 = vpack.c.b16 %v3076, %v3072
    %v3513 = vpack.c.b16 %v3081, %v3077
    %v3514 = vpack.c.b16 %v3082, %v3078
    %v3515 = vpack.c.b16 %v3083, %v3079
    %v3516 = vpack.c.b16 %v3084, %v3080
    %v3517 = vpack.c.b16 %v3089, %v3085
    %v3518 = vpack.c.b16 %v3090, %v3086
    %v3519 = vpack.c.b16 %v3091, %v3087
    %v3520 = vpack.c.b16 %v3092, %v3088
    %v3521 = vpack.c.b16 %v3097, %v3093
    %v3522 = vpack.c.b16 %v3098, %v3094
    %v3523 = vpack.c.b16 %v3099, %v3095
    %v3524 = vpack.c.b16 %v3100, %v3096
    %v3525 = vpack.c.b16 %v3105, %v3101
    %v3526 = vpack.c.b16 %v3106, %v3102
    %v3527 = vpack.c.b16 %v3107, %v3103
    %v3528 = vpack.c.b16 %v3108, %v3104
    %v3529 = vpack.c.b16 %v3113, %v3109
    %v3530 = vpack.c.b16 %v3114, %v3110
    %v3531 = vpack.c.b16 %v3115, %v3111
    %v3532 = vpack.c.b16 %v3116, %v3112
    %v3533 = vpack.c.b16 %v3121, %v3117
    %v3534 = vpack.c.b16 %v3122, %v3118
    %v3535 = vpack.c.b16 %v3123, %v3119
    %v3536 = vpack.c.b16 %v3124, %v3120
    %v3537 = vpack.c.b16 %v3129, %v3125
    %v3538 = vpack.c.b16 %v3130, %v3126
    %v3539 = vpack.c.b16 %v3131, %v3127
    %v3540 = vpack.c.b16 %v3132, %v3128
    %v3541 = vpack.c.b16 %v3137, %v3133
    %v3542 = vpack.c.b16 %v3138, %v3134
    %v3543 = vpack.c.b16 %v3139, %v3135
    %v3544 = vpack.c.b16 %v3140, %v3136
    %v3545 = vpack.c.b16 %v3145, %v3141
    %v3546 = vpack.c.b16 %v3146, %v3142
    %v3547 = vpack.c.b16 %v3147, %v3143
    %v3548 = vpack.c.b16 %v3148, %v3144
    %v3549 = vpack.c.b16 %v3153, %v3149
    %v3550 = vpack.c.b16 %v3154, %v3150
    %v3551 = vpack.c.b16 %v3155, %v3151
    %v3552 = vpack.c.b16 %v3156, %v3152
    %v3553 = vpack.c.b16 %v3161, %v3157
    %v3554 = vpack.c.b16 %v3162, %v3158
    %v3555 = vpack.c.b16 %v3163, %v3159
    %v3556 = vpack.c.b16 %v3164, %v3160
    %v3557 = vpack.c.b16 %v3169, %v3165
    %v3558 = vpack.c.b16 %v3170, %v3166
    %v3559 = vpack.c.b16 %v3171, %v3167
    %v3560 = vpack.c.b16 %v3172, %v3168
    %v3561 = vpack.c.b16 %v3177, %v3173
    %v3562 = vpack.c.b16 %v3178, %v3174
    %v3563 = vpack.c.b16 %v3179, %v3175
    %v3564 = vpack.c.b16 %v3180, %v3176
    %v3565 = vpack.c.b16 %v3185, %v3181
    %v3566 = vpack.c.b16 %v3186, %v3182
    %v3567 = vpack.c.b16 %v3187, %v3183
    %v3568 = vpack.c.b16 %v3188, %v3184
    %v3569 = vpack.c.b16 %v3193, %v3189
    %v3570 = vpack.c.b16 %v3194, %v3190
    %v3571 = vpack.c.b16 %v3195, %v3191
    %v3572 = vpack.c.b16 %v3196, %v3192
    %v3573 = vpack.c.b16 %v3201, %v3197
    %v3574 = vpack.c.b16 %v3202, %v3198
    %v3575 = vpack.c.b16 %v3203, %v3199
    %v3576 = vpack.c.b16 %v3204, %v3200
    %v3577 = vpack.c.b16 %v3209, %v3205
    %v3578 = vpack.c.b16 %v3210, %v3206
    %v3579 = vpack.c.b16 %v3211, %v3207
    %v3580 = vpack.c.b16 %v3212, %v3208
    %v3581 = vpack.c.b16 %v3217, %v3213
    %v3582 = vpack.c.b16 %v3218, %v3214
    %v3583 = vpack.c.b16 %v3219, %v3215
    %v3584 = vpack.c.b16 %v3220, %v3216
    %v3585 = vpack.c.b16 %v3225, %v3221
    %v3586 = vpack.c.b16 %v3226, %v3222
    %v3587 = vpack.c.b16 %v3227, %v3223
    %v3588 = vpack.c.b16 %v3228, %v3224
    %v3589 = vpack.c.b16 %v3233, %v3229
    %v3590 = vpack.c.b16 %v3234, %v3230
    %v3591 = vpack.c.b16 %v3235, %v3231
    %v3592 = vpack.c.b16 %v3236, %v3232
    %v3593 = vpack.c.b16 %v3241, %v3237
    %v3594 = vpack.c.b16 %v3242, %v3238
    %v3595 = vpack.c.b16 %v3243, %v3239
    %v3596 = vpack.c.b16 %v3244, %v3240
    %v3597 = vpack.c.b16 %v3249, %v3245
    %v3598 = vpack.c.b16 %v3250, %v3246
    %v3599 = vpack.c.b16 %v3251, %v3247
    %v3600 = vpack.c.b16 %v3252, %v3248
    %v3601 = vpack.c.b16 %v3257, %v3253
    %v3602 = vpack.c.b16 %v3258, %v3254
    %v3603 = vpack.c.b16 %v3259, %v3255
    %v3604 = vpack.c.b16 %v3260, %v3256
    %v3605 = vpack.c.b16 %v3265, %v3261
    %v3606 = vpack.c.b16 %v3266, %v3262
    %v3607 = vpack.c.b16 %v3267, %v3263
    %v3608 = vpack.c.b16 %v3268, %v3264
    %v3609 = vpack.c.b16 %v3273, %v3269
    %v3610 = vpack.c.b16 %v3274, %v3270
    %v3611 = vpack.c.b16 %v3275, %v3271
    %v3612 = vpack.c.b16 %v3276, %v3272
    %v3613 = vpack.c.b16 %v3281, %v3277
    %v3614 = vpack.c.b16 %v3282, %v3278
    %v3615 = vpack.c.b16 %v3283, %v3279
    %v3616 = vpack.c.b16 %v3284, %v3280
    %v3617 = vpack.c.b16 %v3289, %v3285
    %v3618 = vpack.c.b16 %v3290, %v3286
    %v3619 = vpack.c.b16 %v3291, %v3287
    %v3620 = vpack.c.b16 %v3292, %v3288
    %v3621 = vpack.c.b16 %v3297, %v3293
    %v3622 = vpack.c.b16 %v3298, %v3294
    %v3623 = vpack.c.b16 %v3299, %v3295
    %v3624 = vpack.c.b16 %v3300, %v3296
    %v3625 = vpack.c.b16 %v3305, %v3301
    %v3626 = vpack.c.b16 %v3306, %v3302
    %v3627 = vpack.c.b16 %v3307, %v3303
    %v3628 = vpack.c.b16 %v3308, %v3304
    %v3629 = vpack.c.b16 %v3313, %v3309
    %v3630 = vpack.c.b16 %v3314, %v3310
    %v3631 = vpack.c.b16 %v3315, %v3311
    %v3632 = vpack.c.b16 %v3316, %v3312
    %v3633 = vpack.c.b16 %v3321, %v3317
    %v3634 = vpack.c.b16 %v3322, %v3318
    %v3635 = vpack.c.b16 %v3323, %v3319
    %v3636 = vpack.c.b16 %v3324, %v3320
    %v3637 = vpack.c.b16 %v3329, %v3325
    %v3638 = vpack.c.b16 %v3330, %v3326
    %v3639 = vpack.c.b16 %v3331, %v3327
    %v3640 = vpack.c.b16 %v3332, %v3328
    %v3641 = vpack.c.b16 %v3337, %v3333
    %v3642 = vpack.c.b16 %v3338, %v3334
    %v3643 = vpack.c.b16 %v3339, %v3335
    %v3644 = vpack.c.b16 %v3340, %v3336
    %v3645 = vpack.c.b16 %v3345, %v3341
    %v3646 = vpack.c.b16 %v3346, %v3342
    %v3647 = vpack.c.b16 %v3347, %v3343
    %v3648 = vpack.c.b16 %v3348, %v3344
    %v3649 = vpack.c.b16 %v3353, %v3349
    %v3650 = vpack.c.b16 %v3354, %v3350
    %v3651 = vpack.c.b16 %v3355, %v3351
    %v3652 = vpack.c.b16 %v3356, %v3352
    %v3653 = vpack.c.b16 %v3361, %v3357
    %v3654 = vpack.c.b16 %v3362, %v3358
    %v3655 = vpack.c.b16 %v3363, %v3359
    %v3656 = vpack.c.b16 %v3364, %v3360
    %v3657 = vpack.c.b16 %v3369, %v3365
    %v3658 = vpack.c.b16 %v3370, %v3366
    %v3659 = vpack.c.b16 %v3371, %v3367
    %v3660 = vpack.c.b16 %v3372, %v3368
    %v3661 = vpack.c.b16 %v3377, %v3373
    %v3662 = vpack.c.b16 %v3378, %v3374
    %v3663 = vpack.c.b16 %v3379, %v3375
    %v3664 = vpack.c.b16 %v3380, %v3376
    %v3665 = vpack.c.b16 %v3385, %v3381
    %v3666 = vpack.c.b16 %v3386, %v3382
    %v3667 = vpack.c.b16 %v3387, %v3383
    %v3668 = vpack.c.b16 %v3388, %v3384
    %v3669 = vpack.c.b16 %v3393, %v3389
    %v3670 = vpack.c.b16 %v3394, %v3390
    %v3671 = vpack.c.b16 %v3395, %v3391
    %v3672 = vpack.c.b16 %v3396, %v3392
    %v3673 = vpack.c.b16 %v3401, %v3397
    %v3674 = vpack.c.b16 %v3402, %v3398
    %v3675 = vpack.c.b16 %v3403, %v3399
    %v3676 = vpack.c.b16 %v3404, %v3400
    %v3677 = vpack.c.b16 %v3409, %v3405
    %v3678 = vpack.c.b16 %v3410, %v3406
    %v3679 = vpack.c.b16 %v3411, %v3407
    %v3680 = vpack.c.b16 %v3412, %v3408
    %v3681 = vpack.c.b16 %v3417, %v3413
    %v3682 = vpack.c.b16 %v3418, %v3414
    %v3683 = vpack.c.b16 %v3419, %v3415
    %v3684 = vpack.c.b16 %v3420, %v3416
    %v3685 = vpack.c.b16 %v3425, %v3421
    %v3686 = vpack.c.b16 %v3426, %v3422
    %v3687 = vpack.c.b16 %v3427, %v3423
    %v3688 = vpack.c.b16 %v3428, %v3424
    %v3689 = vpack.c.b16 %v3433, %v3429
    %v3690 = vpack.c.b16 %v3434, %v3430
    %v3691 = vpack.c.b16 %v3435, %v3431
    %v3692 = vpack.c.b16 %v3436, %v3432
    %3949 = vmatprep.subr.bf16.mxu0 %v3466
    %3950 = vmatpush1.bf16.msra.mxu0 %v3465
    %3951 = vmatprep.subr.bf16.mxu0 %v3462
    %3952 = vmatpush1.bf16.msra.mxu0 %v3461
    %3953 = vmatprep.subr.bf16.mxu0 %v3458
    %3954 = vmatpush1.bf16.msra.mxu0 %v3457
    %3955 = vmatprep.subr.bf16.mxu0 %v3454
    %3956 = vmatpush1.bf16.msra.mxu0 %v3453
    %3957 = vmatprep.subr.bf16.mxu0 %v3450
    %3958 = vmatpush1.bf16.msra.mxu0 %v3449
    %3959 = vmatprep.subr.bf16.mxu0 %v3446
    %3960 = vmatpush1.bf16.msra.mxu0 %v3445
    %3961 = vmatprep.subr.bf16.mxu0 %v3442
    %3962 = vmatpush1.bf16.msra.mxu0 %v3441
    %3963 = vmatprep.subr.bf16.mxu0 %v3438
    %3964 = vmatpush1.bf16.msra.mxu0 %v3437
    %3965 = vmatprep.subr.bf16.mxu0 %v3498
    %3966 = vmatpush2.bf16.msra.mxu0 %v3497
    %3967 = vmatprep.subr.bf16.mxu0 %v3494
    %3968 = vmatpush2.bf16.msra.mxu0 %v3493
    %3969 = vmatprep.subr.bf16.mxu0 %v3490
    %3970 = vmatpush2.bf16.msra.mxu0 %v3489
    %3971 = vmatprep.subr.bf16.mxu0 %v3486
    %3972 = vmatpush2.bf16.msra.mxu0 %v3485
    %3973 = vmatprep.subr.bf16.mxu0 %v3482
    %3974 = vmatpush2.bf16.msra.mxu0 %v3481
    %3975 = vmatprep.subr.bf16.mxu0 %v3478
    %3976 = vmatpush2.bf16.msra.mxu0 %v3477
    %3977 = vmatprep.subr.bf16.mxu0 %v3474
    %3978 = vmatpush2.bf16.msra.mxu0 %v3473
    %3979 = vmatprep.subr.bf16.mxu0 %v3470
    %3980 = vmatpush2.bf16.msra.mxu0 %v3469
    %3981 = vmatprep.mubr.bf16.mxu0 %v2384
    %3982 = vmatmul.mubr.bf16.gmra.mxu0 %v2383
    %v3983 = vpop.f32.mrf.mxu0
    %v3984 = vadd.f32 %v2652, %v3983
    %v3985 = vpop.f32.mrf.mxu0
    %v3986 = vadd.f32 %v2656, %v3985
    %v3987 = vpop.f32.mrf.mxu0
    %v3988 = vpop.f32.mrf.mxu0
    %3989 = vdwg.mxu0
    %3990 = vmatprep.subr.bf16.mxu0 %v3530
    %3991 = vmatpush1.bf16.msra.mxu0 %v3529
    %3992 = vmatprep.subr.bf16.mxu0 %v3526
    %3993 = vmatpush1.bf16.msra.mxu0 %v3525
    %3994 = vmatprep.subr.bf16.mxu0 %v3522
    %3995 = vmatpush1.bf16.msra.mxu0 %v3521
    %3996 = vmatprep.subr.bf16.mxu0 %v3518
    %3997 = vmatpush1.bf16.msra.mxu0 %v3517
    %3998 = vmatprep.subr.bf16.mxu0 %v3514
    %3999 = vmatpush1.bf16.msra.mxu0 %v3513
    %4000 = vmatprep.subr.bf16.mxu0 %v3510
    %4001 = vmatpush1.bf16.msra.mxu0 %v3509
    %4002 = vmatprep.subr.bf16.mxu0 %v3506
    %4003 = vmatpush1.bf16.msra.mxu0 %v3505
    %4004 = vmatprep.subr.bf16.mxu0 %v3502
    %4005 = vmatpush1.bf16.msra.mxu0 %v3501
    %4006 = vmatprep.subr.bf16.mxu0 %v3562
    %4007 = vmatpush2.bf16.msra.mxu0 %v3561
    %4008 = vmatprep.subr.bf16.mxu0 %v3558
    %4009 = vmatpush2.bf16.msra.mxu0 %v3557
    %4010 = vmatprep.subr.bf16.mxu0 %v3554
    %4011 = vmatpush2.bf16.msra.mxu0 %v3553
    %4012 = vmatprep.subr.bf16.mxu0 %v3550
    %4013 = vmatpush2.bf16.msra.mxu0 %v3549
    %4014 = vmatprep.subr.bf16.mxu0 %v3546
    %4015 = vmatpush2.bf16.msra.mxu0 %v3545
    %4016 = vmatprep.subr.bf16.mxu0 %v3542
    %4017 = vmatpush2.bf16.msra.mxu0 %v3541
    %4018 = vmatprep.subr.bf16.mxu0 %v3538
    %4019 = vmatpush2.bf16.msra.mxu0 %v3537
    %4020 = vmatprep.subr.bf16.mxu0 %v3534
    %4021 = vmatpush2.bf16.msra.mxu0 %v3533
    %4022 = vmatprep.mubr.bf16.mxu0 %v2386
    %4023 = vmatmul.mubr.bf16.gmra.mxu0 %v2385
    %v4024 = vpop.f32.mrf.mxu0
    %v4025 = vadd.f32 %v3984, %v4024
    %v4026 = vpop.f32.mrf.mxu0
    %v4027 = vadd.f32 %v3986, %v4026
    %v4028 = vpop.f32.mrf.mxu0
    %v4029 = vpop.f32.mrf.mxu0
    %4030 = vdwg.mxu0
    %4031 = vmatprep.subr.bf16.mxu0 %v3594
    %4032 = vmatpush1.bf16.msra.mxu0 %v3593
    %4033 = vmatprep.subr.bf16.mxu0 %v3590
    %4034 = vmatpush1.bf16.msra.mxu0 %v3589
    %4035 = vmatprep.subr.bf16.mxu0 %v3586
    %4036 = vmatpush1.bf16.msra.mxu0 %v3585
    %4037 = vmatprep.subr.bf16.mxu0 %v3582
    %4038 = vmatpush1.bf16.msra.mxu0 %v3581
    %4039 = vmatprep.subr.bf16.mxu0 %v3578
    %4040 = vmatpush1.bf16.msra.mxu0 %v3577
    %4041 = vmatprep.subr.bf16.mxu0 %v3574
    %4042 = vmatpush1.bf16.msra.mxu0 %v3573
    %4043 = vmatprep.subr.bf16.mxu0 %v3570
    %4044 = vmatpush1.bf16.msra.mxu0 %v3569
    %4045 = vmatprep.subr.bf16.mxu0 %v3566
    %4046 = vmatpush1.bf16.msra.mxu0 %v3565
    %4047 = vmatprep.subr.bf16.mxu0 %v3626
    %4048 = vmatpush2.bf16.msra.mxu0 %v3625
    %4049 = vmatprep.subr.bf16.mxu0 %v3622
    %4050 = vmatpush2.bf16.msra.mxu0 %v3621
    %4051 = vmatprep.subr.bf16.mxu0 %v3618
    %4052 = vmatpush2.bf16.msra.mxu0 %v3617
    %4053 = vmatprep.subr.bf16.mxu0 %v3614
    %4054 = vmatpush2.bf16.msra.mxu0 %v3613
    %4055 = vmatprep.subr.bf16.mxu0 %v3610
    %4056 = vmatpush2.bf16.msra.mxu0 %v3609
    %4057 = vmatprep.subr.bf16.mxu0 %v3606
    %4058 = vmatpush2.bf16.msra.mxu0 %v3605
    %4059 = vmatprep.subr.bf16.mxu0 %v3602
    %4060 = vmatpush2.bf16.msra.mxu0 %v3601
    %4061 = vmatprep.subr.bf16.mxu0 %v3598
    %4062 = vmatpush2.bf16.msra.mxu0 %v3597
    %4063 = vmatprep.mubr.bf16.mxu0 %v2388
    %4064 = vmatmul.mubr.bf16.gmra.mxu0 %v2387
    %v4065 = vpop.f32.mrf.mxu0
    %v4066 = vadd.f32 %v4025, %v4065
    %v4067 = vpop.f32.mrf.mxu0
    %v4068 = vadd.f32 %v4027, %v4067
    %v4069 = vpop.f32.mrf.mxu0
    %v4070 = vpop.f32.mrf.mxu0
    %4071 = vdwg.mxu0
    %4072 = vmatprep.subr.bf16.mxu0 %v3658
    %4073 = vmatpush1.bf16.msra.mxu0 %v3657
    %4074 = vmatprep.subr.bf16.mxu0 %v3654
    %4075 = vmatpush1.bf16.msra.mxu0 %v3653
    %4076 = vmatprep.subr.bf16.mxu0 %v3650
    %4077 = vmatpush1.bf16.msra.mxu0 %v3649
    %4078 = vmatprep.subr.bf16.mxu0 %v3646
    %4079 = vmatpush1.bf16.msra.mxu0 %v3645
    %4080 = vmatprep.subr.bf16.mxu0 %v3642
    %4081 = vmatpush1.bf16.msra.mxu0 %v3641
    %4082 = vmatprep.subr.bf16.mxu0 %v3638
    %4083 = vmatpush1.bf16.msra.mxu0 %v3637
    %4084 = vmatprep.subr.bf16.mxu0 %v3634
    %4085 = vmatpush1.bf16.msra.mxu0 %v3633
    %4086 = vmatprep.subr.bf16.mxu0 %v3630
    %4087 = vmatpush1.bf16.msra.mxu0 %v3629
    %4088 = vmatprep.subr.bf16.mxu0 %v3690
    %4089 = vmatpush2.bf16.msra.mxu0 %v3689
    %4090 = vmatprep.subr.bf16.mxu0 %v3686
    %4091 = vmatpush2.bf16.msra.mxu0 %v3685
    %4092 = vmatprep.subr.bf16.mxu0 %v3682
    %4093 = vmatpush2.bf16.msra.mxu0 %v3681
    %4094 = vmatprep.subr.bf16.mxu0 %v3678
    %4095 = vmatpush2.bf16.msra.mxu0 %v3677
    %4096 = vmatprep.subr.bf16.mxu0 %v3674
    %4097 = vmatpush2.bf16.msra.mxu0 %v3673
    %4098 = vmatprep.subr.bf16.mxu0 %v3670
    %4099 = vmatpush2.bf16.msra.mxu0 %v3669
    %4100 = vmatprep.subr.bf16.mxu0 %v3666
    %4101 = vmatpush2.bf16.msra.mxu0 %v3665
    %4102 = vmatprep.subr.bf16.mxu0 %v3662
    %4103 = vmatpush2.bf16.msra.mxu0 %v3661
    %4104 = vmatprep.mubr.bf16.mxu0 %v2390
    %4105 = vmatmul.mubr.bf16.gmra.mxu0 %v2389
    %v4106 = vpop.f32.mrf.mxu0
    %v4107 = vadd.f32 %v4066, %v4106
    %v4108 = vpop.f32.mrf.mxu0
    %v4109 = vadd.f32 %v4068, %v4108
    %v4110 = vpop.f32.mrf.mxu0
    %v4111 = vpop.f32.mrf.mxu0
    %4112 = vdwg.mxu0
    %4113 = vmatprep.subr.bf16.mxu0 %v3468
    %4114 = vmatpush1.bf16.msra.mxu0 %v3467
    %4115 = vmatprep.subr.bf16.mxu0 %v3464
    %4116 = vmatpush1.bf16.msra.mxu0 %v3463
    %4117 = vmatprep.subr.bf16.mxu0 %v3460
    %4118 = vmatpush1.bf16.msra.mxu0 %v3459
    %4119 = vmatprep.subr.bf16.mxu0 %v3456
    %4120 = vmatpush1.bf16.msra.mxu0 %v3455
    %4121 = vmatprep.subr.bf16.mxu0 %v3452
    %4122 = vmatpush1.bf16.msra.mxu0 %v3451
    %4123 = vmatprep.subr.bf16.mxu0 %v3448
    %4124 = vmatpush1.bf16.msra.mxu0 %v3447
    %4125 = vmatprep.subr.bf16.mxu0 %v3444
    %4126 = vmatpush1.bf16.msra.mxu0 %v3443
    %4127 = vmatprep.subr.bf16.mxu0 %v3440
    %4128 = vmatpush1.bf16.msra.mxu0 %v3439
    %4129 = vmatprep.subr.bf16.mxu0 %v3500
    %4130 = vmatpush2.bf16.msra.mxu0 %v3499
    %4131 = vmatprep.subr.bf16.mxu0 %v3496
    %4132 = vmatpush2.bf16.msra.mxu0 %v3495
    %4133 = vmatprep.subr.bf16.mxu0 %v3492
    %4134 = vmatpush2.bf16.msra.mxu0 %v3491
    %4135 = vmatprep.subr.bf16.mxu0 %v3488
    %4136 = vmatpush2.bf16.msra.mxu0 %v3487
    %4137 = vmatprep.subr.bf16.mxu0 %v3484
    %4138 = vmatpush2.bf16.msra.mxu0 %v3483
    %4139 = vmatprep.subr.bf16.mxu0 %v3480
    %4140 = vmatpush2.bf16.msra.mxu0 %v3479
    %4141 = vmatprep.subr.bf16.mxu0 %v3476
    %4142 = vmatpush2.bf16.msra.mxu0 %v3475
    %4143 = vmatprep.subr.bf16.mxu0 %v3472
    %4144 = vmatpush2.bf16.msra.mxu0 %v3471
    %4145 = vmatprep.mubr.bf16.mxu0 %v2384
    %4146 = vmatmul.mubr.bf16.gmra.mxu0 %v2383
    %v4147 = vpop.f32.mrf.mxu0
    %v4148 = vadd.f32 %v2660, %v4147
    %v4149 = vpop.f32.mrf.mxu0
    %v4150 = vadd.f32 %v2664, %v4149
    %v4151 = vpop.f32.mrf.mxu0
    %v4152 = vpop.f32.mrf.mxu0
    %4153 = vdwg.mxu0
    %4154 = vmatprep.subr.bf16.mxu0 %v3532
    %4155 = vmatpush1.bf16.msra.mxu0 %v3531
    %4156 = vmatprep.subr.bf16.mxu0 %v3528
    %4157 = vmatpush1.bf16.msra.mxu0 %v3527
    %4158 = vmatprep.subr.bf16.mxu0 %v3524
    %4159 = vmatpush1.bf16.msra.mxu0 %v3523
    %4160 = vmatprep.subr.bf16.mxu0 %v3520
    %4161 = vmatpush1.bf16.msra.mxu0 %v3519
    %4162 = vmatprep.subr.bf16.mxu0 %v3516
    %4163 = vmatpush1.bf16.msra.mxu0 %v3515
    %4164 = vmatprep.subr.bf16.mxu0 %v3512
    %4165 = vmatpush1.bf16.msra.mxu0 %v3511
    %4166 = vmatprep.subr.bf16.mxu0 %v3508
    %4167 = vmatpush1.bf16.msra.mxu0 %v3507
    %4168 = vmatprep.subr.bf16.mxu0 %v3504
    %4169 = vmatpush1.bf16.msra.mxu0 %v3503
    %4170 = vmatprep.subr.bf16.mxu0 %v3564
    %4171 = vmatpush2.bf16.msra.mxu0 %v3563
    %4172 = vmatprep.subr.bf16.mxu0 %v3560
    %4173 = vmatpush2.bf16.msra.mxu0 %v3559
    %4174 = vmatprep.subr.bf16.mxu0 %v3556
    %4175 = vmatpush2.bf16.msra.mxu0 %v3555
    %4176 = vmatprep.subr.bf16.mxu0 %v3552
    %4177 = vmatpush2.bf16.msra.mxu0 %v3551
    %4178 = vmatprep.subr.bf16.mxu0 %v3548
    %4179 = vmatpush2.bf16.msra.mxu0 %v3547
    %4180 = vmatprep.subr.bf16.mxu0 %v3544
    %4181 = vmatpush2.bf16.msra.mxu0 %v3543
    %4182 = vmatprep.subr.bf16.mxu0 %v3540
    %4183 = vmatpush2.bf16.msra.mxu0 %v3539
    %4184 = vmatprep.subr.bf16.mxu0 %v3536
    %4185 = vmatpush2.bf16.msra.mxu0 %v3535
    %4186 = vmatprep.mubr.bf16.mxu0 %v2386
    %4187 = vmatmul.mubr.bf16.gmra.mxu0 %v2385
    %v4188 = vpop.f32.mrf.mxu0
    %v4189 = vadd.f32 %v4148, %v4188
    %v4190 = vpop.f32.mrf.mxu0
    %v4191 = vadd.f32 %v4150, %v4190
    %v4192 = vpop.f32.mrf.mxu0
    %v4193 = vpop.f32.mrf.mxu0
    %4194 = vdwg.mxu0
    %4195 = vmatprep.subr.bf16.mxu0 %v3596
    %4196 = vmatpush1.bf16.msra.mxu0 %v3595
    %4197 = vmatprep.subr.bf16.mxu0 %v3592
    %4198 = vmatpush1.bf16.msra.mxu0 %v3591
    %4199 = vmatprep.subr.bf16.mxu0 %v3588
    %4200 = vmatpush1.bf16.msra.mxu0 %v3587
    %4201 = vmatprep.subr.bf16.mxu0 %v3584
    %4202 = vmatpush1.bf16.msra.mxu0 %v3583
    %4203 = vmatprep.subr.bf16.mxu0 %v3580
    %4204 = vmatpush1.bf16.msra.mxu0 %v3579
    %4205 = vmatprep.subr.bf16.mxu0 %v3576
    %4206 = vmatpush1.bf16.msra.mxu0 %v3575
    %4207 = vmatprep.subr.bf16.mxu0 %v3572
    %4208 = vmatpush1.bf16.msra.mxu0 %v3571
    %4209 = vmatprep.subr.bf16.mxu0 %v3568
    %4210 = vmatpush1.bf16.msra.mxu0 %v3567
    %4211 = vmatprep.subr.bf16.mxu0 %v3628
    %4212 = vmatpush2.bf16.msra.mxu0 %v3627
    %4213 = vmatprep.subr.bf16.mxu0 %v3624
    %4214 = vmatpush2.bf16.msra.mxu0 %v3623
    %4215 = vmatprep.subr.bf16.mxu0 %v3620
    %4216 = vmatpush2.bf16.msra.mxu0 %v3619
    %4217 = vmatprep.subr.bf16.mxu0 %v3616
    %4218 = vmatpush2.bf16.msra.mxu0 %v3615
    %4219 = vmatprep.subr.bf16.mxu0 %v3612
    %4220 = vmatpush2.bf16.msra.mxu0 %v3611
    %4221 = vmatprep.subr.bf16.mxu0 %v3608
    %4222 = vmatpush2.bf16.msra.mxu0 %v3607
    %4223 = vmatprep.subr.bf16.mxu0 %v3604
    %4224 = vmatpush2.bf16.msra.mxu0 %v3603
    %4225 = vmatprep.subr.bf16.mxu0 %v3600
    %4226 = vmatpush2.bf16.msra.mxu0 %v3599
    %4227 = vmatprep.mubr.bf16.mxu0 %v2388
    %4228 = vmatmul.mubr.bf16.gmra.mxu0 %v2387
    %v4229 = vpop.f32.mrf.mxu0
    %v4230 = vadd.f32 %v4189, %v4229
    %v4231 = vpop.f32.mrf.mxu0
    %v4232 = vadd.f32 %v4191, %v4231
    %v4233 = vpop.f32.mrf.mxu0
    %v4234 = vpop.f32.mrf.mxu0
    %4235 = vdwg.mxu0
    %4236 = vmatprep.subr.bf16.mxu0 %v3660
    %4237 = vmatpush1.bf16.msra.mxu0 %v3659
    %4238 = vmatprep.subr.bf16.mxu0 %v3656
    %4239 = vmatpush1.bf16.msra.mxu0 %v3655
    %4240 = vmatprep.subr.bf16.mxu0 %v3652
    %4241 = vmatpush1.bf16.msra.mxu0 %v3651
    %4242 = vmatprep.subr.bf16.mxu0 %v3648
    %4243 = vmatpush1.bf16.msra.mxu0 %v3647
    %4244 = vmatprep.subr.bf16.mxu0 %v3644
    %4245 = vmatpush1.bf16.msra.mxu0 %v3643
    %4246 = vmatprep.subr.bf16.mxu0 %v3640
    %4247 = vmatpush1.bf16.msra.mxu0 %v3639
    %4248 = vmatprep.subr.bf16.mxu0 %v3636
    %4249 = vmatpush1.bf16.msra.mxu0 %v3635
    %4250 = vmatprep.subr.bf16.mxu0 %v3632
    %4251 = vmatpush1.bf16.msra.mxu0 %v3631
    %4252 = vmatprep.subr.bf16.mxu0 %v3692
    %4253 = vmatpush2.bf16.msra.mxu0 %v3691
    %4254 = vmatprep.subr.bf16.mxu0 %v3688
    %4255 = vmatpush2.bf16.msra.mxu0 %v3687
    %4256 = vmatprep.subr.bf16.mxu0 %v3684
    %4257 = vmatpush2.bf16.msra.mxu0 %v3683
    %4258 = vmatprep.subr.bf16.mxu0 %v3680
    %4259 = vmatpush2.bf16.msra.mxu0 %v3679
    %4260 = vmatprep.subr.bf16.mxu0 %v3676
    %4261 = vmatpush2.bf16.msra.mxu0 %v3675
    %4262 = vmatprep.subr.bf16.mxu0 %v3672
    %4263 = vmatpush2.bf16.msra.mxu0 %v3671
    %4264 = vmatprep.subr.bf16.mxu0 %v3668
    %4265 = vmatpush2.bf16.msra.mxu0 %v3667
    %4266 = vmatprep.subr.bf16.mxu0 %v3664
    %4267 = vmatpush2.bf16.msra.mxu0 %v3663
    %4268 = vmatprep.mubr.bf16.mxu0 %v2390
    %4269 = vmatmul.mubr.bf16.gmra.mxu0 %v2389
    %v4270 = vpop.f32.mrf.mxu0
    %v4271 = vadd.f32 %v4230, %v4270
    %v4272 = vpop.f32.mrf.mxu0
    %v4273 = vadd.f32 %v4232, %v4272
    %v4274 = vpop.f32.mrf.mxu0
    %v4275 = vpop.f32.mrf.mxu0
    %4276 = vdwg.mxu0
    %v4277 = vmax.f32 %v4107, 0.0
    %v4278 = vmax.f32 %v4109, 0.0
    %v4279 = vmax.f32 %v4271, 0.0
    %v4280 = vmax.f32 %v4273, 0.0
    %v4281 = vpack.c.bf16 %v4277, %v4277
    %v4282 = vpack.c.bf16 %v4278, %v4278
    %v4283 = vpack.c.bf16 %v4279, %v4279
    %v4284 = vpack.c.bf16 %v4280, %v4280
    %v4285 = vld [vmem:[#allocation13] sm:$0xff]
    %v4286 = vld [vmem:[#allocation13 + $0x8] sm:$0xff]
    %v4287 = vld [vmem:[#allocation13 + $0x10] sm:$0xff]
    %v4288 = vld [vmem:[#allocation13 + $0x18] sm:$0xff]
    %v4289 = vld [vmem:[#allocation13 + $0x20] sm:$0xff]
    %v4290 = vld [vmem:[#allocation13 + $0x28] sm:$0xff]
    %v4291 = vld [vmem:[#allocation13 + $0x30] sm:$0xff]
    %v4292 = vld [vmem:[#allocation13 + $0x38] sm:$0xff]
    %v4293 = vld [vmem:[#allocation13 + $0x40] sm:$0xff]
    %v4294 = vld [vmem:[#allocation13 + $0x48] sm:$0xff]
    %v4295 = vld [vmem:[#allocation13 + $0x50] sm:$0xff]
    %v4296 = vld [vmem:[#allocation13 + $0x58] sm:$0xff]
    %v4297 = vld [vmem:[#allocation13 + $0x60] sm:$0xff]
    %v4298 = vld [vmem:[#allocation13 + $0x68] sm:$0xff]
    %v4299 = vld [vmem:[#allocation13 + $0x70] sm:$0xff]
    %v4300 = vld [vmem:[#allocation13 + $0x78] sm:$0xff]
    %v4301 = vld [vmem:[#allocation13 + $0x80] sm:$0xff]
    %v4302 = vld [vmem:[#allocation13 + $0x88] sm:$0xff]
    %v4303 = vld [vmem:[#allocation13 + $0x90] sm:$0xff]
    %v4304 = vld [vmem:[#allocation13 + $0x98] sm:$0xff]
    %v4305 = vld [vmem:[#allocation13 + $0xa0] sm:$0xff]
    %v4306 = vld [vmem:[#allocation13 + $0xa8] sm:$0xff]
    %v4307 = vld [vmem:[#allocation13 + $0xb0] sm:$0xff]
    %v4308 = vld [vmem:[#allocation13 + $0xb8] sm:$0xff]
    %v4309 = vld [vmem:[#allocation13 + $0xc0] sm:$0xff]
    %v4310 = vld [vmem:[#allocation13 + $0xc8] sm:$0xff]
    %v4311 = vld [vmem:[#allocation13 + $0xd0] sm:$0xff]
    %v4312 = vld [vmem:[#allocation13 + $0xd8] sm:$0xff]
    %v4313 = vld [vmem:[#allocation13 + $0xe0] sm:$0xff]
    %v4314 = vld [vmem:[#allocation13 + $0xe8] sm:$0xff]
    %v4315 = vld [vmem:[#allocation13 + $0xf0] sm:$0xff]
    %v4316 = vld [vmem:[#allocation13 + $0xf8] sm:$0xff]
    %v4317 = vld [vmem:[#allocation13 + $0x100] sm:$0xff]
    %v4318 = vld [vmem:[#allocation13 + $0x108] sm:$0xff]
    %v4319 = vld [vmem:[#allocation13 + $0x110] sm:$0xff]
    %v4320 = vld [vmem:[#allocation13 + $0x118] sm:$0xff]
    %v4321 = vld [vmem:[#allocation13 + $0x120] sm:$0xff]
    %v4322 = vld [vmem:[#allocation13 + $0x128] sm:$0xff]
    %v4323 = vld [vmem:[#allocation13 + $0x130] sm:$0xff]
    %v4324 = vld [vmem:[#allocation13 + $0x138] sm:$0xff]
    %v4325 = vld [vmem:[#allocation13 + $0x140] sm:$0xff]
    %v4326 = vld [vmem:[#allocation13 + $0x148] sm:$0xff]
    %v4327 = vld [vmem:[#allocation13 + $0x150] sm:$0xff]
    %v4328 = vld [vmem:[#allocation13 + $0x158] sm:$0xff]
    %v4329 = vld [vmem:[#allocation13 + $0x160] sm:$0xff]
    %v4330 = vld [vmem:[#allocation13 + $0x168] sm:$0xff]
    %v4331 = vld [vmem:[#allocation13 + $0x170] sm:$0xff]
    %v4332 = vld [vmem:[#allocation13 + $0x178] sm:$0xff]
    %v4333 = vld [vmem:[#allocation13 + $0x180] sm:$0xff]
    %v4334 = vld [vmem:[#allocation13 + $0x188] sm:$0xff]
    %v4335 = vld [vmem:[#allocation13 + $0x190] sm:$0xff]
    %v4336 = vld [vmem:[#allocation13 + $0x198] sm:$0xff]
    %v4337 = vld [vmem:[#allocation13 + $0x1a0] sm:$0xff]
    %v4338 = vld [vmem:[#allocation13 + $0x1a8] sm:$0xff]
    %v4339 = vld [vmem:[#allocation13 + $0x1b0] sm:$0xff]
    %v4340 = vld [vmem:[#allocation13 + $0x1b8] sm:$0xff]
    %v4341 = vld [vmem:[#allocation13 + $0x1c0] sm:$0xff]
    %v4342 = vld [vmem:[#allocation13 + $0x1c8] sm:$0xff]
    %v4343 = vld [vmem:[#allocation13 + $0x1d0] sm:$0xff]
    %v4344 = vld [vmem:[#allocation13 + $0x1d8] sm:$0xff]
    %v4345 = vld [vmem:[#allocation13 + $0x1e0] sm:$0xff]
    %v4346 = vld [vmem:[#allocation13 + $0x1e8] sm:$0xff]
    %v4347 = vld [vmem:[#allocation13 + $0x1f0] sm:$0xff]
    %v4348 = vld [vmem:[#allocation13 + $0x1f8] sm:$0xff]
    %v4349 = vld [vmem:[#allocation14] sm:$0x3]
    %v4351 = vlaneseq
    %v4352 = vshrl.u32 %v4351, 7
    %v4353 = vsub.s32 0, %v4352
    %v4354 = vrot.slane %v4349, %v4353
    %v4355 = vlaneseq
    %v4356 = vshrl.u32 %v4355, 7
    %v4357 = vsub.s32 1, %v4356
    %v4358 = vrot.slane %v4349, %v4357
    %v4425 = vunpack.c.l.b16 %v4285
    %v4426 = vunpack.c.h.b16 %v4285
    %v4427 = vunpack.c.l.b16 %v4286
    %v4428 = vunpack.c.h.b16 %v4286
    %v4429 = vunpack.c.l.b16 %v4287
    %v4430 = vunpack.c.h.b16 %v4287
    %v4431 = vunpack.c.l.b16 %v4288
    %v4432 = vunpack.c.h.b16 %v4288
    %v4433 = vunpack.c.l.b16 %v4289
    %v4434 = vunpack.c.h.b16 %v4289
    %v4435 = vunpack.c.l.b16 %v4290
    %v4436 = vunpack.c.h.b16 %v4290
    %v4437 = vunpack.c.l.b16 %v4291
    %v4438 = vunpack.c.h.b16 %v4291
    %v4439 = vunpack.c.l.b16 %v4292
    %v4440 = vunpack.c.h.b16 %v4292
    %v4441 = vunpack.c.l.b16 %v4293
    %v4442 = vunpack.c.h.b16 %v4293
    %v4443 = vunpack.c.l.b16 %v4294
    %v4444 = vunpack.c.h.b16 %v4294
    %v4445 = vunpack.c.l.b16 %v4295
    %v4446 = vunpack.c.h.b16 %v4295
    %v4447 = vunpack.c.l.b16 %v4296
    %v4448 = vunpack.c.h.b16 %v4296
    %v4449 = vunpack.c.l.b16 %v4297
    %v4450 = vunpack.c.h.b16 %v4297
    %v4451 = vunpack.c.l.b16 %v4298
    %v4452 = vunpack.c.h.b16 %v4298
    %v4453 = vunpack.c.l.b16 %v4299
    %v4454 = vunpack.c.h.b16 %v4299
    %v4455 = vunpack.c.l.b16 %v4300
    %v4456 = vunpack.c.h.b16 %v4300
    %v4457 = vunpack.c.l.b16 %v4301
    %v4458 = vunpack.c.h.b16 %v4301
    %v4459 = vunpack.c.l.b16 %v4302
    %v4460 = vunpack.c.h.b16 %v4302
    %v4461 = vunpack.c.l.b16 %v4303
    %v4462 = vunpack.c.h.b16 %v4303
    %v4463 = vunpack.c.l.b16 %v4304
    %v4464 = vunpack.c.h.b16 %v4304
    %v4465 = vunpack.c.l.b16 %v4305
    %v4466 = vunpack.c.h.b16 %v4305
    %v4467 = vunpack.c.l.b16 %v4306
    %v4468 = vunpack.c.h.b16 %v4306
    %v4469 = vunpack.c.l.b16 %v4307
    %v4470 = vunpack.c.h.b16 %v4307
    %v4471 = vunpack.c.l.b16 %v4308
    %v4472 = vunpack.c.h.b16 %v4308
    %v4473 = vunpack.c.l.b16 %v4309
    %v4474 = vunpack.c.h.b16 %v4309
    %v4475 = vunpack.c.l.b16 %v4310
    %v4476 = vunpack.c.h.b16 %v4310
    %v4477 = vunpack.c.l.b16 %v4311
    %v4478 = vunpack.c.h.b16 %v4311
    %v4479 = vunpack.c.l.b16 %v4312
    %v4480 = vunpack.c.h.b16 %v4312
    %v4481 = vunpack.c.l.b16 %v4313
    %v4482 = vunpack.c.h.b16 %v4313
    %v4483 = vunpack.c.l.b16 %v4314
    %v4484 = vunpack.c.h.b16 %v4314
    %v4485 = vunpack.c.l.b16 %v4315
    %v4486 = vunpack.c.h.b16 %v4315
    %v4487 = vunpack.c.l.b16 %v4316
    %v4488 = vunpack.c.h.b16 %v4316
    %v4489 = vunpack.c.l.b16 %v4317
    %v4490 = vunpack.c.h.b16 %v4317
    %v4491 = vunpack.c.l.b16 %v4318
    %v4492 = vunpack.c.h.b16 %v4318
    %v4493 = vunpack.c.l.b16 %v4319
    %v4494 = vunpack.c.h.b16 %v4319
    %v4495 = vunpack.c.l.b16 %v4320
    %v4496 = vunpack.c.h.b16 %v4320
    %v4497 = vunpack.c.l.b16 %v4321
    %v4498 = vunpack.c.h.b16 %v4321
    %v4499 = vunpack.c.l.b16 %v4322
    %v4500 = vunpack.c.h.b16 %v4322
    %v4501 = vunpack.c.l.b16 %v4323
    %v4502 = vunpack.c.h.b16 %v4323
    %v4503 = vunpack.c.l.b16 %v4324
    %v4504 = vunpack.c.h.b16 %v4324
    %v4505 = vunpack.c.l.b16 %v4325
    %v4506 = vunpack.c.h.b16 %v4325
    %v4507 = vunpack.c.l.b16 %v4326
    %v4508 = vunpack.c.h.b16 %v4326
    %v4509 = vunpack.c.l.b16 %v4327
    %v4510 = vunpack.c.h.b16 %v4327
    %v4511 = vunpack.c.l.b16 %v4328
    %v4512 = vunpack.c.h.b16 %v4328
    %v4513 = vunpack.c.l.b16 %v4329
    %v4514 = vunpack.c.h.b16 %v4329
    %v4515 = vunpack.c.l.b16 %v4330
    %v4516 = vunpack.c.h.b16 %v4330
    %v4517 = vunpack.c.l.b16 %v4331
    %v4518 = vunpack.c.h.b16 %v4331
    %v4519 = vunpack.c.l.b16 %v4332
    %v4520 = vunpack.c.h.b16 %v4332
    %v4521 = vunpack.c.l.b16 %v4333
    %v4522 = vunpack.c.h.b16 %v4333
    %v4523 = vunpack.c.l.b16 %v4334
    %v4524 = vunpack.c.h.b16 %v4334
    %v4525 = vunpack.c.l.b16 %v4335
    %v4526 = vunpack.c.h.b16 %v4335
    %v4527 = vunpack.c.l.b16 %v4336
    %v4528 = vunpack.c.h.b16 %v4336
    %v4529 = vunpack.c.l.b16 %v4337
    %v4530 = vunpack.c.h.b16 %v4337
    %v4531 = vunpack.c.l.b16 %v4338
    %v4532 = vunpack.c.h.b16 %v4338
    %v4533 = vunpack.c.l.b16 %v4339
    %v4534 = vunpack.c.h.b16 %v4339
    %v4535 = vunpack.c.l.b16 %v4340
    %v4536 = vunpack.c.h.b16 %v4340
    %v4537 = vunpack.c.l.b16 %v4341
    %v4538 = vunpack.c.h.b16 %v4341
    %v4539 = vunpack.c.l.b16 %v4342
    %v4540 = vunpack.c.h.b16 %v4342
    %v4541 = vunpack.c.l.b16 %v4343
    %v4542 = vunpack.c.h.b16 %v4343
    %v4543 = vunpack.c.l.b16 %v4344
    %v4544 = vunpack.c.h.b16 %v4344
    %v4545 = vunpack.c.l.b16 %v4345
    %v4546 = vunpack.c.h.b16 %v4345
    %v4547 = vunpack.c.l.b16 %v4346
    %v4548 = vunpack.c.h.b16 %v4346
    %v4549 = vunpack.c.l.b16 %v4347
    %v4550 = vunpack.c.h.b16 %v4347
    %v4551 = vunpack.c.l.b16 %v4348
    %v4552 = vunpack.c.h.b16 %v4348
    %v4553 = vpack.c.b16 %v4427, %v4425
    %v4554 = vpack.c.b16 %v4428, %v4426
    %v4555 = vpack.c.b16 %v4431, %v4429
    %v4556 = vpack.c.b16 %v4432, %v4430
    %v4557 = vpack.c.b16 %v4435, %v4433
    %v4558 = vpack.c.b16 %v4436, %v4434
    %v4559 = vpack.c.b16 %v4439, %v4437
    %v4560 = vpack.c.b16 %v4440, %v4438
    %v4561 = vpack.c.b16 %v4443, %v4441
    %v4562 = vpack.c.b16 %v4444, %v4442
    %v4563 = vpack.c.b16 %v4447, %v4445
    %v4564 = vpack.c.b16 %v4448, %v4446
    %v4565 = vpack.c.b16 %v4451, %v4449
    %v4566 = vpack.c.b16 %v4452, %v4450
    %v4567 = vpack.c.b16 %v4455, %v4453
    %v4568 = vpack.c.b16 %v4456, %v4454
    %v4569 = vpack.c.b16 %v4459, %v4457
    %v4570 = vpack.c.b16 %v4460, %v4458
    %v4571 = vpack.c.b16 %v4463, %v4461
    %v4572 = vpack.c.b16 %v4464, %v4462
    %v4573 = vpack.c.b16 %v4467, %v4465
    %v4574 = vpack.c.b16 %v4468, %v4466
    %v4575 = vpack.c.b16 %v4471, %v4469
    %v4576 = vpack.c.b16 %v4472, %v4470
    %v4577 = vpack.c.b16 %v4475, %v4473
    %v4578 = vpack.c.b16 %v4476, %v4474
    %v4579 = vpack.c.b16 %v4479, %v4477
    %v4580 = vpack.c.b16 %v4480, %v4478
    %v4581 = vpack.c.b16 %v4483, %v4481
    %v4582 = vpack.c.b16 %v4484, %v4482
    %v4583 = vpack.c.b16 %v4487, %v4485
    %v4584 = vpack.c.b16 %v4488, %v4486
    %v4585 = vpack.c.b16 %v4491, %v4489
    %v4586 = vpack.c.b16 %v4492, %v4490
    %v4587 = vpack.c.b16 %v4495, %v4493
    %v4588 = vpack.c.b16 %v4496, %v4494
    %v4589 = vpack.c.b16 %v4499, %v4497
    %v4590 = vpack.c.b16 %v4500, %v4498
    %v4591 = vpack.c.b16 %v4503, %v4501
    %v4592 = vpack.c.b16 %v4504, %v4502
    %v4593 = vpack.c.b16 %v4507, %v4505
    %v4594 = vpack.c.b16 %v4508, %v4506
    %v4595 = vpack.c.b16 %v4511, %v4509
    %v4596 = vpack.c.b16 %v4512, %v4510
    %v4597 = vpack.c.b16 %v4515, %v4513
    %v4598 = vpack.c.b16 %v4516, %v4514
    %v4599 = vpack.c.b16 %v4519, %v4517
    %v4600 = vpack.c.b16 %v4520, %v4518
    %v4601 = vpack.c.b16 %v4523, %v4521
    %v4602 = vpack.c.b16 %v4524, %v4522
    %v4603 = vpack.c.b16 %v4527, %v4525
    %v4604 = vpack.c.b16 %v4528, %v4526
    %v4605 = vpack.c.b16 %v4531, %v4529
    %v4606 = vpack.c.b16 %v4532, %v4530
    %v4607 = vpack.c.b16 %v4535, %v4533
    %v4608 = vpack.c.b16 %v4536, %v4534
    %v4609 = vpack.c.b16 %v4539, %v4537
    %v4610 = vpack.c.b16 %v4540, %v4538
    %v4611 = vpack.c.b16 %v4543, %v4541
    %v4612 = vpack.c.b16 %v4544, %v4542
    %v4613 = vpack.c.b16 %v4547, %v4545
    %v4614 = vpack.c.b16 %v4548, %v4546
    %v4615 = vpack.c.b16 %v4551, %v4549
    %v4616 = vpack.c.b16 %v4552, %v4550
    %4681 = vmatprep.subr.bf16.mxu0 %v4568
    %4682 = vmatpush1.bf16.msra.mxu0 %v4567
    %4683 = vmatprep.subr.bf16.mxu0 %v4566
    %4684 = vmatpush1.bf16.msra.mxu0 %v4565
    %4685 = vmatprep.subr.bf16.mxu0 %v4564
    %4686 = vmatpush1.bf16.msra.mxu0 %v4563
    %4687 = vmatprep.subr.bf16.mxu0 %v4562
    %4688 = vmatpush1.bf16.msra.mxu0 %v4561
    %4689 = vmatprep.subr.bf16.mxu0 %v4560
    %4690 = vmatpush1.bf16.msra.mxu0 %v4559
    %4691 = vmatprep.subr.bf16.mxu0 %v4558
    %4692 = vmatpush1.bf16.msra.mxu0 %v4557
    %4693 = vmatprep.subr.bf16.mxu0 %v4556
    %4694 = vmatpush1.bf16.msra.mxu0 %v4555
    %4695 = vmatprep.subr.bf16.mxu0 %v4554
    %4696 = vmatpush1.bf16.msra.mxu0 %v4553
    %4697 = vmatprep.subr.bf16.mxu0 %v4584
    %4698 = vmatpush2.bf16.msra.mxu0 %v4583
    %4699 = vmatprep.subr.bf16.mxu0 %v4582
    %4700 = vmatpush2.bf16.msra.mxu0 %v4581
    %4701 = vmatprep.subr.bf16.mxu0 %v4580
    %4702 = vmatpush2.bf16.msra.mxu0 %v4579
    %4703 = vmatprep.subr.bf16.mxu0 %v4578
    %4704 = vmatpush2.bf16.msra.mxu0 %v4577
    %4705 = vmatprep.subr.bf16.mxu0 %v4576
    %4706 = vmatpush2.bf16.msra.mxu0 %v4575
    %4707 = vmatprep.subr.bf16.mxu0 %v4574
    %4708 = vmatpush2.bf16.msra.mxu0 %v4573
    %4709 = vmatprep.subr.bf16.mxu0 %v4572
    %4710 = vmatpush2.bf16.msra.mxu0 %v4571
    %4711 = vmatprep.subr.bf16.mxu0 %v4570
    %4712 = vmatpush2.bf16.msra.mxu0 %v4569
    %4713 = vmatprep.mubr.bf16.mxu0 %v4282
    %4714 = vmatmul.mubr.bf16.gmra.mxu0 %v4281
    %v4715 = vpop.f32.mrf.mxu0
    %v4716 = vadd.f32 %v4354, %v4715
    %v4717 = vpop.f32.mrf.mxu0
    %v4718 = vadd.f32 %v4358, %v4717
    %v4719 = vpop.f32.mrf.mxu0
    %v4720 = vpop.f32.mrf.mxu0
    %4721 = vdwg.mxu0
    %4722 = vmatprep.subr.bf16.mxu0 %v4600
    %4723 = vmatpush1.bf16.msra.mxu0 %v4599
    %4724 = vmatprep.subr.bf16.mxu0 %v4598
    %4725 = vmatpush1.bf16.msra.mxu0 %v4597
    %4726 = vmatprep.subr.bf16.mxu0 %v4596
    %4727 = vmatpush1.bf16.msra.mxu0 %v4595
    %4728 = vmatprep.subr.bf16.mxu0 %v4594
    %4729 = vmatpush1.bf16.msra.mxu0 %v4593
    %4730 = vmatprep.subr.bf16.mxu0 %v4592
    %4731 = vmatpush1.bf16.msra.mxu0 %v4591
    %4732 = vmatprep.subr.bf16.mxu0 %v4590
    %4733 = vmatpush1.bf16.msra.mxu0 %v4589
    %4734 = vmatprep.subr.bf16.mxu0 %v4588
    %4735 = vmatpush1.bf16.msra.mxu0 %v4587
    %4736 = vmatprep.subr.bf16.mxu0 %v4586
    %4737 = vmatpush1.bf16.msra.mxu0 %v4585
    %4738 = vmatprep.subr.bf16.mxu0 %v4616
    %4739 = vmatpush2.bf16.msra.mxu0 %v4615
    %4740 = vmatprep.subr.bf16.mxu0 %v4614
    %4741 = vmatpush2.bf16.msra.mxu0 %v4613
    %4742 = vmatprep.subr.bf16.mxu0 %v4612
    %4743 = vmatpush2.bf16.msra.mxu0 %v4611
    %4744 = vmatprep.subr.bf16.mxu0 %v4610
    %4745 = vmatpush2.bf16.msra.mxu0 %v4609
    %4746 = vmatprep.subr.bf16.mxu0 %v4608
    %4747 = vmatpush2.bf16.msra.mxu0 %v4607
    %4748 = vmatprep.subr.bf16.mxu0 %v4606
    %4749 = vmatpush2.bf16.msra.mxu0 %v4605
    %4750 = vmatprep.subr.bf16.mxu0 %v4604
    %4751 = vmatpush2.bf16.msra.mxu0 %v4603
    %4752 = vmatprep.subr.bf16.mxu0 %v4602
    %4753 = vmatpush2.bf16.msra.mxu0 %v4601
    %4754 = vmatprep.mubr.bf16.mxu0 %v4284
    %4755 = vmatmul.mubr.bf16.gmra.mxu0 %v4283
    %v4756 = vpop.f32.mrf.mxu0
    %v4757 = vadd.f32 %v4716, %v4756
    %v4758 = vpop.f32.mrf.mxu0
    %v4759 = vadd.f32 %v4718, %v4758
    %v4760 = vpop.f32.mrf.mxu0
    %v4761 = vpop.f32.mrf.mxu0
    %4762 = vdwg.mxu0
    %v4763 = vmax.f32 %v4757, 0.0
    %v4764 = vmax.f32 %v4759, 0.0
    %v4765 = vpack.c.bf16 %v4763, %v4763
    %v4766 = vpack.c.bf16 %v4764, %v4764
    %v4767 = vld [vmem:[#allocation16] sm:$0xff]
    %v4768 = vld [vmem:[#allocation16 + $0x8] sm:$0xff]
    %v4769 = vld [vmem:[#allocation16 + $0x10] sm:$0xff]
    %v4770 = vld [vmem:[#allocation16 + $0x18] sm:$0xff]
    %v4771 = vld [vmem:[#allocation16 + $0x20] sm:$0xff]
    %v4772 = vld [vmem:[#allocation16 + $0x28] sm:$0xff]
    %v4773 = vld [vmem:[#allocation16 + $0x30] sm:$0xff]
    %v4774 = vld [vmem:[#allocation16 + $0x38] sm:$0xff]
    %v4775 = vld [vmem:[#allocation16 + $0x40] sm:$0xff]
    %v4776 = vld [vmem:[#allocation16 + $0x48] sm:$0xff]
    %v4777 = vld [vmem:[#allocation16 + $0x50] sm:$0xff]
    %v4778 = vld [vmem:[#allocation16 + $0x58] sm:$0xff]
    %v4779 = vld [vmem:[#allocation16 + $0x60] sm:$0xff]
    %v4780 = vld [vmem:[#allocation16 + $0x68] sm:$0xff]
    %v4781 = vld [vmem:[#allocation16 + $0x70] sm:$0xff]
    %v4782 = vld [vmem:[#allocation16 + $0x78] sm:$0xff]
    %v4783 = vld [vmem:[#allocation16 + $0x80] sm:$0xff]
    %v4784 = vld [vmem:[#allocation16 + $0x88] sm:$0xff]
    %v4785 = vld [vmem:[#allocation16 + $0x90] sm:$0xff]
    %v4786 = vld [vmem:[#allocation16 + $0x98] sm:$0xff]
    %v4787 = vld [vmem:[#allocation16 + $0xa0] sm:$0xff]
    %v4788 = vld [vmem:[#allocation16 + $0xa8] sm:$0xff]
    %v4789 = vld [vmem:[#allocation16 + $0xb0] sm:$0xff]
    %v4790 = vld [vmem:[#allocation16 + $0xb8] sm:$0xff]
    %v4791 = vld [vmem:[#allocation16 + $0xc0] sm:$0xff]
    %v4792 = vld [vmem:[#allocation16 + $0xc8] sm:$0xff]
    %v4793 = vld [vmem:[#allocation16 + $0xd0] sm:$0xff]
    %v4794 = vld [vmem:[#allocation16 + $0xd8] sm:$0xff]
    %v4795 = vld [vmem:[#allocation16 + $0xe0] sm:$0xff]
    %v4796 = vld [vmem:[#allocation16 + $0xe8] sm:$0xff]
    %v4797 = vld [vmem:[#allocation16 + $0xf0] sm:$0xff]
    %v4798 = vld [vmem:[#allocation16 + $0xf8] sm:$0xff]
    %v4799 = vld [vmem:[#allocation17] sm:$0x3]
    %v4801 = vlaneseq
    %v4802 = vshrl.u32 %v4801, 7
    %v4803 = vsub.s32 0, %v4802
    %v4804 = vrot.slane %v4799, %v4803
    %v4805 = vlaneseq
    %v4806 = vshrl.u32 %v4805, 7
    %v4807 = vsub.s32 1, %v4806
    %v4808 = vrot.slane %v4799, %v4807
    %v4843 = vunpack.c.l.b16 %v4767
    %v4844 = vunpack.c.h.b16 %v4767
    %v4845 = vunpack.c.l.b16 %v4768
    %v4846 = vunpack.c.h.b16 %v4768
    %v4847 = vunpack.c.l.b16 %v4769
    %v4848 = vunpack.c.h.b16 %v4769
    %v4849 = vunpack.c.l.b16 %v4770
    %v4850 = vunpack.c.h.b16 %v4770
    %v4851 = vunpack.c.l.b16 %v4771
    %v4852 = vunpack.c.h.b16 %v4771
    %v4853 = vunpack.c.l.b16 %v4772
    %v4854 = vunpack.c.h.b16 %v4772
    %v4855 = vunpack.c.l.b16 %v4773
    %v4856 = vunpack.c.h.b16 %v4773
    %v4857 = vunpack.c.l.b16 %v4774
    %v4858 = vunpack.c.h.b16 %v4774
    %v4859 = vunpack.c.l.b16 %v4775
    %v4860 = vunpack.c.h.b16 %v4775
    %v4861 = vunpack.c.l.b16 %v4776
    %v4862 = vunpack.c.h.b16 %v4776
    %v4863 = vunpack.c.l.b16 %v4777
    %v4864 = vunpack.c.h.b16 %v4777
    %v4865 = vunpack.c.l.b16 %v4778
    %v4866 = vunpack.c.h.b16 %v4778
    %v4867 = vunpack.c.l.b16 %v4779
    %v4868 = vunpack.c.h.b16 %v4779
    %v4869 = vunpack.c.l.b16 %v4780
    %v4870 = vunpack.c.h.b16 %v4780
    %v4871 = vunpack.c.l.b16 %v4781
    %v4872 = vunpack.c.h.b16 %v4781
    %v4873 = vunpack.c.l.b16 %v4782
    %v4874 = vunpack.c.h.b16 %v4782
    %v4875 = vunpack.c.l.b16 %v4783
    %v4876 = vunpack.c.h.b16 %v4783
    %v4877 = vunpack.c.l.b16 %v4784
    %v4878 = vunpack.c.h.b16 %v4784
    %v4879 = vunpack.c.l.b16 %v4785
    %v4880 = vunpack.c.h.b16 %v4785
    %v4881 = vunpack.c.l.b16 %v4786
    %v4882 = vunpack.c.h.b16 %v4786
    %v4883 = vunpack.c.l.b16 %v4787
    %v4884 = vunpack.c.h.b16 %v4787
    %v4885 = vunpack.c.l.b16 %v4788
    %v4886 = vunpack.c.h.b16 %v4788
    %v4887 = vunpack.c.l.b16 %v4789
    %v4888 = vunpack.c.h.b16 %v4789
    %v4889 = vunpack.c.l.b16 %v4790
    %v4890 = vunpack.c.h.b16 %v4790
    %v4891 = vunpack.c.l.b16 %v4791
    %v4892 = vunpack.c.h.b16 %v4791
    %v4893 = vunpack.c.l.b16 %v4792
    %v4894 = vunpack.c.h.b16 %v4792
    %v4895 = vunpack.c.l.b16 %v4793
    %v4896 = vunpack.c.h.b16 %v4793
    %v4897 = vunpack.c.l.b16 %v4794
    %v4898 = vunpack.c.h.b16 %v4794
    %v4899 = vunpack.c.l.b16 %v4795
    %v4900 = vunpack.c.h.b16 %v4795
    %v4901 = vunpack.c.l.b16 %v4796
    %v4902 = vunpack.c.h.b16 %v4796
    %v4903 = vunpack.c.l.b16 %v4797
    %v4904 = vunpack.c.h.b16 %v4797
    %v4905 = vunpack.c.l.b16 %v4798
    %v4906 = vunpack.c.h.b16 %v4798
    %v4907 = vpack.c.b16 %v4845, %v4843
    %v4908 = vpack.c.b16 %v4846, %v4844
    %v4909 = vpack.c.b16 %v4849, %v4847
    %v4910 = vpack.c.b16 %v4850, %v4848
    %v4911 = vpack.c.b16 %v4853, %v4851
    %v4912 = vpack.c.b16 %v4854, %v4852
    %v4913 = vpack.c.b16 %v4857, %v4855
    %v4914 = vpack.c.b16 %v4858, %v4856
    %v4915 = vpack.c.b16 %v4861, %v4859
    %v4916 = vpack.c.b16 %v4862, %v4860
    %v4917 = vpack.c.b16 %v4865, %v4863
    %v4918 = vpack.c.b16 %v4866, %v4864
    %v4919 = vpack.c.b16 %v4869, %v4867
    %v4920 = vpack.c.b16 %v4870, %v4868
    %v4921 = vpack.c.b16 %v4873, %v4871
    %v4922 = vpack.c.b16 %v4874, %v4872
    %v4923 = vpack.c.b16 %v4877, %v4875
    %v4924 = vpack.c.b16 %v4878, %v4876
    %v4925 = vpack.c.b16 %v4881, %v4879
    %v4926 = vpack.c.b16 %v4882, %v4880
    %v4927 = vpack.c.b16 %v4885, %v4883
    %v4928 = vpack.c.b16 %v4886, %v4884
    %v4929 = vpack.c.b16 %v4889, %v4887
    %v4930 = vpack.c.b16 %v4890, %v4888
    %v4931 = vpack.c.b16 %v4893, %v4891
    %v4932 = vpack.c.b16 %v4894, %v4892
    %v4933 = vpack.c.b16 %v4897, %v4895
    %v4934 = vpack.c.b16 %v4898, %v4896
    %v4935 = vpack.c.b16 %v4901, %v4899
    %v4936 = vpack.c.b16 %v4902, %v4900
    %v4937 = vpack.c.b16 %v4905, %v4903
    %v4938 = vpack.c.b16 %v4906, %v4904
    %4971 = vmatprep.subr.bf16.mxu0 %v4922
    %4972 = vmatpush1.bf16.msra.mxu0 %v4921
    %4973 = vmatprep.subr.bf16.mxu0 %v4920
    %4974 = vmatpush1.bf16.msra.mxu0 %v4919
    %4975 = vmatprep.subr.bf16.mxu0 %v4918
    %4976 = vmatpush1.bf16.msra.mxu0 %v4917
    %4977 = vmatprep.subr.bf16.mxu0 %v4916
    %4978 = vmatpush1.bf16.msra.mxu0 %v4915
    %4979 = vmatprep.subr.bf16.mxu0 %v4914
    %4980 = vmatpush1.bf16.msra.mxu0 %v4913
    %4981 = vmatprep.subr.bf16.mxu0 %v4912
    %4982 = vmatpush1.bf16.msra.mxu0 %v4911
    %4983 = vmatprep.subr.bf16.mxu0 %v4910
    %4984 = vmatpush1.bf16.msra.mxu0 %v4909
    %4985 = vmatprep.subr.bf16.mxu0 %v4908
    %4986 = vmatpush1.bf16.msra.mxu0 %v4907
    %4987 = vmatprep.subr.bf16.mxu0 %v4938
    %4988 = vmatpush2.bf16.msra.mxu0 %v4937
    %4989 = vmatprep.subr.bf16.mxu0 %v4936
    %4990 = vmatpush2.bf16.msra.mxu0 %v4935
    %4991 = vmatprep.subr.bf16.mxu0 %v4934
    %4992 = vmatpush2.bf16.msra.mxu0 %v4933
    %4993 = vmatprep.subr.bf16.mxu0 %v4932
    %4994 = vmatpush2.bf16.msra.mxu0 %v4931
    %4995 = vmatprep.subr.bf16.mxu0 %v4930
    %4996 = vmatpush2.bf16.msra.mxu0 %v4929
    %4997 = vmatprep.subr.bf16.mxu0 %v4928
    %4998 = vmatpush2.bf16.msra.mxu0 %v4927
    %4999 = vmatprep.subr.bf16.mxu0 %v4926
    %5000 = vmatpush2.bf16.msra.mxu0 %v4925
    %5001 = vmatprep.subr.bf16.mxu0 %v4924
    %5002 = vmatpush2.bf16.msra.mxu0 %v4923
    %5003 = vmatprep.mubr.bf16.mxu0 %v4766
    %5004 = vmatmul.mubr.bf16.gmra.mxu0 %v4765
    %v5005 = vpop.f32.mrf.mxu0
    %v5006 = vadd.f32 %v4804, %v5005
    %v5007 = vpop.f32.mrf.mxu0
    %v5008 = vadd.f32 %v4808, %v5007
    %v5009 = vpop.f32.mrf.mxu0
    %v5010 = vpop.f32.mrf.mxu0
    %5011 = vdwg.mxu0
    %v5012 = vmul.f32 %v5008, 0.5
    %v5013 = vmul.f32 %v5012, 1.442695
    %v5014 = vpow.pop %v5013
    %v5015 = vld [vmem:[#allocation5] sm:$0xff]
    %v5016 = vmul.f32 %v5014, %v5015
    %v5017 = vadd.f32 %v5006, %v5016
    %5018 = vst [vmem:[#allocation27] sm:$0xff] %v5006
    %5019 = vst [vmem:[#allocation29] sm:$0xff] %v5008
    %v5020 = vpack.c.bf16 %v5017, %v5017
    %v5021 = vld [vmem:[#allocation19] sm:$0xff]
    %v5022 = vld [vmem:[#allocation19 + $0x8] sm:$0xff]
    %v5023 = vld [vmem:[#allocation19 + $0x10] sm:$0xff]
    %v5024 = vld [vmem:[#allocation19 + $0x18] sm:$0xff]
    %v5025 = vld [vmem:[#allocation19 + $0x20] sm:$0xff]
    %v5026 = vld [vmem:[#allocation19 + $0x28] sm:$0xff]
    %v5027 = vld [vmem:[#allocation19 + $0x30] sm:$0xff]
    %v5028 = vld [vmem:[#allocation19 + $0x38] sm:$0xff]
    %v5029 = vld [vmem:[#allocation19 + $0x40] sm:$0xff]
    %v5030 = vld [vmem:[#allocation19 + $0x48] sm:$0xff]
    %v5031 = vld [vmem:[#allocation19 + $0x50] sm:$0xff]
    %v5032 = vld [vmem:[#allocation19 + $0x58] sm:$0xff]
    %v5033 = vld [vmem:[#allocation19 + $0x60] sm:$0xff]
    %v5034 = vld [vmem:[#allocation19 + $0x68] sm:$0xff]
    %v5035 = vld [vmem:[#allocation19 + $0x70] sm:$0xff]
    %v5036 = vld [vmem:[#allocation19 + $0x78] sm:$0xff]
    %v5037 = vld [vmem:[#allocation20] sm:$0x3]
    %v5039 = vlaneseq
    %v5040 = vshrl.u32 %v5039, 7
    %v5041 = vsub.s32 0, %v5040
    %v5042 = vrot.slane %v5037, %v5041
    %v5043 = vlaneseq
    %v5044 = vshrl.u32 %v5043, 7
    %v5045 = vsub.s32 1, %v5044
    %v5046 = vrot.slane %v5037, %v5045
    %v5065 = vunpack.c.l.b16 %v5021
    %v5066 = vunpack.c.h.b16 %v5021
    %v5067 = vunpack.c.l.b16 %v5022
    %v5068 = vunpack.c.h.b16 %v5022
    %v5069 = vunpack.c.l.b16 %v5023
    %v5070 = vunpack.c.h.b16 %v5023
    %v5071 = vunpack.c.l.b16 %v5024
    %v5072 = vunpack.c.h.b16 %v5024
    %v5073 = vunpack.c.l.b16 %v5025
    %v5074 = vunpack.c.h.b16 %v5025
    %v5075 = vunpack.c.l.b16 %v5026
    %v5076 = vunpack.c.h.b16 %v5026
    %v5077 = vunpack.c.l.b16 %v5027
    %v5078 = vunpack.c.h.b16 %v5027
    %v5079 = vunpack.c.l.b16 %v5028
    %v5080 = vunpack.c.h.b16 %v5028
    %v5081 = vunpack.c.l.b16 %v5029
    %v5082 = vunpack.c.h.b16 %v5029
    %v5083 = vunpack.c.l.b16 %v5030
    %v5084 = vunpack.c.h.b16 %v5030
    %v5085 = vunpack.c.l.b16 %v5031
    %v5086 = vunpack.c.h.b16 %v5031
    %v5087 = vunpack.c.l.b16 %v5032
    %v5088 = vunpack.c.h.b16 %v5032
    %v5089 = vunpack.c.l.b16 %v5033
    %v5090 = vunpack.c.h.b16 %v5033
    %v5091 = vunpack.c.l.b16 %v5034
    %v5092 = vunpack.c.h.b16 %v5034
    %v5093 = vunpack.c.l.b16 %v5035
    %v5094 = vunpack.c.h.b16 %v5035
    %v5095 = vunpack.c.l.b16 %v5036
    %v5096 = vunpack.c.h.b16 %v5036
    %v5097 = vpack.c.b16 %v5067, %v5065
    %v5098 = vpack.c.b16 %v5068, %v5066
    %v5099 = vpack.c.b16 %v5071, %v5069
    %v5100 = vpack.c.b16 %v5072, %v5070
    %v5101 = vpack.c.b16 %v5075, %v5073
    %v5102 = vpack.c.b16 %v5076, %v5074
    %v5103 = vpack.c.b16 %v5079, %v5077
    %v5104 = vpack.c.b16 %v5080, %v5078
    %v5105 = vpack.c.b16 %v5083, %v5081
    %v5106 = vpack.c.b16 %v5084, %v5082
    %v5107 = vpack.c.b16 %v5087, %v5085
    %v5108 = vpack.c.b16 %v5088, %v5086
    %v5109 = vpack.c.b16 %v5091, %v5089
    %v5110 = vpack.c.b16 %v5092, %v5090
    %v5111 = vpack.c.b16 %v5095, %v5093
    %v5112 = vpack.c.b16 %v5096, %v5094
    %5129 = vmatprep.subr.bf16.mxu0 %v5112
    %5130 = vmatpush1.bf16.msra.mxu0 %v5111
    %5131 = vmatprep.subr.bf16.mxu0 %v5110
    %5132 = vmatpush1.bf16.msra.mxu0 %v5109
    %5133 = vmatprep.subr.bf16.mxu0 %v5108
    %5134 = vmatpush1.bf16.msra.mxu0 %v5107
    %5135 = vmatprep.subr.bf16.mxu0 %v5106
    %5136 = vmatpush1.bf16.msra.mxu0 %v5105
    %5137 = vmatprep.subr.bf16.mxu0 %v5104
    %5138 = vmatpush1.bf16.msra.mxu0 %v5103
    %5139 = vmatprep.subr.bf16.mxu0 %v5102
    %5140 = vmatpush1.bf16.msra.mxu0 %v5101
    %5141 = vmatprep.subr.bf16.mxu0 %v5100
    %5142 = vmatpush1.bf16.msra.mxu0 %v5099
    %5143 = vmatprep.subr.bf16.mxu0 %v5098
    %5144 = vmatpush1.bf16.msra.mxu0 %v5097
    %5145 = vmatprep.subr.bf16.mxu0 0
    %5146 = vmatpush2.bf16.msra.mxu0 0
    %5147 = vmatprep.subr.bf16.mxu0 0
    %5148 = vmatpush2.bf16.msra.mxu0 0
    %5149 = vmatprep.subr.bf16.mxu0 0
    %5150 = vmatpush2.bf16.msra.mxu0 0
    %5151 = vmatprep.subr.bf16.mxu0 0
    %5152 = vmatpush2.bf16.msra.mxu0 0
    %5153 = vmatprep.subr.bf16.mxu0 0
    %5154 = vmatpush2.bf16.msra.mxu0 0
    %5155 = vmatprep.subr.bf16.mxu0 0
    %5156 = vmatpush2.bf16.msra.mxu0 0
    %5157 = vmatprep.subr.bf16.mxu0 0
    %5158 = vmatpush2.bf16.msra.mxu0 0
    %5159 = vmatprep.subr.bf16.mxu0 0
    %5160 = vmatpush2.bf16.msra.mxu0 0
    %5161 = vmatprep.mubr.bf16.mxu0 0
    %5162 = vmatmul.mubr.bf16.gmra.mxu0 %v5020
    %v5163 = vpop.f32.mrf.mxu0
    %v5164 = vadd.f32 %v5042, %v5163
    %v5165 = vpop.f32.mrf.mxu0
    %v5166 = vadd.f32 %v5046, %v5165
    %v5167 = vpop.f32.mrf.mxu0
    %v5168 = vpop.f32.mrf.mxu0
    %5169 = vdwg.mxu0
    %v5170 = vld [vmem:[%s13] sm:$0xf]
    %v5172 = vlaneseq
    %v5173 = vshrl.u32 %v5172, 7
    %v5174 = vsub.s32 0, %v5173
    %v5175 = vrot.slane %v5170, %v5174
    %v5176 = vlaneseq
    %v5177 = vshrl.u32 %v5176, 7
    %v5178 = vsub.s32 2, %v5177
    %v5179 = vrot.slane %v5170, %v5178
    %v5182 = vlaneseq
    %v5183 = vshrl.u32 %v5182, 7
    %v5184 = vsub.s32 0, %v5183
    %v5185 = vrot.slane %v5175, %v5184
    %v5186 = vlaneseq
    %v5187 = vshrl.u32 %v5186, 7
    %v5188 = vsub.s32 0, %v5187
    %v5189 = vrot.slane %v5179, %v5188
    %v5190 = vmul.f32 %v2191, %v5185
    %v5191 = vmul.f32 %v2191, %v5189
    %v5192 = vadd.f32 %v5164, %v5190
    %v5193 = vadd.f32 %v5166, %v5191
    %v5194 = vlaneseq
    %v5195 = vshrl.u32 %v5194, 7
    %v5196 = vsub.s32 1, %v5195
    %v5197 = vrot.slane %v5170, %v5196
    %v5198 = vlaneseq
    %v5199 = vshrl.u32 %v5198, 7
    %v5200 = vsub.s32 3, %v5199
    %v5201 = vrot.slane %v5170, %v5200
    %v5204 = vlaneseq
    %v5205 = vshrl.u32 %v5204, 7
    %v5206 = vsub.s32 1, %v5205
    %v5207 = vrot.slane %v5197, %v5206
    %v5208 = vlaneseq
    %v5209 = vshrl.u32 %v5208, 7
    %v5210 = vsub.s32 1, %v5209
    %v5211 = vrot.slane %v5201, %v5210
    %v5212 = vmul.f32 %v2285, %v5207
    %v5213 = vmul.f32 %v2285, %v5211
    %v5214 = vadd.f32 %v5192, %v5212
    %v5215 = vadd.f32 %v5193, %v5213
    %v5216 = vmax.f32 %v5214, 0.0
    %v5217 = vmax.f32 %v5215, 0.0
    %v5218 = vpack.c.bf16 %v5216, %v5216
    %v5219 = vpack.c.bf16 %v5217, %v5217
    %v5220 = vld [vmem:[#allocation22] sm:$0xff]
    %v5221 = vld [vmem:[#allocation22 + $0x8] sm:$0xff]
    %v5222 = vld [vmem:[#allocation22 + $0x10] sm:$0xff]
    %v5223 = vld [vmem:[#allocation22 + $0x18] sm:$0xff]
    %v5224 = vld [vmem:[#allocation22 + $0x20] sm:$0xff]
    %v5225 = vld [vmem:[#allocation22 + $0x28] sm:$0xff]
    %v5226 = vld [vmem:[#allocation22 + $0x30] sm:$0xff]
    %v5227 = vld [vmem:[#allocation22 + $0x38] sm:$0xff]
    %v5228 = vld [vmem:[#allocation22 + $0x40] sm:$0xff]
    %v5229 = vld [vmem:[#allocation22 + $0x48] sm:$0xff]
    %v5230 = vld [vmem:[#allocation22 + $0x50] sm:$0xff]
    %v5231 = vld [vmem:[#allocation22 + $0x58] sm:$0xff]
    %v5232 = vld [vmem:[#allocation22 + $0x60] sm:$0xff]
    %v5233 = vld [vmem:[#allocation22 + $0x68] sm:$0xff]
    %v5234 = vld [vmem:[#allocation22 + $0x70] sm:$0xff]
    %v5235 = vld [vmem:[#allocation22 + $0x78] sm:$0xff]
    %v5236 = vld [vmem:[#allocation22 + $0x80] sm:$0xff]
    %v5237 = vld [vmem:[#allocation22 + $0x88] sm:$0xff]
    %v5238 = vld [vmem:[#allocation22 + $0x90] sm:$0xff]
    %v5239 = vld [vmem:[#allocation22 + $0x98] sm:$0xff]
    %v5240 = vld [vmem:[#allocation22 + $0xa0] sm:$0xff]
    %v5241 = vld [vmem:[#allocation22 + $0xa8] sm:$0xff]
    %v5242 = vld [vmem:[#allocation22 + $0xb0] sm:$0xff]
    %v5243 = vld [vmem:[#allocation22 + $0xb8] sm:$0xff]
    %v5244 = vld [vmem:[#allocation22 + $0xc0] sm:$0xff]
    %v5245 = vld [vmem:[#allocation22 + $0xc8] sm:$0xff]
    %v5246 = vld [vmem:[#allocation22 + $0xd0] sm:$0xff]
    %v5247 = vld [vmem:[#allocation22 + $0xd8] sm:$0xff]
    %v5248 = vld [vmem:[#allocation22 + $0xe0] sm:$0xff]
    %v5249 = vld [vmem:[#allocation22 + $0xe8] sm:$0xff]
    %v5250 = vld [vmem:[#allocation22 + $0xf0] sm:$0xff]
    %v5251 = vld [vmem:[#allocation22 + $0xf8] sm:$0xff]
    %v5252 = vld [vmem:[#allocation22 + $0x100] sm:$0xff]
    %v5253 = vld [vmem:[#allocation22 + $0x108] sm:$0xff]
    %v5254 = vld [vmem:[#allocation22 + $0x110] sm:$0xff]
    %v5255 = vld [vmem:[#allocation22 + $0x118] sm:$0xff]
    %v5256 = vld [vmem:[#allocation22 + $0x120] sm:$0xff]
    %v5257 = vld [vmem:[#allocation22 + $0x128] sm:$0xff]
    %v5258 = vld [vmem:[#allocation22 + $0x130] sm:$0xff]
    %v5259 = vld [vmem:[#allocation22 + $0x138] sm:$0xff]
    %v5260 = vld [vmem:[#allocation22 + $0x140] sm:$0xff]
    %v5261 = vld [vmem:[#allocation22 + $0x148] sm:$0xff]
    %v5262 = vld [vmem:[#allocation22 + $0x150] sm:$0xff]
    %v5263 = vld [vmem:[#allocation22 + $0x158] sm:$0xff]
    %v5264 = vld [vmem:[#allocation22 + $0x160] sm:$0xff]
    %v5265 = vld [vmem:[#allocation22 + $0x168] sm:$0xff]
    %v5266 = vld [vmem:[#allocation22 + $0x170] sm:$0xff]
    %v5267 = vld [vmem:[#allocation22 + $0x178] sm:$0xff]
    %v5268 = vld [vmem:[#allocation22 + $0x180] sm:$0xff]
    %v5269 = vld [vmem:[#allocation22 + $0x188] sm:$0xff]
    %v5270 = vld [vmem:[#allocation22 + $0x190] sm:$0xff]
    %v5271 = vld [vmem:[#allocation22 + $0x198] sm:$0xff]
    %v5272 = vld [vmem:[#allocation22 + $0x1a0] sm:$0xff]
    %v5273 = vld [vmem:[#allocation22 + $0x1a8] sm:$0xff]
    %v5274 = vld [vmem:[#allocation22 + $0x1b0] sm:$0xff]
    %v5275 = vld [vmem:[#allocation22 + $0x1b8] sm:$0xff]
    %v5276 = vld [vmem:[#allocation22 + $0x1c0] sm:$0xff]
    %v5277 = vld [vmem:[#allocation22 + $0x1c8] sm:$0xff]
    %v5278 = vld [vmem:[#allocation22 + $0x1d0] sm:$0xff]
    %v5279 = vld [vmem:[#allocation22 + $0x1d8] sm:$0xff]
    %v5280 = vld [vmem:[#allocation22 + $0x1e0] sm:$0xff]
    %v5281 = vld [vmem:[#allocation22 + $0x1e8] sm:$0xff]
    %v5282 = vld [vmem:[#allocation22 + $0x1f0] sm:$0xff]
    %v5283 = vld [vmem:[#allocation22 + $0x1f8] sm:$0xff]
    %v5284 = vld [vmem:[%s16] sm:$0xf]
    %v5286 = vlaneseq
    %v5287 = vshrl.u32 %v5286, 7
    %v5288 = vsub.s32 0, %v5287
    %v5289 = vrot.slane %v5284, %v5288
    %v5290 = vlaneseq
    %v5291 = vshrl.u32 %v5290, 7
    %v5292 = vsub.s32 1, %v5291
    %v5293 = vrot.slane %v5284, %v5292
    %v5294 = vlaneseq
    %v5295 = vshrl.u32 %v5294, 7
    %v5296 = vsub.s32 2, %v5295
    %v5297 = vrot.slane %v5284, %v5296
    %v5298 = vlaneseq
    %v5299 = vshrl.u32 %v5298, 7
    %v5300 = vsub.s32 3, %v5299
    %v5301 = vrot.slane %v5284, %v5300
    %v5370 = vunpack.c.l.b16 %v5220
    %v5371 = vunpack.c.h.b16 %v5220
    %v5372 = vunpack.c.l.b16 %v5221
    %v5373 = vunpack.c.h.b16 %v5221
    %v5374 = vunpack.c.l.b16 %v5222
    %v5375 = vunpack.c.h.b16 %v5222
    %v5376 = vunpack.c.l.b16 %v5223
    %v5377 = vunpack.c.h.b16 %v5223
    %v5378 = vunpack.c.l.b16 %v5224
    %v5379 = vunpack.c.h.b16 %v5224
    %v5380 = vunpack.c.l.b16 %v5225
    %v5381 = vunpack.c.h.b16 %v5225
    %v5382 = vunpack.c.l.b16 %v5226
    %v5383 = vunpack.c.h.b16 %v5226
    %v5384 = vunpack.c.l.b16 %v5227
    %v5385 = vunpack.c.h.b16 %v5227
    %v5386 = vunpack.c.l.b16 %v5228
    %v5387 = vunpack.c.h.b16 %v5228
    %v5388 = vunpack.c.l.b16 %v5229
    %v5389 = vunpack.c.h.b16 %v5229
    %v5390 = vunpack.c.l.b16 %v5230
    %v5391 = vunpack.c.h.b16 %v5230
    %v5392 = vunpack.c.l.b16 %v5231
    %v5393 = vunpack.c.h.b16 %v5231
    %v5394 = vunpack.c.l.b16 %v5232
    %v5395 = vunpack.c.h.b16 %v5232
    %v5396 = vunpack.c.l.b16 %v5233
    %v5397 = vunpack.c.h.b16 %v5233
    %v5398 = vunpack.c.l.b16 %v5234
    %v5399 = vunpack.c.h.b16 %v5234
    %v5400 = vunpack.c.l.b16 %v5235
    %v5401 = vunpack.c.h.b16 %v5235
    %v5402 = vunpack.c.l.b16 %v5236
    %v5403 = vunpack.c.h.b16 %v5236
    %v5404 = vunpack.c.l.b16 %v5237
    %v5405 = vunpack.c.h.b16 %v5237
    %v5406 = vunpack.c.l.b16 %v5238
    %v5407 = vunpack.c.h.b16 %v5238
    %v5408 = vunpack.c.l.b16 %v5239
    %v5409 = vunpack.c.h.b16 %v5239
    %v5410 = vunpack.c.l.b16 %v5240
    %v5411 = vunpack.c.h.b16 %v5240
    %v5412 = vunpack.c.l.b16 %v5241
    %v5413 = vunpack.c.h.b16 %v5241
    %v5414 = vunpack.c.l.b16 %v5242
    %v5415 = vunpack.c.h.b16 %v5242
    %v5416 = vunpack.c.l.b16 %v5243
    %v5417 = vunpack.c.h.b16 %v5243
    %v5418 = vunpack.c.l.b16 %v5244
    %v5419 = vunpack.c.h.b16 %v5244
    %v5420 = vunpack.c.l.b16 %v5245
    %v5421 = vunpack.c.h.b16 %v5245
    %v5422 = vunpack.c.l.b16 %v5246
    %v5423 = vunpack.c.h.b16 %v5246
    %v5424 = vunpack.c.l.b16 %v5247
    %v5425 = vunpack.c.h.b16 %v5247
    %v5426 = vunpack.c.l.b16 %v5248
    %v5427 = vunpack.c.h.b16 %v5248
    %v5428 = vunpack.c.l.b16 %v5249
    %v5429 = vunpack.c.h.b16 %v5249
    %v5430 = vunpack.c.l.b16 %v5250
    %v5431 = vunpack.c.h.b16 %v5250
    %v5432 = vunpack.c.l.b16 %v5251
    %v5433 = vunpack.c.h.b16 %v5251
    %v5434 = vunpack.c.l.b16 %v5252
    %v5435 = vunpack.c.h.b16 %v5252
    %v5436 = vunpack.c.l.b16 %v5253
    %v5437 = vunpack.c.h.b16 %v5253
    %v5438 = vunpack.c.l.b16 %v5254
    %v5439 = vunpack.c.h.b16 %v5254
    %v5440 = vunpack.c.l.b16 %v5255
    %v5441 = vunpack.c.h.b16 %v5255
    %v5442 = vunpack.c.l.b16 %v5256
    %v5443 = vunpack.c.h.b16 %v5256
    %v5444 = vunpack.c.l.b16 %v5257
    %v5445 = vunpack.c.h.b16 %v5257
    %v5446 = vunpack.c.l.b16 %v5258
    %v5447 = vunpack.c.h.b16 %v5258
    %v5448 = vunpack.c.l.b16 %v5259
    %v5449 = vunpack.c.h.b16 %v5259
    %v5450 = vunpack.c.l.b16 %v5260
    %v5451 = vunpack.c.h.b16 %v5260
    %v5452 = vunpack.c.l.b16 %v5261
    %v5453 = vunpack.c.h.b16 %v5261
    %v5454 = vunpack.c.l.b16 %v5262
    %v5455 = vunpack.c.h.b16 %v5262
    %v5456 = vunpack.c.l.b16 %v5263
    %v5457 = vunpack.c.h.b16 %v5263
    %v5458 = vunpack.c.l.b16 %v5264
    %v5459 = vunpack.c.h.b16 %v5264
    %v5460 = vunpack.c.l.b16 %v5265
    %v5461 = vunpack.c.h.b16 %v5265
    %v5462 = vunpack.c.l.b16 %v5266
    %v5463 = vunpack.c.h.b16 %v5266
    %v5464 = vunpack.c.l.b16 %v5267
    %v5465 = vunpack.c.h.b16 %v5267
    %v5466 = vunpack.c.l.b16 %v5268
    %v5467 = vunpack.c.h.b16 %v5268
    %v5468 = vunpack.c.l.b16 %v5269
    %v5469 = vunpack.c.h.b16 %v5269
    %v5470 = vunpack.c.l.b16 %v5270
    %v5471 = vunpack.c.h.b16 %v5270
    %v5472 = vunpack.c.l.b16 %v5271
    %v5473 = vunpack.c.h.b16 %v5271
    %v5474 = vunpack.c.l.b16 %v5272
    %v5475 = vunpack.c.h.b16 %v5272
    %v5476 = vunpack.c.l.b16 %v5273
    %v5477 = vunpack.c.h.b16 %v5273
    %v5478 = vunpack.c.l.b16 %v5274
    %v5479 = vunpack.c.h.b16 %v5274
    %v5480 = vunpack.c.l.b16 %v5275
    %v5481 = vunpack.c.h.b16 %v5275
    %v5482 = vunpack.c.l.b16 %v5276
    %v5483 = vunpack.c.h.b16 %v5276
    %v5484 = vunpack.c.l.b16 %v5277
    %v5485 = vunpack.c.h.b16 %v5277
    %v5486 = vunpack.c.l.b16 %v5278
    %v5487 = vunpack.c.h.b16 %v5278
    %v5488 = vunpack.c.l.b16 %v5279
    %v5489 = vunpack.c.h.b16 %v5279
    %v5490 = vunpack.c.l.b16 %v5280
    %v5491 = vunpack.c.h.b16 %v5280
    %v5492 = vunpack.c.l.b16 %v5281
    %v5493 = vunpack.c.h.b16 %v5281
    %v5494 = vunpack.c.l.b16 %v5282
    %v5495 = vunpack.c.h.b16 %v5282
    %v5496 = vunpack.c.l.b16 %v5283
    %v5497 = vunpack.c.h.b16 %v5283
    %v5498 = vpack.c.b16 %v5374, %v5370
    %v5499 = vpack.c.b16 %v5375, %v5371
    %v5500 = vpack.c.b16 %v5376, %v5372
    %v5501 = vpack.c.b16 %v5377, %v5373
    %v5502 = vpack.c.b16 %v5382, %v5378
    %v5503 = vpack.c.b16 %v5383, %v5379
    %v5504 = vpack.c.b16 %v5384, %v5380
    %v5505 = vpack.c.b16 %v5385, %v5381
    %v5506 = vpack.c.b16 %v5390, %v5386
    %v5507 = vpack.c.b16 %v5391, %v5387
    %v5508 = vpack.c.b16 %v5392, %v5388
    %v5509 = vpack.c.b16 %v5393, %v5389
    %v5510 = vpack.c.b16 %v5398, %v5394
    %v5511 = vpack.c.b16 %v5399, %v5395
    %v5512 = vpack.c.b16 %v5400, %v5396
    %v5513 = vpack.c.b16 %v5401, %v5397
    %v5514 = vpack.c.b16 %v5406, %v5402
    %v5515 = vpack.c.b16 %v5407, %v5403
    %v5516 = vpack.c.b16 %v5408, %v5404
    %v5517 = vpack.c.b16 %v5409, %v5405
    %v5518 = vpack.c.b16 %v5414, %v5410
    %v5519 = vpack.c.b16 %v5415, %v5411
    %v5520 = vpack.c.b16 %v5416, %v5412
    %v5521 = vpack.c.b16 %v5417, %v5413
    %v5522 = vpack.c.b16 %v5422, %v5418
    %v5523 = vpack.c.b16 %v5423, %v5419
    %v5524 = vpack.c.b16 %v5424, %v5420
    %v5525 = vpack.c.b16 %v5425, %v5421
    %v5526 = vpack.c.b16 %v5430, %v5426
    %v5527 = vpack.c.b16 %v5431, %v5427
    %v5528 = vpack.c.b16 %v5432, %v5428
    %v5529 = vpack.c.b16 %v5433, %v5429
    %v5530 = vpack.c.b16 %v5438, %v5434
    %v5531 = vpack.c.b16 %v5439, %v5435
    %v5532 = vpack.c.b16 %v5440, %v5436
    %v5533 = vpack.c.b16 %v5441, %v5437
    %v5534 = vpack.c.b16 %v5446, %v5442
    %v5535 = vpack.c.b16 %v5447, %v5443
    %v5536 = vpack.c.b16 %v5448, %v5444
    %v5537 = vpack.c.b16 %v5449, %v5445
    %v5538 = vpack.c.b16 %v5454, %v5450
    %v5539 = vpack.c.b16 %v5455, %v5451
    %v5540 = vpack.c.b16 %v5456, %v5452
    %v5541 = vpack.c.b16 %v5457, %v5453
    %v5542 = vpack.c.b16 %v5462, %v5458
    %v5543 = vpack.c.b16 %v5463, %v5459
    %v5544 = vpack.c.b16 %v5464, %v5460
    %v5545 = vpack.c.b16 %v5465, %v5461
    %v5546 = vpack.c.b16 %v5470, %v5466
    %v5547 = vpack.c.b16 %v5471, %v5467
    %v5548 = vpack.c.b16 %v5472, %v5468
    %v5549 = vpack.c.b16 %v5473, %v5469
    %v5550 = vpack.c.b16 %v5478, %v5474
    %v5551 = vpack.c.b16 %v5479, %v5475
    %v5552 = vpack.c.b16 %v5480, %v5476
    %v5553 = vpack.c.b16 %v5481, %v5477
    %v5554 = vpack.c.b16 %v5486, %v5482
    %v5555 = vpack.c.b16 %v5487, %v5483
    %v5556 = vpack.c.b16 %v5488, %v5484
    %v5557 = vpack.c.b16 %v5489, %v5485
    %v5558 = vpack.c.b16 %v5494, %v5490
    %v5559 = vpack.c.b16 %v5495, %v5491
    %v5560 = vpack.c.b16 %v5496, %v5492
    %v5561 = vpack.c.b16 %v5497, %v5493
    %5626 = vmatprep.subr.bf16.mxu0 %v5527
    %5627 = vmatpush1.bf16.msra.mxu0 %v5526
    %5628 = vmatprep.subr.bf16.mxu0 %v5523
    %5629 = vmatpush1.bf16.msra.mxu0 %v5522
    %5630 = vmatprep.subr.bf16.mxu0 %v5519
    %5631 = vmatpush1.bf16.msra.mxu0 %v5518
    %5632 = vmatprep.subr.bf16.mxu0 %v5515
    %5633 = vmatpush1.bf16.msra.mxu0 %v5514
    %5634 = vmatprep.subr.bf16.mxu0 %v5511
    %5635 = vmatpush1.bf16.msra.mxu0 %v5510
    %5636 = vmatprep.subr.bf16.mxu0 %v5507
    %5637 = vmatpush1.bf16.msra.mxu0 %v5506
    %5638 = vmatprep.subr.bf16.mxu0 %v5503
    %5639 = vmatpush1.bf16.msra.mxu0 %v5502
    %5640 = vmatprep.subr.bf16.mxu0 %v5499
    %5641 = vmatpush1.bf16.msra.mxu0 %v5498
    %5642 = vmatprep.subr.bf16.mxu0 %v5559
    %5643 = vmatpush2.bf16.msra.mxu0 %v5558
    %5644 = vmatprep.subr.bf16.mxu0 %v5555
    %5645 = vmatpush2.bf16.msra.mxu0 %v5554
    %5646 = vmatprep.subr.bf16.mxu0 %v5551
    %5647 = vmatpush2.bf16.msra.mxu0 %v5550
    %5648 = vmatprep.subr.bf16.mxu0 %v5547
    %5649 = vmatpush2.bf16.msra.mxu0 %v5546
    %5650 = vmatprep.subr.bf16.mxu0 %v5543
    %5651 = vmatpush2.bf16.msra.mxu0 %v5542
    %5652 = vmatprep.subr.bf16.mxu0 %v5539
    %5653 = vmatpush2.bf16.msra.mxu0 %v5538
    %5654 = vmatprep.subr.bf16.mxu0 %v5535
    %5655 = vmatpush2.bf16.msra.mxu0 %v5534
    %5656 = vmatprep.subr.bf16.mxu0 %v5531
    %5657 = vmatpush2.bf16.msra.mxu0 %v5530
    %5658 = vmatprep.mubr.bf16.mxu0 %v5219
    %5659 = vmatmul.mubr.bf16.gmra.mxu0 %v5218
    %v5660 = vpop.f32.mrf.mxu0
    %v5661 = vadd.f32 %v5289, %v5660
    %v5662 = vpop.f32.mrf.mxu0
    %v5663 = vadd.f32 %v5293, %v5662
    %v5664 = vpop.f32.mrf.mxu0
    %v5665 = vpop.f32.mrf.mxu0
    %5666 = vdwg.mxu0
    %5667 = vmatprep.subr.bf16.mxu0 %v5529
    %5668 = vmatpush1.bf16.msra.mxu0 %v5528
    %5669 = vmatprep.subr.bf16.mxu0 %v5525
    %5670 = vmatpush1.bf16.msra.mxu0 %v5524
    %5671 = vmatprep.subr.bf16.mxu0 %v5521
    %5672 = vmatpush1.bf16.msra.mxu0 %v5520
    %5673 = vmatprep.subr.bf16.mxu0 %v5517
    %5674 = vmatpush1.bf16.msra.mxu0 %v5516
    %5675 = vmatprep.subr.bf16.mxu0 %v5513
    %5676 = vmatpush1.bf16.msra.mxu0 %v5512
    %5677 = vmatprep.subr.bf16.mxu0 %v5509
    %5678 = vmatpush1.bf16.msra.mxu0 %v5508
    %5679 = vmatprep.subr.bf16.mxu0 %v5505
    %5680 = vmatpush1.bf16.msra.mxu0 %v5504
    %5681 = vmatprep.subr.bf16.mxu0 %v5501
    %5682 = vmatpush1.bf16.msra.mxu0 %v5500
    %5683 = vmatprep.subr.bf16.mxu0 %v5561
    %5684 = vmatpush2.bf16.msra.mxu0 %v5560
    %5685 = vmatprep.subr.bf16.mxu0 %v5557
    %5686 = vmatpush2.bf16.msra.mxu0 %v5556
    %5687 = vmatprep.subr.bf16.mxu0 %v5553
    %5688 = vmatpush2.bf16.msra.mxu0 %v5552
    %5689 = vmatprep.subr.bf16.mxu0 %v5549
    %5690 = vmatpush2.bf16.msra.mxu0 %v5548
    %5691 = vmatprep.subr.bf16.mxu0 %v5545
    %5692 = vmatpush2.bf16.msra.mxu0 %v5544
    %5693 = vmatprep.subr.bf16.mxu0 %v5541
    %5694 = vmatpush2.bf16.msra.mxu0 %v5540
    %5695 = vmatprep.subr.bf16.mxu0 %v5537
    %5696 = vmatpush2.bf16.msra.mxu0 %v5536
    %5697 = vmatprep.subr.bf16.mxu0 %v5533
    %5698 = vmatpush2.bf16.msra.mxu0 %v5532
    %5699 = vmatprep.mubr.bf16.mxu0 %v5219
    %5700 = vmatmul.mubr.bf16.gmra.mxu0 %v5218
    %v5701 = vpop.f32.mrf.mxu0
    %v5702 = vadd.f32 %v5297, %v5701
    %v5703 = vpop.f32.mrf.mxu0
    %v5704 = vadd.f32 %v5301, %v5703
    %v5705 = vpop.f32.mrf.mxu0
    %v5706 = vpop.f32.mrf.mxu0
    %5707 = vdwg.mxu0
    %v5708 = vmax.f32 %v5661, 0.0
    %v5709 = vmax.f32 %v5663, 0.0
    %v5710 = vmax.f32 %v5702, 0.0
    %v5711 = vmax.f32 %v5704, 0.0
    %v5712 = vpack.c.bf16 %v5708, %v5708
    %v5713 = vpack.c.bf16 %v5709, %v5709
    %v5714 = vpack.c.bf16 %v5710, %v5710
    %v5715 = vpack.c.bf16 %v5711, %v5711
    %v5716 = vld [vmem:[#allocation23] sm:$0xff]
    %v5717 = vld [vmem:[#allocation23 + $0x8] sm:$0xff]
    %v5718 = vld [vmem:[#allocation23 + $0x10] sm:$0xff]
    %v5719 = vld [vmem:[#allocation23 + $0x18] sm:$0xff]
    %v5720 = vld [vmem:[#allocation23 + $0x20] sm:$0xff]
    %v5721 = vld [vmem:[#allocation23 + $0x28] sm:$0xff]
    %v5722 = vld [vmem:[#allocation23 + $0x30] sm:$0xff]
    %v5723 = vld [vmem:[#allocation23 + $0x38] sm:$0xff]
    %v5724 = vld [vmem:[#allocation23 + $0x40] sm:$0xff]
    %v5725 = vld [vmem:[#allocation23 + $0x48] sm:$0xff]
    %v5726 = vld [vmem:[#allocation23 + $0x50] sm:$0xff]
    %v5727 = vld [vmem:[#allocation23 + $0x58] sm:$0xff]
    %v5728 = vld [vmem:[#allocation23 + $0x60] sm:$0xff]
    %v5729 = vld [vmem:[#allocation23 + $0x68] sm:$0xff]
    %v5730 = vld [vmem:[#allocation23 + $0x70] sm:$0xff]
    %v5731 = vld [vmem:[#allocation23 + $0x78] sm:$0xff]
    %v5732 = vld [vmem:[#allocation23 + $0x80] sm:$0xff]
    %v5733 = vld [vmem:[#allocation23 + $0x88] sm:$0xff]
    %v5734 = vld [vmem:[#allocation23 + $0x90] sm:$0xff]
    %v5735 = vld [vmem:[#allocation23 + $0x98] sm:$0xff]
    %v5736 = vld [vmem:[#allocation23 + $0xa0] sm:$0xff]
    %v5737 = vld [vmem:[#allocation23 + $0xa8] sm:$0xff]
    %v5738 = vld [vmem:[#allocation23 + $0xb0] sm:$0xff]
    %v5739 = vld [vmem:[#allocation23 + $0xb8] sm:$0xff]
    %v5740 = vld [vmem:[#allocation23 + $0xc0] sm:$0xff]
    %v5741 = vld [vmem:[#allocation23 + $0xc8] sm:$0xff]
    %v5742 = vld [vmem:[#allocation23 + $0xd0] sm:$0xff]
    %v5743 = vld [vmem:[#allocation23 + $0xd8] sm:$0xff]
    %v5744 = vld [vmem:[#allocation23 + $0xe0] sm:$0xff]
    %v5745 = vld [vmem:[#allocation23 + $0xe8] sm:$0xff]
    %v5746 = vld [vmem:[#allocation23 + $0xf0] sm:$0xff]
    %v5747 = vld [vmem:[#allocation23 + $0xf8] sm:$0xff]
    %v5748 = vld [vmem:[#allocation23 + $0x100] sm:$0xff]
    %v5749 = vld [vmem:[#allocation23 + $0x108] sm:$0xff]
    %v5750 = vld [vmem:[#allocation23 + $0x110] sm:$0xff]
    %v5751 = vld [vmem:[#allocation23 + $0x118] sm:$0xff]
    %v5752 = vld [vmem:[#allocation23 + $0x120] sm:$0xff]
    %v5753 = vld [vmem:[#allocation23 + $0x128] sm:$0xff]
    %v5754 = vld [vmem:[#allocation23 + $0x130] sm:$0xff]
    %v5755 = vld [vmem:[#allocation23 + $0x138] sm:$0xff]
    %v5756 = vld [vmem:[#allocation23 + $0x140] sm:$0xff]
    %v5757 = vld [vmem:[#allocation23 + $0x148] sm:$0xff]
    %v5758 = vld [vmem:[#allocation23 + $0x150] sm:$0xff]
    %v5759 = vld [vmem:[#allocation23 + $0x158] sm:$0xff]
    %v5760 = vld [vmem:[#allocation23 + $0x160] sm:$0xff]
    %v5761 = vld [vmem:[#allocation23 + $0x168] sm:$0xff]
    %v5762 = vld [vmem:[#allocation23 + $0x170] sm:$0xff]
    %v5763 = vld [vmem:[#allocation23 + $0x178] sm:$0xff]
    %v5764 = vld [vmem:[#allocation23 + $0x180] sm:$0xff]
    %v5765 = vld [vmem:[#allocation23 + $0x188] sm:$0xff]
    %v5766 = vld [vmem:[#allocation23 + $0x190] sm:$0xff]
    %v5767 = vld [vmem:[#allocation23 + $0x198] sm:$0xff]
    %v5768 = vld [vmem:[#allocation23 + $0x1a0] sm:$0xff]
    %v5769 = vld [vmem:[#allocation23 + $0x1a8] sm:$0xff]
    %v5770 = vld [vmem:[#allocation23 + $0x1b0] sm:$0xff]
    %v5771 = vld [vmem:[#allocation23 + $0x1b8] sm:$0xff]
    %v5772 = vld [vmem:[#allocation23 + $0x1c0] sm:$0xff]
    %v5773 = vld [vmem:[#allocation23 + $0x1c8] sm:$0xff]
    %v5774 = vld [vmem:[#allocation23 + $0x1d0] sm:$0xff]
    %v5775 = vld [vmem:[#allocation23 + $0x1d8] sm:$0xff]
    %v5776 = vld [vmem:[#allocation23 + $0x1e0] sm:$0xff]
    %v5777 = vld [vmem:[#allocation23 + $0x1e8] sm:$0xff]
    %v5778 = vld [vmem:[#allocation23 + $0x1f0] sm:$0xff]
    %v5779 = vld [vmem:[#allocation23 + $0x1f8] sm:$0xff]
    %v5780 = vld [vmem:[#allocation23 + $0x200] sm:$0xff]
    %v5781 = vld [vmem:[#allocation23 + $0x208] sm:$0xff]
    %v5782 = vld [vmem:[#allocation23 + $0x210] sm:$0xff]
    %v5783 = vld [vmem:[#allocation23 + $0x218] sm:$0xff]
    %v5784 = vld [vmem:[#allocation23 + $0x220] sm:$0xff]
    %v5785 = vld [vmem:[#allocation23 + $0x228] sm:$0xff]
    %v5786 = vld [vmem:[#allocation23 + $0x230] sm:$0xff]
    %v5787 = vld [vmem:[#allocation23 + $0x238] sm:$0xff]
    %v5788 = vld [vmem:[#allocation23 + $0x240] sm:$0xff]
    %v5789 = vld [vmem:[#allocation23 + $0x248] sm:$0xff]
    %v5790 = vld [vmem:[#allocation23 + $0x250] sm:$0xff]
    %v5791 = vld [vmem:[#allocation23 + $0x258] sm:$0xff]
    %v5792 = vld [vmem:[#allocation23 + $0x260] sm:$0xff]
    %v5793 = vld [vmem:[#allocation23 + $0x268] sm:$0xff]
    %v5794 = vld [vmem:[#allocation23 + $0x270] sm:$0xff]
    %v5795 = vld [vmem:[#allocation23 + $0x278] sm:$0xff]
    %v5796 = vld [vmem:[#allocation23 + $0x280] sm:$0xff]
    %v5797 = vld [vmem:[#allocation23 + $0x288] sm:$0xff]
    %v5798 = vld [vmem:[#allocation23 + $0x290] sm:$0xff]
    %v5799 = vld [vmem:[#allocation23 + $0x298] sm:$0xff]
    %v5800 = vld [vmem:[#allocation23 + $0x2a0] sm:$0xff]
    %v5801 = vld [vmem:[#allocation23 + $0x2a8] sm:$0xff]
    %v5802 = vld [vmem:[#allocation23 + $0x2b0] sm:$0xff]
    %v5803 = vld [vmem:[#allocation23 + $0x2b8] sm:$0xff]
    %v5804 = vld [vmem:[#allocation23 + $0x2c0] sm:$0xff]
    %v5805 = vld [vmem:[#allocation23 + $0x2c8] sm:$0xff]
    %v5806 = vld [vmem:[#allocation23 + $0x2d0] sm:$0xff]
    %v5807 = vld [vmem:[#allocation23 + $0x2d8] sm:$0xff]
    %v5808 = vld [vmem:[#allocation23 + $0x2e0] sm:$0xff]
    %v5809 = vld [vmem:[#allocation23 + $0x2e8] sm:$0xff]
    %v5810 = vld [vmem:[#allocation23 + $0x2f0] sm:$0xff]
    %v5811 = vld [vmem:[#allocation23 + $0x2f8] sm:$0xff]
    %v5812 = vld [vmem:[#allocation23 + $0x300] sm:$0xff]
    %v5813 = vld [vmem:[#allocation23 + $0x308] sm:$0xff]
    %v5814 = vld [vmem:[#allocation23 + $0x310] sm:$0xff]
    %v5815 = vld [vmem:[#allocation23 + $0x318] sm:$0xff]
    %v5816 = vld [vmem:[#allocation23 + $0x320] sm:$0xff]
    %v5817 = vld [vmem:[#allocation23 + $0x328] sm:$0xff]
    %v5818 = vld [vmem:[#allocation23 + $0x330] sm:$0xff]
    %v5819 = vld [vmem:[#allocation23 + $0x338] sm:$0xff]
    %v5820 = vld [vmem:[#allocation23 + $0x340] sm:$0xff]
    %v5821 = vld [vmem:[#allocation23 + $0x348] sm:$0xff]
    %v5822 = vld [vmem:[#allocation23 + $0x350] sm:$0xff]
    %v5823 = vld [vmem:[#allocation23 + $0x358] sm:$0xff]
    %v5824 = vld [vmem:[#allocation23 + $0x360] sm:$0xff]
    %v5825 = vld [vmem:[#allocation23 + $0x368] sm:$0xff]
    %v5826 = vld [vmem:[#allocation23 + $0x370] sm:$0xff]
    %v5827 = vld [vmem:[#allocation23 + $0x378] sm:$0xff]
    %v5828 = vld [vmem:[#allocation23 + $0x380] sm:$0xff]
    %v5829 = vld [vmem:[#allocation23 + $0x388] sm:$0xff]
    %v5830 = vld [vmem:[#allocation23 + $0x390] sm:$0xff]
    %v5831 = vld [vmem:[#allocation23 + $0x398] sm:$0xff]
    %v5832 = vld [vmem:[#allocation23 + $0x3a0] sm:$0xff]
    %v5833 = vld [vmem:[#allocation23 + $0x3a8] sm:$0xff]
    %v5834 = vld [vmem:[#allocation23 + $0x3b0] sm:$0xff]
    %v5835 = vld [vmem:[#allocation23 + $0x3b8] sm:$0xff]
    %v5836 = vld [vmem:[#allocation23 + $0x3c0] sm:$0xff]
    %v5837 = vld [vmem:[#allocation23 + $0x3c8] sm:$0xff]
    %v5838 = vld [vmem:[#allocation23 + $0x3d0] sm:$0xff]
    %v5839 = vld [vmem:[#allocation23 + $0x3d8] sm:$0xff]
    %v5840 = vld [vmem:[#allocation23 + $0x3e0] sm:$0xff]
    %v5841 = vld [vmem:[#allocation23 + $0x3e8] sm:$0xff]
    %v5842 = vld [vmem:[#allocation23 + $0x3f0] sm:$0xff]
    %v5843 = vld [vmem:[#allocation23 + $0x3f8] sm:$0xff]
    %v5844 = vld [vmem:[#allocation23 + $0x400] sm:$0xff]
    %v5845 = vld [vmem:[#allocation23 + $0x408] sm:$0xff]
    %v5846 = vld [vmem:[#allocation23 + $0x410] sm:$0xff]
    %v5847 = vld [vmem:[#allocation23 + $0x418] sm:$0xff]
    %v5848 = vld [vmem:[#allocation23 + $0x420] sm:$0xff]
    %v5849 = vld [vmem:[#allocation23 + $0x428] sm:$0xff]
    %v5850 = vld [vmem:[#allocation23 + $0x430] sm:$0xff]
    %v5851 = vld [vmem:[#allocation23 + $0x438] sm:$0xff]
    %v5852 = vld [vmem:[#allocation23 + $0x440] sm:$0xff]
    %v5853 = vld [vmem:[#allocation23 + $0x448] sm:$0xff]
    %v5854 = vld [vmem:[#allocation23 + $0x450] sm:$0xff]
    %v5855 = vld [vmem:[#allocation23 + $0x458] sm:$0xff]
    %v5856 = vld [vmem:[#allocation23 + $0x460] sm:$0xff]
    %v5857 = vld [vmem:[#allocation23 + $0x468] sm:$0xff]
    %v5858 = vld [vmem:[#allocation23 + $0x470] sm:$0xff]
    %v5859 = vld [vmem:[#allocation23 + $0x478] sm:$0xff]
    %v5860 = vld [vmem:[#allocation23 + $0x480] sm:$0xff]
    %v5861 = vld [vmem:[#allocation23 + $0x488] sm:$0xff]
    %v5862 = vld [vmem:[#allocation23 + $0x490] sm:$0xff]
    %v5863 = vld [vmem:[#allocation23 + $0x498] sm:$0xff]
    %v5864 = vld [vmem:[#allocation23 + $0x4a0] sm:$0xff]
    %v5865 = vld [vmem:[#allocation23 + $0x4a8] sm:$0xff]
    %v5866 = vld [vmem:[#allocation23 + $0x4b0] sm:$0xff]
    %v5867 = vld [vmem:[#allocation23 + $0x4b8] sm:$0xff]
    %v5868 = vld [vmem:[#allocation23 + $0x4c0] sm:$0xff]
    %v5869 = vld [vmem:[#allocation23 + $0x4c8] sm:$0xff]
    %v5870 = vld [vmem:[#allocation23 + $0x4d0] sm:$0xff]
    %v5871 = vld [vmem:[#allocation23 + $0x4d8] sm:$0xff]
    %v5872 = vld [vmem:[#allocation23 + $0x4e0] sm:$0xff]
    %v5873 = vld [vmem:[#allocation23 + $0x4e8] sm:$0xff]
    %v5874 = vld [vmem:[#allocation23 + $0x4f0] sm:$0xff]
    %v5875 = vld [vmem:[#allocation23 + $0x4f8] sm:$0xff]
    %v5876 = vld [vmem:[#allocation23 + $0x500] sm:$0xff]
    %v5877 = vld [vmem:[#allocation23 + $0x508] sm:$0xff]
    %v5878 = vld [vmem:[#allocation23 + $0x510] sm:$0xff]
    %v5879 = vld [vmem:[#allocation23 + $0x518] sm:$0xff]
    %v5880 = vld [vmem:[#allocation23 + $0x520] sm:$0xff]
    %v5881 = vld [vmem:[#allocation23 + $0x528] sm:$0xff]
    %v5882 = vld [vmem:[#allocation23 + $0x530] sm:$0xff]
    %v5883 = vld [vmem:[#allocation23 + $0x538] sm:$0xff]
    %v5884 = vld [vmem:[#allocation23 + $0x540] sm:$0xff]
    %v5885 = vld [vmem:[#allocation23 + $0x548] sm:$0xff]
    %v5886 = vld [vmem:[#allocation23 + $0x550] sm:$0xff]
    %v5887 = vld [vmem:[#allocation23 + $0x558] sm:$0xff]
    %v5888 = vld [vmem:[#allocation23 + $0x560] sm:$0xff]
    %v5889 = vld [vmem:[#allocation23 + $0x568] sm:$0xff]
    %v5890 = vld [vmem:[#allocation23 + $0x570] sm:$0xff]
    %v5891 = vld [vmem:[#allocation23 + $0x578] sm:$0xff]
    %v5892 = vld [vmem:[#allocation23 + $0x580] sm:$0xff]
    %v5893 = vld [vmem:[#allocation23 + $0x588] sm:$0xff]
    %v5894 = vld [vmem:[#allocation23 + $0x590] sm:$0xff]
    %v5895 = vld [vmem:[#allocation23 + $0x598] sm:$0xff]
    %v5896 = vld [vmem:[#allocation23 + $0x5a0] sm:$0xff]
    %v5897 = vld [vmem:[#allocation23 + $0x5a8] sm:$0xff]
    %v5898 = vld [vmem:[#allocation23 + $0x5b0] sm:$0xff]
    %v5899 = vld [vmem:[#allocation23 + $0x5b8] sm:$0xff]
    %v5900 = vld [vmem:[#allocation23 + $0x5c0] sm:$0xff]
    %v5901 = vld [vmem:[#allocation23 + $0x5c8] sm:$0xff]
    %v5902 = vld [vmem:[#allocation23 + $0x5d0] sm:$0xff]
    %v5903 = vld [vmem:[#allocation23 + $0x5d8] sm:$0xff]
    %v5904 = vld [vmem:[#allocation23 + $0x5e0] sm:$0xff]
    %v5905 = vld [vmem:[#allocation23 + $0x5e8] sm:$0xff]
    %v5906 = vld [vmem:[#allocation23 + $0x5f0] sm:$0xff]
    %v5907 = vld [vmem:[#allocation23 + $0x5f8] sm:$0xff]
    %v5908 = vld [vmem:[#allocation23 + $0x600] sm:$0xff]
    %v5909 = vld [vmem:[#allocation23 + $0x608] sm:$0xff]
    %v5910 = vld [vmem:[#allocation23 + $0x610] sm:$0xff]
    %v5911 = vld [vmem:[#allocation23 + $0x618] sm:$0xff]
    %v5912 = vld [vmem:[#allocation23 + $0x620] sm:$0xff]
    %v5913 = vld [vmem:[#allocation23 + $0x628] sm:$0xff]
    %v5914 = vld [vmem:[#allocation23 + $0x630] sm:$0xff]
    %v5915 = vld [vmem:[#allocation23 + $0x638] sm:$0xff]
    %v5916 = vld [vmem:[#allocation23 + $0x640] sm:$0xff]
    %v5917 = vld [vmem:[#allocation23 + $0x648] sm:$0xff]
    %v5918 = vld [vmem:[#allocation23 + $0x650] sm:$0xff]
    %v5919 = vld [vmem:[#allocation23 + $0x658] sm:$0xff]
    %v5920 = vld [vmem:[#allocation23 + $0x660] sm:$0xff]
    %v5921 = vld [vmem:[#allocation23 + $0x668] sm:$0xff]
    %v5922 = vld [vmem:[#allocation23 + $0x670] sm:$0xff]
    %v5923 = vld [vmem:[#allocation23 + $0x678] sm:$0xff]
    %v5924 = vld [vmem:[#allocation23 + $0x680] sm:$0xff]
    %v5925 = vld [vmem:[#allocation23 + $0x688] sm:$0xff]
    %v5926 = vld [vmem:[#allocation23 + $0x690] sm:$0xff]
    %v5927 = vld [vmem:[#allocation23 + $0x698] sm:$0xff]
    %v5928 = vld [vmem:[#allocation23 + $0x6a0] sm:$0xff]
    %v5929 = vld [vmem:[#allocation23 + $0x6a8] sm:$0xff]
    %v5930 = vld [vmem:[#allocation23 + $0x6b0] sm:$0xff]
    %v5931 = vld [vmem:[#allocation23 + $0x6b8] sm:$0xff]
    %v5932 = vld [vmem:[#allocation23 + $0x6c0] sm:$0xff]
    %v5933 = vld [vmem:[#allocation23 + $0x6c8] sm:$0xff]
    %v5934 = vld [vmem:[#allocation23 + $0x6d0] sm:$0xff]
    %v5935 = vld [vmem:[#allocation23 + $0x6d8] sm:$0xff]
    %v5936 = vld [vmem:[#allocation23 + $0x6e0] sm:$0xff]
    %v5937 = vld [vmem:[#allocation23 + $0x6e8] sm:$0xff]
    %v5938 = vld [vmem:[#allocation23 + $0x6f0] sm:$0xff]
    %v5939 = vld [vmem:[#allocation23 + $0x6f8] sm:$0xff]
    %v5940 = vld [vmem:[#allocation23 + $0x700] sm:$0xff]
    %v5941 = vld [vmem:[#allocation23 + $0x708] sm:$0xff]
    %v5942 = vld [vmem:[#allocation23 + $0x710] sm:$0xff]
    %v5943 = vld [vmem:[#allocation23 + $0x718] sm:$0xff]
    %v5944 = vld [vmem:[#allocation23 + $0x720] sm:$0xff]
    %v5945 = vld [vmem:[#allocation23 + $0x728] sm:$0xff]
    %v5946 = vld [vmem:[#allocation23 + $0x730] sm:$0xff]
    %v5947 = vld [vmem:[#allocation23 + $0x738] sm:$0xff]
    %v5948 = vld [vmem:[#allocation23 + $0x740] sm:$0xff]
    %v5949 = vld [vmem:[#allocation23 + $0x748] sm:$0xff]
    %v5950 = vld [vmem:[#allocation23 + $0x750] sm:$0xff]
    %v5951 = vld [vmem:[#allocation23 + $0x758] sm:$0xff]
    %v5952 = vld [vmem:[#allocation23 + $0x760] sm:$0xff]
    %v5953 = vld [vmem:[#allocation23 + $0x768] sm:$0xff]
    %v5954 = vld [vmem:[#allocation23 + $0x770] sm:$0xff]
    %v5955 = vld [vmem:[#allocation23 + $0x778] sm:$0xff]
    %v5956 = vld [vmem:[#allocation23 + $0x780] sm:$0xff]
    %v5957 = vld [vmem:[#allocation23 + $0x788] sm:$0xff]
    %v5958 = vld [vmem:[#allocation23 + $0x790] sm:$0xff]
    %v5959 = vld [vmem:[#allocation23 + $0x798] sm:$0xff]
    %v5960 = vld [vmem:[#allocation23 + $0x7a0] sm:$0xff]
    %v5961 = vld [vmem:[#allocation23 + $0x7a8] sm:$0xff]
    %v5962 = vld [vmem:[#allocation23 + $0x7b0] sm:$0xff]
    %v5963 = vld [vmem:[#allocation23 + $0x7b8] sm:$0xff]
    %v5964 = vld [vmem:[#allocation23 + $0x7c0] sm:$0xff]
    %v5965 = vld [vmem:[#allocation23 + $0x7c8] sm:$0xff]
    %v5966 = vld [vmem:[#allocation23 + $0x7d0] sm:$0xff]
    %v5967 = vld [vmem:[#allocation23 + $0x7d8] sm:$0xff]
    %v5968 = vld [vmem:[#allocation23 + $0x7e0] sm:$0xff]
    %v5969 = vld [vmem:[#allocation23 + $0x7e8] sm:$0xff]
    %v5970 = vld [vmem:[#allocation23 + $0x7f0] sm:$0xff]
    %v5971 = vld [vmem:[#allocation23 + $0x7f8] sm:$0xff]
    %v5972 = vld [vmem:[%s18] sm:$0xff]
    %v5974 = vlaneseq
    %v5975 = vshrl.u32 %v5974, 7
    %v5976 = vsub.s32 0, %v5975
    %v5977 = vrot.slane %v5972, %v5976
    %v5978 = vlaneseq
    %v5979 = vshrl.u32 %v5978, 7
    %v5980 = vsub.s32 1, %v5979
    %v5981 = vrot.slane %v5972, %v5980
    %v5982 = vlaneseq
    %v5983 = vshrl.u32 %v5982, 7
    %v5984 = vsub.s32 2, %v5983
    %v5985 = vrot.slane %v5972, %v5984
    %v5986 = vlaneseq
    %v5987 = vshrl.u32 %v5986, 7
    %v5988 = vsub.s32 3, %v5987
    %v5989 = vrot.slane %v5972, %v5988
    %v5990 = vlaneseq
    %v5991 = vshrl.u32 %v5990, 7
    %v5992 = vsub.s32 4, %v5991
    %v5993 = vrot.slane %v5972, %v5992
    %v5994 = vlaneseq
    %v5995 = vshrl.u32 %v5994, 7
    %v5996 = vsub.s32 5, %v5995
    %v5997 = vrot.slane %v5972, %v5996
    %v5998 = vlaneseq
    %v5999 = vshrl.u32 %v5998, 7
    %v6000 = vsub.s32 6, %v5999
    %v6001 = vrot.slane %v5972, %v6000
    %v6002 = vlaneseq
    %v6003 = vshrl.u32 %v6002, 7
    %v6004 = vsub.s32 7, %v6003
    %v6005 = vrot.slane %v5972, %v6004
    %v6270 = vunpack.c.l.b16 %v5716
    %v6271 = vunpack.c.h.b16 %v5716
    %v6272 = vunpack.c.l.b16 %v5717
    %v6273 = vunpack.c.h.b16 %v5717
    %v6274 = vunpack.c.l.b16 %v5718
    %v6275 = vunpack.c.h.b16 %v5718
    %v6276 = vunpack.c.l.b16 %v5719
    %v6277 = vunpack.c.h.b16 %v5719
    %v6278 = vunpack.c.l.b16 %v5720
    %v6279 = vunpack.c.h.b16 %v5720
    %v6280 = vunpack.c.l.b16 %v5721
    %v6281 = vunpack.c.h.b16 %v5721
    %v6282 = vunpack.c.l.b16 %v5722
    %v6283 = vunpack.c.h.b16 %v5722
    %v6284 = vunpack.c.l.b16 %v5723
    %v6285 = vunpack.c.h.b16 %v5723
    %v6286 = vunpack.c.l.b16 %v5724
    %v6287 = vunpack.c.h.b16 %v5724
    %v6288 = vunpack.c.l.b16 %v5725
    %v6289 = vunpack.c.h.b16 %v5725
    %v6290 = vunpack.c.l.b16 %v5726
    %v6291 = vunpack.c.h.b16 %v5726
    %v6292 = vunpack.c.l.b16 %v5727
    %v6293 = vunpack.c.h.b16 %v5727
    %v6294 = vunpack.c.l.b16 %v5728
    %v6295 = vunpack.c.h.b16 %v5728
    %v6296 = vunpack.c.l.b16 %v5729
    %v6297 = vunpack.c.h.b16 %v5729
    %v6298 = vunpack.c.l.b16 %v5730
    %v6299 = vunpack.c.h.b16 %v5730
    %v6300 = vunpack.c.l.b16 %v5731
    %v6301 = vunpack.c.h.b16 %v5731
    %v6302 = vunpack.c.l.b16 %v5732
    %v6303 = vunpack.c.h.b16 %v5732
    %v6304 = vunpack.c.l.b16 %v5733
    %v6305 = vunpack.c.h.b16 %v5733
    %v6306 = vunpack.c.l.b16 %v5734
    %v6307 = vunpack.c.h.b16 %v5734
    %v6308 = vunpack.c.l.b16 %v5735
    %v6309 = vunpack.c.h.b16 %v5735
    %v6310 = vunpack.c.l.b16 %v5736
    %v6311 = vunpack.c.h.b16 %v5736
    %v6312 = vunpack.c.l.b16 %v5737
    %v6313 = vunpack.c.h.b16 %v5737
    %v6314 = vunpack.c.l.b16 %v5738
    %v6315 = vunpack.c.h.b16 %v5738
    %v6316 = vunpack.c.l.b16 %v5739
    %v6317 = vunpack.c.h.b16 %v5739
    %v6318 = vunpack.c.l.b16 %v5740
    %v6319 = vunpack.c.h.b16 %v5740
    %v6320 = vunpack.c.l.b16 %v5741
    %v6321 = vunpack.c.h.b16 %v5741
    %v6322 = vunpack.c.l.b16 %v5742
    %v6323 = vunpack.c.h.b16 %v5742
    %v6324 = vunpack.c.l.b16 %v5743
    %v6325 = vunpack.c.h.b16 %v5743
    %v6326 = vunpack.c.l.b16 %v5744
    %v6327 = vunpack.c.h.b16 %v5744
    %v6328 = vunpack.c.l.b16 %v5745
    %v6329 = vunpack.c.h.b16 %v5745
    %v6330 = vunpack.c.l.b16 %v5746
    %v6331 = vunpack.c.h.b16 %v5746
    %v6332 = vunpack.c.l.b16 %v5747
    %v6333 = vunpack.c.h.b16 %v5747
    %v6334 = vunpack.c.l.b16 %v5748
    %v6335 = vunpack.c.h.b16 %v5748
    %v6336 = vunpack.c.l.b16 %v5749
    %v6337 = vunpack.c.h.b16 %v5749
    %v6338 = vunpack.c.l.b16 %v5750
    %v6339 = vunpack.c.h.b16 %v5750
    %v6340 = vunpack.c.l.b16 %v5751
    %v6341 = vunpack.c.h.b16 %v5751
    %v6342 = vunpack.c.l.b16 %v5752
    %v6343 = vunpack.c.h.b16 %v5752
    %v6344 = vunpack.c.l.b16 %v5753
    %v6345 = vunpack.c.h.b16 %v5753
    %v6346 = vunpack.c.l.b16 %v5754
    %v6347 = vunpack.c.h.b16 %v5754
    %v6348 = vunpack.c.l.b16 %v5755
    %v6349 = vunpack.c.h.b16 %v5755
    %v6350 = vunpack.c.l.b16 %v5756
    %v6351 = vunpack.c.h.b16 %v5756
    %v6352 = vunpack.c.l.b16 %v5757
    %v6353 = vunpack.c.h.b16 %v5757
    %v6354 = vunpack.c.l.b16 %v5758
    %v6355 = vunpack.c.h.b16 %v5758
    %v6356 = vunpack.c.l.b16 %v5759
    %v6357 = vunpack.c.h.b16 %v5759
    %v6358 = vunpack.c.l.b16 %v5760
    %v6359 = vunpack.c.h.b16 %v5760
    %v6360 = vunpack.c.l.b16 %v5761
    %v6361 = vunpack.c.h.b16 %v5761
    %v6362 = vunpack.c.l.b16 %v5762
    %v6363 = vunpack.c.h.b16 %v5762
    %v6364 = vunpack.c.l.b16 %v5763
    %v6365 = vunpack.c.h.b16 %v5763
    %v6366 = vunpack.c.l.b16 %v5764
    %v6367 = vunpack.c.h.b16 %v5764
    %v6368 = vunpack.c.l.b16 %v5765
    %v6369 = vunpack.c.h.b16 %v5765
    %v6370 = vunpack.c.l.b16 %v5766
    %v6371 = vunpack.c.h.b16 %v5766
    %v6372 = vunpack.c.l.b16 %v5767
    %v6373 = vunpack.c.h.b16 %v5767
    %v6374 = vunpack.c.l.b16 %v5768
    %v6375 = vunpack.c.h.b16 %v5768
    %v6376 = vunpack.c.l.b16 %v5769
    %v6377 = vunpack.c.h.b16 %v5769
    %v6378 = vunpack.c.l.b16 %v5770
    %v6379 = vunpack.c.h.b16 %v5770
    %v6380 = vunpack.c.l.b16 %v5771
    %v6381 = vunpack.c.h.b16 %v5771
    %v6382 = vunpack.c.l.b16 %v5772
    %v6383 = vunpack.c.h.b16 %v5772
    %v6384 = vunpack.c.l.b16 %v5773
    %v6385 = vunpack.c.h.b16 %v5773
    %v6386 = vunpack.c.l.b16 %v5774
    %v6387 = vunpack.c.h.b16 %v5774
    %v6388 = vunpack.c.l.b16 %v5775
    %v6389 = vunpack.c.h.b16 %v5775
    %v6390 = vunpack.c.l.b16 %v5776
    %v6391 = vunpack.c.h.b16 %v5776
    %v6392 = vunpack.c.l.b16 %v5777
    %v6393 = vunpack.c.h.b16 %v5777
    %v6394 = vunpack.c.l.b16 %v5778
    %v6395 = vunpack.c.h.b16 %v5778
    %v6396 = vunpack.c.l.b16 %v5779
    %v6397 = vunpack.c.h.b16 %v5779
    %v6398 = vunpack.c.l.b16 %v5780
    %v6399 = vunpack.c.h.b16 %v5780
    %v6400 = vunpack.c.l.b16 %v5781
    %v6401 = vunpack.c.h.b16 %v5781
    %v6402 = vunpack.c.l.b16 %v5782
    %v6403 = vunpack.c.h.b16 %v5782
    %v6404 = vunpack.c.l.b16 %v5783
    %v6405 = vunpack.c.h.b16 %v5783
    %v6406 = vunpack.c.l.b16 %v5784
    %v6407 = vunpack.c.h.b16 %v5784
    %v6408 = vunpack.c.l.b16 %v5785
    %v6409 = vunpack.c.h.b16 %v5785
    %v6410 = vunpack.c.l.b16 %v5786
    %v6411 = vunpack.c.h.b16 %v5786
    %v6412 = vunpack.c.l.b16 %v5787
    %v6413 = vunpack.c.h.b16 %v5787
    %v6414 = vunpack.c.l.b16 %v5788
    %v6415 = vunpack.c.h.b16 %v5788
    %v6416 = vunpack.c.l.b16 %v5789
    %v6417 = vunpack.c.h.b16 %v5789
    %v6418 = vunpack.c.l.b16 %v5790
    %v6419 = vunpack.c.h.b16 %v5790
    %v6420 = vunpack.c.l.b16 %v5791
    %v6421 = vunpack.c.h.b16 %v5791
    %v6422 = vunpack.c.l.b16 %v5792
    %v6423 = vunpack.c.h.b16 %v5792
    %v6424 = vunpack.c.l.b16 %v5793
    %v6425 = vunpack.c.h.b16 %v5793
    %v6426 = vunpack.c.l.b16 %v5794
    %v6427 = vunpack.c.h.b16 %v5794
    %v6428 = vunpack.c.l.b16 %v5795
    %v6429 = vunpack.c.h.b16 %v5795
    %v6430 = vunpack.c.l.b16 %v5796
    %v6431 = vunpack.c.h.b16 %v5796
    %v6432 = vunpack.c.l.b16 %v5797
    %v6433 = vunpack.c.h.b16 %v5797
    %v6434 = vunpack.c.l.b16 %v5798
    %v6435 = vunpack.c.h.b16 %v5798
    %v6436 = vunpack.c.l.b16 %v5799
    %v6437 = vunpack.c.h.b16 %v5799
    %v6438 = vunpack.c.l.b16 %v5800
    %v6439 = vunpack.c.h.b16 %v5800
    %v6440 = vunpack.c.l.b16 %v5801
    %v6441 = vunpack.c.h.b16 %v5801
    %v6442 = vunpack.c.l.b16 %v5802
    %v6443 = vunpack.c.h.b16 %v5802
    %v6444 = vunpack.c.l.b16 %v5803
    %v6445 = vunpack.c.h.b16 %v5803
    %v6446 = vunpack.c.l.b16 %v5804
    %v6447 = vunpack.c.h.b16 %v5804
    %v6448 = vunpack.c.l.b16 %v5805
    %v6449 = vunpack.c.h.b16 %v5805
    %v6450 = vunpack.c.l.b16 %v5806
    %v6451 = vunpack.c.h.b16 %v5806
    %v6452 = vunpack.c.l.b16 %v5807
    %v6453 = vunpack.c.h.b16 %v5807
    %v6454 = vunpack.c.l.b16 %v5808
    %v6455 = vunpack.c.h.b16 %v5808
    %v6456 = vunpack.c.l.b16 %v5809
    %v6457 = vunpack.c.h.b16 %v5809
    %v6458 = vunpack.c.l.b16 %v5810
    %v6459 = vunpack.c.h.b16 %v5810
    %v6460 = vunpack.c.l.b16 %v5811
    %v6461 = vunpack.c.h.b16 %v5811
    %v6462 = vunpack.c.l.b16 %v5812
    %v6463 = vunpack.c.h.b16 %v5812
    %v6464 = vunpack.c.l.b16 %v5813
    %v6465 = vunpack.c.h.b16 %v5813
    %v6466 = vunpack.c.l.b16 %v5814
    %v6467 = vunpack.c.h.b16 %v5814
    %v6468 = vunpack.c.l.b16 %v5815
    %v6469 = vunpack.c.h.b16 %v5815
    %v6470 = vunpack.c.l.b16 %v5816
    %v6471 = vunpack.c.h.b16 %v5816
    %v6472 = vunpack.c.l.b16 %v5817
    %v6473 = vunpack.c.h.b16 %v5817
    %v6474 = vunpack.c.l.b16 %v5818
    %v6475 = vunpack.c.h.b16 %v5818
    %v6476 = vunpack.c.l.b16 %v5819
    %v6477 = vunpack.c.h.b16 %v5819
    %v6478 = vunpack.c.l.b16 %v5820
    %v6479 = vunpack.c.h.b16 %v5820
    %v6480 = vunpack.c.l.b16 %v5821
    %v6481 = vunpack.c.h.b16 %v5821
    %v6482 = vunpack.c.l.b16 %v5822
    %v6483 = vunpack.c.h.b16 %v5822
    %v6484 = vunpack.c.l.b16 %v5823
    %v6485 = vunpack.c.h.b16 %v5823
    %v6486 = vunpack.c.l.b16 %v5824
    %v6487 = vunpack.c.h.b16 %v5824
    %v6488 = vunpack.c.l.b16 %v5825
    %v6489 = vunpack.c.h.b16 %v5825
    %v6490 = vunpack.c.l.b16 %v5826
    %v6491 = vunpack.c.h.b16 %v5826
    %v6492 = vunpack.c.l.b16 %v5827
    %v6493 = vunpack.c.h.b16 %v5827
    %v6494 = vunpack.c.l.b16 %v5828
    %v6495 = vunpack.c.h.b16 %v5828
    %v6496 = vunpack.c.l.b16 %v5829
    %v6497 = vunpack.c.h.b16 %v5829
    %v6498 = vunpack.c.l.b16 %v5830
    %v6499 = vunpack.c.h.b16 %v5830
    %v6500 = vunpack.c.l.b16 %v5831
    %v6501 = vunpack.c.h.b16 %v5831
    %v6502 = vunpack.c.l.b16 %v5832
    %v6503 = vunpack.c.h.b16 %v5832
    %v6504 = vunpack.c.l.b16 %v5833
    %v6505 = vunpack.c.h.b16 %v5833
    %v6506 = vunpack.c.l.b16 %v5834
    %v6507 = vunpack.c.h.b16 %v5834
    %v6508 = vunpack.c.l.b16 %v5835
    %v6509 = vunpack.c.h.b16 %v5835
    %v6510 = vunpack.c.l.b16 %v5836
    %v6511 = vunpack.c.h.b16 %v5836
    %v6512 = vunpack.c.l.b16 %v5837
    %v6513 = vunpack.c.h.b16 %v5837
    %v6514 = vunpack.c.l.b16 %v5838
    %v6515 = vunpack.c.h.b16 %v5838
    %v6516 = vunpack.c.l.b16 %v5839
    %v6517 = vunpack.c.h.b16 %v5839
    %v6518 = vunpack.c.l.b16 %v5840
    %v6519 = vunpack.c.h.b16 %v5840
    %v6520 = vunpack.c.l.b16 %v5841
    %v6521 = vunpack.c.h.b16 %v5841
    %v6522 = vunpack.c.l.b16 %v5842
    %v6523 = vunpack.c.h.b16 %v5842
    %v6524 = vunpack.c.l.b16 %v5843
    %v6525 = vunpack.c.h.b16 %v5843
    %v6526 = vunpack.c.l.b16 %v5844
    %v6527 = vunpack.c.h.b16 %v5844
    %v6528 = vunpack.c.l.b16 %v5845
    %v6529 = vunpack.c.h.b16 %v5845
    %v6530 = vunpack.c.l.b16 %v5846
    %v6531 = vunpack.c.h.b16 %v5846
    %v6532 = vunpack.c.l.b16 %v5847
    %v6533 = vunpack.c.h.b16 %v5847
    %v6534 = vunpack.c.l.b16 %v5848
    %v6535 = vunpack.c.h.b16 %v5848
    %v6536 = vunpack.c.l.b16 %v5849
    %v6537 = vunpack.c.h.b16 %v5849
    %v6538 = vunpack.c.l.b16 %v5850
    %v6539 = vunpack.c.h.b16 %v5850
    %v6540 = vunpack.c.l.b16 %v5851
    %v6541 = vunpack.c.h.b16 %v5851
    %v6542 = vunpack.c.l.b16 %v5852
    %v6543 = vunpack.c.h.b16 %v5852
    %v6544 = vunpack.c.l.b16 %v5853
    %v6545 = vunpack.c.h.b16 %v5853
    %v6546 = vunpack.c.l.b16 %v5854
    %v6547 = vunpack.c.h.b16 %v5854
    %v6548 = vunpack.c.l.b16 %v5855
    %v6549 = vunpack.c.h.b16 %v5855
    %v6550 = vunpack.c.l.b16 %v5856
    %v6551 = vunpack.c.h.b16 %v5856
    %v6552 = vunpack.c.l.b16 %v5857
    %v6553 = vunpack.c.h.b16 %v5857
    %v6554 = vunpack.c.l.b16 %v5858
    %v6555 = vunpack.c.h.b16 %v5858
    %v6556 = vunpack.c.l.b16 %v5859
    %v6557 = vunpack.c.h.b16 %v5859
    %v6558 = vunpack.c.l.b16 %v5860
    %v6559 = vunpack.c.h.b16 %v5860
    %v6560 = vunpack.c.l.b16 %v5861
    %v6561 = vunpack.c.h.b16 %v5861
    %v6562 = vunpack.c.l.b16 %v5862
    %v6563 = vunpack.c.h.b16 %v5862
    %v6564 = vunpack.c.l.b16 %v5863
    %v6565 = vunpack.c.h.b16 %v5863
    %v6566 = vunpack.c.l.b16 %v5864
    %v6567 = vunpack.c.h.b16 %v5864
    %v6568 = vunpack.c.l.b16 %v5865
    %v6569 = vunpack.c.h.b16 %v5865
    %v6570 = vunpack.c.l.b16 %v5866
    %v6571 = vunpack.c.h.b16 %v5866
    %v6572 = vunpack.c.l.b16 %v5867
    %v6573 = vunpack.c.h.b16 %v5867
    %v6574 = vunpack.c.l.b16 %v5868
    %v6575 = vunpack.c.h.b16 %v5868
    %v6576 = vunpack.c.l.b16 %v5869
    %v6577 = vunpack.c.h.b16 %v5869
    %v6578 = vunpack.c.l.b16 %v5870
    %v6579 = vunpack.c.h.b16 %v5870
    %v6580 = vunpack.c.l.b16 %v5871
    %v6581 = vunpack.c.h.b16 %v5871
    %v6582 = vunpack.c.l.b16 %v5872
    %v6583 = vunpack.c.h.b16 %v5872
    %v6584 = vunpack.c.l.b16 %v5873
    %v6585 = vunpack.c.h.b16 %v5873
    %v6586 = vunpack.c.l.b16 %v5874
    %v6587 = vunpack.c.h.b16 %v5874
    %v6588 = vunpack.c.l.b16 %v5875
    %v6589 = vunpack.c.h.b16 %v5875
    %v6590 = vunpack.c.l.b16 %v5876
    %v6591 = vunpack.c.h.b16 %v5876
    %v6592 = vunpack.c.l.b16 %v5877
    %v6593 = vunpack.c.h.b16 %v5877
    %v6594 = vunpack.c.l.b16 %v5878
    %v6595 = vunpack.c.h.b16 %v5878
    %v6596 = vunpack.c.l.b16 %v5879
    %v6597 = vunpack.c.h.b16 %v5879
    %v6598 = vunpack.c.l.b16 %v5880
    %v6599 = vunpack.c.h.b16 %v5880
    %v6600 = vunpack.c.l.b16 %v5881
    %v6601 = vunpack.c.h.b16 %v5881
    %v6602 = vunpack.c.l.b16 %v5882
    %v6603 = vunpack.c.h.b16 %v5882
    %v6604 = vunpack.c.l.b16 %v5883
    %v6605 = vunpack.c.h.b16 %v5883
    %v6606 = vunpack.c.l.b16 %v5884
    %v6607 = vunpack.c.h.b16 %v5884
    %v6608 = vunpack.c.l.b16 %v5885
    %v6609 = vunpack.c.h.b16 %v5885
    %v6610 = vunpack.c.l.b16 %v5886
    %v6611 = vunpack.c.h.b16 %v5886
    %v6612 = vunpack.c.l.b16 %v5887
    %v6613 = vunpack.c.h.b16 %v5887
    %v6614 = vunpack.c.l.b16 %v5888
    %v6615 = vunpack.c.h.b16 %v5888
    %v6616 = vunpack.c.l.b16 %v5889
    %v6617 = vunpack.c.h.b16 %v5889
    %v6618 = vunpack.c.l.b16 %v5890
    %v6619 = vunpack.c.h.b16 %v5890
    %v6620 = vunpack.c.l.b16 %v5891
    %v6621 = vunpack.c.h.b16 %v5891
    %v6622 = vunpack.c.l.b16 %v5892
    %v6623 = vunpack.c.h.b16 %v5892
    %v6624 = vunpack.c.l.b16 %v5893
    %v6625 = vunpack.c.h.b16 %v5893
    %v6626 = vunpack.c.l.b16 %v5894
    %v6627 = vunpack.c.h.b16 %v5894
    %v6628 = vunpack.c.l.b16 %v5895
    %v6629 = vunpack.c.h.b16 %v5895
    %v6630 = vunpack.c.l.b16 %v5896
    %v6631 = vunpack.c.h.b16 %v5896
    %v6632 = vunpack.c.l.b16 %v5897
    %v6633 = vunpack.c.h.b16 %v5897
    %v6634 = vunpack.c.l.b16 %v5898
    %v6635 = vunpack.c.h.b16 %v5898
    %v6636 = vunpack.c.l.b16 %v5899
    %v6637 = vunpack.c.h.b16 %v5899
    %v6638 = vunpack.c.l.b16 %v5900
    %v6639 = vunpack.c.h.b16 %v5900
    %v6640 = vunpack.c.l.b16 %v5901
    %v6641 = vunpack.c.h.b16 %v5901
    %v6642 = vunpack.c.l.b16 %v5902
    %v6643 = vunpack.c.h.b16 %v5902
    %v6644 = vunpack.c.l.b16 %v5903
    %v6645 = vunpack.c.h.b16 %v5903
    %v6646 = vunpack.c.l.b16 %v5904
    %v6647 = vunpack.c.h.b16 %v5904
    %v6648 = vunpack.c.l.b16 %v5905
    %v6649 = vunpack.c.h.b16 %v5905
    %v6650 = vunpack.c.l.b16 %v5906
    %v6651 = vunpack.c.h.b16 %v5906
    %v6652 = vunpack.c.l.b16 %v5907
    %v6653 = vunpack.c.h.b16 %v5907
    %v6654 = vunpack.c.l.b16 %v5908
    %v6655 = vunpack.c.h.b16 %v5908
    %v6656 = vunpack.c.l.b16 %v5909
    %v6657 = vunpack.c.h.b16 %v5909
    %v6658 = vunpack.c.l.b16 %v5910
    %v6659 = vunpack.c.h.b16 %v5910
    %v6660 = vunpack.c.l.b16 %v5911
    %v6661 = vunpack.c.h.b16 %v5911
    %v6662 = vunpack.c.l.b16 %v5912
    %v6663 = vunpack.c.h.b16 %v5912
    %v6664 = vunpack.c.l.b16 %v5913
    %v6665 = vunpack.c.h.b16 %v5913
    %v6666 = vunpack.c.l.b16 %v5914
    %v6667 = vunpack.c.h.b16 %v5914
    %v6668 = vunpack.c.l.b16 %v5915
    %v6669 = vunpack.c.h.b16 %v5915
    %v6670 = vunpack.c.l.b16 %v5916
    %v6671 = vunpack.c.h.b16 %v5916
    %v6672 = vunpack.c.l.b16 %v5917
    %v6673 = vunpack.c.h.b16 %v5917
    %v6674 = vunpack.c.l.b16 %v5918
    %v6675 = vunpack.c.h.b16 %v5918
    %v6676 = vunpack.c.l.b16 %v5919
    %v6677 = vunpack.c.h.b16 %v5919
    %v6678 = vunpack.c.l.b16 %v5920
    %v6679 = vunpack.c.h.b16 %v5920
    %v6680 = vunpack.c.l.b16 %v5921
    %v6681 = vunpack.c.h.b16 %v5921
    %v6682 = vunpack.c.l.b16 %v5922
    %v6683 = vunpack.c.h.b16 %v5922
    %v6684 = vunpack.c.l.b16 %v5923
    %v6685 = vunpack.c.h.b16 %v5923
    %v6686 = vunpack.c.l.b16 %v5924
    %v6687 = vunpack.c.h.b16 %v5924
    %v6688 = vunpack.c.l.b16 %v5925
    %v6689 = vunpack.c.h.b16 %v5925
    %v6690 = vunpack.c.l.b16 %v5926
    %v6691 = vunpack.c.h.b16 %v5926
    %v6692 = vunpack.c.l.b16 %v5927
    %v6693 = vunpack.c.h.b16 %v5927
    %v6694 = vunpack.c.l.b16 %v5928
    %v6695 = vunpack.c.h.b16 %v5928
    %v6696 = vunpack.c.l.b16 %v5929
    %v6697 = vunpack.c.h.b16 %v5929
    %v6698 = vunpack.c.l.b16 %v5930
    %v6699 = vunpack.c.h.b16 %v5930
    %v6700 = vunpack.c.l.b16 %v5931
    %v6701 = vunpack.c.h.b16 %v5931
    %v6702 = vunpack.c.l.b16 %v5932
    %v6703 = vunpack.c.h.b16 %v5932
    %v6704 = vunpack.c.l.b16 %v5933
    %v6705 = vunpack.c.h.b16 %v5933
    %v6706 = vunpack.c.l.b16 %v5934
    %v6707 = vunpack.c.h.b16 %v5934
    %v6708 = vunpack.c.l.b16 %v5935
    %v6709 = vunpack.c.h.b16 %v5935
    %v6710 = vunpack.c.l.b16 %v5936
    %v6711 = vunpack.c.h.b16 %v5936
    %v6712 = vunpack.c.l.b16 %v5937
    %v6713 = vunpack.c.h.b16 %v5937
    %v6714 = vunpack.c.l.b16 %v5938
    %v6715 = vunpack.c.h.b16 %v5938
    %v6716 = vunpack.c.l.b16 %v5939
    %v6717 = vunpack.c.h.b16 %v5939
    %v6718 = vunpack.c.l.b16 %v5940
    %v6719 = vunpack.c.h.b16 %v5940
    %v6720 = vunpack.c.l.b16 %v5941
    %v6721 = vunpack.c.h.b16 %v5941
    %v6722 = vunpack.c.l.b16 %v5942
    %v6723 = vunpack.c.h.b16 %v5942
    %v6724 = vunpack.c.l.b16 %v5943
    %v6725 = vunpack.c.h.b16 %v5943
    %v6726 = vunpack.c.l.b16 %v5944
    %v6727 = vunpack.c.h.b16 %v5944
    %v6728 = vunpack.c.l.b16 %v5945
    %v6729 = vunpack.c.h.b16 %v5945
    %v6730 = vunpack.c.l.b16 %v5946
    %v6731 = vunpack.c.h.b16 %v5946
    %v6732 = vunpack.c.l.b16 %v5947
    %v6733 = vunpack.c.h.b16 %v5947
    %v6734 = vunpack.c.l.b16 %v5948
    %v6735 = vunpack.c.h.b16 %v5948
    %v6736 = vunpack.c.l.b16 %v5949
    %v6737 = vunpack.c.h.b16 %v5949
    %v6738 = vunpack.c.l.b16 %v5950
    %v6739 = vunpack.c.h.b16 %v5950
    %v6740 = vunpack.c.l.b16 %v5951
    %v6741 = vunpack.c.h.b16 %v5951
    %v6742 = vunpack.c.l.b16 %v5952
    %v6743 = vunpack.c.h.b16 %v5952
    %v6744 = vunpack.c.l.b16 %v5953
    %v6745 = vunpack.c.h.b16 %v5953
    %v6746 = vunpack.c.l.b16 %v5954
    %v6747 = vunpack.c.h.b16 %v5954
    %v6748 = vunpack.c.l.b16 %v5955
    %v6749 = vunpack.c.h.b16 %v5955
    %v6750 = vunpack.c.l.b16 %v5956
    %v6751 = vunpack.c.h.b16 %v5956
    %v6752 = vunpack.c.l.b16 %v5957
    %v6753 = vunpack.c.h.b16 %v5957
    %v6754 = vunpack.c.l.b16 %v5958
    %v6755 = vunpack.c.h.b16 %v5958
    %v6756 = vunpack.c.l.b16 %v5959
    %v6757 = vunpack.c.h.b16 %v5959
    %v6758 = vunpack.c.l.b16 %v5960
    %v6759 = vunpack.c.h.b16 %v5960
    %v6760 = vunpack.c.l.b16 %v5961
    %v6761 = vunpack.c.h.b16 %v5961
    %v6762 = vunpack.c.l.b16 %v5962
    %v6763 = vunpack.c.h.b16 %v5962
    %v6764 = vunpack.c.l.b16 %v5963
    %v6765 = vunpack.c.h.b16 %v5963
    %v6766 = vunpack.c.l.b16 %v5964
    %v6767 = vunpack.c.h.b16 %v5964
    %v6768 = vunpack.c.l.b16 %v5965
    %v6769 = vunpack.c.h.b16 %v5965
    %v6770 = vunpack.c.l.b16 %v5966
    %v6771 = vunpack.c.h.b16 %v5966
    %v6772 = vunpack.c.l.b16 %v5967
    %v6773 = vunpack.c.h.b16 %v5967
    %v6774 = vunpack.c.l.b16 %v5968
    %v6775 = vunpack.c.h.b16 %v5968
    %v6776 = vunpack.c.l.b16 %v5969
    %v6777 = vunpack.c.h.b16 %v5969
    %v6778 = vunpack.c.l.b16 %v5970
    %v6779 = vunpack.c.h.b16 %v5970
    %v6780 = vunpack.c.l.b16 %v5971
    %v6781 = vunpack.c.h.b16 %v5971
    %v6782 = vpack.c.b16 %v6278, %v6270
    %v6783 = vpack.c.b16 %v6279, %v6271
    %v6784 = vpack.c.b16 %v6280, %v6272
    %v6785 = vpack.c.b16 %v6281, %v6273
    %v6786 = vpack.c.b16 %v6282, %v6274
    %v6787 = vpack.c.b16 %v6283, %v6275
    %v6788 = vpack.c.b16 %v6284, %v6276
    %v6789 = vpack.c.b16 %v6285, %v6277
    %v6790 = vpack.c.b16 %v6294, %v6286
    %v6791 = vpack.c.b16 %v6295, %v6287
    %v6792 = vpack.c.b16 %v6296, %v6288
    %v6793 = vpack.c.b16 %v6297, %v6289
    %v6794 = vpack.c.b16 %v6298, %v6290
    %v6795 = vpack.c.b16 %v6299, %v6291
    %v6796 = vpack.c.b16 %v6300, %v6292
    %v6797 = vpack.c.b16 %v6301, %v6293
    %v6798 = vpack.c.b16 %v6310, %v6302
    %v6799 = vpack.c.b16 %v6311, %v6303
    %v6800 = vpack.c.b16 %v6312, %v6304
    %v6801 = vpack.c.b16 %v6313, %v6305
    %v6802 = vpack.c.b16 %v6314, %v6306
    %v6803 = vpack.c.b16 %v6315, %v6307
    %v6804 = vpack.c.b16 %v6316, %v6308
    %v6805 = vpack.c.b16 %v6317, %v6309
    %v6806 = vpack.c.b16 %v6326, %v6318
    %v6807 = vpack.c.b16 %v6327, %v6319
    %v6808 = vpack.c.b16 %v6328, %v6320
    %v6809 = vpack.c.b16 %v6329, %v6321
    %v6810 = vpack.c.b16 %v6330, %v6322
    %v6811 = vpack.c.b16 %v6331, %v6323
    %v6812 = vpack.c.b16 %v6332, %v6324
    %v6813 = vpack.c.b16 %v6333, %v6325
    %v6814 = vpack.c.b16 %v6342, %v6334
    %v6815 = vpack.c.b16 %v6343, %v6335
    %v6816 = vpack.c.b16 %v6344, %v6336
    %v6817 = vpack.c.b16 %v6345, %v6337
    %v6818 = vpack.c.b16 %v6346, %v6338
    %v6819 = vpack.c.b16 %v6347, %v6339
    %v6820 = vpack.c.b16 %v6348, %v6340
    %v6821 = vpack.c.b16 %v6349, %v6341
    %v6822 = vpack.c.b16 %v6358, %v6350
    %v6823 = vpack.c.b16 %v6359, %v6351
    %v6824 = vpack.c.b16 %v6360, %v6352
    %v6825 = vpack.c.b16 %v6361, %v6353
    %v6826 = vpack.c.b16 %v6362, %v6354
    %v6827 = vpack.c.b16 %v6363, %v6355
    %v6828 = vpack.c.b16 %v6364, %v6356
    %v6829 = vpack.c.b16 %v6365, %v6357
    %v6830 = vpack.c.b16 %v6374, %v6366
    %v6831 = vpack.c.b16 %v6375, %v6367
    %v6832 = vpack.c.b16 %v6376, %v6368
    %v6833 = vpack.c.b16 %v6377, %v6369
    %v6834 = vpack.c.b16 %v6378, %v6370
    %v6835 = vpack.c.b16 %v6379, %v6371
    %v6836 = vpack.c.b16 %v6380, %v6372
    %v6837 = vpack.c.b16 %v6381, %v6373
    %v6838 = vpack.c.b16 %v6390, %v6382
    %v6839 = vpack.c.b16 %v6391, %v6383
    %v6840 = vpack.c.b16 %v6392, %v6384
    %v6841 = vpack.c.b16 %v6393, %v6385
    %v6842 = vpack.c.b16 %v6394, %v6386
    %v6843 = vpack.c.b16 %v6395, %v6387
    %v6844 = vpack.c.b16 %v6396, %v6388
    %v6845 = vpack.c.b16 %v6397, %v6389
    %v6846 = vpack.c.b16 %v6406, %v6398
    %v6847 = vpack.c.b16 %v6407, %v6399
    %v6848 = vpack.c.b16 %v6408, %v6400
    %v6849 = vpack.c.b16 %v6409, %v6401
    %v6850 = vpack.c.b16 %v6410, %v6402
    %v6851 = vpack.c.b16 %v6411, %v6403
    %v6852 = vpack.c.b16 %v6412, %v6404
    %v6853 = vpack.c.b16 %v6413, %v6405
    %v6854 = vpack.c.b16 %v6422, %v6414
    %v6855 = vpack.c.b16 %v6423, %v6415
    %v6856 = vpack.c.b16 %v6424, %v6416
    %v6857 = vpack.c.b16 %v6425, %v6417
    %v6858 = vpack.c.b16 %v6426, %v6418
    %v6859 = vpack.c.b16 %v6427, %v6419
    %v6860 = vpack.c.b16 %v6428, %v6420
    %v6861 = vpack.c.b16 %v6429, %v6421
    %v6862 = vpack.c.b16 %v6438, %v6430
    %v6863 = vpack.c.b16 %v6439, %v6431
    %v6864 = vpack.c.b16 %v6440, %v6432
    %v6865 = vpack.c.b16 %v6441, %v6433
    %v6866 = vpack.c.b16 %v6442, %v6434
    %v6867 = vpack.c.b16 %v6443, %v6435
    %v6868 = vpack.c.b16 %v6444, %v6436
    %v6869 = vpack.c.b16 %v6445, %v6437
    %v6870 = vpack.c.b16 %v6454, %v6446
    %v6871 = vpack.c.b16 %v6455, %v6447
    %v6872 = vpack.c.b16 %v6456, %v6448
    %v6873 = vpack.c.b16 %v6457, %v6449
    %v6874 = vpack.c.b16 %v6458, %v6450
    %v6875 = vpack.c.b16 %v6459, %v6451
    %v6876 = vpack.c.b16 %v6460, %v6452
    %v6877 = vpack.c.b16 %v6461, %v6453
    %v6878 = vpack.c.b16 %v6470, %v6462
    %v6879 = vpack.c.b16 %v6471, %v6463
    %v6880 = vpack.c.b16 %v6472, %v6464
    %v6881 = vpack.c.b16 %v6473, %v6465
    %v6882 = vpack.c.b16 %v6474, %v6466
    %v6883 = vpack.c.b16 %v6475, %v6467
    %v6884 = vpack.c.b16 %v6476, %v6468
    %v6885 = vpack.c.b16 %v6477, %v6469
    %v6886 = vpack.c.b16 %v6486, %v6478
    %v6887 = vpack.c.b16 %v6487, %v6479
    %v6888 = vpack.c.b16 %v6488, %v6480
    %v6889 = vpack.c.b16 %v6489, %v6481
    %v6890 = vpack.c.b16 %v6490, %v6482
    %v6891 = vpack.c.b16 %v6491, %v6483
    %v6892 = vpack.c.b16 %v6492, %v6484
    %v6893 = vpack.c.b16 %v6493, %v6485
    %v6894 = vpack.c.b16 %v6502, %v6494
    %v6895 = vpack.c.b16 %v6503, %v6495
    %v6896 = vpack.c.b16 %v6504, %v6496
    %v6897 = vpack.c.b16 %v6505, %v6497
    %v6898 = vpack.c.b16 %v6506, %v6498
    %v6899 = vpack.c.b16 %v6507, %v6499
    %v6900 = vpack.c.b16 %v6508, %v6500
    %v6901 = vpack.c.b16 %v6509, %v6501
    %v6902 = vpack.c.b16 %v6518, %v6510
    %v6903 = vpack.c.b16 %v6519, %v6511
    %v6904 = vpack.c.b16 %v6520, %v6512
    %v6905 = vpack.c.b16 %v6521, %v6513
    %v6906 = vpack.c.b16 %v6522, %v6514
    %v6907 = vpack.c.b16 %v6523, %v6515
    %v6908 = vpack.c.b16 %v6524, %v6516
    %v6909 = vpack.c.b16 %v6525, %v6517
    %v6910 = vpack.c.b16 %v6534, %v6526
    %v6911 = vpack.c.b16 %v6535, %v6527
    %v6912 = vpack.c.b16 %v6536, %v6528
    %v6913 = vpack.c.b16 %v6537, %v6529
    %v6914 = vpack.c.b16 %v6538, %v6530
    %v6915 = vpack.c.b16 %v6539, %v6531
    %v6916 = vpack.c.b16 %v6540, %v6532
    %v6917 = vpack.c.b16 %v6541, %v6533
    %v6918 = vpack.c.b16 %v6550, %v6542
    %v6919 = vpack.c.b16 %v6551, %v6543
    %v6920 = vpack.c.b16 %v6552, %v6544
    %v6921 = vpack.c.b16 %v6553, %v6545
    %v6922 = vpack.c.b16 %v6554, %v6546
    %v6923 = vpack.c.b16 %v6555, %v6547
    %v6924 = vpack.c.b16 %v6556, %v6548
    %v6925 = vpack.c.b16 %v6557, %v6549
    %v6926 = vpack.c.b16 %v6566, %v6558
    %v6927 = vpack.c.b16 %v6567, %v6559
    %v6928 = vpack.c.b16 %v6568, %v6560
    %v6929 = vpack.c.b16 %v6569, %v6561
    %v6930 = vpack.c.b16 %v6570, %v6562
    %v6931 = vpack.c.b16 %v6571, %v6563
    %v6932 = vpack.c.b16 %v6572, %v6564
    %v6933 = vpack.c.b16 %v6573, %v6565
    %v6934 = vpack.c.b16 %v6582, %v6574
    %v6935 = vpack.c.b16 %v6583, %v6575
    %v6936 = vpack.c.b16 %v6584, %v6576
    %v6937 = vpack.c.b16 %v6585, %v6577
    %v6938 = vpack.c.b16 %v6586, %v6578
    %v6939 = vpack.c.b16 %v6587, %v6579
    %v6940 = vpack.c.b16 %v6588, %v6580
    %v6941 = vpack.c.b16 %v6589, %v6581
    %v6942 = vpack.c.b16 %v6598, %v6590
    %v6943 = vpack.c.b16 %v6599, %v6591
    %v6944 = vpack.c.b16 %v6600, %v6592
    %v6945 = vpack.c.b16 %v6601, %v6593
    %v6946 = vpack.c.b16 %v6602, %v6594
    %v6947 = vpack.c.b16 %v6603, %v6595
    %v6948 = vpack.c.b16 %v6604, %v6596
    %v6949 = vpack.c.b16 %v6605, %v6597
    %v6950 = vpack.c.b16 %v6614, %v6606
    %v6951 = vpack.c.b16 %v6615, %v6607
    %v6952 = vpack.c.b16 %v6616, %v6608
    %v6953 = vpack.c.b16 %v6617, %v6609
    %v6954 = vpack.c.b16 %v6618, %v6610
    %v6955 = vpack.c.b16 %v6619, %v6611
    %v6956 = vpack.c.b16 %v6620, %v6612
    %v6957 = vpack.c.b16 %v6621, %v6613
    %v6958 = vpack.c.b16 %v6630, %v6622
    %v6959 = vpack.c.b16 %v6631, %v6623
    %v6960 = vpack.c.b16 %v6632, %v6624
    %v6961 = vpack.c.b16 %v6633, %v6625
    %v6962 = vpack.c.b16 %v6634, %v6626
    %v6963 = vpack.c.b16 %v6635, %v6627
    %v6964 = vpack.c.b16 %v6636, %v6628
    %v6965 = vpack.c.b16 %v6637, %v6629
    %v6966 = vpack.c.b16 %v6646, %v6638
    %v6967 = vpack.c.b16 %v6647, %v6639
    %v6968 = vpack.c.b16 %v6648, %v6640
    %v6969 = vpack.c.b16 %v6649, %v6641
    %v6970 = vpack.c.b16 %v6650, %v6642
    %v6971 = vpack.c.b16 %v6651, %v6643
    %v6972 = vpack.c.b16 %v6652, %v6644
    %v6973 = vpack.c.b16 %v6653, %v6645
    %v6974 = vpack.c.b16 %v6662, %v6654
    %v6975 = vpack.c.b16 %v6663, %v6655
    %v6976 = vpack.c.b16 %v6664, %v6656
    %v6977 = vpack.c.b16 %v6665, %v6657
    %v6978 = vpack.c.b16 %v6666, %v6658
    %v6979 = vpack.c.b16 %v6667, %v6659
    %v6980 = vpack.c.b16 %v6668, %v6660
    %v6981 = vpack.c.b16 %v6669, %v6661
    %v6982 = vpack.c.b16 %v6678, %v6670
    %v6983 = vpack.c.b16 %v6679, %v6671
    %v6984 = vpack.c.b16 %v6680, %v6672
    %v6985 = vpack.c.b16 %v6681, %v6673
    %v6986 = vpack.c.b16 %v6682, %v6674
    %v6987 = vpack.c.b16 %v6683, %v6675
    %v6988 = vpack.c.b16 %v6684, %v6676
    %v6989 = vpack.c.b16 %v6685, %v6677
    %v6990 = vpack.c.b16 %v6694, %v6686
    %v6991 = vpack.c.b16 %v6695, %v6687
    %v6992 = vpack.c.b16 %v6696, %v6688
    %v6993 = vpack.c.b16 %v6697, %v6689
    %v6994 = vpack.c.b16 %v6698, %v6690
    %v6995 = vpack.c.b16 %v6699, %v6691
    %v6996 = vpack.c.b16 %v6700, %v6692
    %v6997 = vpack.c.b16 %v6701, %v6693
    %v6998 = vpack.c.b16 %v6710, %v6702
    %v6999 = vpack.c.b16 %v6711, %v6703
    %v7000 = vpack.c.b16 %v6712, %v6704
    %v7001 = vpack.c.b16 %v6713, %v6705
    %v7002 = vpack.c.b16 %v6714, %v6706
    %v7003 = vpack.c.b16 %v6715, %v6707
    %v7004 = vpack.c.b16 %v6716, %v6708
    %v7005 = vpack.c.b16 %v6717, %v6709
    %v7006 = vpack.c.b16 %v6726, %v6718
    %v7007 = vpack.c.b16 %v6727, %v6719
    %v7008 = vpack.c.b16 %v6728, %v6720
    %v7009 = vpack.c.b16 %v6729, %v6721
    %v7010 = vpack.c.b16 %v6730, %v6722
    %v7011 = vpack.c.b16 %v6731, %v6723
    %v7012 = vpack.c.b16 %v6732, %v6724
    %v7013 = vpack.c.b16 %v6733, %v6725
    %v7014 = vpack.c.b16 %v6742, %v6734
    %v7015 = vpack.c.b16 %v6743, %v6735
    %v7016 = vpack.c.b16 %v6744, %v6736
    %v7017 = vpack.c.b16 %v6745, %v6737
    %v7018 = vpack.c.b16 %v6746, %v6738
    %v7019 = vpack.c.b16 %v6747, %v6739
    %v7020 = vpack.c.b16 %v6748, %v6740
    %v7021 = vpack.c.b16 %v6749, %v6741
    %v7022 = vpack.c.b16 %v6758, %v6750
    %v7023 = vpack.c.b16 %v6759, %v6751
    %v7024 = vpack.c.b16 %v6760, %v6752
    %v7025 = vpack.c.b16 %v6761, %v6753
    %v7026 = vpack.c.b16 %v6762, %v6754
    %v7027 = vpack.c.b16 %v6763, %v6755
    %v7028 = vpack.c.b16 %v6764, %v6756
    %v7029 = vpack.c.b16 %v6765, %v6757
    %v7030 = vpack.c.b16 %v6774, %v6766
    %v7031 = vpack.c.b16 %v6775, %v6767
    %v7032 = vpack.c.b16 %v6776, %v6768
    %v7033 = vpack.c.b16 %v6777, %v6769
    %v7034 = vpack.c.b16 %v6778, %v6770
    %v7035 = vpack.c.b16 %v6779, %v6771
    %v7036 = vpack.c.b16 %v6780, %v6772
    %v7037 = vpack.c.b16 %v6781, %v6773
    %7294 = vmatprep.subr.bf16.mxu0 %v6839
    %7295 = vmatpush1.bf16.msra.mxu0 %v6838
    %7296 = vmatprep.subr.bf16.mxu0 %v6831
    %7297 = vmatpush1.bf16.msra.mxu0 %v6830
    %7298 = vmatprep.subr.bf16.mxu0 %v6823
    %7299 = vmatpush1.bf16.msra.mxu0 %v6822
    %7300 = vmatprep.subr.bf16.mxu0 %v6815
    %7301 = vmatpush1.bf16.msra.mxu0 %v6814
    %7302 = vmatprep.subr.bf16.mxu0 %v6807
    %7303 = vmatpush1.bf16.msra.mxu0 %v6806
    %7304 = vmatprep.subr.bf16.mxu0 %v6799
    %7305 = vmatpush1.bf16.msra.mxu0 %v6798
    %7306 = vmatprep.subr.bf16.mxu0 %v6791
    %7307 = vmatpush1.bf16.msra.mxu0 %v6790
    %7308 = vmatprep.subr.bf16.mxu0 %v6783
    %7309 = vmatpush1.bf16.msra.mxu0 %v6782
    %7310 = vmatprep.subr.bf16.mxu0 %v6903
    %7311 = vmatpush2.bf16.msra.mxu0 %v6902
    %7312 = vmatprep.subr.bf16.mxu0 %v6895
    %7313 = vmatpush2.bf16.msra.mxu0 %v6894
    %7314 = vmatprep.subr.bf16.mxu0 %v6887
    %7315 = vmatpush2.bf16.msra.mxu0 %v6886
    %7316 = vmatprep.subr.bf16.mxu0 %v6879
    %7317 = vmatpush2.bf16.msra.mxu0 %v6878
    %7318 = vmatprep.subr.bf16.mxu0 %v6871
    %7319 = vmatpush2.bf16.msra.mxu0 %v6870
    %7320 = vmatprep.subr.bf16.mxu0 %v6863
    %7321 = vmatpush2.bf16.msra.mxu0 %v6862
    %7322 = vmatprep.subr.bf16.mxu0 %v6855
    %7323 = vmatpush2.bf16.msra.mxu0 %v6854
    %7324 = vmatprep.subr.bf16.mxu0 %v6847
    %7325 = vmatpush2.bf16.msra.mxu0 %v6846
    %7326 = vmatprep.mubr.bf16.mxu0 %v5713
    %7327 = vmatmul.mubr.bf16.gmra.mxu0 %v5712
    %v7328 = vpop.f32.mrf.mxu0
    %v7329 = vadd.f32 %v5977, %v7328
    %v7330 = vpop.f32.mrf.mxu0
    %v7331 = vadd.f32 %v5981, %v7330
    %v7332 = vpop.f32.mrf.mxu0
    %v7333 = vpop.f32.mrf.mxu0
    %7334 = vdwg.mxu0
    %7335 = vmatprep.subr.bf16.mxu0 %v6967
    %7336 = vmatpush1.bf16.msra.mxu0 %v6966
    %7337 = vmatprep.subr.bf16.mxu0 %v6959
    %7338 = vmatpush1.bf16.msra.mxu0 %v6958
    %7339 = vmatprep.subr.bf16.mxu0 %v6951
    %7340 = vmatpush1.bf16.msra.mxu0 %v6950
    %7341 = vmatprep.subr.bf16.mxu0 %v6943
    %7342 = vmatpush1.bf16.msra.mxu0 %v6942
    %7343 = vmatprep.subr.bf16.mxu0 %v6935
    %7344 = vmatpush1.bf16.msra.mxu0 %v6934
    %7345 = vmatprep.subr.bf16.mxu0 %v6927
    %7346 = vmatpush1.bf16.msra.mxu0 %v6926
    %7347 = vmatprep.subr.bf16.mxu0 %v6919
    %7348 = vmatpush1.bf16.msra.mxu0 %v6918
    %7349 = vmatprep.subr.bf16.mxu0 %v6911
    %7350 = vmatpush1.bf16.msra.mxu0 %v6910
    %7351 = vmatprep.subr.bf16.mxu0 %v7031
    %7352 = vmatpush2.bf16.msra.mxu0 %v7030
    %7353 = vmatprep.subr.bf16.mxu0 %v7023
    %7354 = vmatpush2.bf16.msra.mxu0 %v7022
    %7355 = vmatprep.subr.bf16.mxu0 %v7015
    %7356 = vmatpush2.bf16.msra.mxu0 %v7014
    %7357 = vmatprep.subr.bf16.mxu0 %v7007
    %7358 = vmatpush2.bf16.msra.mxu0 %v7006
    %7359 = vmatprep.subr.bf16.mxu0 %v6999
    %7360 = vmatpush2.bf16.msra.mxu0 %v6998
    %7361 = vmatprep.subr.bf16.mxu0 %v6991
    %7362 = vmatpush2.bf16.msra.mxu0 %v6990
    %7363 = vmatprep.subr.bf16.mxu0 %v6983
    %7364 = vmatpush2.bf16.msra.mxu0 %v6982
    %7365 = vmatprep.subr.bf16.mxu0 %v6975
    %7366 = vmatpush2.bf16.msra.mxu0 %v6974
    %7367 = vmatprep.mubr.bf16.mxu0 %v5715
    %7368 = vmatmul.mubr.bf16.gmra.mxu0 %v5714
    %v7369 = vpop.f32.mrf.mxu0
    %v7370 = vadd.f32 %v7329, %v7369
    %v7371 = vpop.f32.mrf.mxu0
    %v7372 = vadd.f32 %v7331, %v7371
    %v7373 = vpop.f32.mrf.mxu0
    %v7374 = vpop.f32.mrf.mxu0
    %7375 = vdwg.mxu0
    %7376 = vmatprep.subr.bf16.mxu0 %v6841
    %7377 = vmatpush1.bf16.msra.mxu0 %v6840
    %7378 = vmatprep.subr.bf16.mxu0 %v6833
    %7379 = vmatpush1.bf16.msra.mxu0 %v6832
    %7380 = vmatprep.subr.bf16.mxu0 %v6825
    %7381 = vmatpush1.bf16.msra.mxu0 %v6824
    %7382 = vmatprep.subr.bf16.mxu0 %v6817
    %7383 = vmatpush1.bf16.msra.mxu0 %v6816
    %7384 = vmatprep.subr.bf16.mxu0 %v6809
    %7385 = vmatpush1.bf16.msra.mxu0 %v6808
    %7386 = vmatprep.subr.bf16.mxu0 %v6801
    %7387 = vmatpush1.bf16.msra.mxu0 %v6800
    %7388 = vmatprep.subr.bf16.mxu0 %v6793
    %7389 = vmatpush1.bf16.msra.mxu0 %v6792
    %7390 = vmatprep.subr.bf16.mxu0 %v6785
    %7391 = vmatpush1.bf16.msra.mxu0 %v6784
    %7392 = vmatprep.subr.bf16.mxu0 %v6905
    %7393 = vmatpush2.bf16.msra.mxu0 %v6904
    %7394 = vmatprep.subr.bf16.mxu0 %v6897
    %7395 = vmatpush2.bf16.msra.mxu0 %v6896
    %7396 = vmatprep.subr.bf16.mxu0 %v6889
    %7397 = vmatpush2.bf16.msra.mxu0 %v6888
    %7398 = vmatprep.subr.bf16.mxu0 %v6881
    %7399 = vmatpush2.bf16.msra.mxu0 %v6880
    %7400 = vmatprep.subr.bf16.mxu0 %v6873
    %7401 = vmatpush2.bf16.msra.mxu0 %v6872
    %7402 = vmatprep.subr.bf16.mxu0 %v6865
    %7403 = vmatpush2.bf16.msra.mxu0 %v6864
    %7404 = vmatprep.subr.bf16.mxu0 %v6857
    %7405 = vmatpush2.bf16.msra.mxu0 %v6856
    %7406 = vmatprep.subr.bf16.mxu0 %v6849
    %7407 = vmatpush2.bf16.msra.mxu0 %v6848
    %7408 = vmatprep.mubr.bf16.mxu0 %v5713
    %7409 = vmatmul.mubr.bf16.gmra.mxu0 %v5712
    %v7410 = vpop.f32.mrf.mxu0
    %v7411 = vadd.f32 %v5985, %v7410
    %v7412 = vpop.f32.mrf.mxu0
    %v7413 = vadd.f32 %v5989, %v7412
    %v7414 = vpop.f32.mrf.mxu0
    %v7415 = vpop.f32.mrf.mxu0
    %7416 = vdwg.mxu0
    %7417 = vmatprep.subr.bf16.mxu0 %v6969
    %7418 = vmatpush1.bf16.msra.mxu0 %v6968
    %7419 = vmatprep.subr.bf16.mxu0 %v6961
    %7420 = vmatpush1.bf16.msra.mxu0 %v6960
    %7421 = vmatprep.subr.bf16.mxu0 %v6953
    %7422 = vmatpush1.bf16.msra.mxu0 %v6952
    %7423 = vmatprep.subr.bf16.mxu0 %v6945
    %7424 = vmatpush1.bf16.msra.mxu0 %v6944
    %7425 = vmatprep.subr.bf16.mxu0 %v6937
    %7426 = vmatpush1.bf16.msra.mxu0 %v6936
    %7427 = vmatprep.subr.bf16.mxu0 %v6929
    %7428 = vmatpush1.bf16.msra.mxu0 %v6928
    %7429 = vmatprep.subr.bf16.mxu0 %v6921
    %7430 = vmatpush1.bf16.msra.mxu0 %v6920
    %7431 = vmatprep.subr.bf16.mxu0 %v6913
    %7432 = vmatpush1.bf16.msra.mxu0 %v6912
    %7433 = vmatprep.subr.bf16.mxu0 %v7033
    %7434 = vmatpush2.bf16.msra.mxu0 %v7032
    %7435 = vmatprep.subr.bf16.mxu0 %v7025
    %7436 = vmatpush2.bf16.msra.mxu0 %v7024
    %7437 = vmatprep.subr.bf16.mxu0 %v7017
    %7438 = vmatpush2.bf16.msra.mxu0 %v7016
    %7439 = vmatprep.subr.bf16.mxu0 %v7009
    %7440 = vmatpush2.bf16.msra.mxu0 %v7008
    %7441 = vmatprep.subr.bf16.mxu0 %v7001
    %7442 = vmatpush2.bf16.msra.mxu0 %v7000
    %7443 = vmatprep.subr.bf16.mxu0 %v6993
    %7444 = vmatpush2.bf16.msra.mxu0 %v6992
    %7445 = vmatprep.subr.bf16.mxu0 %v6985
    %7446 = vmatpush2.bf16.msra.mxu0 %v6984
    %7447 = vmatprep.subr.bf16.mxu0 %v6977
    %7448 = vmatpush2.bf16.msra.mxu0 %v6976
    %7449 = vmatprep.mubr.bf16.mxu0 %v5715
    %7450 = vmatmul.mubr.bf16.gmra.mxu0 %v5714
    %v7451 = vpop.f32.mrf.mxu0
    %v7452 = vadd.f32 %v7411, %v7451
    %v7453 = vpop.f32.mrf.mxu0
    %v7454 = vadd.f32 %v7413, %v7453
    %v7455 = vpop.f32.mrf.mxu0
    %v7456 = vpop.f32.mrf.mxu0
    %7457 = vdwg.mxu0
    %7458 = vmatprep.subr.bf16.mxu0 %v6843
    %7459 = vmatpush1.bf16.msra.mxu0 %v6842
    %7460 = vmatprep.subr.bf16.mxu0 %v6835
    %7461 = vmatpush1.bf16.msra.mxu0 %v6834
    %7462 = vmatprep.subr.bf16.mxu0 %v6827
    %7463 = vmatpush1.bf16.msra.mxu0 %v6826
    %7464 = vmatprep.subr.bf16.mxu0 %v6819
    %7465 = vmatpush1.bf16.msra.mxu0 %v6818
    %7466 = vmatprep.subr.bf16.mxu0 %v6811
    %7467 = vmatpush1.bf16.msra.mxu0 %v6810
    %7468 = vmatprep.subr.bf16.mxu0 %v6803
    %7469 = vmatpush1.bf16.msra.mxu0 %v6802
    %7470 = vmatprep.subr.bf16.mxu0 %v6795
    %7471 = vmatpush1.bf16.msra.mxu0 %v6794
    %7472 = vmatprep.subr.bf16.mxu0 %v6787
    %7473 = vmatpush1.bf16.msra.mxu0 %v6786
    %7474 = vmatprep.subr.bf16.mxu0 %v6907
    %7475 = vmatpush2.bf16.msra.mxu0 %v6906
    %7476 = vmatprep.subr.bf16.mxu0 %v6899
    %7477 = vmatpush2.bf16.msra.mxu0 %v6898
    %7478 = vmatprep.subr.bf16.mxu0 %v6891
    %7479 = vmatpush2.bf16.msra.mxu0 %v6890
    %7480 = vmatprep.subr.bf16.mxu0 %v6883
    %7481 = vmatpush2.bf16.msra.mxu0 %v6882
    %7482 = vmatprep.subr.bf16.mxu0 %v6875
    %7483 = vmatpush2.bf16.msra.mxu0 %v6874
    %7484 = vmatprep.subr.bf16.mxu0 %v6867
    %7485 = vmatpush2.bf16.msra.mxu0 %v6866
    %7486 = vmatprep.subr.bf16.mxu0 %v6859
    %7487 = vmatpush2.bf16.msra.mxu0 %v6858
    %7488 = vmatprep.subr.bf16.mxu0 %v6851
    %7489 = vmatpush2.bf16.msra.mxu0 %v6850
    %7490 = vmatprep.mubr.bf16.mxu0 %v5713
    %7491 = vmatmul.mubr.bf16.gmra.mxu0 %v5712
    %v7492 = vpop.f32.mrf.mxu0
    %v7493 = vadd.f32 %v5993, %v7492
    %v7494 = vpop.f32.mrf.mxu0
    %v7495 = vadd.f32 %v5997, %v7494
    %v7496 = vpop.f32.mrf.mxu0
    %v7497 = vpop.f32.mrf.mxu0
    %7498 = vdwg.mxu0
    %7499 = vmatprep.subr.bf16.mxu0 %v6971
    %7500 = vmatpush1.bf16.msra.mxu0 %v6970
    %7501 = vmatprep.subr.bf16.mxu0 %v6963
    %7502 = vmatpush1.bf16.msra.mxu0 %v6962
    %7503 = vmatprep.subr.bf16.mxu0 %v6955
    %7504 = vmatpush1.bf16.msra.mxu0 %v6954
    %7505 = vmatprep.subr.bf16.mxu0 %v6947
    %7506 = vmatpush1.bf16.msra.mxu0 %v6946
    %7507 = vmatprep.subr.bf16.mxu0 %v6939
    %7508 = vmatpush1.bf16.msra.mxu0 %v6938
    %7509 = vmatprep.subr.bf16.mxu0 %v6931
    %7510 = vmatpush1.bf16.msra.mxu0 %v6930
    %7511 = vmatprep.subr.bf16.mxu0 %v6923
    %7512 = vmatpush1.bf16.msra.mxu0 %v6922
    %7513 = vmatprep.subr.bf16.mxu0 %v6915
    %7514 = vmatpush1.bf16.msra.mxu0 %v6914
    %7515 = vmatprep.subr.bf16.mxu0 %v7035
    %7516 = vmatpush2.bf16.msra.mxu0 %v7034
    %7517 = vmatprep.subr.bf16.mxu0 %v7027
    %7518 = vmatpush2.bf16.msra.mxu0 %v7026
    %7519 = vmatprep.subr.bf16.mxu0 %v7019
    %7520 = vmatpush2.bf16.msra.mxu0 %v7018
    %7521 = vmatprep.subr.bf16.mxu0 %v7011
    %7522 = vmatpush2.bf16.msra.mxu0 %v7010
    %7523 = vmatprep.subr.bf16.mxu0 %v7003
    %7524 = vmatpush2.bf16.msra.mxu0 %v7002
    %7525 = vmatprep.subr.bf16.mxu0 %v6995
    %7526 = vmatpush2.bf16.msra.mxu0 %v6994
    %7527 = vmatprep.subr.bf16.mxu0 %v6987
    %7528 = vmatpush2.bf16.msra.mxu0 %v6986
    %7529 = vmatprep.subr.bf16.mxu0 %v6979
    %7530 = vmatpush2.bf16.msra.mxu0 %v6978
    %7531 = vmatprep.mubr.bf16.mxu0 %v5715
    %7532 = vmatmul.mubr.bf16.gmra.mxu0 %v5714
    %v7533 = vpop.f32.mrf.mxu0
    %v7534 = vadd.f32 %v7493, %v7533
    %v7535 = vpop.f32.mrf.mxu0
    %v7536 = vadd.f32 %v7495, %v7535
    %v7537 = vpop.f32.mrf.mxu0
    %v7538 = vpop.f32.mrf.mxu0
    %7539 = vdwg.mxu0
    %7540 = vmatprep.subr.bf16.mxu0 %v6845
    %7541 = vmatpush1.bf16.msra.mxu0 %v6844
    %7542 = vmatprep.subr.bf16.mxu0 %v6837
    %7543 = vmatpush1.bf16.msra.mxu0 %v6836
    %7544 = vmatprep.subr.bf16.mxu0 %v6829
    %7545 = vmatpush1.bf16.msra.mxu0 %v6828
    %7546 = vmatprep.subr.bf16.mxu0 %v6821
    %7547 = vmatpush1.bf16.msra.mxu0 %v6820
    %7548 = vmatprep.subr.bf16.mxu0 %v6813
    %7549 = vmatpush1.bf16.msra.mxu0 %v6812
    %7550 = vmatprep.subr.bf16.mxu0 %v6805
    %7551 = vmatpush1.bf16.msra.mxu0 %v6804
    %7552 = vmatprep.subr.bf16.mxu0 %v6797
    %7553 = vmatpush1.bf16.msra.mxu0 %v6796
    %7554 = vmatprep.subr.bf16.mxu0 %v6789
    %7555 = vmatpush1.bf16.msra.mxu0 %v6788
    %7556 = vmatprep.subr.bf16.mxu0 %v6909
    %7557 = vmatpush2.bf16.msra.mxu0 %v6908
    %7558 = vmatprep.subr.bf16.mxu0 %v6901
    %7559 = vmatpush2.bf16.msra.mxu0 %v6900
    %7560 = vmatprep.subr.bf16.mxu0 %v6893
    %7561 = vmatpush2.bf16.msra.mxu0 %v6892
    %7562 = vmatprep.subr.bf16.mxu0 %v6885
    %7563 = vmatpush2.bf16.msra.mxu0 %v6884
    %7564 = vmatprep.subr.bf16.mxu0 %v6877
    %7565 = vmatpush2.bf16.msra.mxu0 %v6876
    %7566 = vmatprep.subr.bf16.mxu0 %v6869
    %7567 = vmatpush2.bf16.msra.mxu0 %v6868
    %7568 = vmatprep.subr.bf16.mxu0 %v6861
    %7569 = vmatpush2.bf16.msra.mxu0 %v6860
    %7570 = vmatprep.subr.bf16.mxu0 %v6853
    %7571 = vmatpush2.bf16.msra.mxu0 %v6852
    %7572 = vmatprep.mubr.bf16.mxu0 %v5713
    %7573 = vmatmul.mubr.bf16.gmra.mxu0 %v5712
    %v7574 = vpop.f32.mrf.mxu0
    %v7575 = vadd.f32 %v6001, %v7574
    %v7576 = vpop.f32.mrf.mxu0
    %v7577 = vadd.f32 %v6005, %v7576
    %v7578 = vpop.f32.mrf.mxu0
    %v7579 = vpop.f32.mrf.mxu0
    %7580 = vdwg.mxu0
    %7581 = vmatprep.subr.bf16.mxu0 %v6973
    %7582 = vmatpush1.bf16.msra.mxu0 %v6972
    %7583 = vmatprep.subr.bf16.mxu0 %v6965
    %7584 = vmatpush1.bf16.msra.mxu0 %v6964
    %7585 = vmatprep.subr.bf16.mxu0 %v6957
    %7586 = vmatpush1.bf16.msra.mxu0 %v6956
    %7587 = vmatprep.subr.bf16.mxu0 %v6949
    %7588 = vmatpush1.bf16.msra.mxu0 %v6948
    %7589 = vmatprep.subr.bf16.mxu0 %v6941
    %7590 = vmatpush1.bf16.msra.mxu0 %v6940
    %7591 = vmatprep.subr.bf16.mxu0 %v6933
    %7592 = vmatpush1.bf16.msra.mxu0 %v6932
    %7593 = vmatprep.subr.bf16.mxu0 %v6925
    %7594 = vmatpush1.bf16.msra.mxu0 %v6924
    %7595 = vmatprep.subr.bf16.mxu0 %v6917
    %7596 = vmatpush1.bf16.msra.mxu0 %v6916
    %7597 = vmatprep.subr.bf16.mxu0 %v7037
    %7598 = vmatpush2.bf16.msra.mxu0 %v7036
    %7599 = vmatprep.subr.bf16.mxu0 %v7029
    %7600 = vmatpush2.bf16.msra.mxu0 %v7028
    %7601 = vmatprep.subr.bf16.mxu0 %v7021
    %7602 = vmatpush2.bf16.msra.mxu0 %v7020
    %7603 = vmatprep.subr.bf16.mxu0 %v7013
    %7604 = vmatpush2.bf16.msra.mxu0 %v7012
    %7605 = vmatprep.subr.bf16.mxu0 %v7005
    %7606 = vmatpush2.bf16.msra.mxu0 %v7004
    %7607 = vmatprep.subr.bf16.mxu0 %v6997
    %7608 = vmatpush2.bf16.msra.mxu0 %v6996
    %7609 = vmatprep.subr.bf16.mxu0 %v6989
    %7610 = vmatpush2.bf16.msra.mxu0 %v6988
    %7611 = vmatprep.subr.bf16.mxu0 %v6981
    %7612 = vmatpush2.bf16.msra.mxu0 %v6980
    %7613 = vmatprep.mubr.bf16.mxu0 %v5715
    %7614 = vmatmul.mubr.bf16.gmra.mxu0 %v5714
    %v7615 = vpop.f32.mrf.mxu0
    %v7616 = vadd.f32 %v7575, %v7615
    %v7617 = vpop.f32.mrf.mxu0
    %v7618 = vadd.f32 %v7577, %v7617
    %v7619 = vpop.f32.mrf.mxu0
    %v7620 = vpop.f32.mrf.mxu0
    %7621 = vdwg.mxu0
    %v7622 = vmax.f32 %v7370, 0.0
    %v7623 = vmax.f32 %v7372, 0.0
    %v7624 = vmax.f32 %v7452, 0.0
    %v7625 = vmax.f32 %v7454, 0.0
    %v7626 = vmax.f32 %v7534, 0.0
    %v7627 = vmax.f32 %v7536, 0.0
    %v7628 = vmax.f32 %v7616, 0.0
    %v7629 = vmax.f32 %v7618, 0.0
    %v7630 = vpack.c.bf16 %v7622, %v7622
    %v7631 = vpack.c.bf16 %v7623, %v7623
    %v7632 = vpack.c.bf16 %v7624, %v7624
    %v7633 = vpack.c.bf16 %v7625, %v7625
    %v7634 = vpack.c.bf16 %v7626, %v7626
    %v7635 = vpack.c.bf16 %v7627, %v7627
    %v7636 = vpack.c.bf16 %v7628, %v7628
    %v7637 = vpack.c.bf16 %v7629, %v7629
    %v7638 = vld [vmem:[#allocation25] sm:$0xff]
    %v7639 = vld [vmem:[#allocation25 + $0x8] sm:$0xff]
    %v7640 = vld [vmem:[#allocation25 + $0x10] sm:$0xff]
    %v7641 = vld [vmem:[#allocation25 + $0x18] sm:$0xff]
    %v7642 = vld [vmem:[#allocation25 + $0x20] sm:$0xff]
    %v7643 = vld [vmem:[#allocation25 + $0x28] sm:$0xff]
    %v7644 = vld [vmem:[#allocation25 + $0x30] sm:$0xff]
    %v7645 = vld [vmem:[#allocation25 + $0x38] sm:$0xff]
    %v7646 = vld [vmem:[#allocation25 + $0x40] sm:$0xff]
    %v7647 = vld [vmem:[#allocation25 + $0x48] sm:$0xff]
    %v7648 = vld [vmem:[#allocation25 + $0x50] sm:$0xff]
    %v7649 = vld [vmem:[#allocation25 + $0x58] sm:$0xff]
    %v7650 = vld [vmem:[#allocation25 + $0x60] sm:$0xff]
    %v7651 = vld [vmem:[#allocation25 + $0x68] sm:$0xff]
    %v7652 = vld [vmem:[#allocation25 + $0x70] sm:$0xff]
    %v7653 = vld [vmem:[#allocation25 + $0x78] sm:$0xff]
    %v7654 = vld [vmem:[#allocation25 + $0x80] sm:$0xff]
    %v7655 = vld [vmem:[#allocation25 + $0x88] sm:$0xff]
    %v7656 = vld [vmem:[#allocation25 + $0x90] sm:$0xff]
    %v7657 = vld [vmem:[#allocation25 + $0x98] sm:$0xff]
    %v7658 = vld [vmem:[#allocation25 + $0xa0] sm:$0xff]
    %v7659 = vld [vmem:[#allocation25 + $0xa8] sm:$0xff]
    %v7660 = vld [vmem:[#allocation25 + $0xb0] sm:$0xff]
    %v7661 = vld [vmem:[#allocation25 + $0xb8] sm:$0xff]
    %v7662 = vld [vmem:[#allocation25 + $0xc0] sm:$0xff]
    %v7663 = vld [vmem:[#allocation25 + $0xc8] sm:$0xff]
    %v7664 = vld [vmem:[#allocation25 + $0xd0] sm:$0xff]
    %v7665 = vld [vmem:[#allocation25 + $0xd8] sm:$0xff]
    %v7666 = vld [vmem:[#allocation25 + $0xe0] sm:$0xff]
    %v7667 = vld [vmem:[#allocation25 + $0xe8] sm:$0xff]
    %v7668 = vld [vmem:[#allocation25 + $0xf0] sm:$0xff]
    %v7669 = vld [vmem:[#allocation25 + $0xf8] sm:$0xff]
    %v7670 = vld [vmem:[#allocation25 + $0x100] sm:$0xff]
    %v7671 = vld [vmem:[#allocation25 + $0x108] sm:$0xff]
    %v7672 = vld [vmem:[#allocation25 + $0x110] sm:$0xff]
    %v7673 = vld [vmem:[#allocation25 + $0x118] sm:$0xff]
    %v7674 = vld [vmem:[#allocation25 + $0x120] sm:$0xff]
    %v7675 = vld [vmem:[#allocation25 + $0x128] sm:$0xff]
    %v7676 = vld [vmem:[#allocation25 + $0x130] sm:$0xff]
    %v7677 = vld [vmem:[#allocation25 + $0x138] sm:$0xff]
    %v7678 = vld [vmem:[#allocation25 + $0x140] sm:$0xff]
    %v7679 = vld [vmem:[#allocation25 + $0x148] sm:$0xff]
    %v7680 = vld [vmem:[#allocation25 + $0x150] sm:$0xff]
    %v7681 = vld [vmem:[#allocation25 + $0x158] sm:$0xff]
    %v7682 = vld [vmem:[#allocation25 + $0x160] sm:$0xff]
    %v7683 = vld [vmem:[#allocation25 + $0x168] sm:$0xff]
    %v7684 = vld [vmem:[#allocation25 + $0x170] sm:$0xff]
    %v7685 = vld [vmem:[#allocation25 + $0x178] sm:$0xff]
    %v7686 = vld [vmem:[#allocation25 + $0x180] sm:$0xff]
    %v7687 = vld [vmem:[#allocation25 + $0x188] sm:$0xff]
    %v7688 = vld [vmem:[#allocation25 + $0x190] sm:$0xff]
    %v7689 = vld [vmem:[#allocation25 + $0x198] sm:$0xff]
    %v7690 = vld [vmem:[#allocation25 + $0x1a0] sm:$0xff]
    %v7691 = vld [vmem:[#allocation25 + $0x1a8] sm:$0xff]
    %v7692 = vld [vmem:[#allocation25 + $0x1b0] sm:$0xff]
    %v7693 = vld [vmem:[#allocation25 + $0x1b8] sm:$0xff]
    %v7694 = vld [vmem:[#allocation25 + $0x1c0] sm:$0xff]
    %v7695 = vld [vmem:[#allocation25 + $0x1c8] sm:$0xff]
    %v7696 = vld [vmem:[#allocation25 + $0x1d0] sm:$0xff]
    %v7697 = vld [vmem:[#allocation25 + $0x1d8] sm:$0xff]
    %v7698 = vld [vmem:[#allocation25 + $0x1e0] sm:$0xff]
    %v7699 = vld [vmem:[#allocation25 + $0x1e8] sm:$0xff]
    %v7700 = vld [vmem:[#allocation25 + $0x1f0] sm:$0xff]
    %v7701 = vld [vmem:[#allocation25 + $0x1f8] sm:$0xff]
    %v7702 = vld [vmem:[#allocation25 + $0x200] sm:$0xff]
    %v7703 = vld [vmem:[#allocation25 + $0x208] sm:$0xff]
    %v7704 = vld [vmem:[#allocation25 + $0x210] sm:$0xff]
    %v7705 = vld [vmem:[#allocation25 + $0x218] sm:$0xff]
    %v7706 = vld [vmem:[#allocation25 + $0x220] sm:$0xff]
    %v7707 = vld [vmem:[#allocation25 + $0x228] sm:$0xff]
    %v7708 = vld [vmem:[#allocation25 + $0x230] sm:$0xff]
    %v7709 = vld [vmem:[#allocation25 + $0x238] sm:$0xff]
    %v7710 = vld [vmem:[#allocation25 + $0x240] sm:$0xff]
    %v7711 = vld [vmem:[#allocation25 + $0x248] sm:$0xff]
    %v7712 = vld [vmem:[#allocation25 + $0x250] sm:$0xff]
    %v7713 = vld [vmem:[#allocation25 + $0x258] sm:$0xff]
    %v7714 = vld [vmem:[#allocation25 + $0x260] sm:$0xff]
    %v7715 = vld [vmem:[#allocation25 + $0x268] sm:$0xff]
    %v7716 = vld [vmem:[#allocation25 + $0x270] sm:$0xff]
    %v7717 = vld [vmem:[#allocation25 + $0x278] sm:$0xff]
    %v7718 = vld [vmem:[#allocation25 + $0x280] sm:$0xff]
    %v7719 = vld [vmem:[#allocation25 + $0x288] sm:$0xff]
    %v7720 = vld [vmem:[#allocation25 + $0x290] sm:$0xff]
    %v7721 = vld [vmem:[#allocation25 + $0x298] sm:$0xff]
    %v7722 = vld [vmem:[#allocation25 + $0x2a0] sm:$0xff]
    %v7723 = vld [vmem:[#allocation25 + $0x2a8] sm:$0xff]
    %v7724 = vld [vmem:[#allocation25 + $0x2b0] sm:$0xff]
    %v7725 = vld [vmem:[#allocation25 + $0x2b8] sm:$0xff]
    %v7726 = vld [vmem:[#allocation25 + $0x2c0] sm:$0xff]
    %v7727 = vld [vmem:[#allocation25 + $0x2c8] sm:$0xff]
    %v7728 = vld [vmem:[#allocation25 + $0x2d0] sm:$0xff]
    %v7729 = vld [vmem:[#allocation25 + $0x2d8] sm:$0xff]
    %v7730 = vld [vmem:[#allocation25 + $0x2e0] sm:$0xff]
    %v7731 = vld [vmem:[#allocation25 + $0x2e8] sm:$0xff]
    %v7732 = vld [vmem:[#allocation25 + $0x2f0] sm:$0xff]
    %v7733 = vld [vmem:[#allocation25 + $0x2f8] sm:$0xff]
    %v7734 = vld [vmem:[#allocation25 + $0x300] sm:$0xff]
    %v7735 = vld [vmem:[#allocation25 + $0x308] sm:$0xff]
    %v7736 = vld [vmem:[#allocation25 + $0x310] sm:$0xff]
    %v7737 = vld [vmem:[#allocation25 + $0x318] sm:$0xff]
    %v7738 = vld [vmem:[#allocation25 + $0x320] sm:$0xff]
    %v7739 = vld [vmem:[#allocation25 + $0x328] sm:$0xff]
    %v7740 = vld [vmem:[#allocation25 + $0x330] sm:$0xff]
    %v7741 = vld [vmem:[#allocation25 + $0x338] sm:$0xff]
    %v7742 = vld [vmem:[#allocation25 + $0x340] sm:$0xff]
    %v7743 = vld [vmem:[#allocation25 + $0x348] sm:$0xff]
    %v7744 = vld [vmem:[#allocation25 + $0x350] sm:$0xff]
    %v7745 = vld [vmem:[#allocation25 + $0x358] sm:$0xff]
    %v7746 = vld [vmem:[#allocation25 + $0x360] sm:$0xff]
    %v7747 = vld [vmem:[#allocation25 + $0x368] sm:$0xff]
    %v7748 = vld [vmem:[#allocation25 + $0x370] sm:$0xff]
    %v7749 = vld [vmem:[#allocation25 + $0x378] sm:$0xff]
    %v7750 = vld [vmem:[#allocation25 + $0x380] sm:$0xff]
    %v7751 = vld [vmem:[#allocation25 + $0x388] sm:$0xff]
    %v7752 = vld [vmem:[#allocation25 + $0x390] sm:$0xff]
    %v7753 = vld [vmem:[#allocation25 + $0x398] sm:$0xff]
    %v7754 = vld [vmem:[#allocation25 + $0x3a0] sm:$0xff]
    %v7755 = vld [vmem:[#allocation25 + $0x3a8] sm:$0xff]
    %v7756 = vld [vmem:[#allocation25 + $0x3b0] sm:$0xff]
    %v7757 = vld [vmem:[#allocation25 + $0x3b8] sm:$0xff]
    %v7758 = vld [vmem:[#allocation25 + $0x3c0] sm:$0xff]
    %v7759 = vld [vmem:[#allocation25 + $0x3c8] sm:$0xff]
    %v7760 = vld [vmem:[#allocation25 + $0x3d0] sm:$0xff]
    %v7761 = vld [vmem:[#allocation25 + $0x3d8] sm:$0xff]
    %v7762 = vld [vmem:[#allocation25 + $0x3e0] sm:$0xff]
    %v7763 = vld [vmem:[#allocation25 + $0x3e8] sm:$0xff]
    %v7764 = vld [vmem:[#allocation25 + $0x3f0] sm:$0xff]
    %v7765 = vld [vmem:[#allocation25 + $0x3f8] sm:$0xff]
    %v7766 = vld [vmem:[#allocation25 + $0x400] sm:$0xff]
    %v7767 = vld [vmem:[#allocation25 + $0x408] sm:$0xff]
    %v7768 = vld [vmem:[#allocation25 + $0x410] sm:$0xff]
    %v7769 = vld [vmem:[#allocation25 + $0x418] sm:$0xff]
    %v7770 = vld [vmem:[#allocation25 + $0x420] sm:$0xff]
    %v7771 = vld [vmem:[#allocation25 + $0x428] sm:$0xff]
    %v7772 = vld [vmem:[#allocation25 + $0x430] sm:$0xff]
    %v7773 = vld [vmem:[#allocation25 + $0x438] sm:$0xff]
    %v7774 = vld [vmem:[#allocation25 + $0x440] sm:$0xff]
    %v7775 = vld [vmem:[#allocation25 + $0x448] sm:$0xff]
    %v7776 = vld [vmem:[#allocation25 + $0x450] sm:$0xff]
    %v7777 = vld [vmem:[#allocation25 + $0x458] sm:$0xff]
    %v7778 = vld [vmem:[#allocation25 + $0x460] sm:$0xff]
    %v7779 = vld [vmem:[#allocation25 + $0x468] sm:$0xff]
    %v7780 = vld [vmem:[#allocation25 + $0x470] sm:$0xff]
    %v7781 = vld [vmem:[#allocation25 + $0x478] sm:$0xff]
    %v7782 = vld [vmem:[#allocation25 + $0x480] sm:$0xff]
    %v7783 = vld [vmem:[#allocation25 + $0x488] sm:$0xff]
    %v7784 = vld [vmem:[#allocation25 + $0x490] sm:$0xff]
    %v7785 = vld [vmem:[#allocation25 + $0x498] sm:$0xff]
    %v7786 = vld [vmem:[#allocation25 + $0x4a0] sm:$0xff]
    %v7787 = vld [vmem:[#allocation25 + $0x4a8] sm:$0xff]
    %v7788 = vld [vmem:[#allocation25 + $0x4b0] sm:$0xff]
    %v7789 = vld [vmem:[#allocation25 + $0x4b8] sm:$0xff]
    %v7790 = vld [vmem:[#allocation25 + $0x4c0] sm:$0xff]
    %v7791 = vld [vmem:[#allocation25 + $0x4c8] sm:$0xff]
    %v7792 = vld [vmem:[#allocation25 + $0x4d0] sm:$0xff]
    %v7793 = vld [vmem:[#allocation25 + $0x4d8] sm:$0xff]
    %v7794 = vld [vmem:[#allocation25 + $0x4e0] sm:$0xff]
    %v7795 = vld [vmem:[#allocation25 + $0x4e8] sm:$0xff]
    %v7796 = vld [vmem:[#allocation25 + $0x4f0] sm:$0xff]
    %v7797 = vld [vmem:[#allocation25 + $0x4f8] sm:$0xff]
    %v7798 = vld [vmem:[#allocation25 + $0x500] sm:$0xff]
    %v7799 = vld [vmem:[#allocation25 + $0x508] sm:$0xff]
    %v7800 = vld [vmem:[#allocation25 + $0x510] sm:$0xff]
    %v7801 = vld [vmem:[#allocation25 + $0x518] sm:$0xff]
    %v7802 = vld [vmem:[#allocation25 + $0x520] sm:$0xff]
    %v7803 = vld [vmem:[#allocation25 + $0x528] sm:$0xff]
    %v7804 = vld [vmem:[#allocation25 + $0x530] sm:$0xff]
    %v7805 = vld [vmem:[#allocation25 + $0x538] sm:$0xff]
    %v7806 = vld [vmem:[#allocation25 + $0x540] sm:$0xff]
    %v7807 = vld [vmem:[#allocation25 + $0x548] sm:$0xff]
    %v7808 = vld [vmem:[#allocation25 + $0x550] sm:$0xff]
    %v7809 = vld [vmem:[#allocation25 + $0x558] sm:$0xff]
    %v7810 = vld [vmem:[#allocation25 + $0x560] sm:$0xff]
    %v7811 = vld [vmem:[#allocation25 + $0x568] sm:$0xff]
    %v7812 = vld [vmem:[#allocation25 + $0x570] sm:$0xff]
    %v7813 = vld [vmem:[#allocation25 + $0x578] sm:$0xff]
    %v7814 = vld [vmem:[#allocation25 + $0x580] sm:$0xff]
    %v7815 = vld [vmem:[#allocation25 + $0x588] sm:$0xff]
    %v7816 = vld [vmem:[#allocation25 + $0x590] sm:$0xff]
    %v7817 = vld [vmem:[#allocation25 + $0x598] sm:$0xff]
    %v7818 = vld [vmem:[#allocation25 + $0x5a0] sm:$0xff]
    %v7819 = vld [vmem:[#allocation25 + $0x5a8] sm:$0xff]
    %v7820 = vld [vmem:[#allocation25 + $0x5b0] sm:$0xff]
    %v7821 = vld [vmem:[#allocation25 + $0x5b8] sm:$0xff]
    %v7822 = vld [vmem:[#allocation25 + $0x5c0] sm:$0xff]
    %v7823 = vld [vmem:[#allocation25 + $0x5c8] sm:$0xff]
    %v7824 = vld [vmem:[#allocation25 + $0x5d0] sm:$0xff]
    %v7825 = vld [vmem:[#allocation25 + $0x5d8] sm:$0xff]
    %v7826 = vld [vmem:[#allocation25 + $0x5e0] sm:$0xff]
    %v7827 = vld [vmem:[#allocation25 + $0x5e8] sm:$0xff]
    %v7828 = vld [vmem:[#allocation25 + $0x5f0] sm:$0xff]
    %v7829 = vld [vmem:[#allocation25 + $0x5f8] sm:$0xff]
    %v7830 = vld [vmem:[#allocation25 + $0x600] sm:$0xff]
    %v7831 = vld [vmem:[#allocation25 + $0x608] sm:$0xff]
    %v7832 = vld [vmem:[#allocation25 + $0x610] sm:$0xff]
    %v7833 = vld [vmem:[#allocation25 + $0x618] sm:$0xff]
    %v7834 = vld [vmem:[#allocation25 + $0x620] sm:$0xff]
    %v7835 = vld [vmem:[#allocation25 + $0x628] sm:$0xff]
    %v7836 = vld [vmem:[#allocation25 + $0x630] sm:$0xff]
    %v7837 = vld [vmem:[#allocation25 + $0x638] sm:$0xff]
    %v7838 = vld [vmem:[#allocation25 + $0x640] sm:$0xff]
    %v7839 = vld [vmem:[#allocation25 + $0x648] sm:$0xff]
    %v7840 = vld [vmem:[#allocation25 + $0x650] sm:$0xff]
    %v7841 = vld [vmem:[#allocation25 + $0x658] sm:$0xff]
    %v7842 = vld [vmem:[#allocation25 + $0x660] sm:$0xff]
    %v7843 = vld [vmem:[#allocation25 + $0x668] sm:$0xff]
    %v7844 = vld [vmem:[#allocation25 + $0x670] sm:$0xff]
    %v7845 = vld [vmem:[#allocation25 + $0x678] sm:$0xff]
    %v7846 = vld [vmem:[#allocation25 + $0x680] sm:$0xff]
    %v7847 = vld [vmem:[#allocation25 + $0x688] sm:$0xff]
    %v7848 = vld [vmem:[#allocation25 + $0x690] sm:$0xff]
    %v7849 = vld [vmem:[#allocation25 + $0x698] sm:$0xff]
    %v7850 = vld [vmem:[#allocation25 + $0x6a0] sm:$0xff]
    %v7851 = vld [vmem:[#allocation25 + $0x6a8] sm:$0xff]
    %v7852 = vld [vmem:[#allocation25 + $0x6b0] sm:$0xff]
    %v7853 = vld [vmem:[#allocation25 + $0x6b8] sm:$0xff]
    %v7854 = vld [vmem:[#allocation25 + $0x6c0] sm:$0xff]
    %v7855 = vld [vmem:[#allocation25 + $0x6c8] sm:$0xff]
    %v7856 = vld [vmem:[#allocation25 + $0x6d0] sm:$0xff]
    %v7857 = vld [vmem:[#allocation25 + $0x6d8] sm:$0xff]
    %v7858 = vld [vmem:[#allocation25 + $0x6e0] sm:$0xff]
    %v7859 = vld [vmem:[#allocation25 + $0x6e8] sm:$0xff]
    %v7860 = vld [vmem:[#allocation25 + $0x6f0] sm:$0xff]
    %v7861 = vld [vmem:[#allocation25 + $0x6f8] sm:$0xff]
    %v7862 = vld [vmem:[#allocation25 + $0x700] sm:$0xff]
    %v7863 = vld [vmem:[#allocation25 + $0x708] sm:$0xff]
    %v7864 = vld [vmem:[#allocation25 + $0x710] sm:$0xff]
    %v7865 = vld [vmem:[#allocation25 + $0x718] sm:$0xff]
    %v7866 = vld [vmem:[#allocation25 + $0x720] sm:$0xff]
    %v7867 = vld [vmem:[#allocation25 + $0x728] sm:$0xff]
    %v7868 = vld [vmem:[#allocation25 + $0x730] sm:$0xff]
    %v7869 = vld [vmem:[#allocation25 + $0x738] sm:$0xff]
    %v7870 = vld [vmem:[#allocation25 + $0x740] sm:$0xff]
    %v7871 = vld [vmem:[#allocation25 + $0x748] sm:$0xff]
    %v7872 = vld [vmem:[#allocation25 + $0x750] sm:$0xff]
    %v7873 = vld [vmem:[#allocation25 + $0x758] sm:$0xff]
    %v7874 = vld [vmem:[#allocation25 + $0x760] sm:$0xff]
    %v7875 = vld [vmem:[#allocation25 + $0x768] sm:$0xff]
    %v7876 = vld [vmem:[#allocation25 + $0x770] sm:$0xff]
    %v7877 = vld [vmem:[#allocation25 + $0x778] sm:$0xff]
    %v7878 = vld [vmem:[#allocation25 + $0x780] sm:$0xff]
    %v7879 = vld [vmem:[#allocation25 + $0x788] sm:$0xff]
    %v7880 = vld [vmem:[#allocation25 + $0x790] sm:$0xff]
    %v7881 = vld [vmem:[#allocation25 + $0x798] sm:$0xff]
    %v7882 = vld [vmem:[#allocation25 + $0x7a0] sm:$0xff]
    %v7883 = vld [vmem:[#allocation25 + $0x7a8] sm:$0xff]
    %v7884 = vld [vmem:[#allocation25 + $0x7b0] sm:$0xff]
    %v7885 = vld [vmem:[#allocation25 + $0x7b8] sm:$0xff]
    %v7886 = vld [vmem:[#allocation25 + $0x7c0] sm:$0xff]
    %v7887 = vld [vmem:[#allocation25 + $0x7c8] sm:$0xff]
    %v7888 = vld [vmem:[#allocation25 + $0x7d0] sm:$0xff]
    %v7889 = vld [vmem:[#allocation25 + $0x7d8] sm:$0xff]
    %v7890 = vld [vmem:[#allocation25 + $0x7e0] sm:$0xff]
    %v7891 = vld [vmem:[#allocation25 + $0x7e8] sm:$0xff]
    %v7892 = vld [vmem:[#allocation25 + $0x7f0] sm:$0xff]
    %v7893 = vld [vmem:[#allocation25 + $0x7f8] sm:$0xff]
    %v7894 = vld [vmem:[%s20] sm:$0xf]
    %v7896 = vlaneseq
    %v7897 = vshrl.u32 %v7896, 7
    %v7898 = vsub.s32 0, %v7897
    %v7899 = vrot.slane %v7894, %v7898
    %v7900 = vlaneseq
    %v7901 = vshrl.u32 %v7900, 7
    %v7902 = vsub.s32 1, %v7901
    %v7903 = vrot.slane %v7894, %v7902
    %v7904 = vlaneseq
    %v7905 = vshrl.u32 %v7904, 7
    %v7906 = vsub.s32 2, %v7905
    %v7907 = vrot.slane %v7894, %v7906
    %v7908 = vlaneseq
    %v7909 = vshrl.u32 %v7908, 7
    %v7910 = vsub.s32 3, %v7909
    %v7911 = vrot.slane %v7894, %v7910
    %v8172 = vunpack.c.l.b16 %v7638
    %v8173 = vunpack.c.h.b16 %v7638
    %v8174 = vunpack.c.l.b16 %v7639
    %v8175 = vunpack.c.h.b16 %v7639
    %v8176 = vunpack.c.l.b16 %v7640
    %v8177 = vunpack.c.h.b16 %v7640
    %v8178 = vunpack.c.l.b16 %v7641
    %v8179 = vunpack.c.h.b16 %v7641
    %v8180 = vunpack.c.l.b16 %v7642
    %v8181 = vunpack.c.h.b16 %v7642
    %v8182 = vunpack.c.l.b16 %v7643
    %v8183 = vunpack.c.h.b16 %v7643
    %v8184 = vunpack.c.l.b16 %v7644
    %v8185 = vunpack.c.h.b16 %v7644
    %v8186 = vunpack.c.l.b16 %v7645
    %v8187 = vunpack.c.h.b16 %v7645
    %v8188 = vunpack.c.l.b16 %v7646
    %v8189 = vunpack.c.h.b16 %v7646
    %v8190 = vunpack.c.l.b16 %v7647
    %v8191 = vunpack.c.h.b16 %v7647
    %v8192 = vunpack.c.l.b16 %v7648
    %v8193 = vunpack.c.h.b16 %v7648
    %v8194 = vunpack.c.l.b16 %v7649
    %v8195 = vunpack.c.h.b16 %v7649
    %v8196 = vunpack.c.l.b16 %v7650
    %v8197 = vunpack.c.h.b16 %v7650
    %v8198 = vunpack.c.l.b16 %v7651
    %v8199 = vunpack.c.h.b16 %v7651
    %v8200 = vunpack.c.l.b16 %v7652
    %v8201 = vunpack.c.h.b16 %v7652
    %v8202 = vunpack.c.l.b16 %v7653
    %v8203 = vunpack.c.h.b16 %v7653
    %v8204 = vunpack.c.l.b16 %v7654
    %v8205 = vunpack.c.h.b16 %v7654
    %v8206 = vunpack.c.l.b16 %v7655
    %v8207 = vunpack.c.h.b16 %v7655
    %v8208 = vunpack.c.l.b16 %v7656
    %v8209 = vunpack.c.h.b16 %v7656
    %v8210 = vunpack.c.l.b16 %v7657
    %v8211 = vunpack.c.h.b16 %v7657
    %v8212 = vunpack.c.l.b16 %v7658
    %v8213 = vunpack.c.h.b16 %v7658
    %v8214 = vunpack.c.l.b16 %v7659
    %v8215 = vunpack.c.h.b16 %v7659
    %v8216 = vunpack.c.l.b16 %v7660
    %v8217 = vunpack.c.h.b16 %v7660
    %v8218 = vunpack.c.l.b16 %v7661
    %v8219 = vunpack.c.h.b16 %v7661
    %v8220 = vunpack.c.l.b16 %v7662
    %v8221 = vunpack.c.h.b16 %v7662
    %v8222 = vunpack.c.l.b16 %v7663
    %v8223 = vunpack.c.h.b16 %v7663
    %v8224 = vunpack.c.l.b16 %v7664
    %v8225 = vunpack.c.h.b16 %v7664
    %v8226 = vunpack.c.l.b16 %v7665
    %v8227 = vunpack.c.h.b16 %v7665
    %v8228 = vunpack.c.l.b16 %v7666
    %v8229 = vunpack.c.h.b16 %v7666
    %v8230 = vunpack.c.l.b16 %v7667
    %v8231 = vunpack.c.h.b16 %v7667
    %v8232 = vunpack.c.l.b16 %v7668
    %v8233 = vunpack.c.h.b16 %v7668
    %v8234 = vunpack.c.l.b16 %v7669
    %v8235 = vunpack.c.h.b16 %v7669
    %v8236 = vunpack.c.l.b16 %v7670
    %v8237 = vunpack.c.h.b16 %v7670
    %v8238 = vunpack.c.l.b16 %v7671
    %v8239 = vunpack.c.h.b16 %v7671
    %v8240 = vunpack.c.l.b16 %v7672
    %v8241 = vunpack.c.h.b16 %v7672
    %v8242 = vunpack.c.l.b16 %v7673
    %v8243 = vunpack.c.h.b16 %v7673
    %v8244 = vunpack.c.l.b16 %v7674
    %v8245 = vunpack.c.h.b16 %v7674
    %v8246 = vunpack.c.l.b16 %v7675
    %v8247 = vunpack.c.h.b16 %v7675
    %v8248 = vunpack.c.l.b16 %v7676
    %v8249 = vunpack.c.h.b16 %v7676
    %v8250 = vunpack.c.l.b16 %v7677
    %v8251 = vunpack.c.h.b16 %v7677
    %v8252 = vunpack.c.l.b16 %v7678
    %v8253 = vunpack.c.h.b16 %v7678
    %v8254 = vunpack.c.l.b16 %v7679
    %v8255 = vunpack.c.h.b16 %v7679
    %v8256 = vunpack.c.l.b16 %v7680
    %v8257 = vunpack.c.h.b16 %v7680
    %v8258 = vunpack.c.l.b16 %v7681
    %v8259 = vunpack.c.h.b16 %v7681
    %v8260 = vunpack.c.l.b16 %v7682
    %v8261 = vunpack.c.h.b16 %v7682
    %v8262 = vunpack.c.l.b16 %v7683
    %v8263 = vunpack.c.h.b16 %v7683
    %v8264 = vunpack.c.l.b16 %v7684
    %v8265 = vunpack.c.h.b16 %v7684
    %v8266 = vunpack.c.l.b16 %v7685
    %v8267 = vunpack.c.h.b16 %v7685
    %v8268 = vunpack.c.l.b16 %v7686
    %v8269 = vunpack.c.h.b16 %v7686
    %v8270 = vunpack.c.l.b16 %v7687
    %v8271 = vunpack.c.h.b16 %v7687
    %v8272 = vunpack.c.l.b16 %v7688
    %v8273 = vunpack.c.h.b16 %v7688
    %v8274 = vunpack.c.l.b16 %v7689
    %v8275 = vunpack.c.h.b16 %v7689
    %v8276 = vunpack.c.l.b16 %v7690
    %v8277 = vunpack.c.h.b16 %v7690
    %v8278 = vunpack.c.l.b16 %v7691
    %v8279 = vunpack.c.h.b16 %v7691
    %v8280 = vunpack.c.l.b16 %v7692
    %v8281 = vunpack.c.h.b16 %v7692
    %v8282 = vunpack.c.l.b16 %v7693
    %v8283 = vunpack.c.h.b16 %v7693
    %v8284 = vunpack.c.l.b16 %v7694
    %v8285 = vunpack.c.h.b16 %v7694
    %v8286 = vunpack.c.l.b16 %v7695
    %v8287 = vunpack.c.h.b16 %v7695
    %v8288 = vunpack.c.l.b16 %v7696
    %v8289 = vunpack.c.h.b16 %v7696
    %v8290 = vunpack.c.l.b16 %v7697
    %v8291 = vunpack.c.h.b16 %v7697
    %v8292 = vunpack.c.l.b16 %v7698
    %v8293 = vunpack.c.h.b16 %v7698
    %v8294 = vunpack.c.l.b16 %v7699
    %v8295 = vunpack.c.h.b16 %v7699
    %v8296 = vunpack.c.l.b16 %v7700
    %v8297 = vunpack.c.h.b16 %v7700
    %v8298 = vunpack.c.l.b16 %v7701
    %v8299 = vunpack.c.h.b16 %v7701
    %v8300 = vunpack.c.l.b16 %v7702
    %v8301 = vunpack.c.h.b16 %v7702
    %v8302 = vunpack.c.l.b16 %v7703
    %v8303 = vunpack.c.h.b16 %v7703
    %v8304 = vunpack.c.l.b16 %v7704
    %v8305 = vunpack.c.h.b16 %v7704
    %v8306 = vunpack.c.l.b16 %v7705
    %v8307 = vunpack.c.h.b16 %v7705
    %v8308 = vunpack.c.l.b16 %v7706
    %v8309 = vunpack.c.h.b16 %v7706
    %v8310 = vunpack.c.l.b16 %v7707
    %v8311 = vunpack.c.h.b16 %v7707
    %v8312 = vunpack.c.l.b16 %v7708
    %v8313 = vunpack.c.h.b16 %v7708
    %v8314 = vunpack.c.l.b16 %v7709
    %v8315 = vunpack.c.h.b16 %v7709
    %v8316 = vunpack.c.l.b16 %v7710
    %v8317 = vunpack.c.h.b16 %v7710
    %v8318 = vunpack.c.l.b16 %v7711
    %v8319 = vunpack.c.h.b16 %v7711
    %v8320 = vunpack.c.l.b16 %v7712
    %v8321 = vunpack.c.h.b16 %v7712
    %v8322 = vunpack.c.l.b16 %v7713
    %v8323 = vunpack.c.h.b16 %v7713
    %v8324 = vunpack.c.l.b16 %v7714
    %v8325 = vunpack.c.h.b16 %v7714
    %v8326 = vunpack.c.l.b16 %v7715
    %v8327 = vunpack.c.h.b16 %v7715
    %v8328 = vunpack.c.l.b16 %v7716
    %v8329 = vunpack.c.h.b16 %v7716
    %v8330 = vunpack.c.l.b16 %v7717
    %v8331 = vunpack.c.h.b16 %v7717
    %v8332 = vunpack.c.l.b16 %v7718
    %v8333 = vunpack.c.h.b16 %v7718
    %v8334 = vunpack.c.l.b16 %v7719
    %v8335 = vunpack.c.h.b16 %v7719
    %v8336 = vunpack.c.l.b16 %v7720
    %v8337 = vunpack.c.h.b16 %v7720
    %v8338 = vunpack.c.l.b16 %v7721
    %v8339 = vunpack.c.h.b16 %v7721
    %v8340 = vunpack.c.l.b16 %v7722
    %v8341 = vunpack.c.h.b16 %v7722
    %v8342 = vunpack.c.l.b16 %v7723
    %v8343 = vunpack.c.h.b16 %v7723
    %v8344 = vunpack.c.l.b16 %v7724
    %v8345 = vunpack.c.h.b16 %v7724
    %v8346 = vunpack.c.l.b16 %v7725
    %v8347 = vunpack.c.h.b16 %v7725
    %v8348 = vunpack.c.l.b16 %v7726
    %v8349 = vunpack.c.h.b16 %v7726
    %v8350 = vunpack.c.l.b16 %v7727
    %v8351 = vunpack.c.h.b16 %v7727
    %v8352 = vunpack.c.l.b16 %v7728
    %v8353 = vunpack.c.h.b16 %v7728
    %v8354 = vunpack.c.l.b16 %v7729
    %v8355 = vunpack.c.h.b16 %v7729
    %v8356 = vunpack.c.l.b16 %v7730
    %v8357 = vunpack.c.h.b16 %v7730
    %v8358 = vunpack.c.l.b16 %v7731
    %v8359 = vunpack.c.h.b16 %v7731
    %v8360 = vunpack.c.l.b16 %v7732
    %v8361 = vunpack.c.h.b16 %v7732
    %v8362 = vunpack.c.l.b16 %v7733
    %v8363 = vunpack.c.h.b16 %v7733
    %v8364 = vunpack.c.l.b16 %v7734
    %v8365 = vunpack.c.h.b16 %v7734
    %v8366 = vunpack.c.l.b16 %v7735
    %v8367 = vunpack.c.h.b16 %v7735
    %v8368 = vunpack.c.l.b16 %v7736
    %v8369 = vunpack.c.h.b16 %v7736
    %v8370 = vunpack.c.l.b16 %v7737
    %v8371 = vunpack.c.h.b16 %v7737
    %v8372 = vunpack.c.l.b16 %v7738
    %v8373 = vunpack.c.h.b16 %v7738
    %v8374 = vunpack.c.l.b16 %v7739
    %v8375 = vunpack.c.h.b16 %v7739
    %v8376 = vunpack.c.l.b16 %v7740
    %v8377 = vunpack.c.h.b16 %v7740
    %v8378 = vunpack.c.l.b16 %v7741
    %v8379 = vunpack.c.h.b16 %v7741
    %v8380 = vunpack.c.l.b16 %v7742
    %v8381 = vunpack.c.h.b16 %v7742
    %v8382 = vunpack.c.l.b16 %v7743
    %v8383 = vunpack.c.h.b16 %v7743
    %v8384 = vunpack.c.l.b16 %v7744
    %v8385 = vunpack.c.h.b16 %v7744
    %v8386 = vunpack.c.l.b16 %v7745
    %v8387 = vunpack.c.h.b16 %v7745
    %v8388 = vunpack.c.l.b16 %v7746
    %v8389 = vunpack.c.h.b16 %v7746
    %v8390 = vunpack.c.l.b16 %v7747
    %v8391 = vunpack.c.h.b16 %v7747
    %v8392 = vunpack.c.l.b16 %v7748
    %v8393 = vunpack.c.h.b16 %v7748
    %v8394 = vunpack.c.l.b16 %v7749
    %v8395 = vunpack.c.h.b16 %v7749
    %v8396 = vunpack.c.l.b16 %v7750
    %v8397 = vunpack.c.h.b16 %v7750
    %v8398 = vunpack.c.l.b16 %v7751
    %v8399 = vunpack.c.h.b16 %v7751
    %v8400 = vunpack.c.l.b16 %v7752
    %v8401 = vunpack.c.h.b16 %v7752
    %v8402 = vunpack.c.l.b16 %v7753
    %v8403 = vunpack.c.h.b16 %v7753
    %v8404 = vunpack.c.l.b16 %v7754
    %v8405 = vunpack.c.h.b16 %v7754
    %v8406 = vunpack.c.l.b16 %v7755
    %v8407 = vunpack.c.h.b16 %v7755
    %v8408 = vunpack.c.l.b16 %v7756
    %v8409 = vunpack.c.h.b16 %v7756
    %v8410 = vunpack.c.l.b16 %v7757
    %v8411 = vunpack.c.h.b16 %v7757
    %v8412 = vunpack.c.l.b16 %v7758
    %v8413 = vunpack.c.h.b16 %v7758
    %v8414 = vunpack.c.l.b16 %v7759
    %v8415 = vunpack.c.h.b16 %v7759
    %v8416 = vunpack.c.l.b16 %v7760
    %v8417 = vunpack.c.h.b16 %v7760
    %v8418 = vunpack.c.l.b16 %v7761
    %v8419 = vunpack.c.h.b16 %v7761
    %v8420 = vunpack.c.l.b16 %v7762
    %v8421 = vunpack.c.h.b16 %v7762
    %v8422 = vunpack.c.l.b16 %v7763
    %v8423 = vunpack.c.h.b16 %v7763
    %v8424 = vunpack.c.l.b16 %v7764
    %v8425 = vunpack.c.h.b16 %v7764
    %v8426 = vunpack.c.l.b16 %v7765
    %v8427 = vunpack.c.h.b16 %v7765
    %v8428 = vunpack.c.l.b16 %v7766
    %v8429 = vunpack.c.h.b16 %v7766
    %v8430 = vunpack.c.l.b16 %v7767
    %v8431 = vunpack.c.h.b16 %v7767
    %v8432 = vunpack.c.l.b16 %v7768
    %v8433 = vunpack.c.h.b16 %v7768
    %v8434 = vunpack.c.l.b16 %v7769
    %v8435 = vunpack.c.h.b16 %v7769
    %v8436 = vunpack.c.l.b16 %v7770
    %v8437 = vunpack.c.h.b16 %v7770
    %v8438 = vunpack.c.l.b16 %v7771
    %v8439 = vunpack.c.h.b16 %v7771
    %v8440 = vunpack.c.l.b16 %v7772
    %v8441 = vunpack.c.h.b16 %v7772
    %v8442 = vunpack.c.l.b16 %v7773
    %v8443 = vunpack.c.h.b16 %v7773
    %v8444 = vunpack.c.l.b16 %v7774
    %v8445 = vunpack.c.h.b16 %v7774
    %v8446 = vunpack.c.l.b16 %v7775
    %v8447 = vunpack.c.h.b16 %v7775
    %v8448 = vunpack.c.l.b16 %v7776
    %v8449 = vunpack.c.h.b16 %v7776
    %v8450 = vunpack.c.l.b16 %v7777
    %v8451 = vunpack.c.h.b16 %v7777
    %v8452 = vunpack.c.l.b16 %v7778
    %v8453 = vunpack.c.h.b16 %v7778
    %v8454 = vunpack.c.l.b16 %v7779
    %v8455 = vunpack.c.h.b16 %v7779
    %v8456 = vunpack.c.l.b16 %v7780
    %v8457 = vunpack.c.h.b16 %v7780
    %v8458 = vunpack.c.l.b16 %v7781
    %v8459 = vunpack.c.h.b16 %v7781
    %v8460 = vunpack.c.l.b16 %v7782
    %v8461 = vunpack.c.h.b16 %v7782
    %v8462 = vunpack.c.l.b16 %v7783
    %v8463 = vunpack.c.h.b16 %v7783
    %v8464 = vunpack.c.l.b16 %v7784
    %v8465 = vunpack.c.h.b16 %v7784
    %v8466 = vunpack.c.l.b16 %v7785
    %v8467 = vunpack.c.h.b16 %v7785
    %v8468 = vunpack.c.l.b16 %v7786
    %v8469 = vunpack.c.h.b16 %v7786
    %v8470 = vunpack.c.l.b16 %v7787
    %v8471 = vunpack.c.h.b16 %v7787
    %v8472 = vunpack.c.l.b16 %v7788
    %v8473 = vunpack.c.h.b16 %v7788
    %v8474 = vunpack.c.l.b16 %v7789
    %v8475 = vunpack.c.h.b16 %v7789
    %v8476 = vunpack.c.l.b16 %v7790
    %v8477 = vunpack.c.h.b16 %v7790
    %v8478 = vunpack.c.l.b16 %v7791
    %v8479 = vunpack.c.h.b16 %v7791
    %v8480 = vunpack.c.l.b16 %v7792
    %v8481 = vunpack.c.h.b16 %v7792
    %v8482 = vunpack.c.l.b16 %v7793
    %v8483 = vunpack.c.h.b16 %v7793
    %v8484 = vunpack.c.l.b16 %v7794
    %v8485 = vunpack.c.h.b16 %v7794
    %v8486 = vunpack.c.l.b16 %v7795
    %v8487 = vunpack.c.h.b16 %v7795
    %v8488 = vunpack.c.l.b16 %v7796
    %v8489 = vunpack.c.h.b16 %v7796
    %v8490 = vunpack.c.l.b16 %v7797
    %v8491 = vunpack.c.h.b16 %v7797
    %v8492 = vunpack.c.l.b16 %v7798
    %v8493 = vunpack.c.h.b16 %v7798
    %v8494 = vunpack.c.l.b16 %v7799
    %v8495 = vunpack.c.h.b16 %v7799
    %v8496 = vunpack.c.l.b16 %v7800
    %v8497 = vunpack.c.h.b16 %v7800
    %v8498 = vunpack.c.l.b16 %v7801
    %v8499 = vunpack.c.h.b16 %v7801
    %v8500 = vunpack.c.l.b16 %v7802
    %v8501 = vunpack.c.h.b16 %v7802
    %v8502 = vunpack.c.l.b16 %v7803
    %v8503 = vunpack.c.h.b16 %v7803
    %v8504 = vunpack.c.l.b16 %v7804
    %v8505 = vunpack.c.h.b16 %v7804
    %v8506 = vunpack.c.l.b16 %v7805
    %v8507 = vunpack.c.h.b16 %v7805
    %v8508 = vunpack.c.l.b16 %v7806
    %v8509 = vunpack.c.h.b16 %v7806
    %v8510 = vunpack.c.l.b16 %v7807
    %v8511 = vunpack.c.h.b16 %v7807
    %v8512 = vunpack.c.l.b16 %v7808
    %v8513 = vunpack.c.h.b16 %v7808
    %v8514 = vunpack.c.l.b16 %v7809
    %v8515 = vunpack.c.h.b16 %v7809
    %v8516 = vunpack.c.l.b16 %v7810
    %v8517 = vunpack.c.h.b16 %v7810
    %v8518 = vunpack.c.l.b16 %v7811
    %v8519 = vunpack.c.h.b16 %v7811
    %v8520 = vunpack.c.l.b16 %v7812
    %v8521 = vunpack.c.h.b16 %v7812
    %v8522 = vunpack.c.l.b16 %v7813
    %v8523 = vunpack.c.h.b16 %v7813
    %v8524 = vunpack.c.l.b16 %v7814
    %v8525 = vunpack.c.h.b16 %v7814
    %v8526 = vunpack.c.l.b16 %v7815
    %v8527 = vunpack.c.h.b16 %v7815
    %v8528 = vunpack.c.l.b16 %v7816
    %v8529 = vunpack.c.h.b16 %v7816
    %v8530 = vunpack.c.l.b16 %v7817
    %v8531 = vunpack.c.h.b16 %v7817
    %v8532 = vunpack.c.l.b16 %v7818
    %v8533 = vunpack.c.h.b16 %v7818
    %v8534 = vunpack.c.l.b16 %v7819
    %v8535 = vunpack.c.h.b16 %v7819
    %v8536 = vunpack.c.l.b16 %v7820
    %v8537 = vunpack.c.h.b16 %v7820
    %v8538 = vunpack.c.l.b16 %v7821
    %v8539 = vunpack.c.h.b16 %v7821
    %v8540 = vunpack.c.l.b16 %v7822
    %v8541 = vunpack.c.h.b16 %v7822
    %v8542 = vunpack.c.l.b16 %v7823
    %v8543 = vunpack.c.h.b16 %v7823
    %v8544 = vunpack.c.l.b16 %v7824
    %v8545 = vunpack.c.h.b16 %v7824
    %v8546 = vunpack.c.l.b16 %v7825
    %v8547 = vunpack.c.h.b16 %v7825
    %v8548 = vunpack.c.l.b16 %v7826
    %v8549 = vunpack.c.h.b16 %v7826
    %v8550 = vunpack.c.l.b16 %v7827
    %v8551 = vunpack.c.h.b16 %v7827
    %v8552 = vunpack.c.l.b16 %v7828
    %v8553 = vunpack.c.h.b16 %v7828
    %v8554 = vunpack.c.l.b16 %v7829
    %v8555 = vunpack.c.h.b16 %v7829
    %v8556 = vunpack.c.l.b16 %v7830
    %v8557 = vunpack.c.h.b16 %v7830
    %v8558 = vunpack.c.l.b16 %v7831
    %v8559 = vunpack.c.h.b16 %v7831
    %v8560 = vunpack.c.l.b16 %v7832
    %v8561 = vunpack.c.h.b16 %v7832
    %v8562 = vunpack.c.l.b16 %v7833
    %v8563 = vunpack.c.h.b16 %v7833
    %v8564 = vunpack.c.l.b16 %v7834
    %v8565 = vunpack.c.h.b16 %v7834
    %v8566 = vunpack.c.l.b16 %v7835
    %v8567 = vunpack.c.h.b16 %v7835
    %v8568 = vunpack.c.l.b16 %v7836
    %v8569 = vunpack.c.h.b16 %v7836
    %v8570 = vunpack.c.l.b16 %v7837
    %v8571 = vunpack.c.h.b16 %v7837
    %v8572 = vunpack.c.l.b16 %v7838
    %v8573 = vunpack.c.h.b16 %v7838
    %v8574 = vunpack.c.l.b16 %v7839
    %v8575 = vunpack.c.h.b16 %v7839
    %v8576 = vunpack.c.l.b16 %v7840
    %v8577 = vunpack.c.h.b16 %v7840
    %v8578 = vunpack.c.l.b16 %v7841
    %v8579 = vunpack.c.h.b16 %v7841
    %v8580 = vunpack.c.l.b16 %v7842
    %v8581 = vunpack.c.h.b16 %v7842
    %v8582 = vunpack.c.l.b16 %v7843
    %v8583 = vunpack.c.h.b16 %v7843
    %v8584 = vunpack.c.l.b16 %v7844
    %v8585 = vunpack.c.h.b16 %v7844
    %v8586 = vunpack.c.l.b16 %v7845
    %v8587 = vunpack.c.h.b16 %v7845
    %v8588 = vunpack.c.l.b16 %v7846
    %v8589 = vunpack.c.h.b16 %v7846
    %v8590 = vunpack.c.l.b16 %v7847
    %v8591 = vunpack.c.h.b16 %v7847
    %v8592 = vunpack.c.l.b16 %v7848
    %v8593 = vunpack.c.h.b16 %v7848
    %v8594 = vunpack.c.l.b16 %v7849
    %v8595 = vunpack.c.h.b16 %v7849
    %v8596 = vunpack.c.l.b16 %v7850
    %v8597 = vunpack.c.h.b16 %v7850
    %v8598 = vunpack.c.l.b16 %v7851
    %v8599 = vunpack.c.h.b16 %v7851
    %v8600 = vunpack.c.l.b16 %v7852
    %v8601 = vunpack.c.h.b16 %v7852
    %v8602 = vunpack.c.l.b16 %v7853
    %v8603 = vunpack.c.h.b16 %v7853
    %v8604 = vunpack.c.l.b16 %v7854
    %v8605 = vunpack.c.h.b16 %v7854
    %v8606 = vunpack.c.l.b16 %v7855
    %v8607 = vunpack.c.h.b16 %v7855
    %v8608 = vunpack.c.l.b16 %v7856
    %v8609 = vunpack.c.h.b16 %v7856
    %v8610 = vunpack.c.l.b16 %v7857
    %v8611 = vunpack.c.h.b16 %v7857
    %v8612 = vunpack.c.l.b16 %v7858
    %v8613 = vunpack.c.h.b16 %v7858
    %v8614 = vunpack.c.l.b16 %v7859
    %v8615 = vunpack.c.h.b16 %v7859
    %v8616 = vunpack.c.l.b16 %v7860
    %v8617 = vunpack.c.h.b16 %v7860
    %v8618 = vunpack.c.l.b16 %v7861
    %v8619 = vunpack.c.h.b16 %v7861
    %v8620 = vunpack.c.l.b16 %v7862
    %v8621 = vunpack.c.h.b16 %v7862
    %v8622 = vunpack.c.l.b16 %v7863
    %v8623 = vunpack.c.h.b16 %v7863
    %v8624 = vunpack.c.l.b16 %v7864
    %v8625 = vunpack.c.h.b16 %v7864
    %v8626 = vunpack.c.l.b16 %v7865
    %v8627 = vunpack.c.h.b16 %v7865
    %v8628 = vunpack.c.l.b16 %v7866
    %v8629 = vunpack.c.h.b16 %v7866
    %v8630 = vunpack.c.l.b16 %v7867
    %v8631 = vunpack.c.h.b16 %v7867
    %v8632 = vunpack.c.l.b16 %v7868
    %v8633 = vunpack.c.h.b16 %v7868
    %v8634 = vunpack.c.l.b16 %v7869
    %v8635 = vunpack.c.h.b16 %v7869
    %v8636 = vunpack.c.l.b16 %v7870
    %v8637 = vunpack.c.h.b16 %v7870
    %v8638 = vunpack.c.l.b16 %v7871
    %v8639 = vunpack.c.h.b16 %v7871
    %v8640 = vunpack.c.l.b16 %v7872
    %v8641 = vunpack.c.h.b16 %v7872
    %v8642 = vunpack.c.l.b16 %v7873
    %v8643 = vunpack.c.h.b16 %v7873
    %v8644 = vunpack.c.l.b16 %v7874
    %v8645 = vunpack.c.h.b16 %v7874
    %v8646 = vunpack.c.l.b16 %v7875
    %v8647 = vunpack.c.h.b16 %v7875
    %v8648 = vunpack.c.l.b16 %v7876
    %v8649 = vunpack.c.h.b16 %v7876
    %v8650 = vunpack.c.l.b16 %v7877
    %v8651 = vunpack.c.h.b16 %v7877
    %v8652 = vunpack.c.l.b16 %v7878
    %v8653 = vunpack.c.h.b16 %v7878
    %v8654 = vunpack.c.l.b16 %v7879
    %v8655 = vunpack.c.h.b16 %v7879
    %v8656 = vunpack.c.l.b16 %v7880
    %v8657 = vunpack.c.h.b16 %v7880
    %v8658 = vunpack.c.l.b16 %v7881
    %v8659 = vunpack.c.h.b16 %v7881
    %v8660 = vunpack.c.l.b16 %v7882
    %v8661 = vunpack.c.h.b16 %v7882
    %v8662 = vunpack.c.l.b16 %v7883
    %v8663 = vunpack.c.h.b16 %v7883
    %v8664 = vunpack.c.l.b16 %v7884
    %v8665 = vunpack.c.h.b16 %v7884
    %v8666 = vunpack.c.l.b16 %v7885
    %v8667 = vunpack.c.h.b16 %v7885
    %v8668 = vunpack.c.l.b16 %v7886
    %v8669 = vunpack.c.h.b16 %v7886
    %v8670 = vunpack.c.l.b16 %v7887
    %v8671 = vunpack.c.h.b16 %v7887
    %v8672 = vunpack.c.l.b16 %v7888
    %v8673 = vunpack.c.h.b16 %v7888
    %v8674 = vunpack.c.l.b16 %v7889
    %v8675 = vunpack.c.h.b16 %v7889
    %v8676 = vunpack.c.l.b16 %v7890
    %v8677 = vunpack.c.h.b16 %v7890
    %v8678 = vunpack.c.l.b16 %v7891
    %v8679 = vunpack.c.h.b16 %v7891
    %v8680 = vunpack.c.l.b16 %v7892
    %v8681 = vunpack.c.h.b16 %v7892
    %v8682 = vunpack.c.l.b16 %v7893
    %v8683 = vunpack.c.h.b16 %v7893
    %v8684 = vpack.c.b16 %v8176, %v8172
    %v8685 = vpack.c.b16 %v8177, %v8173
    %v8686 = vpack.c.b16 %v8178, %v8174
    %v8687 = vpack.c.b16 %v8179, %v8175
    %v8688 = vpack.c.b16 %v8184, %v8180
    %v8689 = vpack.c.b16 %v8185, %v8181
    %v8690 = vpack.c.b16 %v8186, %v8182
    %v8691 = vpack.c.b16 %v8187, %v8183
    %v8692 = vpack.c.b16 %v8192, %v8188
    %v8693 = vpack.c.b16 %v8193, %v8189
    %v8694 = vpack.c.b16 %v8194, %v8190
    %v8695 = vpack.c.b16 %v8195, %v8191
    %v8696 = vpack.c.b16 %v8200, %v8196
    %v8697 = vpack.c.b16 %v8201, %v8197
    %v8698 = vpack.c.b16 %v8202, %v8198
    %v8699 = vpack.c.b16 %v8203, %v8199
    %v8700 = vpack.c.b16 %v8208, %v8204
    %v8701 = vpack.c.b16 %v8209, %v8205
    %v8702 = vpack.c.b16 %v8210, %v8206
    %v8703 = vpack.c.b16 %v8211, %v8207
    %v8704 = vpack.c.b16 %v8216, %v8212
    %v8705 = vpack.c.b16 %v8217, %v8213
    %v8706 = vpack.c.b16 %v8218, %v8214
    %v8707 = vpack.c.b16 %v8219, %v8215
    %v8708 = vpack.c.b16 %v8224, %v8220
    %v8709 = vpack.c.b16 %v8225, %v8221
    %v8710 = vpack.c.b16 %v8226, %v8222
    %v8711 = vpack.c.b16 %v8227, %v8223
    %v8712 = vpack.c.b16 %v8232, %v8228
    %v8713 = vpack.c.b16 %v8233, %v8229
    %v8714 = vpack.c.b16 %v8234, %v8230
    %v8715 = vpack.c.b16 %v8235, %v8231
    %v8716 = vpack.c.b16 %v8240, %v8236
    %v8717 = vpack.c.b16 %v8241, %v8237
    %v8718 = vpack.c.b16 %v8242, %v8238
    %v8719 = vpack.c.b16 %v8243, %v8239
    %v8720 = vpack.c.b16 %v8248, %v8244
    %v8721 = vpack.c.b16 %v8249, %v8245
    %v8722 = vpack.c.b16 %v8250, %v8246
    %v8723 = vpack.c.b16 %v8251, %v8247
    %v8724 = vpack.c.b16 %v8256, %v8252
    %v8725 = vpack.c.b16 %v8257, %v8253
    %v8726 = vpack.c.b16 %v8258, %v8254
    %v8727 = vpack.c.b16 %v8259, %v8255
    %v8728 = vpack.c.b16 %v8264, %v8260
    %v8729 = vpack.c.b16 %v8265, %v8261
    %v8730 = vpack.c.b16 %v8266, %v8262
    %v8731 = vpack.c.b16 %v8267, %v8263
    %v8732 = vpack.c.b16 %v8272, %v8268
    %v8733 = vpack.c.b16 %v8273, %v8269
    %v8734 = vpack.c.b16 %v8274, %v8270
    %v8735 = vpack.c.b16 %v8275, %v8271
    %v8736 = vpack.c.b16 %v8280, %v8276
    %v8737 = vpack.c.b16 %v8281, %v8277
    %v8738 = vpack.c.b16 %v8282, %v8278
    %v8739 = vpack.c.b16 %v8283, %v8279
    %v8740 = vpack.c.b16 %v8288, %v8284
    %v8741 = vpack.c.b16 %v8289, %v8285
    %v8742 = vpack.c.b16 %v8290, %v8286
    %v8743 = vpack.c.b16 %v8291, %v8287
    %v8744 = vpack.c.b16 %v8296, %v8292
    %v8745 = vpack.c.b16 %v8297, %v8293
    %v8746 = vpack.c.b16 %v8298, %v8294
    %v8747 = vpack.c.b16 %v8299, %v8295
    %v8748 = vpack.c.b16 %v8304, %v8300
    %v8749 = vpack.c.b16 %v8305, %v8301
    %v8750 = vpack.c.b16 %v8306, %v8302
    %v8751 = vpack.c.b16 %v8307, %v8303
    %v8752 = vpack.c.b16 %v8312, %v8308
    %v8753 = vpack.c.b16 %v8313, %v8309
    %v8754 = vpack.c.b16 %v8314, %v8310
    %v8755 = vpack.c.b16 %v8315, %v8311
    %v8756 = vpack.c.b16 %v8320, %v8316
    %v8757 = vpack.c.b16 %v8321, %v8317
    %v8758 = vpack.c.b16 %v8322, %v8318
    %v8759 = vpack.c.b16 %v8323, %v8319
    %v8760 = vpack.c.b16 %v8328, %v8324
    %v8761 = vpack.c.b16 %v8329, %v8325
    %v8762 = vpack.c.b16 %v8330, %v8326
    %v8763 = vpack.c.b16 %v8331, %v8327
    %v8764 = vpack.c.b16 %v8336, %v8332
    %v8765 = vpack.c.b16 %v8337, %v8333
    %v8766 = vpack.c.b16 %v8338, %v8334
    %v8767 = vpack.c.b16 %v8339, %v8335
    %v8768 = vpack.c.b16 %v8344, %v8340
    %v8769 = vpack.c.b16 %v8345, %v8341
    %v8770 = vpack.c.b16 %v8346, %v8342
    %v8771 = vpack.c.b16 %v8347, %v8343
    %v8772 = vpack.c.b16 %v8352, %v8348
    %v8773 = vpack.c.b16 %v8353, %v8349
    %v8774 = vpack.c.b16 %v8354, %v8350
    %v8775 = vpack.c.b16 %v8355, %v8351
    %v8776 = vpack.c.b16 %v8360, %v8356
    %v8777 = vpack.c.b16 %v8361, %v8357
    %v8778 = vpack.c.b16 %v8362, %v8358
    %v8779 = vpack.c.b16 %v8363, %v8359
    %v8780 = vpack.c.b16 %v8368, %v8364
    %v8781 = vpack.c.b16 %v8369, %v8365
    %v8782 = vpack.c.b16 %v8370, %v8366
    %v8783 = vpack.c.b16 %v8371, %v8367
    %v8784 = vpack.c.b16 %v8376, %v8372
    %v8785 = vpack.c.b16 %v8377, %v8373
    %v8786 = vpack.c.b16 %v8378, %v8374
    %v8787 = vpack.c.b16 %v8379, %v8375
    %v8788 = vpack.c.b16 %v8384, %v8380
    %v8789 = vpack.c.b16 %v8385, %v8381
    %v8790 = vpack.c.b16 %v8386, %v8382
    %v8791 = vpack.c.b16 %v8387, %v8383
    %v8792 = vpack.c.b16 %v8392, %v8388
    %v8793 = vpack.c.b16 %v8393, %v8389
    %v8794 = vpack.c.b16 %v8394, %v8390
    %v8795 = vpack.c.b16 %v8395, %v8391
    %v8796 = vpack.c.b16 %v8400, %v8396
    %v8797 = vpack.c.b16 %v8401, %v8397
    %v8798 = vpack.c.b16 %v8402, %v8398
    %v8799 = vpack.c.b16 %v8403, %v8399
    %v8800 = vpack.c.b16 %v8408, %v8404
    %v8801 = vpack.c.b16 %v8409, %v8405
    %v8802 = vpack.c.b16 %v8410, %v8406
    %v8803 = vpack.c.b16 %v8411, %v8407
    %v8804 = vpack.c.b16 %v8416, %v8412
    %v8805 = vpack.c.b16 %v8417, %v8413
    %v8806 = vpack.c.b16 %v8418, %v8414
    %v8807 = vpack.c.b16 %v8419, %v8415
    %v8808 = vpack.c.b16 %v8424, %v8420
    %v8809 = vpack.c.b16 %v8425, %v8421
    %v8810 = vpack.c.b16 %v8426, %v8422
    %v8811 = vpack.c.b16 %v8427, %v8423
    %v8812 = vpack.c.b16 %v8432, %v8428
    %v8813 = vpack.c.b16 %v8433, %v8429
    %v8814 = vpack.c.b16 %v8434, %v8430
    %v8815 = vpack.c.b16 %v8435, %v8431
    %v8816 = vpack.c.b16 %v8440, %v8436
    %v8817 = vpack.c.b16 %v8441, %v8437
    %v8818 = vpack.c.b16 %v8442, %v8438
    %v8819 = vpack.c.b16 %v8443, %v8439
    %v8820 = vpack.c.b16 %v8448, %v8444
    %v8821 = vpack.c.b16 %v8449, %v8445
    %v8822 = vpack.c.b16 %v8450, %v8446
    %v8823 = vpack.c.b16 %v8451, %v8447
    %v8824 = vpack.c.b16 %v8456, %v8452
    %v8825 = vpack.c.b16 %v8457, %v8453
    %v8826 = vpack.c.b16 %v8458, %v8454
    %v8827 = vpack.c.b16 %v8459, %v8455
    %v8828 = vpack.c.b16 %v8464, %v8460
    %v8829 = vpack.c.b16 %v8465, %v8461
    %v8830 = vpack.c.b16 %v8466, %v8462
    %v8831 = vpack.c.b16 %v8467, %v8463
    %v8832 = vpack.c.b16 %v8472, %v8468
    %v8833 = vpack.c.b16 %v8473, %v8469
    %v8834 = vpack.c.b16 %v8474, %v8470
    %v8835 = vpack.c.b16 %v8475, %v8471
    %v8836 = vpack.c.b16 %v8480, %v8476
    %v8837 = vpack.c.b16 %v8481, %v8477
    %v8838 = vpack.c.b16 %v8482, %v8478
    %v8839 = vpack.c.b16 %v8483, %v8479
    %v8840 = vpack.c.b16 %v8488, %v8484
    %v8841 = vpack.c.b16 %v8489, %v8485
    %v8842 = vpack.c.b16 %v8490, %v8486
    %v8843 = vpack.c.b16 %v8491, %v8487
    %v8844 = vpack.c.b16 %v8496, %v8492
    %v8845 = vpack.c.b16 %v8497, %v8493
    %v8846 = vpack.c.b16 %v8498, %v8494
    %v8847 = vpack.c.b16 %v8499, %v8495
    %v8848 = vpack.c.b16 %v8504, %v8500
    %v8849 = vpack.c.b16 %v8505, %v8501
    %v8850 = vpack.c.b16 %v8506, %v8502
    %v8851 = vpack.c.b16 %v8507, %v8503
    %v8852 = vpack.c.b16 %v8512, %v8508
    %v8853 = vpack.c.b16 %v8513, %v8509
    %v8854 = vpack.c.b16 %v8514, %v8510
    %v8855 = vpack.c.b16 %v8515, %v8511
    %v8856 = vpack.c.b16 %v8520, %v8516
    %v8857 = vpack.c.b16 %v8521, %v8517
    %v8858 = vpack.c.b16 %v8522, %v8518
    %v8859 = vpack.c.b16 %v8523, %v8519
    %v8860 = vpack.c.b16 %v8528, %v8524
    %v8861 = vpack.c.b16 %v8529, %v8525
    %v8862 = vpack.c.b16 %v8530, %v8526
    %v8863 = vpack.c.b16 %v8531, %v8527
    %v8864 = vpack.c.b16 %v8536, %v8532
    %v8865 = vpack.c.b16 %v8537, %v8533
    %v8866 = vpack.c.b16 %v8538, %v8534
    %v8867 = vpack.c.b16 %v8539, %v8535
    %v8868 = vpack.c.b16 %v8544, %v8540
    %v8869 = vpack.c.b16 %v8545, %v8541
    %v8870 = vpack.c.b16 %v8546, %v8542
    %v8871 = vpack.c.b16 %v8547, %v8543
    %v8872 = vpack.c.b16 %v8552, %v8548
    %v8873 = vpack.c.b16 %v8553, %v8549
    %v8874 = vpack.c.b16 %v8554, %v8550
    %v8875 = vpack.c.b16 %v8555, %v8551
    %v8876 = vpack.c.b16 %v8560, %v8556
    %v8877 = vpack.c.b16 %v8561, %v8557
    %v8878 = vpack.c.b16 %v8562, %v8558
    %v8879 = vpack.c.b16 %v8563, %v8559
    %v8880 = vpack.c.b16 %v8568, %v8564
    %v8881 = vpack.c.b16 %v8569, %v8565
    %v8882 = vpack.c.b16 %v8570, %v8566
    %v8883 = vpack.c.b16 %v8571, %v8567
    %v8884 = vpack.c.b16 %v8576, %v8572
    %v8885 = vpack.c.b16 %v8577, %v8573
    %v8886 = vpack.c.b16 %v8578, %v8574
    %v8887 = vpack.c.b16 %v8579, %v8575
    %v8888 = vpack.c.b16 %v8584, %v8580
    %v8889 = vpack.c.b16 %v8585, %v8581
    %v8890 = vpack.c.b16 %v8586, %v8582
    %v8891 = vpack.c.b16 %v8587, %v8583
    %v8892 = vpack.c.b16 %v8592, %v8588
    %v8893 = vpack.c.b16 %v8593, %v8589
    %v8894 = vpack.c.b16 %v8594, %v8590
    %v8895 = vpack.c.b16 %v8595, %v8591
    %v8896 = vpack.c.b16 %v8600, %v8596
    %v8897 = vpack.c.b16 %v8601, %v8597
    %v8898 = vpack.c.b16 %v8602, %v8598
    %v8899 = vpack.c.b16 %v8603, %v8599
    %v8900 = vpack.c.b16 %v8608, %v8604
    %v8901 = vpack.c.b16 %v8609, %v8605
    %v8902 = vpack.c.b16 %v8610, %v8606
    %v8903 = vpack.c.b16 %v8611, %v8607
    %v8904 = vpack.c.b16 %v8616, %v8612
    %v8905 = vpack.c.b16 %v8617, %v8613
    %v8906 = vpack.c.b16 %v8618, %v8614
    %v8907 = vpack.c.b16 %v8619, %v8615
    %v8908 = vpack.c.b16 %v8624, %v8620
    %v8909 = vpack.c.b16 %v8625, %v8621
    %v8910 = vpack.c.b16 %v8626, %v8622
    %v8911 = vpack.c.b16 %v8627, %v8623
    %v8912 = vpack.c.b16 %v8632, %v8628
    %v8913 = vpack.c.b16 %v8633, %v8629
    %v8914 = vpack.c.b16 %v8634, %v8630
    %v8915 = vpack.c.b16 %v8635, %v8631
    %v8916 = vpack.c.b16 %v8640, %v8636
    %v8917 = vpack.c.b16 %v8641, %v8637
    %v8918 = vpack.c.b16 %v8642, %v8638
    %v8919 = vpack.c.b16 %v8643, %v8639
    %v8920 = vpack.c.b16 %v8648, %v8644
    %v8921 = vpack.c.b16 %v8649, %v8645
    %v8922 = vpack.c.b16 %v8650, %v8646
    %v8923 = vpack.c.b16 %v8651, %v8647
    %v8924 = vpack.c.b16 %v8656, %v8652
    %v8925 = vpack.c.b16 %v8657, %v8653
    %v8926 = vpack.c.b16 %v8658, %v8654
    %v8927 = vpack.c.b16 %v8659, %v8655
    %v8928 = vpack.c.b16 %v8664, %v8660
    %v8929 = vpack.c.b16 %v8665, %v8661
    %v8930 = vpack.c.b16 %v8666, %v8662
    %v8931 = vpack.c.b16 %v8667, %v8663
    %v8932 = vpack.c.b16 %v8672, %v8668
    %v8933 = vpack.c.b16 %v8673, %v8669
    %v8934 = vpack.c.b16 %v8674, %v8670
    %v8935 = vpack.c.b16 %v8675, %v8671
    %v8936 = vpack.c.b16 %v8680, %v8676
    %v8937 = vpack.c.b16 %v8681, %v8677
    %v8938 = vpack.c.b16 %v8682, %v8678
    %v8939 = vpack.c.b16 %v8683, %v8679
    %9196 = vmatprep.subr.bf16.mxu0 %v8713
    %9197 = vmatpush1.bf16.msra.mxu0 %v8712
    %9198 = vmatprep.subr.bf16.mxu0 %v8709
    %9199 = vmatpush1.bf16.msra.mxu0 %v8708
    %9200 = vmatprep.subr.bf16.mxu0 %v8705
    %9201 = vmatpush1.bf16.msra.mxu0 %v8704
    %9202 = vmatprep.subr.bf16.mxu0 %v8701
    %9203 = vmatpush1.bf16.msra.mxu0 %v8700
    %9204 = vmatprep.subr.bf16.mxu0 %v8697
    %9205 = vmatpush1.bf16.msra.mxu0 %v8696
    %9206 = vmatprep.subr.bf16.mxu0 %v8693
    %9207 = vmatpush1.bf16.msra.mxu0 %v8692
    %9208 = vmatprep.subr.bf16.mxu0 %v8689
    %9209 = vmatpush1.bf16.msra.mxu0 %v8688
    %9210 = vmatprep.subr.bf16.mxu0 %v8685
    %9211 = vmatpush1.bf16.msra.mxu0 %v8684
    %9212 = vmatprep.subr.bf16.mxu0 %v8745
    %9213 = vmatpush2.bf16.msra.mxu0 %v8744
    %9214 = vmatprep.subr.bf16.mxu0 %v8741
    %9215 = vmatpush2.bf16.msra.mxu0 %v8740
    %9216 = vmatprep.subr.bf16.mxu0 %v8737
    %9217 = vmatpush2.bf16.msra.mxu0 %v8736
    %9218 = vmatprep.subr.bf16.mxu0 %v8733
    %9219 = vmatpush2.bf16.msra.mxu0 %v8732
    %9220 = vmatprep.subr.bf16.mxu0 %v8729
    %9221 = vmatpush2.bf16.msra.mxu0 %v8728
    %9222 = vmatprep.subr.bf16.mxu0 %v8725
    %9223 = vmatpush2.bf16.msra.mxu0 %v8724
    %9224 = vmatprep.subr.bf16.mxu0 %v8721
    %9225 = vmatpush2.bf16.msra.mxu0 %v8720
    %9226 = vmatprep.subr.bf16.mxu0 %v8717
    %9227 = vmatpush2.bf16.msra.mxu0 %v8716
    %9228 = vmatprep.mubr.bf16.mxu0 %v7631
    %9229 = vmatmul.mubr.bf16.gmra.mxu0 %v7630
    %v9230 = vpop.f32.mrf.mxu0
    %v9231 = vadd.f32 %v7899, %v9230
    %v9232 = vpop.f32.mrf.mxu0
    %v9233 = vadd.f32 %v7903, %v9232
    %v9234 = vpop.f32.mrf.mxu0
    %v9235 = vpop.f32.mrf.mxu0
    %9236 = vdwg.mxu0
    %9237 = vmatprep.subr.bf16.mxu0 %v8777
    %9238 = vmatpush1.bf16.msra.mxu0 %v8776
    %9239 = vmatprep.subr.bf16.mxu0 %v8773
    %9240 = vmatpush1.bf16.msra.mxu0 %v8772
    %9241 = vmatprep.subr.bf16.mxu0 %v8769
    %9242 = vmatpush1.bf16.msra.mxu0 %v8768
    %9243 = vmatprep.subr.bf16.mxu0 %v8765
    %9244 = vmatpush1.bf16.msra.mxu0 %v8764
    %9245 = vmatprep.subr.bf16.mxu0 %v8761
    %9246 = vmatpush1.bf16.msra.mxu0 %v8760
    %9247 = vmatprep.subr.bf16.mxu0 %v8757
    %9248 = vmatpush1.bf16.msra.mxu0 %v8756
    %9249 = vmatprep.subr.bf16.mxu0 %v8753
    %9250 = vmatpush1.bf16.msra.mxu0 %v8752
    %9251 = vmatprep.subr.bf16.mxu0 %v8749
    %9252 = vmatpush1.bf16.msra.mxu0 %v8748
    %9253 = vmatprep.subr.bf16.mxu0 %v8809
    %9254 = vmatpush2.bf16.msra.mxu0 %v8808
    %9255 = vmatprep.subr.bf16.mxu0 %v8805
    %9256 = vmatpush2.bf16.msra.mxu0 %v8804
    %9257 = vmatprep.subr.bf16.mxu0 %v8801
    %9258 = vmatpush2.bf16.msra.mxu0 %v8800
    %9259 = vmatprep.subr.bf16.mxu0 %v8797
    %9260 = vmatpush2.bf16.msra.mxu0 %v8796
    %9261 = vmatprep.subr.bf16.mxu0 %v8793
    %9262 = vmatpush2.bf16.msra.mxu0 %v8792
    %9263 = vmatprep.subr.bf16.mxu0 %v8789
    %9264 = vmatpush2.bf16.msra.mxu0 %v8788
    %9265 = vmatprep.subr.bf16.mxu0 %v8785
    %9266 = vmatpush2.bf16.msra.mxu0 %v8784
    %9267 = vmatprep.subr.bf16.mxu0 %v8781
    %9268 = vmatpush2.bf16.msra.mxu0 %v8780
    %9269 = vmatprep.mubr.bf16.mxu0 %v7633
    %9270 = vmatmul.mubr.bf16.gmra.mxu0 %v7632
    %v9271 = vpop.f32.mrf.mxu0
    %v9272 = vadd.f32 %v9231, %v9271
    %v9273 = vpop.f32.mrf.mxu0
    %v9274 = vadd.f32 %v9233, %v9273
    %v9275 = vpop.f32.mrf.mxu0
    %v9276 = vpop.f32.mrf.mxu0
    %9277 = vdwg.mxu0
    %9278 = vmatprep.subr.bf16.mxu0 %v8841
    %9279 = vmatpush1.bf16.msra.mxu0 %v8840
    %9280 = vmatprep.subr.bf16.mxu0 %v8837
    %9281 = vmatpush1.bf16.msra.mxu0 %v8836
    %9282 = vmatprep.subr.bf16.mxu0 %v8833
    %9283 = vmatpush1.bf16.msra.mxu0 %v8832
    %9284 = vmatprep.subr.bf16.mxu0 %v8829
    %9285 = vmatpush1.bf16.msra.mxu0 %v8828
    %9286 = vmatprep.subr.bf16.mxu0 %v8825
    %9287 = vmatpush1.bf16.msra.mxu0 %v8824
    %9288 = vmatprep.subr.bf16.mxu0 %v8821
    %9289 = vmatpush1.bf16.msra.mxu0 %v8820
    %9290 = vmatprep.subr.bf16.mxu0 %v8817
    %9291 = vmatpush1.bf16.msra.mxu0 %v8816
    %9292 = vmatprep.subr.bf16.mxu0 %v8813
    %9293 = vmatpush1.bf16.msra.mxu0 %v8812
    %9294 = vmatprep.subr.bf16.mxu0 %v8873
    %9295 = vmatpush2.bf16.msra.mxu0 %v8872
    %9296 = vmatprep.subr.bf16.mxu0 %v8869
    %9297 = vmatpush2.bf16.msra.mxu0 %v8868
    %9298 = vmatprep.subr.bf16.mxu0 %v8865
    %9299 = vmatpush2.bf16.msra.mxu0 %v8864
    %9300 = vmatprep.subr.bf16.mxu0 %v8861
    %9301 = vmatpush2.bf16.msra.mxu0 %v8860
    %9302 = vmatprep.subr.bf16.mxu0 %v8857
    %9303 = vmatpush2.bf16.msra.mxu0 %v8856
    %9304 = vmatprep.subr.bf16.mxu0 %v8853
    %9305 = vmatpush2.bf16.msra.mxu0 %v8852
    %9306 = vmatprep.subr.bf16.mxu0 %v8849
    %9307 = vmatpush2.bf16.msra.mxu0 %v8848
    %9308 = vmatprep.subr.bf16.mxu0 %v8845
    %9309 = vmatpush2.bf16.msra.mxu0 %v8844
    %9310 = vmatprep.mubr.bf16.mxu0 %v7635
    %9311 = vmatmul.mubr.bf16.gmra.mxu0 %v7634
    %v9312 = vpop.f32.mrf.mxu0
    %v9313 = vadd.f32 %v9272, %v9312
    %v9314 = vpop.f32.mrf.mxu0
    %v9315 = vadd.f32 %v9274, %v9314
    %v9316 = vpop.f32.mrf.mxu0
    %v9317 = vpop.f32.mrf.mxu0
    %9318 = vdwg.mxu0
    %9319 = vmatprep.subr.bf16.mxu0 %v8905
    %9320 = vmatpush1.bf16.msra.mxu0 %v8904
    %9321 = vmatprep.subr.bf16.mxu0 %v8901
    %9322 = vmatpush1.bf16.msra.mxu0 %v8900
    %9323 = vmatprep.subr.bf16.mxu0 %v8897
    %9324 = vmatpush1.bf16.msra.mxu0 %v8896
    %9325 = vmatprep.subr.bf16.mxu0 %v8893
    %9326 = vmatpush1.bf16.msra.mxu0 %v8892
    %9327 = vmatprep.subr.bf16.mxu0 %v8889
    %9328 = vmatpush1.bf16.msra.mxu0 %v8888
    %9329 = vmatprep.subr.bf16.mxu0 %v8885
    %9330 = vmatpush1.bf16.msra.mxu0 %v8884
    %9331 = vmatprep.subr.bf16.mxu0 %v8881
    %9332 = vmatpush1.bf16.msra.mxu0 %v8880
    %9333 = vmatprep.subr.bf16.mxu0 %v8877
    %9334 = vmatpush1.bf16.msra.mxu0 %v8876
    %9335 = vmatprep.subr.bf16.mxu0 %v8937
    %9336 = vmatpush2.bf16.msra.mxu0 %v8936
    %9337 = vmatprep.subr.bf16.mxu0 %v8933
    %9338 = vmatpush2.bf16.msra.mxu0 %v8932
    %9339 = vmatprep.subr.bf16.mxu0 %v8929
    %9340 = vmatpush2.bf16.msra.mxu0 %v8928
    %9341 = vmatprep.subr.bf16.mxu0 %v8925
    %9342 = vmatpush2.bf16.msra.mxu0 %v8924
    %9343 = vmatprep.subr.bf16.mxu0 %v8921
    %9344 = vmatpush2.bf16.msra.mxu0 %v8920
    %9345 = vmatprep.subr.bf16.mxu0 %v8917
    %9346 = vmatpush2.bf16.msra.mxu0 %v8916
    %9347 = vmatprep.subr.bf16.mxu0 %v8913
    %9348 = vmatpush2.bf16.msra.mxu0 %v8912
    %9349 = vmatprep.subr.bf16.mxu0 %v8909
    %9350 = vmatpush2.bf16.msra.mxu0 %v8908
    %9351 = vmatprep.mubr.bf16.mxu0 %v7637
    %9352 = vmatmul.mubr.bf16.gmra.mxu0 %v7636
    %v9353 = vpop.f32.mrf.mxu0
    %v9354 = vadd.f32 %v9313, %v9353
    %v9355 = vpop.f32.mrf.mxu0
    %v9356 = vadd.f32 %v9315, %v9355
    %v9357 = vpop.f32.mrf.mxu0
    %v9358 = vpop.f32.mrf.mxu0
    %9359 = vdwg.mxu0
    %9360 = vmatprep.subr.bf16.mxu0 %v8715
    %9361 = vmatpush1.bf16.msra.mxu0 %v8714
    %9362 = vmatprep.subr.bf16.mxu0 %v8711
    %9363 = vmatpush1.bf16.msra.mxu0 %v8710
    %9364 = vmatprep.subr.bf16.mxu0 %v8707
    %9365 = vmatpush1.bf16.msra.mxu0 %v8706
    %9366 = vmatprep.subr.bf16.mxu0 %v8703
    %9367 = vmatpush1.bf16.msra.mxu0 %v8702
    %9368 = vmatprep.subr.bf16.mxu0 %v8699
    %9369 = vmatpush1.bf16.msra.mxu0 %v8698
    %9370 = vmatprep.subr.bf16.mxu0 %v8695
    %9371 = vmatpush1.bf16.msra.mxu0 %v8694
    %9372 = vmatprep.subr.bf16.mxu0 %v8691
    %9373 = vmatpush1.bf16.msra.mxu0 %v8690
    %9374 = vmatprep.subr.bf16.mxu0 %v8687
    %9375 = vmatpush1.bf16.msra.mxu0 %v8686
    %9376 = vmatprep.subr.bf16.mxu0 %v8747
    %9377 = vmatpush2.bf16.msra.mxu0 %v8746
    %9378 = vmatprep.subr.bf16.mxu0 %v8743
    %9379 = vmatpush2.bf16.msra.mxu0 %v8742
    %9380 = vmatprep.subr.bf16.mxu0 %v8739
    %9381 = vmatpush2.bf16.msra.mxu0 %v8738
    %9382 = vmatprep.subr.bf16.mxu0 %v8735
    %9383 = vmatpush2.bf16.msra.mxu0 %v8734
    %9384 = vmatprep.subr.bf16.mxu0 %v8731
    %9385 = vmatpush2.bf16.msra.mxu0 %v8730
    %9386 = vmatprep.subr.bf16.mxu0 %v8727
    %9387 = vmatpush2.bf16.msra.mxu0 %v8726
    %9388 = vmatprep.subr.bf16.mxu0 %v8723
    %9389 = vmatpush2.bf16.msra.mxu0 %v8722
    %9390 = vmatprep.subr.bf16.mxu0 %v8719
    %9391 = vmatpush2.bf16.msra.mxu0 %v8718
    %9392 = vmatprep.mubr.bf16.mxu0 %v7631
    %9393 = vmatmul.mubr.bf16.gmra.mxu0 %v7630
    %v9394 = vpop.f32.mrf.mxu0
    %v9395 = vadd.f32 %v7907, %v9394
    %v9396 = vpop.f32.mrf.mxu0
    %v9397 = vadd.f32 %v7911, %v9396
    %v9398 = vpop.f32.mrf.mxu0
    %v9399 = vpop.f32.mrf.mxu0
    %9400 = vdwg.mxu0
    %9401 = vmatprep.subr.bf16.mxu0 %v8779
    %9402 = vmatpush1.bf16.msra.mxu0 %v8778
    %9403 = vmatprep.subr.bf16.mxu0 %v8775
    %9404 = vmatpush1.bf16.msra.mxu0 %v8774
    %9405 = vmatprep.subr.bf16.mxu0 %v8771
    %9406 = vmatpush1.bf16.msra.mxu0 %v8770
    %9407 = vmatprep.subr.bf16.mxu0 %v8767
    %9408 = vmatpush1.bf16.msra.mxu0 %v8766
    %9409 = vmatprep.subr.bf16.mxu0 %v8763
    %9410 = vmatpush1.bf16.msra.mxu0 %v8762
    %9411 = vmatprep.subr.bf16.mxu0 %v8759
    %9412 = vmatpush1.bf16.msra.mxu0 %v8758
    %9413 = vmatprep.subr.bf16.mxu0 %v8755
    %9414 = vmatpush1.bf16.msra.mxu0 %v8754
    %9415 = vmatprep.subr.bf16.mxu0 %v8751
    %9416 = vmatpush1.bf16.msra.mxu0 %v8750
    %9417 = vmatprep.subr.bf16.mxu0 %v8811
    %9418 = vmatpush2.bf16.msra.mxu0 %v8810
    %9419 = vmatprep.subr.bf16.mxu0 %v8807
    %9420 = vmatpush2.bf16.msra.mxu0 %v8806
    %9421 = vmatprep.subr.bf16.mxu0 %v8803
    %9422 = vmatpush2.bf16.msra.mxu0 %v8802
    %9423 = vmatprep.subr.bf16.mxu0 %v8799
    %9424 = vmatpush2.bf16.msra.mxu0 %v8798
    %9425 = vmatprep.subr.bf16.mxu0 %v8795
    %9426 = vmatpush2.bf16.msra.mxu0 %v8794
    %9427 = vmatprep.subr.bf16.mxu0 %v8791
    %9428 = vmatpush2.bf16.msra.mxu0 %v8790
    %9429 = vmatprep.subr.bf16.mxu0 %v8787
    %9430 = vmatpush2.bf16.msra.mxu0 %v8786
    %9431 = vmatprep.subr.bf16.mxu0 %v8783
    %9432 = vmatpush2.bf16.msra.mxu0 %v8782
    %9433 = vmatprep.mubr.bf16.mxu0 %v7633
    %9434 = vmatmul.mubr.bf16.gmra.mxu0 %v7632
    %v9435 = vpop.f32.mrf.mxu0
    %v9436 = vadd.f32 %v9395, %v9435
    %v9437 = vpop.f32.mrf.mxu0
    %v9438 = vadd.f32 %v9397, %v9437
    %v9439 = vpop.f32.mrf.mxu0
    %v9440 = vpop.f32.mrf.mxu0
    %9441 = vdwg.mxu0
    %9442 = vmatprep.subr.bf16.mxu0 %v8843
    %9443 = vmatpush1.bf16.msra.mxu0 %v8842
    %9444 = vmatprep.subr.bf16.mxu0 %v8839
    %9445 = vmatpush1.bf16.msra.mxu0 %v8838
    %9446 = vmatprep.subr.bf16.mxu0 %v8835
    %9447 = vmatpush1.bf16.msra.mxu0 %v8834
    %9448 = vmatprep.subr.bf16.mxu0 %v8831
    %9449 = vmatpush1.bf16.msra.mxu0 %v8830
    %9450 = vmatprep.subr.bf16.mxu0 %v8827
    %9451 = vmatpush1.bf16.msra.mxu0 %v8826
    %9452 = vmatprep.subr.bf16.mxu0 %v8823
    %9453 = vmatpush1.bf16.msra.mxu0 %v8822
    %9454 = vmatprep.subr.bf16.mxu0 %v8819
    %9455 = vmatpush1.bf16.msra.mxu0 %v8818
    %9456 = vmatprep.subr.bf16.mxu0 %v8815
    %9457 = vmatpush1.bf16.msra.mxu0 %v8814
    %9458 = vmatprep.subr.bf16.mxu0 %v8875
    %9459 = vmatpush2.bf16.msra.mxu0 %v8874
    %9460 = vmatprep.subr.bf16.mxu0 %v8871
    %9461 = vmatpush2.bf16.msra.mxu0 %v8870
    %9462 = vmatprep.subr.bf16.mxu0 %v8867
    %9463 = vmatpush2.bf16.msra.mxu0 %v8866
    %9464 = vmatprep.subr.bf16.mxu0 %v8863
    %9465 = vmatpush2.bf16.msra.mxu0 %v8862
    %9466 = vmatprep.subr.bf16.mxu0 %v8859
    %9467 = vmatpush2.bf16.msra.mxu0 %v8858
    %9468 = vmatprep.subr.bf16.mxu0 %v8855
    %9469 = vmatpush2.bf16.msra.mxu0 %v8854
    %9470 = vmatprep.subr.bf16.mxu0 %v8851
    %9471 = vmatpush2.bf16.msra.mxu0 %v8850
    %9472 = vmatprep.subr.bf16.mxu0 %v8847
    %9473 = vmatpush2.bf16.msra.mxu0 %v8846
    %9474 = vmatprep.mubr.bf16.mxu0 %v7635
    %9475 = vmatmul.mubr.bf16.gmra.mxu0 %v7634
    %v9476 = vpop.f32.mrf.mxu0
    %v9477 = vadd.f32 %v9436, %v9476
    %v9478 = vpop.f32.mrf.mxu0
    %v9479 = vadd.f32 %v9438, %v9478
    %v9480 = vpop.f32.mrf.mxu0
    %v9481 = vpop.f32.mrf.mxu0
    %9482 = vdwg.mxu0
    %9483 = vmatprep.subr.bf16.mxu0 %v8907
    %9484 = vmatpush1.bf16.msra.mxu0 %v8906
    %9485 = vmatprep.subr.bf16.mxu0 %v8903
    %9486 = vmatpush1.bf16.msra.mxu0 %v8902
    %9487 = vmatprep.subr.bf16.mxu0 %v8899
    %9488 = vmatpush1.bf16.msra.mxu0 %v8898
    %9489 = vmatprep.subr.bf16.mxu0 %v8895
    %9490 = vmatpush1.bf16.msra.mxu0 %v8894
    %9491 = vmatprep.subr.bf16.mxu0 %v8891
    %9492 = vmatpush1.bf16.msra.mxu0 %v8890
    %9493 = vmatprep.subr.bf16.mxu0 %v8887
    %9494 = vmatpush1.bf16.msra.mxu0 %v8886
    %9495 = vmatprep.subr.bf16.mxu0 %v8883
    %9496 = vmatpush1.bf16.msra.mxu0 %v8882
    %9497 = vmatprep.subr.bf16.mxu0 %v8879
    %9498 = vmatpush1.bf16.msra.mxu0 %v8878
    %9499 = vmatprep.subr.bf16.mxu0 %v8939
    %9500 = vmatpush2.bf16.msra.mxu0 %v8938
    %9501 = vmatprep.subr.bf16.mxu0 %v8935
    %9502 = vmatpush2.bf16.msra.mxu0 %v8934
    %9503 = vmatprep.subr.bf16.mxu0 %v8931
    %9504 = vmatpush2.bf16.msra.mxu0 %v8930
    %9505 = vmatprep.subr.bf16.mxu0 %v8927
    %9506 = vmatpush2.bf16.msra.mxu0 %v8926
    %9507 = vmatprep.subr.bf16.mxu0 %v8923
    %9508 = vmatpush2.bf16.msra.mxu0 %v8922
    %9509 = vmatprep.subr.bf16.mxu0 %v8919
    %9510 = vmatpush2.bf16.msra.mxu0 %v8918
    %9511 = vmatprep.subr.bf16.mxu0 %v8915
    %9512 = vmatpush2.bf16.msra.mxu0 %v8914
    %9513 = vmatprep.subr.bf16.mxu0 %v8911
    %9514 = vmatpush2.bf16.msra.mxu0 %v8910
    %9515 = vmatprep.mubr.bf16.mxu0 %v7637
    %9516 = vmatmul.mubr.bf16.gmra.mxu0 %v7636
    %v9517 = vpop.f32.mrf.mxu0
    %v9518 = vadd.f32 %v9477, %v9517
    %v9519 = vpop.f32.mrf.mxu0
    %v9520 = vadd.f32 %v9479, %v9519
    %v9521 = vpop.f32.mrf.mxu0
    %v9522 = vpop.f32.mrf.mxu0
    %9523 = vdwg.mxu0
    %v9524 = vxor.u32 %v9354, 2147483648
    %v9525 = vxor.u32 %v9356, 2147483648
    %v9526 = vxor.u32 %v9518, 2147483648
    %v9527 = vxor.u32 %v9520, 2147483648
    %v9528 = vmul.f32 %v9524, 1.442695
    %v9529 = vpow.pop %v9528
    %v9530 = vmul.f32 %v9525, 1.442695
    %v9531 = vpow.pop %v9530
    %v9532 = vmul.f32 %v9526, 1.442695
    %v9533 = vpow.pop %v9532
    %v9534 = vmul.f32 %v9527, 1.442695
    %v9535 = vpow.pop %v9534
    %v9536 = vadd.f32 %v9529, 1.0
    %v9537 = vadd.f32 %v9531, 1.0
    %v9538 = vadd.f32 %v9533, 1.0
    %v9539 = vadd.f32 %v9535, 1.0
    %v9540 = vrcp.pop %v9536
    %v9541 = vmul.f32 1.0, %v9540
    %v9542 = vrcp.pop %v9537
    %v9543 = vmul.f32 1.0, %v9542
    %v9544 = vrcp.pop %v9538
    %v9545 = vmul.f32 1.0, %v9544
    %v9546 = vrcp.pop %v9539
    %v9547 = vmul.f32 1.0, %v9546
    %9548 = vst [vmem:[#allocation26] sm:$0xff] %v9541
    %9549 = vst [vmem:[#allocation26 + $0x8] sm:$0xff] %v9543
    %9550 = vst [vmem:[#allocation26 + $0x10] sm:$0xff] %v9545
    %9551 = vst [vmem:[#allocation26 + $0x18] sm:$0xff] %v9547
    // Predicated region
    $region146: #{tpu_custom_call.1} parent=1 // pred_check
      _
    $region147: #{tpu_custom_call.1} parent=1 // pred_check_branch
      %9553 = sbr.rel (0) target = $region149
    $region148: #{tpu_custom_call.1} parent=1 // pred_region
      %s9555 = ssub.s32 512, 512
      %9556 = vsyncadd [#allocation4], %s9555
      %s9558 = sshll.u32 [#allocation26], 4
      %s9559 = int_to_ptr.vmem [resolvable:$true] %s9558
      %9561 = dma.vmem_to_hbm [thread:$0]  %s9559, 512, %s21, [#allocation4]
    $region149: #{tpu_custom_call.1} parent=1 // pred_fallthru
      _
    // Predicated region
    $region150: #{tpu_custom_call.1} parent=1 // pred_check
      _
    $region151: #{tpu_custom_call.1} parent=1 // pred_check_branch
      %9563 = sbr.rel (0) target = $region153
    $region152: #{tpu_custom_call.1} parent=1 // pred_region
      %s9565 = ssub.s32 128, 128
      %9566 = vsyncadd [#allocation28], %s9565
      %s9568 = sshll.u32 [#allocation27], 4
      %s9569 = int_to_ptr.vmem [resolvable:$true] %s9568
      %9571 = dma.vmem_to_hbm [thread:$0]  %s9569, 128, %s22, [#allocation28]
    $region153: #{tpu_custom_call.1} parent=1 // pred_fallthru
      _
    // Predicated region
    $region154: #{tpu_custom_call.1} parent=1 // pred_check
      _
    $region155: #{tpu_custom_call.1} parent=1 // pred_check_branch
      %9573 = sbr.rel (0) target = $region157
    $region156: #{tpu_custom_call.1} parent=1 // pred_region
      %s9575 = ssub.s32 128, 128
      %9576 = vsyncadd [#allocation28], %s9575
      %s9578 = sshll.u32 [#allocation29], 4
      %s9579 = int_to_ptr.vmem [resolvable:$true] %s9578
      %9581 = dma.vmem_to_hbm [thread:$0]  %s9579, 128, %s23, [#allocation28]
    $region157: #{tpu_custom_call.1} parent=1 // pred_fallthru
      _
    // Predicated region
    $region158: #{tpu_custom_call.1} parent=1 // pred_check
      _
    $region159: #{tpu_custom_call.1} parent=1 // pred_check_branch
      %9583 = sbr.rel (0) target = $region161
    $region160: #{tpu_custom_call.1} parent=1 // pred_region
      %9584 = dma.done [#allocation4], 512
    $region161: #{tpu_custom_call.1} parent=1 // pred_fallthru
      _
    // Predicated region
    $region162: #{tpu_custom_call.1} parent=1 // pred_check
      _
    $region163: #{tpu_custom_call.1} parent=1 // pred_check_branch
      %9586 = sbr.rel (0) target = $region165
    $region164: #{tpu_custom_call.1} parent=1 // pred_region
      %9587 = dma.done [#allocation28], 128
    $region165: #{tpu_custom_call.1} parent=1 // pred_fallthru
      _
    // Predicated region
    $region166: #{tpu_custom_call.1} parent=1 // pred_check
      _
    $region167: #{tpu_custom_call.1} parent=1 // pred_check_branch
      %9589 = sbr.rel (0) target = $region169
    $region168: #{tpu_custom_call.1} parent=1 // pred_region
      %9590 = dma.done [#allocation28], 128
    $region169: #{tpu_custom_call.1} parent=1 // pred_fallthru
      _
    %9591 = vsyncpa [#allocation3], 1
    %9592 = vsyncpa [#allocation6], 1
    %9593 = vsyncpa [#allocation9], 1
    %9594 = vsyncpa [#allocation12], 1
    %9595 = vsyncpa [#allocation15], 1
    %9596 = vsyncpa [#allocation18], 1
    %9597 = vsyncpa [#allocation21], 1
    %9598 = vsyncpa [#allocation24], 1
    %9599 = vsyncpa [#allocation4], 1
    %9600 = vsyncpa [#allocation28], 1

</llo_original>
